<compile_context>
chip_gen: v7x
topology: tpu7x:2x2x1
jax: 0.10.0
libtpu: 0.0.40
codegen_flags: <defaults>
</compile_context>

<pallas_src>
import jax
import jax.numpy as jnp
from jax.experimental import pallas as pl
from jax.experimental.pallas import tpu as pltpu

EPS = 1e-5
_VMEM_LIMIT = 32 * 1024 * 1024      # scoped-VMEM limit handed to Mosaic (safe on v5e..v7x)
_VMEM_BUDGET = 20 * 1024 * 1024     # what the batch-tile picker aims to stay under


# -----------------------------------------------------------------------------
# In-kernel helpers
# -----------------------------------------------------------------------------
def _pad_hw(x):
    """Zero-pad (B, H, W, C) -> (B, H+2, W+2, C) with value-level concatenates."""
    B, H, W, C = x.shape
    zr = jnp.zeros((B, 1, W, C), x.dtype)
    zc = jnp.zeros((B, H + 2, 1, C), x.dtype)
    x = jnp.concatenate([zr, x, zr], axis=1)      # pad H (outer dim: cheap)
    return jnp.concatenate([zc, x, zc], axis=2)   # pad W (sublane dim)


def _conv3x3_mxu(x_bf16, w_flat):
    """3x3 / stride-1 conv of a (B, H, W, Cin) bf16 tile -> (B*H*W, Cout) f32.

    w_flat: (9*Cin, Cout) bf16 with row index (kh*3 + kw)*Cin + cin.
      * Cin >= 128: one big-K MXU matmul over a lane-concatenated im2col slab
        (all lane offsets are multiples of 128 -> aligned concat).
      * Cin <  128: nine accumulating K=Cin dots; the lane-misaligned concat
        would cost more (XLU/vld) than it saves at small channel counts.
    """
    B, H, W, Cin = x_bf16.shape
    Cout = w_flat.shape[-1]
    pad = _pad_hw(x_bf16)
    offs = [(dy, dx) for dy in range(3) for dx in range(3)]
    if Cin >= 128:
        cols = jnp.concatenate(
            [pad[:, dy:dy + H, dx:dx + W, :] for dy, dx in offs], axis=-1)
        return jnp.dot(cols.reshape(B * H * W, 9 * Cin), w_flat,
                       preferred_element_type=jnp.float32)
    acc = jnp.zeros((B * H * W, Cout), jnp.float32)
    for k, (dy, dx) in enumerate(offs):
        lhs = pad[:, dy:dy + H, dx:dx + W, :].reshape(B * H * W, Cin)
        acc = acc + jnp.dot(lhs, w_flat[k * Cin:(k + 1) * Cin, :],
                            preferred_element_type=jnp.float32)
    return acc


def _tile_stats(acc):
    """(M, C) f32 -> (2, C): [per-channel sum ; tile-mean-centered sum-of-squares].

    Centering by the per-tile mean keeps the wrapper-side Chan combine
    numerically stable (no catastrophic E[x^2]-E[x]^2 cancellation).
    """
    inv_m = 1.0 / acc.shape[0]
    s = jnp.sum(acc, axis=0, keepdims=True)
    d = acc - s * inv_m
    return jnp.concatenate([s, jnp.sum(d * d, axis=0, keepdims=True)], axis=0)


# -----------------------------------------------------------------------------
# Phase 1: conv1 per batch tile + per-tile bn1 statistics.
# -----------------------------------------------------------------------------
def _conv1_stats_kernel(x_ref, w1_ref, y1_ref, stats_ref):
    # x_ref  : (B, H, W, Cin) bf16     w1_ref   : (9*Cin, C) bf16
    # y1_ref : (B, H, W, C)   bf16     stats_ref: (1, 2, C)  f32 (per-step block)
    B, H, W, _ = x_ref.shape
    acc = _conv3x3_mxu(x_ref[...], w1_ref[...])                 # (B*H*W, C) f32
    y1_ref[...] = acc.reshape(B, H, W, -1).astype(y1_ref.dtype)
    stats_ref[...] = _tile_stats(acc)[None]


# -----------------------------------------------------------------------------
# Phase 2: bn1 (precomputed scale/shift) + relu + conv2 + per-tile bn2 stats.
# -----------------------------------------------------------------------------
def _bn1_relu_conv2_stats_kernel(y1_ref, s1_ref, t1_ref, w2_ref, y2_ref, stats_ref):
    # y1_ref : (B, H, W, C) bf16 ; s1/t1 : (1, C) f32 precomputed BN scale/shift
    B, H, W, C = y1_ref.shape
    h = jnp.maximum(y1_ref[...].astype(jnp.float32) * s1_ref[...] + t1_ref[...], 0.0)
    acc = _conv3x3_mxu(h.astype(jnp.bfloat16), w2_ref[...])     # (B*H*W, C) f32
    y2_ref[...] = acc.reshape(B, H, W, C).astype(y2_ref.dtype)
    stats_ref[...] = _tile_stats(acc)[None]


# -----------------------------------------------------------------------------
# Phase 3: bn2 (precomputed scale/shift) + residual add + relu (elementwise).
# -----------------------------------------------------------------------------
def _bn2_residual_relu_kernel(y2_ref, x_ref, s2_ref, t2_ref, out_ref):
    out_ref[...] = jnp.maximum(
        y2_ref[...].astype(jnp.float32) * s2_ref[...] + t2_ref[...] + x_ref[...], 0.0)


# -----------------------------------------------------------------------------
# Wrapper
# -----------------------------------------------------------------------------
def _bn_scale_shift(stats, gamma, beta, count_per_tile):
    """stats: (T, 2, C) per-tile [sum ; centered M2] -> per-channel BN scale/shift.

    Chan's parallel-variance combine; biased variance (nn.BatchNorm2d training mode).
    """
    sums, m2s = stats[:, 0, :], stats[:, 1, :]
    total = stats.shape[0] * count_per_tile
    mean = jnp.sum(sums, axis=0) / total
    tile_means = sums / count_per_tile
    m2 = jnp.sum(m2s, axis=0) + count_per_tile * jnp.sum(
        jnp.square(tile_means - mean[None, :]), axis=0)
    var = jnp.maximum(m2 / total, 0.0)
    scale = gamma.astype(jnp.float32) * jax.lax.rsqrt(var + EPS)
    shift = beta.astype(jnp.float32) - mean * scale
    return scale.reshape(1, -1), shift.reshape(1, -1)


def _pick_batch_tile(N, H, W, C):
    """Largest divisor of N whose per-step working set stays inside the VMEM budget."""
    def per_step_bytes(B):
        m = B * H * W
        pad = B * (H + 2) * (W + 2) * C * 2            # padded bf16 tile
        acc = m * C * 4 * 2                            # f32 conv acc + centered temp
        io = 2 * 2 * (m * C * 2)                       # double-buffered bf16 in/out tiles
        slab = m * (9 * C if C >= 128 else C) * 2      # im2col slab (big-K path only)
        return pad + acc + io + slab
    best = 1
    for B in range(1, N + 1):
        if N % B == 0 and per_step_bytes(B) <= _VMEM_BUDGET:
            best = B
    return best


def basic_block_forward(x_nchw, w1_oihw, w2_oihw, g1, b1, g2, b2):
    """PyTorch-compatible entry: x NCHW f32, conv weights OIHW; returns NCHW f32."""
    N, Cin, H, W = x_nchw.shape
    C = w1_oihw.shape[0]
    assert Cin == C, "downsample is None => inplanes must equal planes"

    x_nhwc = jnp.transpose(x_nchw, (0, 2, 3, 1)).astype(jnp.float32)   # f32 residual
    x_bf16 = x_nhwc.astype(jnp.bfloat16)                               # bf16 conv1 input

    # OIHW -> (kh, kw, cin, cout) -> (9*cin, cout); bf16 MXU operands.
    w1 = jnp.transpose(w1_oihw, (2, 3, 1, 0)).reshape(9 * Cin, C).astype(jnp.bfloat16)
    w2 = jnp.transpose(w2_oihw, (2, 3, 1, 0)).reshape(9 * C, C).astype(jnp.bfloat16)

    B = _pick_batch_tile(N, H, W, C)
    T = N // B
    count_per_tile = B * H * W

    tile4 = lambda n: (n, 0, 0, 0)                     # per-step image-batch block
    vecC = pl.BlockSpec((1, C), lambda n: (0, 0))      # resident BN scale/shift
    stats_spec = pl.BlockSpec((1, 2, C), lambda n: (n, 0, 0))
    # Constant-index weight blocks: single-buffer when they get big (>= ~2.3 MB).
    w_kwargs = dict(pipeline_mode=pl.Buffered(1)) if C >= 256 else {}
    w1_spec = pl.BlockSpec((9 * Cin, C), lambda n: (0, 0), **w_kwargs)
    w2_spec = pl.BlockSpec((9 * C, C), lambda n: (0, 0), **w_kwargs)

    cparams = pltpu.CompilerParams(
        dimension_semantics=("parallel",),             # no cross-step state anywhere
        vmem_limit_bytes=_VMEM_LIMIT)

    # ---- phase 1: conv1 + per-tile bn1 statistics -----------------------------
    y1, stats1 = pl.pallas_call(
        _conv1_stats_kernel,
        grid=(T,),
        in_specs=[pl.BlockSpec((B, H, W, Cin), tile4), w1_spec],
        out_specs=(pl.BlockSpec((B, H, W, C), tile4), stats_spec),
        out_shape=(jax.ShapeDtypeStruct((N, H, W, C), jnp.bfloat16),
                   jax.ShapeDtypeStruct((T, 2, C), jnp.float32)),
        compiler_params=cparams,
    )(x_bf16, w1)

    scale1, shift1 = _bn_scale_shift(stats1, g1, b1, count_per_tile)

    # ---- phase 2: bn1 + relu + conv2 + per-tile bn2 statistics ----------------
    y2, stats2 = pl.pallas_call(
        _bn1_relu_conv2_stats_kernel,
        grid=(T,),
        in_specs=[pl.BlockSpec((B, H, W, C), tile4), vecC, vecC, w2_spec],
        out_specs=(pl.BlockSpec((B, H, W, C), tile4), stats_spec),
        out_shape=(jax.ShapeDtypeStruct((N, H, W, C), jnp.bfloat16),
                   jax.ShapeDtypeStruct((T, 2, C), jnp.float32)),
        compiler_params=cparams,
    )(y1, scale1, shift1, w2)

    scale2, shift2 = _bn_scale_shift(stats2, g2, b2, count_per_tile)

    # ---- phase 3: bn2 + residual add + relu -----------------------------------
    out_nhwc = pl.pallas_call(
        _bn2_residual_relu_kernel,
        grid=(T,),
        in_specs=[pl.BlockSpec((B, H, W, C), tile4),
                  pl.BlockSpec((B, H, W, C), tile4), vecC, vecC],
        out_specs=pl.BlockSpec((B, H, W, C), tile4),
        out_shape=jax.ShapeDtypeStruct((N, H, W, C), jnp.float32),
        compiler_params=cparams,
    )(y2, x_nhwc, scale2, shift2)

    return jnp.transpose(out_nhwc, (0, 3, 1, 2))       # back to NCHW


# -----------------------------------------------------------------------------
# Pure-JAX reference (mirrors the kernel's bf16 matmul operands) + demo
# -----------------------------------------------------------------------------
def _reference(x, w1, w2, g1, b1, g2, b2):
    as_bf16 = lambda a: a.astype(jnp.bfloat16).astype(jnp.float32)

    def conv(inp, w):
        return jax.lax.conv_general_dilated(
            as_bf16(inp), as_bf16(w), window_strides=(1, 1),
            padding=((1, 1), (1, 1)),
            dimension_numbers=("NCHW", "OIHW", "NCHW"),
            precision=jax.lax.Precision.HIGHEST)

    def bn(inp, g, b):
        mean = jnp.mean(inp, axis=(0, 2, 3), keepdims=True)
        var = jnp.var(inp, axis=(0, 2, 3), keepdims=True)
        return ((inp - mean) * jax.lax.rsqrt(var + EPS)
                * g.reshape(1, -1, 1, 1) + b.reshape(1, -1, 1, 1))

    h = jax.nn.relu(bn(conv(x, w1), g1, b1))
    o = bn(conv(h, w2), g2, b2)
    return jax.nn.relu(o + x)


if __name__ == "__main__":
    # BasicBlock(inplanes=8, planes=8, stride=1, downsample=None)
    N, C, H, W = 2, 8, 16, 16

    key = jax.random.PRNGKey(0)
    kx, kw1, kw2, kg1, kb1, kg2, kb2 = jax.random.split(key, 7)

    x = jax.random.normal(kx, (N, C, H, W), jnp.float32)
    w1 = 0.1 * jax.random.normal(kw1, (C, C, 3, 3), jnp.float32)   # conv1.weight
    w2 = 0.1 * jax.random.normal(kw2, (C, C, 3, 3), jnp.float32)   # conv2.weight
    g1 = 1.0 + 0.1 * jax.random.normal(kg1, (C,), jnp.float32)     # bn1.weight
    b1 = 0.1 * jax.random.normal(kb1, (C,), jnp.float32)           # bn1.bias
    g2 = 1.0 + 0.1 * jax.random.normal(kg2, (C,), jnp.float32)     # bn2.weight
    b2 = 0.1 * jax.random.normal(kb2, (C,), jnp.float32)           # bn2.bias

    out = jax.jit(basic_block_forward)(x, w1, w2, g1, b1, g2, b2)
    jax.block_until_ready(out)
    assert out.shape == (N, C, H, W)

    ref = _reference(x, w1, w2, g1, b1, g2, b2)
    # Tolerance widened slightly vs the f32-intermediate version: y1/y2 are now
    # stored in bf16 between phases (per the performance review).
    max_err = float(jnp.max(jnp.abs(out - ref)))
    assert max_err < 5e-2, f"max |out - ref| = {max_err}"

    print("KERNEL_OK")
</pallas_src>

<mosaic_0001>
module attributes {stable_mosaic.version = 11 : i64} {
  func.func @_conv1_stats_kernel(%arg0: i32, %arg1: memref<2x16x16x8xbf16, #tpu.memory_space<vmem>>, %arg2: memref<72x8xbf16, #tpu.memory_space<vmem>>, %arg3: memref<2x16x16x8xbf16, #tpu.memory_space<vmem>>, %arg4: memref<1x2x8xf32, #tpu.memory_space<vmem>>) attributes {dimension_semantics = [#tpu.dimension_semantics<parallel>], iteration_bounds = array<i64: 1>, scalar_prefetch = 0 : i64, scratch_operands = 0 : i64, tpu.core_type = #tpu.core_type<tc>, window_params = [{transform_indices = @transform_0, window_bounds = array<i64: 2, 16, 16, 8>}, {pipeline_mode = #tpu.pipeline_mode<synchronous>, transform_indices = @transform_1, window_bounds = array<i64: 72, 8>}, {transform_indices = @transform_2, window_bounds = array<i64: 2, 16, 16, 8>}, {transform_indices = @transform_3, window_bounds = array<i64: 1, 2, 8>}]} {
    %c0 = arith.constant 0 : index
    %c0_0 = arith.constant 0 : index
    %c0_1 = arith.constant 0 : index
    %c0_2 = arith.constant 0 : index
    %0 = vector.load %arg1[%c0, %c0_0, %c0_1, %c0_2] : memref<2x16x16x8xbf16, #tpu.memory_space<vmem>>, vector<2x16x16x8xbf16>
    %c0_3 = arith.constant 0 : index
    %c0_4 = arith.constant 0 : index
    %1 = vector.load %arg2[%c0_3, %c0_4] : memref<72x8xbf16, #tpu.memory_space<vmem>>, vector<72x8xbf16>
    %cst = arith.constant 0.000000e+00 : bf16
    %2 = vector.broadcast %cst : bf16 to vector<2x1x16x8xbf16>
    %cst_5 = arith.constant 0.000000e+00 : bf16
    %3 = vector.broadcast %cst_5 : bf16 to vector<2x18x1x8xbf16>
    %4 = tpu.concatenate %2, %0, %2 in 1 : vector<2x1x16x8xbf16>, vector<2x16x16x8xbf16>, vector<2x1x16x8xbf16> -> vector<2x18x16x8xbf16>
    %5 = tpu.concatenate %3, %4, %3 in 2 : vector<2x18x1x8xbf16>, vector<2x18x16x8xbf16>, vector<2x18x1x8xbf16> -> vector<2x18x18x8xbf16>
    %cst_6 = arith.constant 0.000000e+00 : f32
    %6 = vector.broadcast %cst_6 : f32 to vector<512x8xf32>
    %7 = vector.extract_strided_slice %5 {offsets = [0, 0, 0, 0], sizes = [2, 16, 16, 8], strides = [1, 1, 1, 1]} : vector<2x18x18x8xbf16> to vector<2x16x16x8xbf16>
    %8 = vector.shape_cast %7 : vector<2x16x16x8xbf16> to vector<512x8xbf16>
    %9 = vector.extract_strided_slice %1 {offsets = [0, 0], sizes = [8, 8], strides = [1, 1]} : vector<72x8xbf16> to vector<8x8xbf16>
    %cst_7 = arith.constant dense<0.000000e+00> : vector<512x8xf32>
    %10 = tpu.matmul %8, %9, %cst_7 {dimension_numbers = #tpu.dot_dimension_numbers<[1], [0], [0], [1], [0, 0, 1, 1], [], []>} : vector<512x8xbf16>, vector<8x8xbf16>, vector<512x8xf32> -> vector<512x8xf32>
    %11 = arith.addf %6, %10 : vector<512x8xf32>
    %12 = vector.extract_strided_slice %5 {offsets = [0, 0, 1, 0], sizes = [2, 16, 16, 8], strides = [1, 1, 1, 1]} : vector<2x18x18x8xbf16> to vector<2x16x16x8xbf16>
    %13 = vector.shape_cast %12 : vector<2x16x16x8xbf16> to vector<512x8xbf16>
    %14 = vector.extract_strided_slice %1 {offsets = [8, 0], sizes = [8, 8], strides = [1, 1]} : vector<72x8xbf16> to vector<8x8xbf16>
    %cst_8 = arith.constant dense<0.000000e+00> : vector<512x8xf32>
    %15 = tpu.matmul %13, %14, %cst_8 {dimension_numbers = #tpu.dot_dimension_numbers<[1], [0], [0], [1], [0, 0, 1, 1], [], []>} : vector<512x8xbf16>, vector<8x8xbf16>, vector<512x8xf32> -> vector<512x8xf32>
    %16 = arith.addf %11, %15 : vector<512x8xf32>
    %17 = vector.extract_strided_slice %5 {offsets = [0, 0, 2, 0], sizes = [2, 16, 16, 8], strides = [1, 1, 1, 1]} : vector<2x18x18x8xbf16> to vector<2x16x16x8xbf16>
    %18 = vector.shape_cast %17 : vector<2x16x16x8xbf16> to vector<512x8xbf16>
    %19 = vector.extract_strided_slice %1 {offsets = [16, 0], sizes = [8, 8], strides = [1, 1]} : vector<72x8xbf16> to vector<8x8xbf16>
    %cst_9 = arith.constant dense<0.000000e+00> : vector<512x8xf32>
    %20 = tpu.matmul %18, %19, %cst_9 {dimension_numbers = #tpu.dot_dimension_numbers<[1], [0], [0], [1], [0, 0, 1, 1], [], []>} : vector<512x8xbf16>, vector<8x8xbf16>, vector<512x8xf32> -> vector<512x8xf32>
    %21 = arith.addf %16, %20 : vector<512x8xf32>
    %22 = vector.extract_strided_slice %5 {offsets = [0, 1, 0, 0], sizes = [2, 16, 16, 8], strides = [1, 1, 1, 1]} : vector<2x18x18x8xbf16> to vector<2x16x16x8xbf16>
    %23 = vector.shape_cast %22 : vector<2x16x16x8xbf16> to vector<512x8xbf16>
    %24 = vector.extract_strided_slice %1 {offsets = [24, 0], sizes = [8, 8], strides = [1, 1]} : vector<72x8xbf16> to vector<8x8xbf16>
    %cst_10 = arith.constant dense<0.000000e+00> : vector<512x8xf32>
    %25 = tpu.matmul %23, %24, %cst_10 {dimension_numbers = #tpu.dot_dimension_numbers<[1], [0], [0], [1], [0, 0, 1, 1], [], []>} : vector<512x8xbf16>, vector<8x8xbf16>, vector<512x8xf32> -> vector<512x8xf32>
    %26 = arith.addf %21, %25 : vector<512x8xf32>
    %27 = vector.extract_strided_slice %5 {offsets = [0, 1, 1, 0], sizes = [2, 16, 16, 8], strides = [1, 1, 1, 1]} : vector<2x18x18x8xbf16> to vector<2x16x16x8xbf16>
    %28 = vector.shape_cast %27 : vector<2x16x16x8xbf16> to vector<512x8xbf16>
    %29 = vector.extract_strided_slice %1 {offsets = [32, 0], sizes = [8, 8], strides = [1, 1]} : vector<72x8xbf16> to vector<8x8xbf16>
    %cst_11 = arith.constant dense<0.000000e+00> : vector<512x8xf32>
    %30 = tpu.matmul %28, %29, %cst_11 {dimension_numbers = #tpu.dot_dimension_numbers<[1], [0], [0], [1], [0, 0, 1, 1], [], []>} : vector<512x8xbf16>, vector<8x8xbf16>, vector<512x8xf32> -> vector<512x8xf32>
    %31 = arith.addf %26, %30 : vector<512x8xf32>
    %32 = vector.extract_strided_slice %5 {offsets = [0, 1, 2, 0], sizes = [2, 16, 16, 8], strides = [1, 1, 1, 1]} : vector<2x18x18x8xbf16> to vector<2x16x16x8xbf16>
    %33 = vector.shape_cast %32 : vector<2x16x16x8xbf16> to vector<512x8xbf16>
    %34 = vector.extract_strided_slice %1 {offsets = [40, 0], sizes = [8, 8], strides = [1, 1]} : vector<72x8xbf16> to vector<8x8xbf16>
    %cst_12 = arith.constant dense<0.000000e+00> : vector<512x8xf32>
    %35 = tpu.matmul %33, %34, %cst_12 {dimension_numbers = #tpu.dot_dimension_numbers<[1], [0], [0], [1], [0, 0, 1, 1], [], []>} : vector<512x8xbf16>, vector<8x8xbf16>, vector<512x8xf32> -> vector<512x8xf32>
    %36 = arith.addf %31, %35 : vector<512x8xf32>
    %37 = vector.extract_strided_slice %5 {offsets = [0, 2, 0, 0], sizes = [2, 16, 16, 8], strides = [1, 1, 1, 1]} : vector<2x18x18x8xbf16> to vector<2x16x16x8xbf16>
    %38 = vector.shape_cast %37 : vector<2x16x16x8xbf16> to vector<512x8xbf16>
    %39 = vector.extract_strided_slice %1 {offsets = [48, 0], sizes = [8, 8], strides = [1, 1]} : vector<72x8xbf16> to vector<8x8xbf16>
    %cst_13 = arith.constant dense<0.000000e+00> : vector<512x8xf32>
    %40 = tpu.matmul %38, %39, %cst_13 {dimension_numbers = #tpu.dot_dimension_numbers<[1], [0], [0], [1], [0, 0, 1, 1], [], []>} : vector<512x8xbf16>, vector<8x8xbf16>, vector<512x8xf32> -> vector<512x8xf32>
    %41 = arith.addf %36, %40 : vector<512x8xf32>
    %42 = vector.extract_strided_slice %5 {offsets = [0, 2, 1, 0], sizes = [2, 16, 16, 8], strides = [1, 1, 1, 1]} : vector<2x18x18x8xbf16> to vector<2x16x16x8xbf16>
    %43 = vector.shape_cast %42 : vector<2x16x16x8xbf16> to vector<512x8xbf16>
    %44 = vector.extract_strided_slice %1 {offsets = [56, 0], sizes = [8, 8], strides = [1, 1]} : vector<72x8xbf16> to vector<8x8xbf16>
    %cst_14 = arith.constant dense<0.000000e+00> : vector<512x8xf32>
    %45 = tpu.matmul %43, %44, %cst_14 {dimension_numbers = #tpu.dot_dimension_numbers<[1], [0], [0], [1], [0, 0, 1, 1], [], []>} : vector<512x8xbf16>, vector<8x8xbf16>, vector<512x8xf32> -> vector<512x8xf32>
    %46 = arith.addf %41, %45 : vector<512x8xf32>
    %47 = vector.extract_strided_slice %5 {offsets = [0, 2, 2, 0], sizes = [2, 16, 16, 8], strides = [1, 1, 1, 1]} : vector<2x18x18x8xbf16> to vector<2x16x16x8xbf16>
    %48 = vector.shape_cast %47 : vector<2x16x16x8xbf16> to vector<512x8xbf16>
    %49 = vector.extract_strided_slice %1 {offsets = [64, 0], sizes = [8, 8], strides = [1, 1]} : vector<72x8xbf16> to vector<8x8xbf16>
    %cst_15 = arith.constant dense<0.000000e+00> : vector<512x8xf32>
    %50 = tpu.matmul %48, %49, %cst_15 {dimension_numbers = #tpu.dot_dimension_numbers<[1], [0], [0], [1], [0, 0, 1, 1], [], []>} : vector<512x8xbf16>, vector<8x8xbf16>, vector<512x8xf32> -> vector<512x8xf32>
    %51 = arith.addf %46, %50 : vector<512x8xf32>
    %52 = vector.shape_cast %51 : vector<512x8xf32> to vector<2x16x16x8xf32>
    %53 = arith.truncf %52 : vector<2x16x16x8xf32> to vector<2x16x16x8xbf16>
    %c0_16 = arith.constant 0 : index
    %c0_17 = arith.constant 0 : index
    %c0_18 = arith.constant 0 : index
    %c0_19 = arith.constant 0 : index
    %54 = vector.load %arg3[%c0_16, %c0_17, %c0_18, %c0_19] : memref<2x16x16x8xbf16, #tpu.memory_space<vmem>>, vector<2x16x16x8xbf16>
    tpu.vector_store %arg3[%c0_16, %c0_17, %c0_18, %c0_19], %53 {strides = array<i32>} : memref<2x16x16x8xbf16, #tpu.memory_space<vmem>>, vector<2x16x16x8xbf16>,
    %cst_20 = arith.constant dense<0.000000e+00> : vector<8xf32>
    %55 = vector.multi_reduction <add>, %51, %cst_20 [0] : vector<512x8xf32> to vector<8xf32>
    %56 = vector.shape_cast %55 : vector<8xf32> to vector<1x8xf32>
    %cst_21 = arith.constant 0.001953125 : f32
    %57 = vector.broadcast %cst_21 : f32 to vector<1x8xf32>
    %58 = arith.mulf %56, %57 : vector<1x8xf32>
    %59 = vector.broadcast %58 : vector<1x8xf32> to vector<512x8xf32>
    %60 = arith.subf %51, %59 : vector<512x8xf32>
    %61 = arith.mulf %60, %60 : vector<512x8xf32>
    %cst_22 = arith.constant dense<0.000000e+00> : vector<8xf32>
    %62 = vector.multi_reduction <add>, %61, %cst_22 [0] : vector<512x8xf32> to vector<8xf32>
    %63 = vector.shape_cast %62 : vector<8xf32> to vector<1x8xf32>
    %64 = tpu.concatenate %56, %63 in 0 : vector<1x8xf32>, vector<1x8xf32> -> vector<2x8xf32>
    %65 = vector.shape_cast %64 : vector<2x8xf32> to vector<1x2x8xf32>
    %c0_23 = arith.constant 0 : index
    %c0_24 = arith.constant 0 : index
    %c0_25 = arith.constant 0 : index
    %66 = vector.load %arg4[%c0_23, %c0_24, %c0_25] : memref<1x2x8xf32, #tpu.memory_space<vmem>>, vector<1x2x8xf32>
    tpu.vector_store %arg4[%c0_23, %c0_24, %c0_25], %65 {strides = array<i32>} : memref<1x2x8xf32, #tpu.memory_space<vmem>>, vector<1x2x8xf32>,
    return
  }
  func.func @transform_0(%arg0: i32) -> (i32, i32, i32, i32) {
    %c0_i32 = arith.constant 0 : i32
    %c0_i32_0 = arith.constant 0 : i32
    %c0_i32_1 = arith.constant 0 : i32
    %c0_i32_2 = arith.constant 0 : i32
    return %arg0, %c0_i32, %c0_i32_0, %c0_i32_1 : i32, i32, i32, i32
  }
  func.func @transform_1(%arg0: i32) -> (i32, i32) {
    %c0_i32 = arith.constant 0 : i32
    %c0_i32_0 = arith.constant 0 : i32
    %c0_i32_1 = arith.constant 0 : i32
    return %c0_i32, %c0_i32_0 : i32, i32
  }
  func.func @transform_2(%arg0: i32) -> (i32, i32, i32, i32) {
    %c0_i32 = arith.constant 0 : i32
    %c0_i32_0 = arith.constant 0 : i32
    %c0_i32_1 = arith.constant 0 : i32
    %c0_i32_2 = arith.constant 0 : i32
    return %arg0, %c0_i32, %c0_i32_0, %c0_i32_1 : i32, i32, i32, i32
  }
  func.func @transform_3(%arg0: i32) -> (i32, i32, i32) {
    %c0_i32 = arith.constant 0 : i32
    %c0_i32_0 = arith.constant 0 : i32
    %c0_i32_1 = arith.constant 0 : i32
    return %arg0, %c0_i32, %c0_i32_0 : i32, i32, i32
  }
}

module attributes {stable_mosaic.version = 11 : i64} {
  func.func @_bn1_relu_conv2_stats_kernel(%arg0: i32, %arg1: memref<2x16x16x8xbf16, #tpu.memory_space<vmem>>, %arg2: memref<1x8xf32, #tpu.memory_space<vmem>>, %arg3: memref<1x8xf32, #tpu.memory_space<vmem>>, %arg4: memref<72x8xbf16, #tpu.memory_space<vmem>>, %arg5: memref<2x16x16x8xbf16, #tpu.memory_space<vmem>>, %arg6: memref<1x2x8xf32, #tpu.memory_space<vmem>>) attributes {dimension_semantics = [#tpu.dimension_semantics<parallel>], iteration_bounds = array<i64: 1>, scalar_prefetch = 0 : i64, scratch_operands = 0 : i64, tpu.core_type = #tpu.core_type<tc>, window_params = [{transform_indices = @transform_0, window_bounds = array<i64: 2, 16, 16, 8>}, {pipeline_mode = #tpu.pipeline_mode<synchronous>, transform_indices = @transform_1, window_bounds = array<i64: 1, 8>}, {pipeline_mode = #tpu.pipeline_mode<synchronous>, transform_indices = @transform_2, window_bounds = array<i64: 1, 8>}, {pipeline_mode = #tpu.pipeline_mode<synchronous>, transform_indices = @transform_3, window_bounds = array<i64: 72, 8>}, {transform_indices = @transform_4, window_bounds = array<i64: 2, 16, 16, 8>}, {transform_indices = @transform_5, window_bounds = array<i64: 1, 2, 8>}]} {
    %c0 = arith.constant 0 : index
    %c0_0 = arith.constant 0 : index
    %c0_1 = arith.constant 0 : index
    %c0_2 = arith.constant 0 : index
    %0 = vector.load %arg1[%c0, %c0_0, %c0_1, %c0_2] : memref<2x16x16x8xbf16, #tpu.memory_space<vmem>>, vector<2x16x16x8xbf16>
    %1 = arith.extf %0 : vector<2x16x16x8xbf16> to vector<2x16x16x8xf32>
    %c0_3 = arith.constant 0 : index
    %c0_4 = arith.constant 0 : index
    %2 = vector.load %arg2[%c0_3, %c0_4] : memref<1x8xf32, #tpu.memory_space<vmem>>, vector<1x8xf32>
    %3 = vector.shape_cast %2 : vector<1x8xf32> to vector<1x1x1x8xf32>
    %4 = vector.broadcast %3 : vector<1x1x1x8xf32> to vector<2x16x16x8xf32>
    %5 = arith.mulf %1, %4 : vector<2x16x16x8xf32>
    %c0_5 = arith.constant 0 : index
    %c0_6 = arith.constant 0 : index
    %6 = vector.load %arg3[%c0_5, %c0_6] : memref<1x8xf32, #tpu.memory_space<vmem>>, vector<1x8xf32>
    %7 = vector.shape_cast %6 : vector<1x8xf32> to vector<1x1x1x8xf32>
    %8 = vector.broadcast %7 : vector<1x1x1x8xf32> to vector<2x16x16x8xf32>
    %9 = arith.addf %5, %8 : vector<2x16x16x8xf32>
    %cst = arith.constant 0.000000e+00 : f32
    %10 = vector.broadcast %cst : f32 to vector<2x16x16x8xf32>
    %11 = arith.maximumf %9, %10 : vector<2x16x16x8xf32>
    %12 = arith.truncf %11 : vector<2x16x16x8xf32> to vector<2x16x16x8xbf16>
    %c0_7 = arith.constant 0 : index
    %c0_8 = arith.constant 0 : index
    %13 = vector.load %arg4[%c0_7, %c0_8] : memref<72x8xbf16, #tpu.memory_space<vmem>>, vector<72x8xbf16>
    %cst_9 = arith.constant 0.000000e+00 : bf16
    %14 = vector.broadcast %cst_9 : bf16 to vector<2x1x16x8xbf16>
    %cst_10 = arith.constant 0.000000e+00 : bf16
    %15 = vector.broadcast %cst_10 : bf16 to vector<2x18x1x8xbf16>
    %16 = tpu.concatenate %14, %12, %14 in 1 : vector<2x1x16x8xbf16>, vector<2x16x16x8xbf16>, vector<2x1x16x8xbf16> -> vector<2x18x16x8xbf16>
    %17 = tpu.concatenate %15, %16, %15 in 2 : vector<2x18x1x8xbf16>, vector<2x18x16x8xbf16>, vector<2x18x1x8xbf16> -> vector<2x18x18x8xbf16>
    %cst_11 = arith.constant 0.000000e+00 : f32
    %18 = vector.broadcast %cst_11 : f32 to vector<512x8xf32>
    %19 = vector.extract_strided_slice %17 {offsets = [0, 0, 0, 0], sizes = [2, 16, 16, 8], strides = [1, 1, 1, 1]} : vector<2x18x18x8xbf16> to vector<2x16x16x8xbf16>
    %20 = vector.shape_cast %19 : vector<2x16x16x8xbf16> to vector<512x8xbf16>
    %21 = vector.extract_strided_slice %13 {offsets = [0, 0], sizes = [8, 8], strides = [1, 1]} : vector<72x8xbf16> to vector<8x8xbf16>
    %cst_12 = arith.constant dense<0.000000e+00> : vector<512x8xf32>
    %22 = tpu.matmul %20, %21, %cst_12 {dimension_numbers = #tpu.dot_dimension_numbers<[1], [0], [0], [1], [0, 0, 1, 1], [], []>} : vector<512x8xbf16>, vector<8x8xbf16>, vector<512x8xf32> -> vector<512x8xf32>
    %23 = arith.addf %18, %22 : vector<512x8xf32>
    %24 = vector.extract_strided_slice %17 {offsets = [0, 0, 1, 0], sizes = [2, 16, 16, 8], strides = [1, 1, 1, 1]} : vector<2x18x18x8xbf16> to vector<2x16x16x8xbf16>
    %25 = vector.shape_cast %24 : vector<2x16x16x8xbf16> to vector<512x8xbf16>
    %26 = vector.extract_strided_slice %13 {offsets = [8, 0], sizes = [8, 8], strides = [1, 1]} : vector<72x8xbf16> to vector<8x8xbf16>
    %cst_13 = arith.constant dense<0.000000e+00> : vector<512x8xf32>
    %27 = tpu.matmul %25, %26, %cst_13 {dimension_numbers = #tpu.dot_dimension_numbers<[1], [0], [0], [1], [0, 0, 1, 1], [], []>} : vector<512x8xbf16>, vector<8x8xbf16>, vector<512x8xf32> -> vector<512x8xf32>
    %28 = arith.addf %23, %27 : vector<512x8xf32>
    %29 = vector.extract_strided_slice %17 {offsets = [0, 0, 2, 0], sizes = [2, 16, 16, 8], strides = [1, 1, 1, 1]} : vector<2x18x18x8xbf16> to vector<2x16x16x8xbf16>
    %30 = vector.shape_cast %29 : vector<2x16x16x8xbf16> to vector<512x8xbf16>
    %31 = vector.extract_strided_slice %13 {offsets = [16, 0], sizes = [8, 8], strides = [1, 1]} : vector<72x8xbf16> to vector<8x8xbf16>
    %cst_14 = arith.constant dense<0.000000e+00> : vector<512x8xf32>
    %32 = tpu.matmul %30, %31, %cst_14 {dimension_numbers = #tpu.dot_dimension_numbers<[1], [0], [0], [1], [0, 0, 1, 1], [], []>} : vector<512x8xbf16>, vector<8x8xbf16>, vector<512x8xf32> -> vector<512x8xf32>
    %33 = arith.addf %28, %32 : vector<512x8xf32>
    %34 = vector.extract_strided_slice %17 {offsets = [0, 1, 0, 0], sizes = [2, 16, 16, 8], strides = [1, 1, 1, 1]} : vector<2x18x18x8xbf16> to vector<2x16x16x8xbf16>
    %35 = vector.shape_cast %34 : vector<2x16x16x8xbf16> to vector<512x8xbf16>
    %36 = vector.extract_strided_slice %13 {offsets = [24, 0], sizes = [8, 8], strides = [1, 1]} : vector<72x8xbf16> to vector<8x8xbf16>
    %cst_15 = arith.constant dense<0.000000e+00> : vector<512x8xf32>
    %37 = tpu.matmul %35, %36, %cst_15 {dimension_numbers = #tpu.dot_dimension_numbers<[1], [0], [0], [1], [0, 0, 1, 1], [], []>} : vector<512x8xbf16>, vector<8x8xbf16>, vector<512x8xf32> -> vector<512x8xf32>
    %38 = arith.addf %33, %37 : vector<512x8xf32>
    %39 = vector.extract_strided_slice %17 {offsets = [0, 1, 1, 0], sizes = [2, 16, 16, 8], strides = [1, 1, 1, 1]} : vector<2x18x18x8xbf16> to vector<2x16x16x8xbf16>
    %40 = vector.shape_cast %39 : vector<2x16x16x8xbf16> to vector<512x8xbf16>
    %41 = vector.extract_strided_slice %13 {offsets = [32, 0], sizes = [8, 8], strides = [1, 1]} : vector<72x8xbf16> to vector<8x8xbf16>
    %cst_16 = arith.constant dense<0.000000e+00> : vector<512x8xf32>
    %42 = tpu.matmul %40, %41, %cst_16 {dimension_numbers = #tpu.dot_dimension_numbers<[1], [0], [0], [1], [0, 0, 1, 1], [], []>} : vector<512x8xbf16>, vector<8x8xbf16>, vector<512x8xf32> -> vector<512x8xf32>
    %43 = arith.addf %38, %42 : vector<512x8xf32>
    %44 = vector.extract_strided_slice %17 {offsets = [0, 1, 2, 0], sizes = [2, 16, 16, 8], strides = [1, 1, 1, 1]} : vector<2x18x18x8xbf16> to vector<2x16x16x8xbf16>
    %45 = vector.shape_cast %44 : vector<2x16x16x8xbf16> to vector<512x8xbf16>
    %46 = vector.extract_strided_slice %13 {offsets = [40, 0], sizes = [8, 8], strides = [1, 1]} : vector<72x8xbf16> to vector<8x8xbf16>
    %cst_17 = arith.constant dense<0.000000e+00> : vector<512x8xf32>
    %47 = tpu.matmul %45, %46, %cst_17 {dimension_numbers = #tpu.dot_dimension_numbers<[1], [0], [0], [1], [0, 0, 1, 1], [], []>} : vector<512x8xbf16>, vector<8x8xbf16>, vector<512x8xf32> -> vector<512x8xf32>
    %48 = arith.addf %43, %47 : vector<512x8xf32>
    %49 = vector.extract_strided_slice %17 {offsets = [0, 2, 0, 0], sizes = [2, 16, 16, 8], strides = [1, 1, 1, 1]} : vector<2x18x18x8xbf16> to vector<2x16x16x8xbf16>
    %50 = vector.shape_cast %49 : vector<2x16x16x8xbf16> to vector<512x8xbf16>
    %51 = vector.extract_strided_slice %13 {offsets = [48, 0], sizes = [8, 8], strides = [1, 1]} : vector<72x8xbf16> to vector<8x8xbf16>
    %cst_18 = arith.constant dense<0.000000e+00> : vector<512x8xf32>
    %52 = tpu.matmul %50, %51, %cst_18 {dimension_numbers = #tpu.dot_dimension_numbers<[1], [0], [0], [1], [0, 0, 1, 1], [], []>} : vector<512x8xbf16>, vector<8x8xbf16>, vector<512x8xf32> -> vector<512x8xf32>
    %53 = arith.addf %48, %52 : vector<512x8xf32>
    %54 = vector.extract_strided_slice %17 {offsets = [0, 2, 1, 0], sizes = [2, 16, 16, 8], strides = [1, 1, 1, 1]} : vector<2x18x18x8xbf16> to vector<2x16x16x8xbf16>
    %55 = vector.shape_cast %54 : vector<2x16x16x8xbf16> to vector<512x8xbf16>
    %56 = vector.extract_strided_slice %13 {offsets = [56, 0], sizes = [8, 8], strides = [1, 1]} : vector<72x8xbf16> to vector<8x8xbf16>
    %cst_19 = arith.constant dense<0.000000e+00> : vector<512x8xf32>
    %57 = tpu.matmul %55, %56, %cst_19 {dimension_numbers = #tpu.dot_dimension_numbers<[1], [0], [0], [1], [0, 0, 1, 1], [], []>} : vector<512x8xbf16>, vector<8x8xbf16>, vector<512x8xf32> -> vector<512x8xf32>
    %58 = arith.addf %53, %57 : vector<512x8xf32>
    %59 = vector.extract_strided_slice %17 {offsets = [0, 2, 2, 0], sizes = [2, 16, 16, 8], strides = [1, 1, 1, 1]} : vector<2x18x18x8xbf16> to vector<2x16x16x8xbf16>
    %60 = vector.shape_cast %59 : vector<2x16x16x8xbf16> to vector<512x8xbf16>
    %61 = vector.extract_strided_slice %13 {offsets = [64, 0], sizes = [8, 8], strides = [1, 1]} : vector<72x8xbf16> to vector<8x8xbf16>
    %cst_20 = arith.constant dense<0.000000e+00> : vector<512x8xf32>
    %62 = tpu.matmul %60, %61, %cst_20 {dimension_numbers = #tpu.dot_dimension_numbers<[1], [0], [0], [1], [0, 0, 1, 1], [], []>} : vector<512x8xbf16>, vector<8x8xbf16>, vector<512x8xf32> -> vector<512x8xf32>
    %63 = arith.addf %58, %62 : vector<512x8xf32>
    %64 = vector.shape_cast %63 : vector<512x8xf32> to vector<2x16x16x8xf32>
    %65 = arith.truncf %64 : vector<2x16x16x8xf32> to vector<2x16x16x8xbf16>
    %c0_21 = arith.constant 0 : index
    %c0_22 = arith.constant 0 : index
    %c0_23 = arith.constant 0 : index
    %c0_24 = arith.constant 0 : index
    %66 = vector.load %arg5[%c0_21, %c0_22, %c0_23, %c0_24] : memref<2x16x16x8xbf16, #tpu.memory_space<vmem>>, vector<2x16x16x8xbf16>
    tpu.vector_store %arg5[%c0_21, %c0_22, %c0_23, %c0_24], %65 {strides = array<i32>} : memref<2x16x16x8xbf16, #tpu.memory_space<vmem>>, vector<2x16x16x8xbf16>,
    %cst_25 = arith.constant dense<0.000000e+00> : vector<8xf32>
    %67 = vector.multi_reduction <add>, %63, %cst_25 [0] : vector<512x8xf32> to vector<8xf32>
    %68 = vector.shape_cast %67 : vector<8xf32> to vector<1x8xf32>
    %cst_26 = arith.constant 0.001953125 : f32
    %69 = vector.broadcast %cst_26 : f32 to vector<1x8xf32>
    %70 = arith.mulf %68, %69 : vector<1x8xf32>
    %71 = vector.broadcast %70 : vector<1x8xf32> to vector<512x8xf32>
    %72 = arith.subf %63, %71 : vector<512x8xf32>
    %73 = arith.mulf %72, %72 : vector<512x8xf32>
    %cst_27 = arith.constant dense<0.000000e+00> : vector<8xf32>
    %74 = vector.multi_reduction <add>, %73, %cst_27 [0] : vector<512x8xf32> to vector<8xf32>
    %75 = vector.shape_cast %74 : vector<8xf32> to vector<1x8xf32>
    %76 = tpu.concatenate %68, %75 in 0 : vector<1x8xf32>, vector<1x8xf32> -> vector<2x8xf32>
    %77 = vector.shape_cast %76 : vector<2x8xf32> to vector<1x2x8xf32>
    %c0_28 = arith.constant 0 : index
    %c0_29 = arith.constant 0 : index
    %c0_30 = arith.constant 0 : index
    %78 = vector.load %arg6[%c0_28, %c0_29, %c0_30] : memref<1x2x8xf32, #tpu.memory_space<vmem>>, vector<1x2x8xf32>
    tpu.vector_store %arg6[%c0_28, %c0_29, %c0_30], %77 {strides = array<i32>} : memref<1x2x8xf32, #tpu.memory_space<vmem>>, vector<1x2x8xf32>,
    return
  }
  func.func @transform_0(%arg0: i32) -> (i32, i32, i32, i32) {
    %c0_i32 = arith.constant 0 : i32
    %c0_i32_0 = arith.constant 0 : i32
    %c0_i32_1 = arith.constant 0 : i32
    %c0_i32_2 = arith.constant 0 : i32
    return %arg0, %c0_i32, %c0_i32_0, %c0_i32_1 : i32, i32, i32, i32
  }
  func.func @transform_1(%arg0: i32) -> (i32, i32) {
    %c0_i32 = arith.constant 0 : i32
    %c0_i32_0 = arith.constant 0 : i32
    %c0_i32_1 = arith.constant 0 : i32
    return %c0_i32, %c0_i32_0 : i32, i32
  }
  func.func @transform_2(%arg0: i32) -> (i32, i32) {
    %c0_i32 = arith.constant 0 : i32
    %c0_i32_0 = arith.constant 0 : i32
    %c0_i32_1 = arith.constant 0 : i32
    return %c0_i32, %c0_i32_0 : i32, i32
  }
  func.func @transform_3(%arg0: i32) -> (i32, i32) {
    %c0_i32 = arith.constant 0 : i32
    %c0_i32_0 = arith.constant 0 : i32
    %c0_i32_1 = arith.constant 0 : i32
    return %c0_i32, %c0_i32_0 : i32, i32
  }
  func.func @transform_4(%arg0: i32) -> (i32, i32, i32, i32) {
    %c0_i32 = arith.constant 0 : i32
    %c0_i32_0 = arith.constant 0 : i32
    %c0_i32_1 = arith.constant 0 : i32
    %c0_i32_2 = arith.constant 0 : i32
    return %arg0, %c0_i32, %c0_i32_0, %c0_i32_1 : i32, i32, i32, i32
  }
  func.func @transform_5(%arg0: i32) -> (i32, i32, i32) {
    %c0_i32 = arith.constant 0 : i32
    %c0_i32_0 = arith.constant 0 : i32
    %c0_i32_1 = arith.constant 0 : i32
    return %arg0, %c0_i32, %c0_i32_0 : i32, i32, i32
  }
}

module attributes {stable_mosaic.version = 11 : i64} {
  func.func @_bn2_residual_relu_kernel(%arg0: i32, %arg1: memref<2x16x16x8xbf16, #tpu.memory_space<vmem>>, %arg2: memref<2x16x16x8xf32, #tpu.memory_space<vmem>>, %arg3: memref<1x8xf32, #tpu.memory_space<vmem>>, %arg4: memref<1x8xf32, #tpu.memory_space<vmem>>, %arg5: memref<2x16x16x8xf32, #tpu.memory_space<vmem>>) attributes {dimension_semantics = [#tpu.dimension_semantics<parallel>], iteration_bounds = array<i64: 1>, scalar_prefetch = 0 : i64, scratch_operands = 0 : i64, tpu.core_type = #tpu.core_type<tc>, window_params = [{transform_indices = @transform_0, window_bounds = array<i64: 2, 16, 16, 8>}, {transform_indices = @transform_1, window_bounds = array<i64: 2, 16, 16, 8>}, {pipeline_mode = #tpu.pipeline_mode<synchronous>, transform_indices = @transform_2, window_bounds = array<i64: 1, 8>}, {pipeline_mode = #tpu.pipeline_mode<synchronous>, transform_indices = @transform_3, window_bounds = array<i64: 1, 8>}, {transform_indices = @transform_4, window_bounds = array<i64: 2, 16, 16, 8>}]} {
    %c0 = arith.constant 0 : index
    %c0_0 = arith.constant 0 : index
    %c0_1 = arith.constant 0 : index
    %c0_2 = arith.constant 0 : index
    %0 = vector.load %arg1[%c0, %c0_0, %c0_1, %c0_2] : memref<2x16x16x8xbf16, #tpu.memory_space<vmem>>, vector<2x16x16x8xbf16>
    %1 = arith.extf %0 : vector<2x16x16x8xbf16> to vector<2x16x16x8xf32>
    %c0_3 = arith.constant 0 : index
    %c0_4 = arith.constant 0 : index
    %2 = vector.load %arg3[%c0_3, %c0_4] : memref<1x8xf32, #tpu.memory_space<vmem>>, vector<1x8xf32>
    %3 = vector.shape_cast %2 : vector<1x8xf32> to vector<1x1x1x8xf32>
    %4 = vector.broadcast %3 : vector<1x1x1x8xf32> to vector<2x16x16x8xf32>
    %5 = arith.mulf %1, %4 : vector<2x16x16x8xf32>
    %c0_5 = arith.constant 0 : index
    %c0_6 = arith.constant 0 : index
    %6 = vector.load %arg4[%c0_5, %c0_6] : memref<1x8xf32, #tpu.memory_space<vmem>>, vector<1x8xf32>
    %7 = vector.shape_cast %6 : vector<1x8xf32> to vector<1x1x1x8xf32>
    %8 = vector.broadcast %7 : vector<1x1x1x8xf32> to vector<2x16x16x8xf32>
    %9 = arith.addf %5, %8 : vector<2x16x16x8xf32>
    %c0_7 = arith.constant 0 : index
    %c0_8 = arith.constant 0 : index
    %c0_9 = arith.constant 0 : index
    %c0_10 = arith.constant 0 : index
    %10 = vector.load %arg2[%c0_7, %c0_8, %c0_9, %c0_10] : memref<2x16x16x8xf32, #tpu.memory_space<vmem>>, vector<2x16x16x8xf32>
    %11 = arith.addf %9, %10 : vector<2x16x16x8xf32>
    %cst = arith.constant 0.000000e+00 : f32
    %12 = vector.broadcast %cst : f32 to vector<2x16x16x8xf32>
    %13 = arith.maximumf %11, %12 : vector<2x16x16x8xf32>
    %c0_11 = arith.constant 0 : index
    %c0_12 = arith.constant 0 : index
    %c0_13 = arith.constant 0 : index
    %c0_14 = arith.constant 0 : index
    %14 = vector.load %arg5[%c0_11, %c0_12, %c0_13, %c0_14] : memref<2x16x16x8xf32, #tpu.memory_space<vmem>>, vector<2x16x16x8xf32>
    tpu.vector_store %arg5[%c0_11, %c0_12, %c0_13, %c0_14], %13 {strides = array<i32>} : memref<2x16x16x8xf32, #tpu.memory_space<vmem>>, vector<2x16x16x8xf32>,
    return
  }
  func.func @transform_0(%arg0: i32) -> (i32, i32, i32, i32) {
    %c0_i32 = arith.constant 0 : i32
    %c0_i32_0 = arith.constant 0 : i32
    %c0_i32_1 = arith.constant 0 : i32
    %c0_i32_2 = arith.constant 0 : i32
    return %arg0, %c0_i32, %c0_i32_0, %c0_i32_1 : i32, i32, i32, i32
  }
  func.func @transform_1(%arg0: i32) -> (i32, i32, i32, i32) {
    %c0_i32 = arith.constant 0 : i32
    %c0_i32_0 = arith.constant 0 : i32
    %c0_i32_1 = arith.constant 0 : i32
    %c0_i32_2 = arith.constant 0 : i32
    return %arg0, %c0_i32, %c0_i32_0, %c0_i32_1 : i32, i32, i32, i32
  }
  func.func @transform_2(%arg0: i32) -> (i32, i32) {
    %c0_i32 = arith.constant 0 : i32
    %c0_i32_0 = arith.constant 0 : i32
    %c0_i32_1 = arith.constant 0 : i32
    return %c0_i32, %c0_i32_0 : i32, i32
  }
  func.func @transform_3(%arg0: i32) -> (i32, i32) {
    %c0_i32 = arith.constant 0 : i32
    %c0_i32_0 = arith.constant 0 : i32
    %c0_i32_1 = arith.constant 0 : i32
    return %c0_i32, %c0_i32_0 : i32, i32
  }
  func.func @transform_4(%arg0: i32) -> (i32, i32, i32, i32) {
    %c0_i32 = arith.constant 0 : i32
    %c0_i32_0 = arith.constant 0 : i32
    %c0_i32_1 = arith.constant 0 : i32
    %c0_i32_2 = arith.constant 0 : i32
    return %arg0, %c0_i32, %c0_i32_0, %c0_i32_1 : i32, i32, i32, i32
  }
}

</mosaic_0001>

<llo_original>
// kernel: basic_block_forward.5
$region0: #{basic_block_forward.5}
  #allocation0 [shape = 'u32[]', space=smem, size = 0x4, offset = 0x4, fixed_abs, tag = 'smem constant byte address 0x4 - core index']
  #allocation1 [shape = 'u32[144,128]{1,0:T(1,128)}', space=vmem, size = 0x12000, scoped, tag = 'internal scratch']
  %s0 = inlined_call_operand.vmem [shape: bf16[2,16,16,8], index: 0, kind: input, shape index: {}]
  %s1 = inlined_call_operand.vmem [shape: f32[2,16,16,8], index: 1, kind: input, shape index: {}]
  %s2 = inlined_call_operand.vmem [shape: f32[1,8], index: 2, kind: input, shape index: {}]
  %s3 = inlined_call_operand.vmem [shape: f32[1,8], index: 3, kind: input, shape index: {}]
  %s4 = inlined_call_operand.vmem [shape: f32[2,16,16,8], index: 4, kind: output, shape index: {}]
  %s5 = sld [smem:[#allocation0]]
  $region26: #{basic_block_forward.5} parent=0
    _
  %s7 = ssub.s32 1, %s5
  %s8 = scalar_select 0, %s7, %s5
  // Predicated region
  $region2: #{basic_block_forward.5} parent=0 // pred_check
    _
  $region3: #{basic_block_forward.5} parent=0 // pred_check_branch
    %10 = sbr.rel (0) target = $region5
  $region4: #{basic_block_forward.5} parent=0 // pred_region
    _
  $region5: #{basic_block_forward.5} parent=0 // pred_fallthru
    _
  // Predicated region
  $region6: #{basic_block_forward.5} parent=0 // pred_check
    _
  $region7: #{basic_block_forward.5} parent=0 // pred_check_branch
    %12 = sbr.rel (0) target = $region9
  $region8: #{basic_block_forward.5} parent=0 // pred_region
    _
  $region9: #{basic_block_forward.5} parent=0 // pred_fallthru
    _
  // Predicated region
  $region10: #{basic_block_forward.5} parent=0 // pred_check
    _
  $region11: #{basic_block_forward.5} parent=0 // pred_check_branch
    %14 = sbr.rel (0) target = $region13
  $region12: #{basic_block_forward.5} parent=0 // pred_region
    _
  $region13: #{basic_block_forward.5} parent=0 // pred_fallthru
    _
  // Predicated region
  $region14: #{basic_block_forward.5} parent=0 // pred_check
    _
  $region15: #{basic_block_forward.5} parent=0 // pred_check_branch
    %16 = sbr.rel (0) target = $region17
  $region16: #{basic_block_forward.5} parent=0 // pred_region
    _
  $region17: #{basic_block_forward.5} parent=0 // pred_fallthru
    _
  %v17 = vld [vmem:[%s0] sm:$0xf]
  %v18 = vld [vmem:[%s0 + $0x4] sm:$0xf]
  %v19 = vld [vmem:[%s0 + $0x8] sm:$0xf]
  %v20 = vld [vmem:[%s0 + $0xc] sm:$0xf]
  %v21 = vld [vmem:[%s0 + $0x10] sm:$0xf]
  %v22 = vld [vmem:[%s0 + $0x14] sm:$0xf]
  %v23 = vld [vmem:[%s0 + $0x18] sm:$0xf]
  %v24 = vld [vmem:[%s0 + $0x1c] sm:$0xf]
  %v25 = vld [vmem:[%s0 + $0x20] sm:$0xf]
  %v26 = vld [vmem:[%s0 + $0x24] sm:$0xf]
  %v27 = vld [vmem:[%s0 + $0x28] sm:$0xf]
  %v28 = vld [vmem:[%s0 + $0x2c] sm:$0xf]
  %v29 = vld [vmem:[%s0 + $0x30] sm:$0xf]
  %v30 = vld [vmem:[%s0 + $0x34] sm:$0xf]
  %v31 = vld [vmem:[%s0 + $0x38] sm:$0xf]
  %v32 = vld [vmem:[%s0 + $0x3c] sm:$0xf]
  %v33 = vld [vmem:[%s0 + $0x40] sm:$0xf]
  %v34 = vld [vmem:[%s0 + $0x44] sm:$0xf]
  %v35 = vld [vmem:[%s0 + $0x48] sm:$0xf]
  %v36 = vld [vmem:[%s0 + $0x4c] sm:$0xf]
  %v37 = vld [vmem:[%s0 + $0x50] sm:$0xf]
  %v38 = vld [vmem:[%s0 + $0x54] sm:$0xf]
  %v39 = vld [vmem:[%s0 + $0x58] sm:$0xf]
  %v40 = vld [vmem:[%s0 + $0x5c] sm:$0xf]
  %v41 = vld [vmem:[%s0 + $0x60] sm:$0xf]
  %v42 = vld [vmem:[%s0 + $0x64] sm:$0xf]
  %v43 = vld [vmem:[%s0 + $0x68] sm:$0xf]
  %v44 = vld [vmem:[%s0 + $0x6c] sm:$0xf]
  %v45 = vld [vmem:[%s0 + $0x70] sm:$0xf]
  %v46 = vld [vmem:[%s0 + $0x74] sm:$0xf]
  %v47 = vld [vmem:[%s0 + $0x78] sm:$0xf]
  %v48 = vld [vmem:[%s0 + $0x7c] sm:$0xf]
  %v49 = vld [vmem:[%s0 + $0x80] sm:$0xf]
  %v50 = vld [vmem:[%s0 + $0x84] sm:$0xf]
  %v51 = vld [vmem:[%s0 + $0x88] sm:$0xf]
  %v52 = vld [vmem:[%s0 + $0x8c] sm:$0xf]
  %v53 = vld [vmem:[%s0 + $0x90] sm:$0xf]
  %v54 = vld [vmem:[%s0 + $0x94] sm:$0xf]
  %v55 = vld [vmem:[%s0 + $0x98] sm:$0xf]
  %v56 = vld [vmem:[%s0 + $0x9c] sm:$0xf]
  %v57 = vld [vmem:[%s0 + $0xa0] sm:$0xf]
  %v58 = vld [vmem:[%s0 + $0xa4] sm:$0xf]
  %v59 = vld [vmem:[%s0 + $0xa8] sm:$0xf]
  %v60 = vld [vmem:[%s0 + $0xac] sm:$0xf]
  %v61 = vld [vmem:[%s0 + $0xb0] sm:$0xf]
  %v62 = vld [vmem:[%s0 + $0xb4] sm:$0xf]
  %v63 = vld [vmem:[%s0 + $0xb8] sm:$0xf]
  %v64 = vld [vmem:[%s0 + $0xbc] sm:$0xf]
  %v65 = vld [vmem:[%s0 + $0xc0] sm:$0xf]
  %v66 = vld [vmem:[%s0 + $0xc4] sm:$0xf]
  %v67 = vld [vmem:[%s0 + $0xc8] sm:$0xf]
  %v68 = vld [vmem:[%s0 + $0xcc] sm:$0xf]
  %v69 = vld [vmem:[%s0 + $0xd0] sm:$0xf]
  %v70 = vld [vmem:[%s0 + $0xd4] sm:$0xf]
  %v71 = vld [vmem:[%s0 + $0xd8] sm:$0xf]
  %v72 = vld [vmem:[%s0 + $0xdc] sm:$0xf]
  %v73 = vld [vmem:[%s0 + $0xe0] sm:$0xf]
  %v74 = vld [vmem:[%s0 + $0xe4] sm:$0xf]
  %v75 = vld [vmem:[%s0 + $0xe8] sm:$0xf]
  %v76 = vld [vmem:[%s0 + $0xec] sm:$0xf]
  %v77 = vld [vmem:[%s0 + $0xf0] sm:$0xf]
  %v78 = vld [vmem:[%s0 + $0xf4] sm:$0xf]
  %v79 = vld [vmem:[%s0 + $0xf8] sm:$0xf]
  %v80 = vld [vmem:[%s0 + $0xfc] sm:$0xf]
  %v81 = vunpack.c.l.bf16 %v17
  %v82 = vunpack.c.l.bf16 %v18
  %v83 = vunpack.c.l.bf16 %v19
  %v84 = vunpack.c.l.bf16 %v20
  %v85 = vunpack.c.l.bf16 %v21
  %v86 = vunpack.c.l.bf16 %v22
  %v87 = vunpack.c.l.bf16 %v23
  %v88 = vunpack.c.l.bf16 %v24
  %v89 = vunpack.c.l.bf16 %v25
  %v90 = vunpack.c.l.bf16 %v26
  %v91 = vunpack.c.l.bf16 %v27
  %v92 = vunpack.c.l.bf16 %v28
  %v93 = vunpack.c.l.bf16 %v29
  %v94 = vunpack.c.l.bf16 %v30
  %v95 = vunpack.c.l.bf16 %v31
  %v96 = vunpack.c.l.bf16 %v32
  %v97 = vunpack.c.l.bf16 %v33
  %v98 = vunpack.c.l.bf16 %v34
  %v99 = vunpack.c.l.bf16 %v35
  %v100 = vunpack.c.l.bf16 %v36
  %v101 = vunpack.c.l.bf16 %v37
  %v102 = vunpack.c.l.bf16 %v38
  %v103 = vunpack.c.l.bf16 %v39
  %v104 = vunpack.c.l.bf16 %v40
  %v105 = vunpack.c.l.bf16 %v41
  %v106 = vunpack.c.l.bf16 %v42
  %v107 = vunpack.c.l.bf16 %v43
  %v108 = vunpack.c.l.bf16 %v44
  %v109 = vunpack.c.l.bf16 %v45
  %v110 = vunpack.c.l.bf16 %v46
  %v111 = vunpack.c.l.bf16 %v47
  %v112 = vunpack.c.l.bf16 %v48
  %v113 = vunpack.c.l.bf16 %v49
  %v114 = vunpack.c.l.bf16 %v50
  %v115 = vunpack.c.l.bf16 %v51
  %v116 = vunpack.c.l.bf16 %v52
  %v117 = vunpack.c.l.bf16 %v53
  %v118 = vunpack.c.l.bf16 %v54
  %v119 = vunpack.c.l.bf16 %v55
  %v120 = vunpack.c.l.bf16 %v56
  %v121 = vunpack.c.l.bf16 %v57
  %v122 = vunpack.c.l.bf16 %v58
  %v123 = vunpack.c.l.bf16 %v59
  %v124 = vunpack.c.l.bf16 %v60
  %v125 = vunpack.c.l.bf16 %v61
  %v126 = vunpack.c.l.bf16 %v62
  %v127 = vunpack.c.l.bf16 %v63
  %v128 = vunpack.c.l.bf16 %v64
  %v129 = vunpack.c.l.bf16 %v65
  %v130 = vunpack.c.l.bf16 %v66
  %v131 = vunpack.c.l.bf16 %v67
  %v132 = vunpack.c.l.bf16 %v68
  %v133 = vunpack.c.l.bf16 %v69
  %v134 = vunpack.c.l.bf16 %v70
  %v135 = vunpack.c.l.bf16 %v71
  %v136 = vunpack.c.l.bf16 %v72
  %v137 = vunpack.c.l.bf16 %v73
  %v138 = vunpack.c.l.bf16 %v74
  %v139 = vunpack.c.l.bf16 %v75
  %v140 = vunpack.c.l.bf16 %v76
  %v141 = vunpack.c.l.bf16 %v77
  %v142 = vunpack.c.l.bf16 %v78
  %v143 = vunpack.c.l.bf16 %v79
  %v144 = vunpack.c.l.bf16 %v80
  %v145 = vld [vmem:[%s2] sm:$0x1]
  %v147 = vlaneseq
  %v148 = vshrl.u32 %v147, 7
  %v149 = vsub.s32 0, %v148
  %v150 = vrot.slane %v145, %v149
  %v152 = vmul.f32 %v81, %v150
  %v153 = vmul.f32 %v82, %v150
  %v154 = vmul.f32 %v83, %v150
  %v155 = vmul.f32 %v84, %v150
  %v156 = vmul.f32 %v85, %v150
  %v157 = vmul.f32 %v86, %v150
  %v158 = vmul.f32 %v87, %v150
  %v159 = vmul.f32 %v88, %v150
  %v160 = vmul.f32 %v89, %v150
  %v161 = vmul.f32 %v90, %v150
  %v162 = vmul.f32 %v91, %v150
  %v163 = vmul.f32 %v92, %v150
  %v164 = vmul.f32 %v93, %v150
  %v165 = vmul.f32 %v94, %v150
  %v166 = vmul.f32 %v95, %v150
  %v167 = vmul.f32 %v96, %v150
  %v168 = vmul.f32 %v97, %v150
  %v169 = vmul.f32 %v98, %v150
  %v170 = vmul.f32 %v99, %v150
  %v171 = vmul.f32 %v100, %v150
  %v172 = vmul.f32 %v101, %v150
  %v173 = vmul.f32 %v102, %v150
  %v174 = vmul.f32 %v103, %v150
  %v175 = vmul.f32 %v104, %v150
  %v176 = vmul.f32 %v105, %v150
  %v177 = vmul.f32 %v106, %v150
  %v178 = vmul.f32 %v107, %v150
  %v179 = vmul.f32 %v108, %v150
  %v180 = vmul.f32 %v109, %v150
  %v181 = vmul.f32 %v110, %v150
  %v182 = vmul.f32 %v111, %v150
  %v183 = vmul.f32 %v112, %v150
  %v184 = vmul.f32 %v113, %v150
  %v185 = vmul.f32 %v114, %v150
  %v186 = vmul.f32 %v115, %v150
  %v187 = vmul.f32 %v116, %v150
  %v188 = vmul.f32 %v117, %v150
  %v189 = vmul.f32 %v118, %v150
  %v190 = vmul.f32 %v119, %v150
  %v191 = vmul.f32 %v120, %v150
  %v192 = vmul.f32 %v121, %v150
  %v193 = vmul.f32 %v122, %v150
  %v194 = vmul.f32 %v123, %v150
  %v195 = vmul.f32 %v124, %v150
  %v196 = vmul.f32 %v125, %v150
  %v197 = vmul.f32 %v126, %v150
  %v198 = vmul.f32 %v127, %v150
  %v199 = vmul.f32 %v128, %v150
  %v200 = vmul.f32 %v129, %v150
  %v201 = vmul.f32 %v130, %v150
  %v202 = vmul.f32 %v131, %v150
  %v203 = vmul.f32 %v132, %v150
  %v204 = vmul.f32 %v133, %v150
  %v205 = vmul.f32 %v134, %v150
  %v206 = vmul.f32 %v135, %v150
  %v207 = vmul.f32 %v136, %v150
  %v208 = vmul.f32 %v137, %v150
  %v209 = vmul.f32 %v138, %v150
  %v210 = vmul.f32 %v139, %v150
  %v211 = vmul.f32 %v140, %v150
  %v212 = vmul.f32 %v141, %v150
  %v213 = vmul.f32 %v142, %v150
  %v214 = vmul.f32 %v143, %v150
  %v215 = vmul.f32 %v144, %v150
  %v216 = vld [vmem:[%s3] sm:$0x1]
  %v218 = vlaneseq
  %v219 = vshrl.u32 %v218, 7
  %v220 = vsub.s32 0, %v219
  %v221 = vrot.slane %v216, %v220
  %v223 = vadd.f32 %v152, %v221
  %v224 = vadd.f32 %v153, %v221
  %v225 = vadd.f32 %v154, %v221
  %v226 = vadd.f32 %v155, %v221
  %v227 = vadd.f32 %v156, %v221
  %v228 = vadd.f32 %v157, %v221
  %v229 = vadd.f32 %v158, %v221
  %v230 = vadd.f32 %v159, %v221
  %v231 = vadd.f32 %v160, %v221
  %v232 = vadd.f32 %v161, %v221
  %v233 = vadd.f32 %v162, %v221
  %v234 = vadd.f32 %v163, %v221
  %v235 = vadd.f32 %v164, %v221
  %v236 = vadd.f32 %v165, %v221
  %v237 = vadd.f32 %v166, %v221
  %v238 = vadd.f32 %v167, %v221
  %v239 = vadd.f32 %v168, %v221
  %v240 = vadd.f32 %v169, %v221
  %v241 = vadd.f32 %v170, %v221
  %v242 = vadd.f32 %v171, %v221
  %v243 = vadd.f32 %v172, %v221
  %v244 = vadd.f32 %v173, %v221
  %v245 = vadd.f32 %v174, %v221
  %v246 = vadd.f32 %v175, %v221
  %v247 = vadd.f32 %v176, %v221
  %v248 = vadd.f32 %v177, %v221
  %v249 = vadd.f32 %v178, %v221
  %v250 = vadd.f32 %v179, %v221
  %v251 = vadd.f32 %v180, %v221
  %v252 = vadd.f32 %v181, %v221
  %v253 = vadd.f32 %v182, %v221
  %v254 = vadd.f32 %v183, %v221
  %v255 = vadd.f32 %v184, %v221
  %v256 = vadd.f32 %v185, %v221
  %v257 = vadd.f32 %v186, %v221
  %v258 = vadd.f32 %v187, %v221
  %v259 = vadd.f32 %v188, %v221
  %v260 = vadd.f32 %v189, %v221
  %v261 = vadd.f32 %v190, %v221
  %v262 = vadd.f32 %v191, %v221
  %v263 = vadd.f32 %v192, %v221
  %v264 = vadd.f32 %v193, %v221
  %v265 = vadd.f32 %v194, %v221
  %v266 = vadd.f32 %v195, %v221
  %v267 = vadd.f32 %v196, %v221
  %v268 = vadd.f32 %v197, %v221
  %v269 = vadd.f32 %v198, %v221
  %v270 = vadd.f32 %v199, %v221
  %v271 = vadd.f32 %v200, %v221
  %v272 = vadd.f32 %v201, %v221
  %v273 = vadd.f32 %v202, %v221
  %v274 = vadd.f32 %v203, %v221
  %v275 = vadd.f32 %v204, %v221
  %v276 = vadd.f32 %v205, %v221
  %v277 = vadd.f32 %v206, %v221
  %v278 = vadd.f32 %v207, %v221
  %v279 = vadd.f32 %v208, %v221
  %v280 = vadd.f32 %v209, %v221
  %v281 = vadd.f32 %v210, %v221
  %v282 = vadd.f32 %v211, %v221
  %v283 = vadd.f32 %v212, %v221
  %v284 = vadd.f32 %v213, %v221
  %v285 = vadd.f32 %v214, %v221
  %v286 = vadd.f32 %v215, %v221
  %v287 = vld [vmem:[%s1] sm:$0xff]
  %v288 = vld [vmem:[%s1 + $0x8] sm:$0xff]
  %v289 = vld [vmem:[%s1 + $0x10] sm:$0xff]
  %v290 = vld [vmem:[%s1 + $0x18] sm:$0xff]
  %v291 = vld [vmem:[%s1 + $0x20] sm:$0xff]
  %v292 = vld [vmem:[%s1 + $0x28] sm:$0xff]
  %v293 = vld [vmem:[%s1 + $0x30] sm:$0xff]
  %v294 = vld [vmem:[%s1 + $0x38] sm:$0xff]
  %v295 = vld [vmem:[%s1 + $0x40] sm:$0xff]
  %v296 = vld [vmem:[%s1 + $0x48] sm:$0xff]
  %v297 = vld [vmem:[%s1 + $0x50] sm:$0xff]
  %v298 = vld [vmem:[%s1 + $0x58] sm:$0xff]
  %v299 = vld [vmem:[%s1 + $0x60] sm:$0xff]
  %v300 = vld [vmem:[%s1 + $0x68] sm:$0xff]
  %v301 = vld [vmem:[%s1 + $0x70] sm:$0xff]
  %v302 = vld [vmem:[%s1 + $0x78] sm:$0xff]
  %v303 = vld [vmem:[%s1 + $0x80] sm:$0xff]
  %v304 = vld [vmem:[%s1 + $0x88] sm:$0xff]
  %v305 = vld [vmem:[%s1 + $0x90] sm:$0xff]
  %v306 = vld [vmem:[%s1 + $0x98] sm:$0xff]
  %v307 = vld [vmem:[%s1 + $0xa0] sm:$0xff]
  %v308 = vld [vmem:[%s1 + $0xa8] sm:$0xff]
  %v309 = vld [vmem:[%s1 + $0xb0] sm:$0xff]
  %v310 = vld [vmem:[%s1 + $0xb8] sm:$0xff]
  %v311 = vld [vmem:[%s1 + $0xc0] sm:$0xff]
  %v312 = vld [vmem:[%s1 + $0xc8] sm:$0xff]
  %v313 = vld [vmem:[%s1 + $0xd0] sm:$0xff]
  %v314 = vld [vmem:[%s1 + $0xd8] sm:$0xff]
  %v315 = vld [vmem:[%s1 + $0xe0] sm:$0xff]
  %v316 = vld [vmem:[%s1 + $0xe8] sm:$0xff]
  %v317 = vld [vmem:[%s1 + $0xf0] sm:$0xff]
  %v318 = vld [vmem:[%s1 + $0xf8] sm:$0xff]
  %v319 = vld [vmem:[%s1 + $0x100] sm:$0xff]
  %v320 = vld [vmem:[%s1 + $0x108] sm:$0xff]
  %v321 = vld [vmem:[%s1 + $0x110] sm:$0xff]
  %v322 = vld [vmem:[%s1 + $0x118] sm:$0xff]
  %v323 = vld [vmem:[%s1 + $0x120] sm:$0xff]
  %v324 = vld [vmem:[%s1 + $0x128] sm:$0xff]
  %v325 = vld [vmem:[%s1 + $0x130] sm:$0xff]
  %v326 = vld [vmem:[%s1 + $0x138] sm:$0xff]
  %v327 = vld [vmem:[%s1 + $0x140] sm:$0xff]
  %v328 = vld [vmem:[%s1 + $0x148] sm:$0xff]
  %v329 = vld [vmem:[%s1 + $0x150] sm:$0xff]
  %v330 = vld [vmem:[%s1 + $0x158] sm:$0xff]
  %v331 = vld [vmem:[%s1 + $0x160] sm:$0xff]
  %v332 = vld [vmem:[%s1 + $0x168] sm:$0xff]
  %v333 = vld [vmem:[%s1 + $0x170] sm:$0xff]
  %v334 = vld [vmem:[%s1 + $0x178] sm:$0xff]
  %v335 = vld [vmem:[%s1 + $0x180] sm:$0xff]
  %v336 = vld [vmem:[%s1 + $0x188] sm:$0xff]
  %v337 = vld [vmem:[%s1 + $0x190] sm:$0xff]
  %v338 = vld [vmem:[%s1 + $0x198] sm:$0xff]
  %v339 = vld [vmem:[%s1 + $0x1a0] sm:$0xff]
  %v340 = vld [vmem:[%s1 + $0x1a8] sm:$0xff]
  %v341 = vld [vmem:[%s1 + $0x1b0] sm:$0xff]
  %v342 = vld [vmem:[%s1 + $0x1b8] sm:$0xff]
  %v343 = vld [vmem:[%s1 + $0x1c0] sm:$0xff]
  %v344 = vld [vmem:[%s1 + $0x1c8] sm:$0xff]
  %v345 = vld [vmem:[%s1 + $0x1d0] sm:$0xff]
  %v346 = vld [vmem:[%s1 + $0x1d8] sm:$0xff]
  %v347 = vld [vmem:[%s1 + $0x1e0] sm:$0xff]
  %v348 = vld [vmem:[%s1 + $0x1e8] sm:$0xff]
  %v349 = vld [vmem:[%s1 + $0x1f0] sm:$0xff]
  %v350 = vld [vmem:[%s1 + $0x1f8] sm:$0xff]
  %v351 = vadd.f32 %v223, %v287
  %v352 = vadd.f32 %v224, %v288
  %v353 = vadd.f32 %v225, %v289
  %v354 = vadd.f32 %v226, %v290
  %v355 = vadd.f32 %v227, %v291
  %v356 = vadd.f32 %v228, %v292
  %v357 = vadd.f32 %v229, %v293
  %v358 = vadd.f32 %v230, %v294
  %v359 = vadd.f32 %v231, %v295
  %v360 = vadd.f32 %v232, %v296
  %v361 = vadd.f32 %v233, %v297
  %v362 = vadd.f32 %v234, %v298
  %v363 = vadd.f32 %v235, %v299
  %v364 = vadd.f32 %v236, %v300
  %v365 = vadd.f32 %v237, %v301
  %v366 = vadd.f32 %v238, %v302
  %v367 = vadd.f32 %v239, %v303
  %v368 = vadd.f32 %v240, %v304
  %v369 = vadd.f32 %v241, %v305
  %v370 = vadd.f32 %v242, %v306
  %v371 = vadd.f32 %v243, %v307
  %v372 = vadd.f32 %v244, %v308
  %v373 = vadd.f32 %v245, %v309
  %v374 = vadd.f32 %v246, %v310
  %v375 = vadd.f32 %v247, %v311
  %v376 = vadd.f32 %v248, %v312
  %v377 = vadd.f32 %v249, %v313
  %v378 = vadd.f32 %v250, %v314
  %v379 = vadd.f32 %v251, %v315
  %v380 = vadd.f32 %v252, %v316
  %v381 = vadd.f32 %v253, %v317
  %v382 = vadd.f32 %v254, %v318
  %v383 = vadd.f32 %v255, %v319
  %v384 = vadd.f32 %v256, %v320
  %v385 = vadd.f32 %v257, %v321
  %v386 = vadd.f32 %v258, %v322
  %v387 = vadd.f32 %v259, %v323
  %v388 = vadd.f32 %v260, %v324
  %v389 = vadd.f32 %v261, %v325
  %v390 = vadd.f32 %v262, %v326
  %v391 = vadd.f32 %v263, %v327
  %v392 = vadd.f32 %v264, %v328
  %v393 = vadd.f32 %v265, %v329
  %v394 = vadd.f32 %v266, %v330
  %v395 = vadd.f32 %v267, %v331
  %v396 = vadd.f32 %v268, %v332
  %v397 = vadd.f32 %v269, %v333
  %v398 = vadd.f32 %v270, %v334
  %v399 = vadd.f32 %v271, %v335
  %v400 = vadd.f32 %v272, %v336
  %v401 = vadd.f32 %v273, %v337
  %v402 = vadd.f32 %v274, %v338
  %v403 = vadd.f32 %v275, %v339
  %v404 = vadd.f32 %v276, %v340
  %v405 = vadd.f32 %v277, %v341
  %v406 = vadd.f32 %v278, %v342
  %v407 = vadd.f32 %v279, %v343
  %v408 = vadd.f32 %v280, %v344
  %v409 = vadd.f32 %v281, %v345
  %v410 = vadd.f32 %v282, %v346
  %v411 = vadd.f32 %v283, %v347
  %v412 = vadd.f32 %v284, %v348
  %v413 = vadd.f32 %v285, %v349
  %v414 = vadd.f32 %v286, %v350
  %v415 = vmax.f32 %v351, 0.0
  %v416 = vmax.f32 %v352, 0.0
  %v417 = vmax.f32 %v353, 0.0
  %v418 = vmax.f32 %v354, 0.0
  %v419 = vmax.f32 %v355, 0.0
  %v420 = vmax.f32 %v356, 0.0
  %v421 = vmax.f32 %v357, 0.0
  %v422 = vmax.f32 %v358, 0.0
  %v423 = vmax.f32 %v359, 0.0
  %v424 = vmax.f32 %v360, 0.0
  %v425 = vmax.f32 %v361, 0.0
  %v426 = vmax.f32 %v362, 0.0
  %v427 = vmax.f32 %v363, 0.0
  %v428 = vmax.f32 %v364, 0.0
  %v429 = vmax.f32 %v365, 0.0
  %v430 = vmax.f32 %v366, 0.0
  %v431 = vmax.f32 %v367, 0.0
  %v432 = vmax.f32 %v368, 0.0
  %v433 = vmax.f32 %v369, 0.0
  %v434 = vmax.f32 %v370, 0.0
  %v435 = vmax.f32 %v371, 0.0
  %v436 = vmax.f32 %v372, 0.0
  %v437 = vmax.f32 %v373, 0.0
  %v438 = vmax.f32 %v374, 0.0
  %v439 = vmax.f32 %v375, 0.0
  %v440 = vmax.f32 %v376, 0.0
  %v441 = vmax.f32 %v377, 0.0
  %v442 = vmax.f32 %v378, 0.0
  %v443 = vmax.f32 %v379, 0.0
  %v444 = vmax.f32 %v380, 0.0
  %v445 = vmax.f32 %v381, 0.0
  %v446 = vmax.f32 %v382, 0.0
  %v447 = vmax.f32 %v383, 0.0
  %v448 = vmax.f32 %v384, 0.0
  %v449 = vmax.f32 %v385, 0.0
  %v450 = vmax.f32 %v386, 0.0
  %v451 = vmax.f32 %v387, 0.0
  %v452 = vmax.f32 %v388, 0.0
  %v453 = vmax.f32 %v389, 0.0
  %v454 = vmax.f32 %v390, 0.0
  %v455 = vmax.f32 %v391, 0.0
  %v456 = vmax.f32 %v392, 0.0
  %v457 = vmax.f32 %v393, 0.0
  %v458 = vmax.f32 %v394, 0.0
  %v459 = vmax.f32 %v395, 0.0
  %v460 = vmax.f32 %v396, 0.0
  %v461 = vmax.f32 %v397, 0.0
  %v462 = vmax.f32 %v398, 0.0
  %v463 = vmax.f32 %v399, 0.0
  %v464 = vmax.f32 %v400, 0.0
  %v465 = vmax.f32 %v401, 0.0
  %v466 = vmax.f32 %v402, 0.0
  %v467 = vmax.f32 %v403, 0.0
  %v468 = vmax.f32 %v404, 0.0
  %v469 = vmax.f32 %v405, 0.0
  %v470 = vmax.f32 %v406, 0.0
  %v471 = vmax.f32 %v407, 0.0
  %v472 = vmax.f32 %v408, 0.0
  %v473 = vmax.f32 %v409, 0.0
  %v474 = vmax.f32 %v410, 0.0
  %v475 = vmax.f32 %v411, 0.0
  %v476 = vmax.f32 %v412, 0.0
  %v477 = vmax.f32 %v413, 0.0
  %v478 = vmax.f32 %v414, 0.0
  %vm479 = vcmask 64512
  %480 = vst.msk [vmem:[%s4] sm:$0xff] %vm479, %v415
  %481 = vst.msk [vmem:[%s4 + $0x8] sm:$0xff] %vm479, %v416
  %482 = vst.msk [vmem:[%s4 + $0x10] sm:$0xff] %vm479, %v417
  %483 = vst.msk [vmem:[%s4 + $0x18] sm:$0xff] %vm479, %v418
  %484 = vst.msk [vmem:[%s4 + $0x20] sm:$0xff] %vm479, %v419
  %485 = vst.msk [vmem:[%s4 + $0x28] sm:$0xff] %vm479, %v420
  %486 = vst.msk [vmem:[%s4 + $0x30] sm:$0xff] %vm479, %v421
  %487 = vst.msk [vmem:[%s4 + $0x38] sm:$0xff] %vm479, %v422
  %488 = vst.msk [vmem:[%s4 + $0x40] sm:$0xff] %vm479, %v423
  %489 = vst.msk [vmem:[%s4 + $0x48] sm:$0xff] %vm479, %v424
  %490 = vst.msk [vmem:[%s4 + $0x50] sm:$0xff] %vm479, %v425
  %491 = vst.msk [vmem:[%s4 + $0x58] sm:$0xff] %vm479, %v426
  %492 = vst.msk [vmem:[%s4 + $0x60] sm:$0xff] %vm479, %v427
  %493 = vst.msk [vmem:[%s4 + $0x68] sm:$0xff] %vm479, %v428
  %494 = vst.msk [vmem:[%s4 + $0x70] sm:$0xff] %vm479, %v429
  %495 = vst.msk [vmem:[%s4 + $0x78] sm:$0xff] %vm479, %v430
  %496 = vst.msk [vmem:[%s4 + $0x80] sm:$0xff] %vm479, %v431
  %497 = vst.msk [vmem:[%s4 + $0x88] sm:$0xff] %vm479, %v432
  %498 = vst.msk [vmem:[%s4 + $0x90] sm:$0xff] %vm479, %v433
  %499 = vst.msk [vmem:[%s4 + $0x98] sm:$0xff] %vm479, %v434
  %500 = vst.msk [vmem:[%s4 + $0xa0] sm:$0xff] %vm479, %v435
  %501 = vst.msk [vmem:[%s4 + $0xa8] sm:$0xff] %vm479, %v436
  %502 = vst.msk [vmem:[%s4 + $0xb0] sm:$0xff] %vm479, %v437
  %503 = vst.msk [vmem:[%s4 + $0xb8] sm:$0xff] %vm479, %v438
  %504 = vst.msk [vmem:[%s4 + $0xc0] sm:$0xff] %vm479, %v439
  %505 = vst.msk [vmem:[%s4 + $0xc8] sm:$0xff] %vm479, %v440
  %506 = vst.msk [vmem:[%s4 + $0xd0] sm:$0xff] %vm479, %v441
  %507 = vst.msk [vmem:[%s4 + $0xd8] sm:$0xff] %vm479, %v442
  %508 = vst.msk [vmem:[%s4 + $0xe0] sm:$0xff] %vm479, %v443
  %509 = vst.msk [vmem:[%s4 + $0xe8] sm:$0xff] %vm479, %v444
  %510 = vst.msk [vmem:[%s4 + $0xf0] sm:$0xff] %vm479, %v445
  %511 = vst.msk [vmem:[%s4 + $0xf8] sm:$0xff] %vm479, %v446
  %512 = vst.msk [vmem:[%s4 + $0x100] sm:$0xff] %vm479, %v447
  %513 = vst.msk [vmem:[%s4 + $0x108] sm:$0xff] %vm479, %v448
  %514 = vst.msk [vmem:[%s4 + $0x110] sm:$0xff] %vm479, %v449
  %515 = vst.msk [vmem:[%s4 + $0x118] sm:$0xff] %vm479, %v450
  %516 = vst.msk [vmem:[%s4 + $0x120] sm:$0xff] %vm479, %v451
  %517 = vst.msk [vmem:[%s4 + $0x128] sm:$0xff] %vm479, %v452
  %518 = vst.msk [vmem:[%s4 + $0x130] sm:$0xff] %vm479, %v453
  %519 = vst.msk [vmem:[%s4 + $0x138] sm:$0xff] %vm479, %v454
  %520 = vst.msk [vmem:[%s4 + $0x140] sm:$0xff] %vm479, %v455
  %521 = vst.msk [vmem:[%s4 + $0x148] sm:$0xff] %vm479, %v456
  %522 = vst.msk [vmem:[%s4 + $0x150] sm:$0xff] %vm479, %v457
  %523 = vst.msk [vmem:[%s4 + $0x158] sm:$0xff] %vm479, %v458
  %524 = vst.msk [vmem:[%s4 + $0x160] sm:$0xff] %vm479, %v459
  %525 = vst.msk [vmem:[%s4 + $0x168] sm:$0xff] %vm479, %v460
  %526 = vst.msk [vmem:[%s4 + $0x170] sm:$0xff] %vm479, %v461
  %527 = vst.msk [vmem:[%s4 + $0x178] sm:$0xff] %vm479, %v462
  %528 = vst.msk [vmem:[%s4 + $0x180] sm:$0xff] %vm479, %v463
  %529 = vst.msk [vmem:[%s4 + $0x188] sm:$0xff] %vm479, %v464
  %530 = vst.msk [vmem:[%s4 + $0x190] sm:$0xff] %vm479, %v465
  %531 = vst.msk [vmem:[%s4 + $0x198] sm:$0xff] %vm479, %v466
  %532 = vst.msk [vmem:[%s4 + $0x1a0] sm:$0xff] %vm479, %v467
  %533 = vst.msk [vmem:[%s4 + $0x1a8] sm:$0xff] %vm479, %v468
  %534 = vst.msk [vmem:[%s4 + $0x1b0] sm:$0xff] %vm479, %v469
  %535 = vst.msk [vmem:[%s4 + $0x1b8] sm:$0xff] %vm479, %v470
  %536 = vst.msk [vmem:[%s4 + $0x1c0] sm:$0xff] %vm479, %v471
  %537 = vst.msk [vmem:[%s4 + $0x1c8] sm:$0xff] %vm479, %v472
  %538 = vst.msk [vmem:[%s4 + $0x1d0] sm:$0xff] %vm479, %v473
  %539 = vst.msk [vmem:[%s4 + $0x1d8] sm:$0xff] %vm479, %v474
  %540 = vst.msk [vmem:[%s4 + $0x1e0] sm:$0xff] %vm479, %v475
  %541 = vst.msk [vmem:[%s4 + $0x1e8] sm:$0xff] %vm479, %v476
  %542 = vst.msk [vmem:[%s4 + $0x1f0] sm:$0xff] %vm479, %v477
  %543 = vst.msk [vmem:[%s4 + $0x1f8] sm:$0xff] %vm479, %v478
  // Predicated region
  $region18: #{basic_block_forward.5} parent=0 // pred_check
    _
  $region19: #{basic_block_forward.5} parent=0 // pred_check_branch
    %545 = sbr.rel (0) target = $region21
  $region20: #{basic_block_forward.5} parent=0 // pred_region
    _
  $region21: #{basic_block_forward.5} parent=0 // pred_fallthru
    _
  // Predicated region
  $region22: #{basic_block_forward.5} parent=0 // pred_check
    _
  $region23: #{basic_block_forward.5} parent=0 // pred_check_branch
    %547 = sbr.rel (0) target = $region25
  $region24: #{basic_block_forward.5} parent=0 // pred_region
    _
  $region25: #{basic_block_forward.5} parent=0 // pred_fallthru
    _

// kernel: basic_block_forward.3
$region0: #{basic_block_forward.3}
  #allocation0 [shape = 'u32[]', space=smem, size = 0x4, offset = 0x4, fixed_abs, tag = 'smem constant byte address 0x4 - core index']
  #allocation1 [shape = 'u32[144,128]{1,0:T(1,128)}', space=vmem, size = 0x12000, scoped, tag = 'internal scratch']
  %s0 = inlined_call_operand.vmem [shape: bf16[2,16,16,8], index: 0, kind: input, shape index: {}]
  %s1 = inlined_call_operand.vmem [shape: bf16[72,8], index: 1, kind: input, shape index: {}]
  %s2 = inlined_call_operand.vmem [shape: bf16[2,16,16,8], index: 2, kind: output, shape index: {0}]
  %s3 = inlined_call_operand.vmem [shape: f32[1,2,8], index: 3, kind: output, shape index: {1}]
  %4 = xla_tuple %s2, %s3
  %s5 = sld [smem:[#allocation0]]
  $region26: #{basic_block_forward.3} parent=0
    _
  %s7 = ssub.s32 1, %s5
  %s8 = scalar_select 0, %s7, %s5
  // Predicated region
  $region2: #{basic_block_forward.3} parent=0 // pred_check
    _
  $region3: #{basic_block_forward.3} parent=0 // pred_check_branch
    %10 = sbr.rel (0) target = $region5
  $region4: #{basic_block_forward.3} parent=0 // pred_region
    _
  $region5: #{basic_block_forward.3} parent=0 // pred_fallthru
    _
  // Predicated region
  $region6: #{basic_block_forward.3} parent=0 // pred_check
    _
  $region7: #{basic_block_forward.3} parent=0 // pred_check_branch
    %12 = sbr.rel (0) target = $region9
  $region8: #{basic_block_forward.3} parent=0 // pred_region
    _
  $region9: #{basic_block_forward.3} parent=0 // pred_fallthru
    _
  %v14 = vld [vmem:[%s0] sm:$0xf]
  %v15 = vld [vmem:[%s0 + $0x4] sm:$0xf]
  %v16 = vld [vmem:[%s0 + $0x8] sm:$0xf]
  %v17 = vld [vmem:[%s0 + $0xc] sm:$0xf]
  %v18 = vld [vmem:[%s0 + $0x10] sm:$0xf]
  %v19 = vld [vmem:[%s0 + $0x14] sm:$0xf]
  %v20 = vld [vmem:[%s0 + $0x18] sm:$0xf]
  %v21 = vld [vmem:[%s0 + $0x1c] sm:$0xf]
  %v22 = vld [vmem:[%s0 + $0x20] sm:$0xf]
  %v23 = vld [vmem:[%s0 + $0x24] sm:$0xf]
  %v24 = vld [vmem:[%s0 + $0x28] sm:$0xf]
  %v25 = vld [vmem:[%s0 + $0x2c] sm:$0xf]
  %v26 = vld [vmem:[%s0 + $0x30] sm:$0xf]
  %v27 = vld [vmem:[%s0 + $0x34] sm:$0xf]
  %v28 = vld [vmem:[%s0 + $0x38] sm:$0xf]
  %v29 = vld [vmem:[%s0 + $0x3c] sm:$0xf]
  %v30 = vld [vmem:[%s0 + $0x40] sm:$0xf]
  %v31 = vld [vmem:[%s0 + $0x44] sm:$0xf]
  %v32 = vld [vmem:[%s0 + $0x48] sm:$0xf]
  %v33 = vld [vmem:[%s0 + $0x4c] sm:$0xf]
  %v34 = vld [vmem:[%s0 + $0x50] sm:$0xf]
  %v35 = vld [vmem:[%s0 + $0x54] sm:$0xf]
  %v36 = vld [vmem:[%s0 + $0x58] sm:$0xf]
  %v37 = vld [vmem:[%s0 + $0x5c] sm:$0xf]
  %v38 = vld [vmem:[%s0 + $0x60] sm:$0xf]
  %v39 = vld [vmem:[%s0 + $0x64] sm:$0xf]
  %v40 = vld [vmem:[%s0 + $0x68] sm:$0xf]
  %v41 = vld [vmem:[%s0 + $0x6c] sm:$0xf]
  %v42 = vld [vmem:[%s0 + $0x70] sm:$0xf]
  %v43 = vld [vmem:[%s0 + $0x74] sm:$0xf]
  %v44 = vld [vmem:[%s0 + $0x78] sm:$0xf]
  %v45 = vld [vmem:[%s0 + $0x7c] sm:$0xf]
  %v46 = vld [vmem:[%s0 + $0x80] sm:$0xf]
  %v47 = vld [vmem:[%s0 + $0x84] sm:$0xf]
  %v48 = vld [vmem:[%s0 + $0x88] sm:$0xf]
  %v49 = vld [vmem:[%s0 + $0x8c] sm:$0xf]
  %v50 = vld [vmem:[%s0 + $0x90] sm:$0xf]
  %v51 = vld [vmem:[%s0 + $0x94] sm:$0xf]
  %v52 = vld [vmem:[%s0 + $0x98] sm:$0xf]
  %v53 = vld [vmem:[%s0 + $0x9c] sm:$0xf]
  %v54 = vld [vmem:[%s0 + $0xa0] sm:$0xf]
  %v55 = vld [vmem:[%s0 + $0xa4] sm:$0xf]
  %v56 = vld [vmem:[%s0 + $0xa8] sm:$0xf]
  %v57 = vld [vmem:[%s0 + $0xac] sm:$0xf]
  %v58 = vld [vmem:[%s0 + $0xb0] sm:$0xf]
  %v59 = vld [vmem:[%s0 + $0xb4] sm:$0xf]
  %v60 = vld [vmem:[%s0 + $0xb8] sm:$0xf]
  %v61 = vld [vmem:[%s0 + $0xbc] sm:$0xf]
  %v62 = vld [vmem:[%s0 + $0xc0] sm:$0xf]
  %v63 = vld [vmem:[%s0 + $0xc4] sm:$0xf]
  %v64 = vld [vmem:[%s0 + $0xc8] sm:$0xf]
  %v65 = vld [vmem:[%s0 + $0xcc] sm:$0xf]
  %v66 = vld [vmem:[%s0 + $0xd0] sm:$0xf]
  %v67 = vld [vmem:[%s0 + $0xd4] sm:$0xf]
  %v68 = vld [vmem:[%s0 + $0xd8] sm:$0xf]
  %v69 = vld [vmem:[%s0 + $0xdc] sm:$0xf]
  %v70 = vld [vmem:[%s0 + $0xe0] sm:$0xf]
  %v71 = vld [vmem:[%s0 + $0xe4] sm:$0xf]
  %v72 = vld [vmem:[%s0 + $0xe8] sm:$0xf]
  %v73 = vld [vmem:[%s0 + $0xec] sm:$0xf]
  %v74 = vld [vmem:[%s0 + $0xf0] sm:$0xf]
  %v75 = vld [vmem:[%s0 + $0xf4] sm:$0xf]
  %v76 = vld [vmem:[%s0 + $0xf8] sm:$0xf]
  %v77 = vld [vmem:[%s0 + $0xfc] sm:$0xf]
  %v78 = vld [vmem:[%s1] sm:$0xf]
  %v79 = vld [vmem:[%s1 + $0x4] sm:$0xf]
  %v80 = vld [vmem:[%s1 + $0x8] sm:$0xf]
  %v81 = vld [vmem:[%s1 + $0xc] sm:$0xf]
  %v82 = vld [vmem:[%s1 + $0x10] sm:$0xf]
  %v83 = vld [vmem:[%s1 + $0x14] sm:$0xf]
  %v84 = vld [vmem:[%s1 + $0x18] sm:$0xf]
  %v85 = vld [vmem:[%s1 + $0x1c] sm:$0xf]
  %v86 = vld [vmem:[%s1 + $0x20] sm:$0xf]
  %v151 = vunpack.c.l.b16 %v14
  %v152 = vunpack.c.l.b16 %v15
  %v153 = vunpack.c.l.b16 %v16
  %v154 = vunpack.c.l.b16 %v17
  %v155 = vunpack.c.l.b16 %v18
  %v156 = vunpack.c.l.b16 %v19
  %v157 = vunpack.c.l.b16 %v20
  %v158 = vunpack.c.l.b16 %v21
  %v159 = vunpack.c.l.b16 %v22
  %v160 = vunpack.c.l.b16 %v23
  %v161 = vunpack.c.l.b16 %v24
  %v162 = vunpack.c.l.b16 %v25
  %v163 = vunpack.c.l.b16 %v26
  %v164 = vunpack.c.l.b16 %v27
  %v165 = vunpack.c.l.b16 %v28
  %v166 = vunpack.c.l.b16 %v29
  %v167 = vunpack.c.l.b16 %v30
  %v168 = vunpack.c.l.b16 %v31
  %v169 = vunpack.c.l.b16 %v32
  %v170 = vunpack.c.l.b16 %v33
  %v171 = vunpack.c.l.b16 %v34
  %v172 = vunpack.c.l.b16 %v35
  %v173 = vunpack.c.l.b16 %v36
  %v174 = vunpack.c.l.b16 %v37
  %v175 = vunpack.c.l.b16 %v38
  %v176 = vunpack.c.l.b16 %v39
  %v177 = vunpack.c.l.b16 %v40
  %v178 = vunpack.c.l.b16 %v41
  %v179 = vunpack.c.l.b16 %v42
  %v180 = vunpack.c.l.b16 %v43
  %v181 = vunpack.c.l.b16 %v44
  %v182 = vunpack.c.l.b16 %v45
  %v183 = vunpack.c.l.b16 %v46
  %v184 = vunpack.c.l.b16 %v47
  %v185 = vunpack.c.l.b16 %v48
  %v186 = vunpack.c.l.b16 %v49
  %v187 = vunpack.c.l.b16 %v50
  %v188 = vunpack.c.l.b16 %v51
  %v189 = vunpack.c.l.b16 %v52
  %v190 = vunpack.c.l.b16 %v53
  %v191 = vunpack.c.l.b16 %v54
  %v192 = vunpack.c.l.b16 %v55
  %v193 = vunpack.c.l.b16 %v56
  %v194 = vunpack.c.l.b16 %v57
  %v195 = vunpack.c.l.b16 %v58
  %v196 = vunpack.c.l.b16 %v59
  %v197 = vunpack.c.l.b16 %v60
  %v198 = vunpack.c.l.b16 %v61
  %v199 = vunpack.c.l.b16 %v62
  %v200 = vunpack.c.l.b16 %v63
  %v201 = vunpack.c.l.b16 %v64
  %v202 = vunpack.c.l.b16 %v65
  %v203 = vunpack.c.l.b16 %v66
  %v204 = vunpack.c.l.b16 %v67
  %v205 = vunpack.c.l.b16 %v68
  %v206 = vunpack.c.l.b16 %v69
  %v207 = vunpack.c.l.b16 %v70
  %v208 = vunpack.c.l.b16 %v71
  %v209 = vunpack.c.l.b16 %v72
  %v210 = vunpack.c.l.b16 %v73
  %v211 = vunpack.c.l.b16 %v74
  %v212 = vunpack.c.l.b16 %v75
  %v213 = vunpack.c.l.b16 %v76
  %v214 = vunpack.c.l.b16 %v77
  %v215 = vpack.c.b16 %v152, %v151
  %v216 = vpack.c.b16 %v154, %v153
  %v217 = vpack.c.b16 %v156, %v155
  %v218 = vpack.c.b16 %v158, %v157
  %v219 = vpack.c.b16 %v160, %v159
  %v220 = vpack.c.b16 %v162, %v161
  %v221 = vpack.c.b16 %v164, %v163
  %v222 = vpack.c.b16 %v166, %v165
  %v223 = vpack.c.b16 %v168, %v167
  %v224 = vpack.c.b16 %v170, %v169
  %v225 = vpack.c.b16 %v172, %v171
  %v226 = vpack.c.b16 %v174, %v173
  %v227 = vpack.c.b16 %v176, %v175
  %v228 = vpack.c.b16 %v178, %v177
  %v229 = vpack.c.b16 %v180, %v179
  %v230 = vpack.c.b16 %v182, %v181
  %v231 = vpack.c.b16 %v184, %v183
  %v232 = vpack.c.b16 %v186, %v185
  %v233 = vpack.c.b16 %v188, %v187
  %v234 = vpack.c.b16 %v190, %v189
  %v235 = vpack.c.b16 %v192, %v191
  %v236 = vpack.c.b16 %v194, %v193
  %v237 = vpack.c.b16 %v196, %v195
  %v238 = vpack.c.b16 %v198, %v197
  %v239 = vpack.c.b16 %v200, %v199
  %v240 = vpack.c.b16 %v202, %v201
  %v241 = vpack.c.b16 %v204, %v203
  %v242 = vpack.c.b16 %v206, %v205
  %v243 = vpack.c.b16 %v208, %v207
  %v244 = vpack.c.b16 %v210, %v209
  %v245 = vpack.c.b16 %v212, %v211
  %v246 = vpack.c.b16 %v214, %v213
  %v248 = vshrl.u32 0, 16
  %v250 = vrot.slane %v248, 7
  %v251 = vshll.u32 0, 16
  %v253 = vor.u32 %v250, %v251
  %v255 = vshrl.u32 %v215, 16
  %v257 = vrot.slane %v255, 7
  %v258 = vshll.u32 %v215, 16
  %v260 = vor.u32 %v257, %v258
  %v262 = vshrl.u32 %v216, 16
  %v264 = vrot.slane %v262, 7
  %v265 = vshll.u32 %v216, 16
  %v267 = vor.u32 %v264, %v265
  %v269 = vshrl.u32 %v217, 16
  %v271 = vrot.slane %v269, 7
  %v272 = vshll.u32 %v217, 16
  %v274 = vor.u32 %v271, %v272
  %v276 = vshrl.u32 %v218, 16
  %v278 = vrot.slane %v276, 7
  %v279 = vshll.u32 %v218, 16
  %v281 = vor.u32 %v278, %v279
  %v283 = vshrl.u32 %v219, 16
  %v285 = vrot.slane %v283, 7
  %v286 = vshll.u32 %v219, 16
  %v288 = vor.u32 %v285, %v286
  %v290 = vshrl.u32 %v220, 16
  %v292 = vrot.slane %v290, 7
  %v293 = vshll.u32 %v220, 16
  %v295 = vor.u32 %v292, %v293
  %v297 = vshrl.u32 %v221, 16
  %v299 = vrot.slane %v297, 7
  %v300 = vshll.u32 %v221, 16
  %v302 = vor.u32 %v299, %v300
  %v304 = vshrl.u32 %v222, 16
  %v306 = vrot.slane %v304, 7
  %v307 = vshll.u32 %v222, 16
  %v309 = vor.u32 %v306, %v307
  %v311 = vshrl.u32 %v223, 16
  %v313 = vrot.slane %v311, 7
  %v314 = vshll.u32 %v223, 16
  %v316 = vor.u32 %v313, %v314
  %v318 = vshrl.u32 %v224, 16
  %v320 = vrot.slane %v318, 7
  %v321 = vshll.u32 %v224, 16
  %v323 = vor.u32 %v320, %v321
  %v325 = vshrl.u32 %v225, 16
  %v327 = vrot.slane %v325, 7
  %v328 = vshll.u32 %v225, 16
  %v330 = vor.u32 %v327, %v328
  %v332 = vshrl.u32 %v226, 16
  %v334 = vrot.slane %v332, 7
  %v335 = vshll.u32 %v226, 16
  %v337 = vor.u32 %v334, %v335
  %v339 = vshrl.u32 %v227, 16
  %v341 = vrot.slane %v339, 7
  %v342 = vshll.u32 %v227, 16
  %v344 = vor.u32 %v341, %v342
  %v346 = vshrl.u32 %v228, 16
  %v348 = vrot.slane %v346, 7
  %v349 = vshll.u32 %v228, 16
  %v351 = vor.u32 %v348, %v349
  %v353 = vshrl.u32 %v229, 16
  %v355 = vrot.slane %v353, 7
  %v356 = vshll.u32 %v229, 16
  %v358 = vor.u32 %v355, %v356
  %v360 = vshrl.u32 %v230, 16
  %v362 = vrot.slane %v360, 7
  %v363 = vshll.u32 %v230, 16
  %v365 = vor.u32 %v362, %v363
  %v367 = vshrl.u32 %v231, 16
  %v369 = vrot.slane %v367, 7
  %v370 = vshll.u32 %v231, 16
  %v372 = vor.u32 %v369, %v370
  %v374 = vshrl.u32 %v232, 16
  %v376 = vrot.slane %v374, 7
  %v377 = vshll.u32 %v232, 16
  %v379 = vor.u32 %v376, %v377
  %v381 = vshrl.u32 %v233, 16
  %v383 = vrot.slane %v381, 7
  %v384 = vshll.u32 %v233, 16
  %v386 = vor.u32 %v383, %v384
  %v388 = vshrl.u32 %v234, 16
  %v390 = vrot.slane %v388, 7
  %v391 = vshll.u32 %v234, 16
  %v393 = vor.u32 %v390, %v391
  %v395 = vshrl.u32 %v235, 16
  %v397 = vrot.slane %v395, 7
  %v398 = vshll.u32 %v235, 16
  %v400 = vor.u32 %v397, %v398
  %v402 = vshrl.u32 %v236, 16
  %v404 = vrot.slane %v402, 7
  %v405 = vshll.u32 %v236, 16
  %v407 = vor.u32 %v404, %v405
  %v409 = vshrl.u32 %v237, 16
  %v411 = vrot.slane %v409, 7
  %v412 = vshll.u32 %v237, 16
  %v414 = vor.u32 %v411, %v412
  %v416 = vshrl.u32 %v238, 16
  %v418 = vrot.slane %v416, 7
  %v419 = vshll.u32 %v238, 16
  %v421 = vor.u32 %v418, %v419
  %v423 = vshrl.u32 %v239, 16
  %v425 = vrot.slane %v423, 7
  %v426 = vshll.u32 %v239, 16
  %v428 = vor.u32 %v425, %v426
  %v430 = vshrl.u32 %v240, 16
  %v432 = vrot.slane %v430, 7
  %v433 = vshll.u32 %v240, 16
  %v435 = vor.u32 %v432, %v433
  %v437 = vshrl.u32 %v241, 16
  %v439 = vrot.slane %v437, 7
  %v440 = vshll.u32 %v241, 16
  %v442 = vor.u32 %v439, %v440
  %v444 = vshrl.u32 %v242, 16
  %v446 = vrot.slane %v444, 7
  %v447 = vshll.u32 %v242, 16
  %v449 = vor.u32 %v446, %v447
  %v451 = vshrl.u32 %v243, 16
  %v453 = vrot.slane %v451, 7
  %v454 = vshll.u32 %v243, 16
  %v456 = vor.u32 %v453, %v454
  %v458 = vshrl.u32 %v244, 16
  %v460 = vrot.slane %v458, 7
  %v461 = vshll.u32 %v244, 16
  %v463 = vor.u32 %v460, %v461
  %v465 = vshrl.u32 %v245, 16
  %v467 = vrot.slane %v465, 7
  %v468 = vshll.u32 %v245, 16
  %v470 = vor.u32 %v467, %v468
  %v472 = vshrl.u32 %v246, 16
  %v474 = vrot.slane %v472, 7
  %v475 = vshll.u32 %v246, 16
  %v477 = vor.u32 %v474, %v475
  %vm544 = vcmask 1040384
  %vm545 = vsmask.f32 256
  %vm546 = vmand %vm544, %vm545
  %v547 = vsel %vm546, 0, %v253
  %v548 = vsel %vm546, 0, %v260
  %v549 = vsel %vm546, 0, %v267
  %v550 = vsel %vm546, 0, %v274
  %v551 = vsel %vm546, 0, %v281
  %v552 = vsel %vm546, 0, %v288
  %v553 = vsel %vm546, 0, %v295
  %v554 = vsel %vm546, 0, %v302
  %v555 = vsel %vm546, 0, %v309
  %v556 = vsel %vm546, 0, %v316
  %v557 = vsel %vm546, 0, %v323
  %v558 = vsel %vm546, 0, %v330
  %v559 = vsel %vm546, 0, %v337
  %v560 = vsel %vm546, 0, %v344
  %v561 = vsel %vm546, 0, %v351
  %v562 = vsel %vm546, 0, %v358
  %v563 = vsel %vm546, 0, %v365
  %v564 = vsel %vm546, 0, %v372
  %v565 = vsel %vm546, 0, %v379
  %v566 = vsel %vm546, 0, %v386
  %v567 = vsel %vm546, 0, %v393
  %v568 = vsel %vm546, 0, %v400
  %v569 = vsel %vm546, 0, %v407
  %v570 = vsel %vm546, 0, %v414
  %v571 = vsel %vm546, 0, %v421
  %v572 = vsel %vm546, 0, %v428
  %v573 = vsel %vm546, 0, %v435
  %v574 = vsel %vm546, 0, %v442
  %v575 = vsel %vm546, 0, %v449
  %v576 = vsel %vm546, 0, %v456
  %v577 = vsel %vm546, 0, %v463
  %v578 = vsel %vm546, 0, %v470
  %v579 = vsel %vm546, 0, %v477
  %v580 = vsel %vm546, %v250, 0
  %v581 = vsel %vm546, %v257, 0
  %v582 = vsel %vm546, %v264, 0
  %v583 = vsel %vm546, %v271, 0
  %v584 = vsel %vm546, %v278, 0
  %v585 = vsel %vm546, %v285, 0
  %v586 = vsel %vm546, %v292, 0
  %v587 = vsel %vm546, %v299, 0
  %v588 = vsel %vm546, %v306, 0
  %v589 = vsel %vm546, %v313, 0
  %v590 = vsel %vm546, %v320, 0
  %v591 = vsel %vm546, %v327, 0
  %v592 = vsel %vm546, %v334, 0
  %v593 = vsel %vm546, %v341, 0
  %v594 = vsel %vm546, %v348, 0
  %v595 = vsel %vm546, %v355, 0
  %v596 = vsel %vm546, %v362, 0
  %v597 = vsel %vm546, %v369, 0
  %v598 = vsel %vm546, %v376, 0
  %v599 = vsel %vm546, %v383, 0
  %v600 = vsel %vm546, %v390, 0
  %v601 = vsel %vm546, %v397, 0
  %v602 = vsel %vm546, %v404, 0
  %v603 = vsel %vm546, %v411, 0
  %v604 = vsel %vm546, %v418, 0
  %v605 = vsel %vm546, %v425, 0
  %v606 = vsel %vm546, %v432, 0
  %v607 = vsel %vm546, %v439, 0
  %v608 = vsel %vm546, %v446, 0
  %v609 = vsel %vm546, %v453, 0
  %v610 = vsel %vm546, %v460, 0
  %v611 = vsel %vm546, %v467, 0
  %v612 = vsel %vm546, %v474, 0
  %vm613 = vsmask.f32 7424
  %v615 = vshrl.u32 %v547, 16
  %v617 = vshll.u32 %v547, 16
  %v619 = vrot.slane %v617, 1
  %v620 = vor.u32 %v615, %v619
  %v622 = vshll.u32 %v580, 16
  %v624 = vrot.slane %v622, 1
  %v625 = vsel %vm613, %v620, %v624
  %v627 = vshrl.u32 %v548, 16
  %v629 = vshll.u32 %v548, 16
  %v631 = vrot.slane %v629, 1
  %v632 = vor.u32 %v627, %v631
  %v634 = vshll.u32 %v581, 16
  %v636 = vrot.slane %v634, 1
  %v637 = vsel %vm613, %v632, %v636
  %v639 = vshrl.u32 %v549, 16
  %v641 = vshll.u32 %v549, 16
  %v643 = vrot.slane %v641, 1
  %v644 = vor.u32 %v639, %v643
  %v646 = vshll.u32 %v582, 16
  %v648 = vrot.slane %v646, 1
  %v649 = vsel %vm613, %v644, %v648
  %v651 = vshrl.u32 %v550, 16
  %v653 = vshll.u32 %v550, 16
  %v655 = vrot.slane %v653, 1
  %v656 = vor.u32 %v651, %v655
  %v658 = vshll.u32 %v583, 16
  %v660 = vrot.slane %v658, 1
  %v661 = vsel %vm613, %v656, %v660
  %v663 = vshrl.u32 %v551, 16
  %v665 = vshll.u32 %v551, 16
  %v667 = vrot.slane %v665, 1
  %v668 = vor.u32 %v663, %v667
  %v670 = vshll.u32 %v584, 16
  %v672 = vrot.slane %v670, 1
  %v673 = vsel %vm613, %v668, %v672
  %v675 = vshrl.u32 %v552, 16
  %v677 = vshll.u32 %v552, 16
  %v679 = vrot.slane %v677, 1
  %v680 = vor.u32 %v675, %v679
  %v682 = vshll.u32 %v585, 16
  %v684 = vrot.slane %v682, 1
  %v685 = vsel %vm613, %v680, %v684
  %v687 = vshrl.u32 %v553, 16
  %v689 = vshll.u32 %v553, 16
  %v691 = vrot.slane %v689, 1
  %v692 = vor.u32 %v687, %v691
  %v694 = vshll.u32 %v586, 16
  %v696 = vrot.slane %v694, 1
  %v697 = vsel %vm613, %v692, %v696
  %v699 = vshrl.u32 %v554, 16
  %v701 = vshll.u32 %v554, 16
  %v703 = vrot.slane %v701, 1
  %v704 = vor.u32 %v699, %v703
  %v706 = vshll.u32 %v587, 16
  %v708 = vrot.slane %v706, 1
  %v709 = vsel %vm613, %v704, %v708
  %v711 = vshrl.u32 %v555, 16
  %v713 = vshll.u32 %v555, 16
  %v715 = vrot.slane %v713, 1
  %v716 = vor.u32 %v711, %v715
  %v718 = vshll.u32 %v588, 16
  %v720 = vrot.slane %v718, 1
  %v721 = vsel %vm613, %v716, %v720
  %v723 = vshrl.u32 %v556, 16
  %v725 = vshll.u32 %v556, 16
  %v727 = vrot.slane %v725, 1
  %v728 = vor.u32 %v723, %v727
  %v730 = vshll.u32 %v589, 16
  %v732 = vrot.slane %v730, 1
  %v733 = vsel %vm613, %v728, %v732
  %v735 = vshrl.u32 %v557, 16
  %v737 = vshll.u32 %v557, 16
  %v739 = vrot.slane %v737, 1
  %v740 = vor.u32 %v735, %v739
  %v742 = vshll.u32 %v590, 16
  %v744 = vrot.slane %v742, 1
  %v745 = vsel %vm613, %v740, %v744
  %v747 = vshrl.u32 %v558, 16
  %v749 = vshll.u32 %v558, 16
  %v751 = vrot.slane %v749, 1
  %v752 = vor.u32 %v747, %v751
  %v754 = vshll.u32 %v591, 16
  %v756 = vrot.slane %v754, 1
  %v757 = vsel %vm613, %v752, %v756
  %v759 = vshrl.u32 %v559, 16
  %v761 = vshll.u32 %v559, 16
  %v763 = vrot.slane %v761, 1
  %v764 = vor.u32 %v759, %v763
  %v766 = vshll.u32 %v592, 16
  %v768 = vrot.slane %v766, 1
  %v769 = vsel %vm613, %v764, %v768
  %v771 = vshrl.u32 %v560, 16
  %v773 = vshll.u32 %v560, 16
  %v775 = vrot.slane %v773, 1
  %v776 = vor.u32 %v771, %v775
  %v778 = vshll.u32 %v593, 16
  %v780 = vrot.slane %v778, 1
  %v781 = vsel %vm613, %v776, %v780
  %v783 = vshrl.u32 %v561, 16
  %v785 = vshll.u32 %v561, 16
  %v787 = vrot.slane %v785, 1
  %v788 = vor.u32 %v783, %v787
  %v790 = vshll.u32 %v594, 16
  %v792 = vrot.slane %v790, 1
  %v793 = vsel %vm613, %v788, %v792
  %v795 = vshrl.u32 %v562, 16
  %v797 = vshll.u32 %v562, 16
  %v799 = vrot.slane %v797, 1
  %v800 = vor.u32 %v795, %v799
  %v802 = vshll.u32 %v595, 16
  %v804 = vrot.slane %v802, 1
  %v805 = vsel %vm613, %v800, %v804
  %v807 = vshrl.u32 %v564, 16
  %v809 = vshll.u32 %v564, 16
  %v811 = vrot.slane %v809, 1
  %v812 = vor.u32 %v807, %v811
  %v814 = vshll.u32 %v597, 16
  %v816 = vrot.slane %v814, 1
  %v817 = vsel %vm613, %v812, %v816
  %v819 = vshrl.u32 %v565, 16
  %v821 = vshll.u32 %v565, 16
  %v823 = vrot.slane %v821, 1
  %v824 = vor.u32 %v819, %v823
  %v826 = vshll.u32 %v598, 16
  %v828 = vrot.slane %v826, 1
  %v829 = vsel %vm613, %v824, %v828
  %v831 = vshrl.u32 %v566, 16
  %v833 = vshll.u32 %v566, 16
  %v835 = vrot.slane %v833, 1
  %v836 = vor.u32 %v831, %v835
  %v838 = vshll.u32 %v599, 16
  %v840 = vrot.slane %v838, 1
  %v841 = vsel %vm613, %v836, %v840
  %v843 = vshrl.u32 %v567, 16
  %v845 = vshll.u32 %v567, 16
  %v847 = vrot.slane %v845, 1
  %v848 = vor.u32 %v843, %v847
  %v850 = vshll.u32 %v600, 16
  %v852 = vrot.slane %v850, 1
  %v853 = vsel %vm613, %v848, %v852
  %v855 = vshrl.u32 %v568, 16
  %v857 = vshll.u32 %v568, 16
  %v859 = vrot.slane %v857, 1
  %v860 = vor.u32 %v855, %v859
  %v862 = vshll.u32 %v601, 16
  %v864 = vrot.slane %v862, 1
  %v865 = vsel %vm613, %v860, %v864
  %v867 = vshrl.u32 %v569, 16
  %v869 = vshll.u32 %v569, 16
  %v871 = vrot.slane %v869, 1
  %v872 = vor.u32 %v867, %v871
  %v874 = vshll.u32 %v602, 16
  %v876 = vrot.slane %v874, 1
  %v877 = vsel %vm613, %v872, %v876
  %v879 = vshrl.u32 %v570, 16
  %v881 = vshll.u32 %v570, 16
  %v883 = vrot.slane %v881, 1
  %v884 = vor.u32 %v879, %v883
  %v886 = vshll.u32 %v603, 16
  %v888 = vrot.slane %v886, 1
  %v889 = vsel %vm613, %v884, %v888
  %v891 = vshrl.u32 %v571, 16
  %v893 = vshll.u32 %v571, 16
  %v895 = vrot.slane %v893, 1
  %v896 = vor.u32 %v891, %v895
  %v898 = vshll.u32 %v604, 16
  %v900 = vrot.slane %v898, 1
  %v901 = vsel %vm613, %v896, %v900
  %v903 = vshrl.u32 %v572, 16
  %v905 = vshll.u32 %v572, 16
  %v907 = vrot.slane %v905, 1
  %v908 = vor.u32 %v903, %v907
  %v910 = vshll.u32 %v605, 16
  %v912 = vrot.slane %v910, 1
  %v913 = vsel %vm613, %v908, %v912
  %v915 = vshrl.u32 %v573, 16
  %v917 = vshll.u32 %v573, 16
  %v919 = vrot.slane %v917, 1
  %v920 = vor.u32 %v915, %v919
  %v922 = vshll.u32 %v606, 16
  %v924 = vrot.slane %v922, 1
  %v925 = vsel %vm613, %v920, %v924
  %v927 = vshrl.u32 %v574, 16
  %v929 = vshll.u32 %v574, 16
  %v931 = vrot.slane %v929, 1
  %v932 = vor.u32 %v927, %v931
  %v934 = vshll.u32 %v607, 16
  %v936 = vrot.slane %v934, 1
  %v937 = vsel %vm613, %v932, %v936
  %v939 = vshrl.u32 %v575, 16
  %v941 = vshll.u32 %v575, 16
  %v943 = vrot.slane %v941, 1
  %v944 = vor.u32 %v939, %v943
  %v946 = vshll.u32 %v608, 16
  %v948 = vrot.slane %v946, 1
  %v949 = vsel %vm613, %v944, %v948
  %v951 = vshrl.u32 %v576, 16
  %v953 = vshll.u32 %v576, 16
  %v955 = vrot.slane %v953, 1
  %v956 = vor.u32 %v951, %v955
  %v958 = vshll.u32 %v609, 16
  %v960 = vrot.slane %v958, 1
  %v961 = vsel %vm613, %v956, %v960
  %v963 = vshrl.u32 %v577, 16
  %v965 = vshll.u32 %v577, 16
  %v967 = vrot.slane %v965, 1
  %v968 = vor.u32 %v963, %v967
  %v970 = vshll.u32 %v610, 16
  %v972 = vrot.slane %v970, 1
  %v973 = vsel %vm613, %v968, %v972
  %v975 = vshrl.u32 %v578, 16
  %v977 = vshll.u32 %v578, 16
  %v979 = vrot.slane %v977, 1
  %v980 = vor.u32 %v975, %v979
  %v982 = vshll.u32 %v611, 16
  %v984 = vrot.slane %v982, 1
  %v985 = vsel %vm613, %v980, %v984
  %vm986 = vcmask 64512
  %v988 = vsel %vm986, %v625, 0
  %v991 = vsel %vm986, %v637, 0
  %v994 = vsel %vm986, %v649, 0
  %v997 = vsel %vm986, %v661, 0
  %v1000 = vsel %vm986, %v673, 0
  %v1003 = vsel %vm986, %v685, 0
  %v1006 = vsel %vm986, %v697, 0
  %v1009 = vsel %vm986, %v709, 0
  %v1012 = vsel %vm986, %v721, 0
  %v1015 = vsel %vm986, %v733, 0
  %v1018 = vsel %vm986, %v745, 0
  %v1021 = vsel %vm986, %v757, 0
  %v1024 = vsel %vm986, %v769, 0
  %v1027 = vsel %vm986, %v781, 0
  %v1030 = vsel %vm986, %v793, 0
  %v1033 = vsel %vm986, %v805, 0
  %v1036 = vsel %vm986, %v817, 0
  %v1039 = vsel %vm986, %v829, 0
  %v1042 = vsel %vm986, %v841, 0
  %v1045 = vsel %vm986, %v853, 0
  %v1048 = vsel %vm986, %v865, 0
  %v1051 = vsel %vm986, %v877, 0
  %v1054 = vsel %vm986, %v889, 0
  %v1057 = vsel %vm986, %v901, 0
  %v1060 = vsel %vm986, %v913, 0
  %v1063 = vsel %vm986, %v925, 0
  %v1066 = vsel %vm986, %v937, 0
  %v1069 = vsel %vm986, %v949, 0
  %v1072 = vsel %vm986, %v961, 0
  %v1075 = vsel %vm986, %v973, 0
  %v1078 = vsel %vm986, %v985, 0
  %vm1080 = vcmask 1043456
  %v1082 = vsel %vm1080, %v79, 0
  %1084 = vmatprep.subr.bf16.mxu0 0
  %1085 = vmatpush1.bf16.msra.mxu0 %v1082
  %1086 = vmatprep.subr.bf16.mxu0 0
  %1087 = vmatpush1.bf16.msra.mxu0 0
  %1088 = vmatprep.subr.bf16.mxu0 0
  %1089 = vmatpush1.bf16.msra.mxu0 0
  %1090 = vmatprep.subr.bf16.mxu0 0
  %1091 = vmatpush1.bf16.msra.mxu0 0
  %1092 = vmatprep.subr.bf16.mxu0 0
  %1093 = vmatpush1.bf16.msra.mxu0 0
  %1094 = vmatprep.subr.bf16.mxu0 0
  %1095 = vmatpush1.bf16.msra.mxu0 0
  %1096 = vmatprep.subr.bf16.mxu0 0
  %1097 = vmatpush1.bf16.msra.mxu0 0
  %1098 = vmatprep.subr.bf16.mxu0 0
  %1099 = vmatpush1.bf16.msra.mxu0 0
  %1100 = vmatprep.subr.bf16.mxu0 0
  %1101 = vmatpush1.bf16.msra.mxu0 0
  %1102 = vmatprep.subr.bf16.mxu0 0
  %1103 = vmatpush1.bf16.msra.mxu0 0
  %1104 = vmatprep.subr.bf16.mxu0 0
  %1105 = vmatpush1.bf16.msra.mxu0 0
  %1106 = vmatprep.subr.bf16.mxu0 0
  %1107 = vmatpush1.bf16.msra.mxu0 0
  %1108 = vmatprep.subr.bf16.mxu0 0
  %1109 = vmatpush1.bf16.msra.mxu0 0
  %1110 = vmatprep.subr.bf16.mxu0 0
  %1111 = vmatpush1.bf16.msra.mxu0 0
  %1112 = vmatprep.subr.bf16.mxu0 0
  %1113 = vmatpush1.bf16.msra.mxu0 0
  %1114 = vmatprep.subr.bf16.mxu0 0
  %1115 = vmatpush1.bf16.msra.mxu0 0
  %1116 = vmatprep.mubr.bf16.mxu0 0
  %1117 = vmatmul.mubr.bf16.gmra.mrb[0].mxu0 %v988
  %v1118 = vpop.f32.mrb[0].mxu0
  %v1119 = vadd.f32 0.0, %v1118
  %v1120 = vpop.f32.mrb[0].mxu0
  %v1121 = vpop.f32.mrb[0].mxu0
  %v1122 = vadd.f32 0.0, %v1121
  %v1123 = vpop.f32.mrb[0].mxu0
  %1124 = vmatprep.mubr.bf16.mxu0 0
  %1125 = vmatmul.mubr.bf16.gmra.mrb[0].mxu0 %v991
  %v1126 = vpop.f32.mrb[0].mxu0
  %v1127 = vadd.f32 0.0, %v1126
  %v1128 = vpop.f32.mrb[0].mxu0
  %v1129 = vpop.f32.mrb[0].mxu0
  %v1130 = vadd.f32 0.0, %v1129
  %v1131 = vpop.f32.mrb[0].mxu0
  %1132 = vmatprep.mubr.bf16.mxu0 0
  %1133 = vmatmul.mubr.bf16.gmra.mrb[0].mxu0 %v994
  %v1134 = vpop.f32.mrb[0].mxu0
  %v1135 = vadd.f32 0.0, %v1134
  %v1136 = vpop.f32.mrb[0].mxu0
  %v1137 = vpop.f32.mrb[0].mxu0
  %v1138 = vadd.f32 0.0, %v1137
  %v1139 = vpop.f32.mrb[0].mxu0
  %1140 = vmatprep.mubr.bf16.mxu0 0
  %1141 = vmatmul.mubr.bf16.gmra.mrb[0].mxu0 %v997
  %v1142 = vpop.f32.mrb[0].mxu0
  %v1143 = vadd.f32 0.0, %v1142
  %v1144 = vpop.f32.mrb[0].mxu0
  %v1145 = vpop.f32.mrb[0].mxu0
  %v1146 = vadd.f32 0.0, %v1145
  %v1147 = vpop.f32.mrb[0].mxu0
  %1148 = vmatprep.mubr.bf16.mxu0 0
  %1149 = vmatmul.mubr.bf16.gmra.mrb[0].mxu0 %v1000
  %v1150 = vpop.f32.mrb[0].mxu0
  %v1151 = vadd.f32 0.0, %v1150
  %v1152 = vpop.f32.mrb[0].mxu0
  %v1153 = vpop.f32.mrb[0].mxu0
  %v1154 = vadd.f32 0.0, %v1153
  %v1155 = vpop.f32.mrb[0].mxu0
  %1156 = vmatprep.mubr.bf16.mxu0 0
  %1157 = vmatmul.mubr.bf16.gmra.mrb[0].mxu0 %v1003
  %v1158 = vpop.f32.mrb[0].mxu0
  %v1159 = vadd.f32 0.0, %v1158
  %v1160 = vpop.f32.mrb[0].mxu0
  %v1161 = vpop.f32.mrb[0].mxu0
  %v1162 = vadd.f32 0.0, %v1161
  %v1163 = vpop.f32.mrb[0].mxu0
  %1164 = vmatprep.mubr.bf16.mxu0 0
  %1165 = vmatmul.mubr.bf16.gmra.mrb[0].mxu0 %v1006
  %v1166 = vpop.f32.mrb[0].mxu0
  %v1167 = vadd.f32 0.0, %v1166
  %v1168 = vpop.f32.mrb[0].mxu0
  %v1169 = vpop.f32.mrb[0].mxu0
  %v1170 = vadd.f32 0.0, %v1169
  %v1171 = vpop.f32.mrb[0].mxu0
  %1172 = vmatprep.mubr.bf16.mxu0 0
  %1173 = vmatmul.mubr.bf16.gmra.mrb[0].mxu0 %v1009
  %v1174 = vpop.f32.mrb[0].mxu0
  %v1175 = vadd.f32 0.0, %v1174
  %v1176 = vpop.f32.mrb[0].mxu0
  %v1177 = vpop.f32.mrb[0].mxu0
  %v1178 = vadd.f32 0.0, %v1177
  %v1179 = vpop.f32.mrb[0].mxu0
  %1180 = vmatprep.mubr.bf16.mxu0 0
  %1181 = vmatmul.mubr.bf16.gmra.mrb[0].mxu0 %v1012
  %v1182 = vpop.f32.mrb[0].mxu0
  %v1183 = vadd.f32 0.0, %v1182
  %v1184 = vpop.f32.mrb[0].mxu0
  %v1185 = vpop.f32.mrb[0].mxu0
  %v1186 = vadd.f32 0.0, %v1185
  %v1187 = vpop.f32.mrb[0].mxu0
  %1188 = vmatprep.mubr.bf16.mxu0 0
  %1189 = vmatmul.mubr.bf16.gmra.mrb[0].mxu0 %v1015
  %v1190 = vpop.f32.mrb[0].mxu0
  %v1191 = vadd.f32 0.0, %v1190
  %v1192 = vpop.f32.mrb[0].mxu0
  %v1193 = vpop.f32.mrb[0].mxu0
  %v1194 = vadd.f32 0.0, %v1193
  %v1195 = vpop.f32.mrb[0].mxu0
  %1196 = vmatprep.mubr.bf16.mxu0 0
  %1197 = vmatmul.mubr.bf16.gmra.mrb[0].mxu0 %v1018
  %v1198 = vpop.f32.mrb[0].mxu0
  %v1199 = vadd.f32 0.0, %v1198
  %v1200 = vpop.f32.mrb[0].mxu0
  %v1201 = vpop.f32.mrb[0].mxu0
  %v1202 = vadd.f32 0.0, %v1201
  %v1203 = vpop.f32.mrb[0].mxu0
  %1204 = vmatprep.mubr.bf16.mxu0 0
  %1205 = vmatmul.mubr.bf16.gmra.mrb[0].mxu0 %v1021
  %v1206 = vpop.f32.mrb[0].mxu0
  %v1207 = vadd.f32 0.0, %v1206
  %v1208 = vpop.f32.mrb[0].mxu0
  %v1209 = vpop.f32.mrb[0].mxu0
  %v1210 = vadd.f32 0.0, %v1209
  %v1211 = vpop.f32.mrb[0].mxu0
  %1212 = vmatprep.mubr.bf16.mxu0 0
  %1213 = vmatmul.mubr.bf16.gmra.mrb[0].mxu0 %v1024
  %v1214 = vpop.f32.mrb[0].mxu0
  %v1215 = vadd.f32 0.0, %v1214
  %v1216 = vpop.f32.mrb[0].mxu0
  %v1217 = vpop.f32.mrb[0].mxu0
  %v1218 = vadd.f32 0.0, %v1217
  %v1219 = vpop.f32.mrb[0].mxu0
  %1220 = vmatprep.mubr.bf16.mxu0 0
  %1221 = vmatmul.mubr.bf16.gmra.mrb[0].mxu0 %v1027
  %v1222 = vpop.f32.mrb[0].mxu0
  %v1223 = vadd.f32 0.0, %v1222
  %v1224 = vpop.f32.mrb[0].mxu0
  %v1225 = vpop.f32.mrb[0].mxu0
  %v1226 = vadd.f32 0.0, %v1225
  %v1227 = vpop.f32.mrb[0].mxu0
  %1228 = vmatprep.mubr.bf16.mxu0 0
  %1229 = vmatmul.mubr.bf16.gmra.mrb[0].mxu0 %v1030
  %v1230 = vpop.f32.mrb[0].mxu0
  %v1231 = vadd.f32 0.0, %v1230
  %v1232 = vpop.f32.mrb[0].mxu0
  %v1233 = vpop.f32.mrb[0].mxu0
  %v1234 = vadd.f32 0.0, %v1233
  %v1235 = vpop.f32.mrb[0].mxu0
  %1236 = vmatprep.mubr.bf16.mxu0 0
  %1237 = vmatmul.mubr.bf16.gmra.mrb[0].mxu0 %v1033
  %v1238 = vpop.f32.mrb[0].mxu0
  %v1239 = vadd.f32 0.0, %v1238
  %v1240 = vpop.f32.mrb[0].mxu0
  %v1241 = vpop.f32.mrb[0].mxu0
  %v1242 = vadd.f32 0.0, %v1241
  %v1243 = vpop.f32.mrb[0].mxu0
  %1244 = vmatprep.mubr.bf16.mxu0 0
  %1245 = vmatmul.mubr.bf16.gmra.mrb[0].mxu0 %v988
  %v1246 = vpop.f32.mrb[0].mxu0
  %v1247 = vadd.f32 0.0, %v1246
  %v1248 = vpop.f32.mrb[0].mxu0
  %v1249 = vpop.f32.mrb[0].mxu0
  %v1250 = vadd.f32 0.0, %v1249
  %v1251 = vpop.f32.mrb[0].mxu0
  %1252 = vmatprep.mubr.bf16.mxu0 0
  %1253 = vmatmul.mubr.bf16.gmra.mrb[0].mxu0 %v1036
  %v1254 = vpop.f32.mrb[0].mxu0
  %v1255 = vadd.f32 0.0, %v1254
  %v1256 = vpop.f32.mrb[0].mxu0
  %v1257 = vpop.f32.mrb[0].mxu0
  %v1258 = vadd.f32 0.0, %v1257
  %v1259 = vpop.f32.mrb[0].mxu0
  %1260 = vmatprep.mubr.bf16.mxu0 0
  %1261 = vmatmul.mubr.bf16.gmra.mrb[0].mxu0 %v1039
  %v1262 = vpop.f32.mrb[0].mxu0
  %v1263 = vadd.f32 0.0, %v1262
  %v1264 = vpop.f32.mrb[0].mxu0
  %v1265 = vpop.f32.mrb[0].mxu0
  %v1266 = vadd.f32 0.0, %v1265
  %v1267 = vpop.f32.mrb[0].mxu0
  %1268 = vmatprep.mubr.bf16.mxu0 0
  %1269 = vmatmul.mubr.bf16.gmra.mrb[0].mxu0 %v1042
  %v1270 = vpop.f32.mrb[0].mxu0
  %v1271 = vadd.f32 0.0, %v1270
  %v1272 = vpop.f32.mrb[0].mxu0
  %v1273 = vpop.f32.mrb[0].mxu0
  %v1274 = vadd.f32 0.0, %v1273
  %v1275 = vpop.f32.mrb[0].mxu0
  %1276 = vmatprep.mubr.bf16.mxu0 0
  %1277 = vmatmul.mubr.bf16.gmra.mrb[0].mxu0 %v1045
  %v1278 = vpop.f32.mrb[0].mxu0
  %v1279 = vadd.f32 0.0, %v1278
  %v1280 = vpop.f32.mrb[0].mxu0
  %v1281 = vpop.f32.mrb[0].mxu0
  %v1282 = vadd.f32 0.0, %v1281
  %v1283 = vpop.f32.mrb[0].mxu0
  %1284 = vmatprep.mubr.bf16.mxu0 0
  %1285 = vmatmul.mubr.bf16.gmra.mrb[0].mxu0 %v1048
  %v1286 = vpop.f32.mrb[0].mxu0
  %v1287 = vadd.f32 0.0, %v1286
  %v1288 = vpop.f32.mrb[0].mxu0
  %v1289 = vpop.f32.mrb[0].mxu0
  %v1290 = vadd.f32 0.0, %v1289
  %v1291 = vpop.f32.mrb[0].mxu0
  %1292 = vmatprep.mubr.bf16.mxu0 0
  %1293 = vmatmul.mubr.bf16.gmra.mrb[0].mxu0 %v1051
  %v1294 = vpop.f32.mrb[0].mxu0
  %v1295 = vadd.f32 0.0, %v1294
  %v1296 = vpop.f32.mrb[0].mxu0
  %v1297 = vpop.f32.mrb[0].mxu0
  %v1298 = vadd.f32 0.0, %v1297
  %v1299 = vpop.f32.mrb[0].mxu0
  %1300 = vmatprep.mubr.bf16.mxu0 0
  %1301 = vmatmul.mubr.bf16.gmra.mrb[0].mxu0 %v1054
  %v1302 = vpop.f32.mrb[0].mxu0
  %v1303 = vadd.f32 0.0, %v1302
  %v1304 = vpop.f32.mrb[0].mxu0
  %v1305 = vpop.f32.mrb[0].mxu0
  %v1306 = vadd.f32 0.0, %v1305
  %v1307 = vpop.f32.mrb[0].mxu0
  %1308 = vmatprep.mubr.bf16.mxu0 0
  %1309 = vmatmul.mubr.bf16.gmra.mrb[0].mxu0 %v1057
  %v1310 = vpop.f32.mrb[0].mxu0
  %v1311 = vadd.f32 0.0, %v1310
  %v1312 = vpop.f32.mrb[0].mxu0
  %v1313 = vpop.f32.mrb[0].mxu0
  %v1314 = vadd.f32 0.0, %v1313
  %v1315 = vpop.f32.mrb[0].mxu0
  %1316 = vmatprep.mubr.bf16.mxu0 0
  %1317 = vmatmul.mubr.bf16.gmra.mrb[0].mxu0 %v1060
  %v1318 = vpop.f32.mrb[0].mxu0
  %v1319 = vadd.f32 0.0, %v1318
  %v1320 = vpop.f32.mrb[0].mxu0
  %v1321 = vpop.f32.mrb[0].mxu0
  %v1322 = vadd.f32 0.0, %v1321
  %v1323 = vpop.f32.mrb[0].mxu0
  %1324 = vmatprep.mubr.bf16.mxu0 0
  %1325 = vmatmul.mubr.bf16.gmra.mrb[0].mxu0 %v1063
  %v1326 = vpop.f32.mrb[0].mxu0
  %v1327 = vadd.f32 0.0, %v1326
  %v1328 = vpop.f32.mrb[0].mxu0
  %v1329 = vpop.f32.mrb[0].mxu0
  %v1330 = vadd.f32 0.0, %v1329
  %v1331 = vpop.f32.mrb[0].mxu0
  %1332 = vmatprep.mubr.bf16.mxu0 0
  %1333 = vmatmul.mubr.bf16.gmra.mrb[0].mxu0 %v1066
  %v1334 = vpop.f32.mrb[0].mxu0
  %v1335 = vadd.f32 0.0, %v1334
  %v1336 = vpop.f32.mrb[0].mxu0
  %v1337 = vpop.f32.mrb[0].mxu0
  %v1338 = vadd.f32 0.0, %v1337
  %v1339 = vpop.f32.mrb[0].mxu0
  %1340 = vmatprep.mubr.bf16.mxu0 0
  %1341 = vmatmul.mubr.bf16.gmra.mrb[0].mxu0 %v1069
  %v1342 = vpop.f32.mrb[0].mxu0
  %v1343 = vadd.f32 0.0, %v1342
  %v1344 = vpop.f32.mrb[0].mxu0
  %v1345 = vpop.f32.mrb[0].mxu0
  %v1346 = vadd.f32 0.0, %v1345
  %v1347 = vpop.f32.mrb[0].mxu0
  %1348 = vmatprep.mubr.bf16.mxu0 0
  %1349 = vmatmul.mubr.bf16.gmra.mrb[0].mxu0 %v1072
  %v1350 = vpop.f32.mrb[0].mxu0
  %v1351 = vadd.f32 0.0, %v1350
  %v1352 = vpop.f32.mrb[0].mxu0
  %v1353 = vpop.f32.mrb[0].mxu0
  %v1354 = vadd.f32 0.0, %v1353
  %v1355 = vpop.f32.mrb[0].mxu0
  %1356 = vmatprep.mubr.bf16.mxu0 0
  %1357 = vmatmul.mubr.bf16.gmra.mrb[0].mxu0 %v1075
  %v1358 = vpop.f32.mrb[0].mxu0
  %v1359 = vadd.f32 0.0, %v1358
  %v1360 = vpop.f32.mrb[0].mxu0
  %v1361 = vpop.f32.mrb[0].mxu0
  %v1362 = vadd.f32 0.0, %v1361
  %v1363 = vpop.f32.mrb[0].mxu0
  %1364 = vmatprep.mubr.bf16.mxu0 0
  %1365 = vmatmul.mubr.bf16.gmra.mrb[0].mxu0 %v1078
  %v1366 = vpop.f32.mrb[0].mxu0
  %v1367 = vadd.f32 0.0, %v1366
  %v1368 = vpop.f32.mrb[0].mxu0
  %v1369 = vpop.f32.mrb[0].mxu0
  %v1370 = vadd.f32 0.0, %v1369
  %v1371 = vpop.f32.mrb[0].mxu0
  %1372 = vdwg.mxu0
  %v1373 = vsel %vm986, %v547, 0
  %v1375 = vsel %vm986, %v548, 0
  %v1377 = vsel %vm986, %v549, 0
  %v1379 = vsel %vm986, %v550, 0
  %v1381 = vsel %vm986, %v551, 0
  %v1383 = vsel %vm986, %v552, 0
  %v1385 = vsel %vm986, %v553, 0
  %v1387 = vsel %vm986, %v554, 0
  %v1389 = vsel %vm986, %v555, 0
  %v1391 = vsel %vm986, %v556, 0
  %v1393 = vsel %vm986, %v557, 0
  %v1395 = vsel %vm986, %v558, 0
  %v1397 = vsel %vm986, %v559, 0
  %v1399 = vsel %vm986, %v560, 0
  %v1401 = vsel %vm986, %v561, 0
  %v1403 = vsel %vm986, %v562, 0
  %v1405 = vsel %vm986, %v564, 0
  %v1407 = vsel %vm986, %v565, 0
  %v1409 = vsel %vm986, %v566, 0
  %v1411 = vsel %vm986, %v567, 0
  %v1413 = vsel %vm986, %v568, 0
  %v1415 = vsel %vm986, %v569, 0
  %v1417 = vsel %vm986, %v570, 0
  %v1419 = vsel %vm986, %v571, 0
  %v1421 = vsel %vm986, %v572, 0
  %v1423 = vsel %vm986, %v573, 0
  %v1425 = vsel %vm986, %v574, 0
  %v1427 = vsel %vm986, %v575, 0
  %v1429 = vsel %vm986, %v576, 0
  %v1431 = vsel %vm986, %v577, 0
  %v1433 = vsel %vm986, %v578, 0
  %v1436 = vsel %vm1080, %v78, 0
  %1438 = vmatprep.subr.bf16.mxu0 0
  %1439 = vmatpush1.bf16.msra.mxu0 %v1436
  %1440 = vmatprep.subr.bf16.mxu0 0
  %1441 = vmatpush1.bf16.msra.mxu0 0
  %1442 = vmatprep.subr.bf16.mxu0 0
  %1443 = vmatpush1.bf16.msra.mxu0 0
  %1444 = vmatprep.subr.bf16.mxu0 0
  %1445 = vmatpush1.bf16.msra.mxu0 0
  %1446 = vmatprep.subr.bf16.mxu0 0
  %1447 = vmatpush1.bf16.msra.mxu0 0
  %1448 = vmatprep.subr.bf16.mxu0 0
  %1449 = vmatpush1.bf16.msra.mxu0 0
  %1450 = vmatprep.subr.bf16.mxu0 0
  %1451 = vmatpush1.bf16.msra.mxu0 0
  %1452 = vmatprep.subr.bf16.mxu0 0
  %1453 = vmatpush1.bf16.msra.mxu0 0
  %1454 = vmatprep.subr.bf16.mxu0 0
  %1455 = vmatpush1.bf16.msra.mxu0 0
  %1456 = vmatprep.subr.bf16.mxu0 0
  %1457 = vmatpush1.bf16.msra.mxu0 0
  %1458 = vmatprep.subr.bf16.mxu0 0
  %1459 = vmatpush1.bf16.msra.mxu0 0
  %1460 = vmatprep.subr.bf16.mxu0 0
  %1461 = vmatpush1.bf16.msra.mxu0 0
  %1462 = vmatprep.subr.bf16.mxu0 0
  %1463 = vmatpush1.bf16.msra.mxu0 0
  %1464 = vmatprep.subr.bf16.mxu0 0
  %1465 = vmatpush1.bf16.msra.mxu0 0
  %1466 = vmatprep.subr.bf16.mxu0 0
  %1467 = vmatpush1.bf16.msra.mxu0 0
  %1468 = vmatprep.subr.bf16.mxu0 0
  %1469 = vmatpush1.bf16.msra.mxu0 0
  %1470 = vmatprep.mubr.bf16.mxu0 0
  %1471 = vmatmul.mubr.bf16.gmra.mrb[0].mxu0 %v1373
  %v1472 = vpop.f32.mrb[0].mxu0
  %v1473 = vadd.f32 %v1119, %v1472
  %v1474 = vpop.f32.mrb[0].mxu0
  %v1475 = vpop.f32.mrb[0].mxu0
  %v1476 = vadd.f32 %v1122, %v1475
  %v1477 = vpop.f32.mrb[0].mxu0
  %1478 = vmatprep.mubr.bf16.mxu0 0
  %1479 = vmatmul.mubr.bf16.gmra.mrb[0].mxu0 %v1375
  %v1480 = vpop.f32.mrb[0].mxu0
  %v1481 = vadd.f32 %v1127, %v1480
  %v1482 = vpop.f32.mrb[0].mxu0
  %v1483 = vpop.f32.mrb[0].mxu0
  %v1484 = vadd.f32 %v1130, %v1483
  %v1485 = vpop.f32.mrb[0].mxu0
  %1486 = vmatprep.mubr.bf16.mxu0 0
  %1487 = vmatmul.mubr.bf16.gmra.mrb[0].mxu0 %v1377
  %v1488 = vpop.f32.mrb[0].mxu0
  %v1489 = vadd.f32 %v1135, %v1488
  %v1490 = vpop.f32.mrb[0].mxu0
  %v1491 = vpop.f32.mrb[0].mxu0
  %v1492 = vadd.f32 %v1138, %v1491
  %v1493 = vpop.f32.mrb[0].mxu0
  %1494 = vmatprep.mubr.bf16.mxu0 0
  %1495 = vmatmul.mubr.bf16.gmra.mrb[0].mxu0 %v1379
  %v1496 = vpop.f32.mrb[0].mxu0
  %v1497 = vadd.f32 %v1143, %v1496
  %v1498 = vpop.f32.mrb[0].mxu0
  %v1499 = vpop.f32.mrb[0].mxu0
  %v1500 = vadd.f32 %v1146, %v1499
  %v1501 = vpop.f32.mrb[0].mxu0
  %1502 = vmatprep.mubr.bf16.mxu0 0
  %1503 = vmatmul.mubr.bf16.gmra.mrb[0].mxu0 %v1381
  %v1504 = vpop.f32.mrb[0].mxu0
  %v1505 = vadd.f32 %v1151, %v1504
  %v1506 = vpop.f32.mrb[0].mxu0
  %v1507 = vpop.f32.mrb[0].mxu0
  %v1508 = vadd.f32 %v1154, %v1507
  %v1509 = vpop.f32.mrb[0].mxu0
  %1510 = vmatprep.mubr.bf16.mxu0 0
  %1511 = vmatmul.mubr.bf16.gmra.mrb[0].mxu0 %v1383
  %v1512 = vpop.f32.mrb[0].mxu0
  %v1513 = vadd.f32 %v1159, %v1512
  %v1514 = vpop.f32.mrb[0].mxu0
  %v1515 = vpop.f32.mrb[0].mxu0
  %v1516 = vadd.f32 %v1162, %v1515
  %v1517 = vpop.f32.mrb[0].mxu0
  %1518 = vmatprep.mubr.bf16.mxu0 0
  %1519 = vmatmul.mubr.bf16.gmra.mrb[0].mxu0 %v1385
  %v1520 = vpop.f32.mrb[0].mxu0
  %v1521 = vadd.f32 %v1167, %v1520
  %v1522 = vpop.f32.mrb[0].mxu0
  %v1523 = vpop.f32.mrb[0].mxu0
  %v1524 = vadd.f32 %v1170, %v1523
  %v1525 = vpop.f32.mrb[0].mxu0
  %1526 = vmatprep.mubr.bf16.mxu0 0
  %1527 = vmatmul.mubr.bf16.gmra.mrb[0].mxu0 %v1387
  %v1528 = vpop.f32.mrb[0].mxu0
  %v1529 = vadd.f32 %v1175, %v1528
  %v1530 = vpop.f32.mrb[0].mxu0
  %v1531 = vpop.f32.mrb[0].mxu0
  %v1532 = vadd.f32 %v1178, %v1531
  %v1533 = vpop.f32.mrb[0].mxu0
  %1534 = vmatprep.mubr.bf16.mxu0 0
  %1535 = vmatmul.mubr.bf16.gmra.mrb[0].mxu0 %v1389
  %v1536 = vpop.f32.mrb[0].mxu0
  %v1537 = vadd.f32 %v1183, %v1536
  %v1538 = vpop.f32.mrb[0].mxu0
  %v1539 = vpop.f32.mrb[0].mxu0
  %v1540 = vadd.f32 %v1186, %v1539
  %v1541 = vpop.f32.mrb[0].mxu0
  %1542 = vmatprep.mubr.bf16.mxu0 0
  %1543 = vmatmul.mubr.bf16.gmra.mrb[0].mxu0 %v1391
  %v1544 = vpop.f32.mrb[0].mxu0
  %v1545 = vadd.f32 %v1191, %v1544
  %v1546 = vpop.f32.mrb[0].mxu0
  %v1547 = vpop.f32.mrb[0].mxu0
  %v1548 = vadd.f32 %v1194, %v1547
  %v1549 = vpop.f32.mrb[0].mxu0
  %1550 = vmatprep.mubr.bf16.mxu0 0
  %1551 = vmatmul.mubr.bf16.gmra.mrb[0].mxu0 %v1393
  %v1552 = vpop.f32.mrb[0].mxu0
  %v1553 = vadd.f32 %v1199, %v1552
  %v1554 = vpop.f32.mrb[0].mxu0
  %v1555 = vpop.f32.mrb[0].mxu0
  %v1556 = vadd.f32 %v1202, %v1555
  %v1557 = vpop.f32.mrb[0].mxu0
  %1558 = vmatprep.mubr.bf16.mxu0 0
  %1559 = vmatmul.mubr.bf16.gmra.mrb[0].mxu0 %v1395
  %v1560 = vpop.f32.mrb[0].mxu0
  %v1561 = vadd.f32 %v1207, %v1560
  %v1562 = vpop.f32.mrb[0].mxu0
  %v1563 = vpop.f32.mrb[0].mxu0
  %v1564 = vadd.f32 %v1210, %v1563
  %v1565 = vpop.f32.mrb[0].mxu0
  %1566 = vmatprep.mubr.bf16.mxu0 0
  %1567 = vmatmul.mubr.bf16.gmra.mrb[0].mxu0 %v1397
  %v1568 = vpop.f32.mrb[0].mxu0
  %v1569 = vadd.f32 %v1215, %v1568
  %v1570 = vpop.f32.mrb[0].mxu0
  %v1571 = vpop.f32.mrb[0].mxu0
  %v1572 = vadd.f32 %v1218, %v1571
  %v1573 = vpop.f32.mrb[0].mxu0
  %1574 = vmatprep.mubr.bf16.mxu0 0
  %1575 = vmatmul.mubr.bf16.gmra.mrb[0].mxu0 %v1399
  %v1576 = vpop.f32.mrb[0].mxu0
  %v1577 = vadd.f32 %v1223, %v1576
  %v1578 = vpop.f32.mrb[0].mxu0
  %v1579 = vpop.f32.mrb[0].mxu0
  %v1580 = vadd.f32 %v1226, %v1579
  %v1581 = vpop.f32.mrb[0].mxu0
  %1582 = vmatprep.mubr.bf16.mxu0 0
  %1583 = vmatmul.mubr.bf16.gmra.mrb[0].mxu0 %v1401
  %v1584 = vpop.f32.mrb[0].mxu0
  %v1585 = vadd.f32 %v1231, %v1584
  %v1586 = vpop.f32.mrb[0].mxu0
  %v1587 = vpop.f32.mrb[0].mxu0
  %v1588 = vadd.f32 %v1234, %v1587
  %v1589 = vpop.f32.mrb[0].mxu0
  %1590 = vmatprep.mubr.bf16.mxu0 0
  %1591 = vmatmul.mubr.bf16.gmra.mrb[0].mxu0 %v1403
  %v1592 = vpop.f32.mrb[0].mxu0
  %v1593 = vadd.f32 %v1239, %v1592
  %v1594 = vpop.f32.mrb[0].mxu0
  %v1595 = vpop.f32.mrb[0].mxu0
  %v1596 = vadd.f32 %v1242, %v1595
  %v1597 = vpop.f32.mrb[0].mxu0
  %1598 = vmatprep.mubr.bf16.mxu0 0
  %1599 = vmatmul.mubr.bf16.gmra.mrb[0].mxu0 %v1373
  %v1600 = vpop.f32.mrb[0].mxu0
  %v1601 = vadd.f32 %v1247, %v1600
  %v1602 = vpop.f32.mrb[0].mxu0
  %v1603 = vpop.f32.mrb[0].mxu0
  %v1604 = vadd.f32 %v1250, %v1603
  %v1605 = vpop.f32.mrb[0].mxu0
  %1606 = vmatprep.mubr.bf16.mxu0 0
  %1607 = vmatmul.mubr.bf16.gmra.mrb[0].mxu0 %v1405
  %v1608 = vpop.f32.mrb[0].mxu0
  %v1609 = vadd.f32 %v1255, %v1608
  %v1610 = vpop.f32.mrb[0].mxu0
  %v1611 = vpop.f32.mrb[0].mxu0
  %v1612 = vadd.f32 %v1258, %v1611
  %v1613 = vpop.f32.mrb[0].mxu0
  %1614 = vmatprep.mubr.bf16.mxu0 0
  %1615 = vmatmul.mubr.bf16.gmra.mrb[0].mxu0 %v1407
  %v1616 = vpop.f32.mrb[0].mxu0
  %v1617 = vadd.f32 %v1263, %v1616
  %v1618 = vpop.f32.mrb[0].mxu0
  %v1619 = vpop.f32.mrb[0].mxu0
  %v1620 = vadd.f32 %v1266, %v1619
  %v1621 = vpop.f32.mrb[0].mxu0
  %1622 = vmatprep.mubr.bf16.mxu0 0
  %1623 = vmatmul.mubr.bf16.gmra.mrb[0].mxu0 %v1409
  %v1624 = vpop.f32.mrb[0].mxu0
  %v1625 = vadd.f32 %v1271, %v1624
  %v1626 = vpop.f32.mrb[0].mxu0
  %v1627 = vpop.f32.mrb[0].mxu0
  %v1628 = vadd.f32 %v1274, %v1627
  %v1629 = vpop.f32.mrb[0].mxu0
  %1630 = vmatprep.mubr.bf16.mxu0 0
  %1631 = vmatmul.mubr.bf16.gmra.mrb[0].mxu0 %v1411
  %v1632 = vpop.f32.mrb[0].mxu0
  %v1633 = vadd.f32 %v1279, %v1632
  %v1634 = vpop.f32.mrb[0].mxu0
  %v1635 = vpop.f32.mrb[0].mxu0
  %v1636 = vadd.f32 %v1282, %v1635
  %v1637 = vpop.f32.mrb[0].mxu0
  %1638 = vmatprep.mubr.bf16.mxu0 0
  %1639 = vmatmul.mubr.bf16.gmra.mrb[0].mxu0 %v1413
  %v1640 = vpop.f32.mrb[0].mxu0
  %v1641 = vadd.f32 %v1287, %v1640
  %v1642 = vpop.f32.mrb[0].mxu0
  %v1643 = vpop.f32.mrb[0].mxu0
  %v1644 = vadd.f32 %v1290, %v1643
  %v1645 = vpop.f32.mrb[0].mxu0
  %1646 = vmatprep.mubr.bf16.mxu0 0
  %1647 = vmatmul.mubr.bf16.gmra.mrb[0].mxu0 %v1415
  %v1648 = vpop.f32.mrb[0].mxu0
  %v1649 = vadd.f32 %v1295, %v1648
  %v1650 = vpop.f32.mrb[0].mxu0
  %v1651 = vpop.f32.mrb[0].mxu0
  %v1652 = vadd.f32 %v1298, %v1651
  %v1653 = vpop.f32.mrb[0].mxu0
  %1654 = vmatprep.mubr.bf16.mxu0 0
  %1655 = vmatmul.mubr.bf16.gmra.mrb[0].mxu0 %v1417
  %v1656 = vpop.f32.mrb[0].mxu0
  %v1657 = vadd.f32 %v1303, %v1656
  %v1658 = vpop.f32.mrb[0].mxu0
  %v1659 = vpop.f32.mrb[0].mxu0
  %v1660 = vadd.f32 %v1306, %v1659
  %v1661 = vpop.f32.mrb[0].mxu0
  %1662 = vmatprep.mubr.bf16.mxu0 0
  %1663 = vmatmul.mubr.bf16.gmra.mrb[0].mxu0 %v1419
  %v1664 = vpop.f32.mrb[0].mxu0
  %v1665 = vadd.f32 %v1311, %v1664
  %v1666 = vpop.f32.mrb[0].mxu0
  %v1667 = vpop.f32.mrb[0].mxu0
  %v1668 = vadd.f32 %v1314, %v1667
  %v1669 = vpop.f32.mrb[0].mxu0
  %1670 = vmatprep.mubr.bf16.mxu0 0
  %1671 = vmatmul.mubr.bf16.gmra.mrb[0].mxu0 %v1421
  %v1672 = vpop.f32.mrb[0].mxu0
  %v1673 = vadd.f32 %v1319, %v1672
  %v1674 = vpop.f32.mrb[0].mxu0
  %v1675 = vpop.f32.mrb[0].mxu0
  %v1676 = vadd.f32 %v1322, %v1675
  %v1677 = vpop.f32.mrb[0].mxu0
  %1678 = vmatprep.mubr.bf16.mxu0 0
  %1679 = vmatmul.mubr.bf16.gmra.mrb[0].mxu0 %v1423
  %v1680 = vpop.f32.mrb[0].mxu0
  %v1681 = vadd.f32 %v1327, %v1680
  %v1682 = vpop.f32.mrb[0].mxu0
  %v1683 = vpop.f32.mrb[0].mxu0
  %v1684 = vadd.f32 %v1330, %v1683
  %v1685 = vpop.f32.mrb[0].mxu0
  %1686 = vmatprep.mubr.bf16.mxu0 0
  %1687 = vmatmul.mubr.bf16.gmra.mrb[0].mxu0 %v1425
  %v1688 = vpop.f32.mrb[0].mxu0
  %v1689 = vadd.f32 %v1335, %v1688
  %v1690 = vpop.f32.mrb[0].mxu0
  %v1691 = vpop.f32.mrb[0].mxu0
  %v1692 = vadd.f32 %v1338, %v1691
  %v1693 = vpop.f32.mrb[0].mxu0
  %1694 = vmatprep.mubr.bf16.mxu0 0
  %1695 = vmatmul.mubr.bf16.gmra.mrb[0].mxu0 %v1427
  %v1696 = vpop.f32.mrb[0].mxu0
  %v1697 = vadd.f32 %v1343, %v1696
  %v1698 = vpop.f32.mrb[0].mxu0
  %v1699 = vpop.f32.mrb[0].mxu0
  %v1700 = vadd.f32 %v1346, %v1699
  %v1701 = vpop.f32.mrb[0].mxu0
  %1702 = vmatprep.mubr.bf16.mxu0 0
  %1703 = vmatmul.mubr.bf16.gmra.mrb[0].mxu0 %v1429
  %v1704 = vpop.f32.mrb[0].mxu0
  %v1705 = vadd.f32 %v1351, %v1704
  %v1706 = vpop.f32.mrb[0].mxu0
  %v1707 = vpop.f32.mrb[0].mxu0
  %v1708 = vadd.f32 %v1354, %v1707
  %v1709 = vpop.f32.mrb[0].mxu0
  %1710 = vmatprep.mubr.bf16.mxu0 0
  %1711 = vmatmul.mubr.bf16.gmra.mrb[0].mxu0 %v1431
  %v1712 = vpop.f32.mrb[0].mxu0
  %v1713 = vadd.f32 %v1359, %v1712
  %v1714 = vpop.f32.mrb[0].mxu0
  %v1715 = vpop.f32.mrb[0].mxu0
  %v1716 = vadd.f32 %v1362, %v1715
  %v1717 = vpop.f32.mrb[0].mxu0
  %1718 = vmatprep.mubr.bf16.mxu0 0
  %1719 = vmatmul.mubr.bf16.gmra.mrb[0].mxu0 %v1433
  %v1720 = vpop.f32.mrb[0].mxu0
  %v1721 = vadd.f32 %v1367, %v1720
  %v1722 = vpop.f32.mrb[0].mxu0
  %v1723 = vpop.f32.mrb[0].mxu0
  %v1724 = vadd.f32 %v1370, %v1723
  %v1725 = vpop.f32.mrb[0].mxu0
  %1726 = vdwg.mxu0
  %vm1789 = vcmask 1046528
  %v1790 = vrot.slane %v547, 1
  %v1791 = vrot.slane %v580, 1
  %v1792 = vsel %vm1789, %v1790, %v1791
  %v1793 = vrot.slane %v548, 1
  %v1794 = vrot.slane %v581, 1
  %v1795 = vsel %vm1789, %v1793, %v1794
  %v1796 = vrot.slane %v549, 1
  %v1797 = vrot.slane %v582, 1
  %v1798 = vsel %vm1789, %v1796, %v1797
  %v1799 = vrot.slane %v550, 1
  %v1800 = vrot.slane %v583, 1
  %v1801 = vsel %vm1789, %v1799, %v1800
  %v1802 = vrot.slane %v551, 1
  %v1803 = vrot.slane %v584, 1
  %v1804 = vsel %vm1789, %v1802, %v1803
  %v1805 = vrot.slane %v552, 1
  %v1806 = vrot.slane %v585, 1
  %v1807 = vsel %vm1789, %v1805, %v1806
  %v1808 = vrot.slane %v553, 1
  %v1809 = vrot.slane %v586, 1
  %v1810 = vsel %vm1789, %v1808, %v1809
  %v1811 = vrot.slane %v554, 1
  %v1812 = vrot.slane %v587, 1
  %v1813 = vsel %vm1789, %v1811, %v1812
  %v1814 = vrot.slane %v555, 1
  %v1815 = vrot.slane %v588, 1
  %v1816 = vsel %vm1789, %v1814, %v1815
  %v1817 = vrot.slane %v556, 1
  %v1818 = vrot.slane %v589, 1
  %v1819 = vsel %vm1789, %v1817, %v1818
  %v1820 = vrot.slane %v557, 1
  %v1821 = vrot.slane %v590, 1
  %v1822 = vsel %vm1789, %v1820, %v1821
  %v1823 = vrot.slane %v558, 1
  %v1824 = vrot.slane %v591, 1
  %v1825 = vsel %vm1789, %v1823, %v1824
  %v1826 = vrot.slane %v559, 1
  %v1827 = vrot.slane %v592, 1
  %v1828 = vsel %vm1789, %v1826, %v1827
  %v1829 = vrot.slane %v560, 1
  %v1830 = vrot.slane %v593, 1
  %v1831 = vsel %vm1789, %v1829, %v1830
  %v1832 = vrot.slane %v561, 1
  %v1833 = vrot.slane %v594, 1
  %v1834 = vsel %vm1789, %v1832, %v1833
  %v1835 = vrot.slane %v562, 1
  %v1836 = vrot.slane %v595, 1
  %v1837 = vsel %vm1789, %v1835, %v1836
  %v1838 = vrot.slane %v564, 1
  %v1839 = vrot.slane %v597, 1
  %v1840 = vsel %vm1789, %v1838, %v1839
  %v1841 = vrot.slane %v565, 1
  %v1842 = vrot.slane %v598, 1
  %v1843 = vsel %vm1789, %v1841, %v1842
  %v1844 = vrot.slane %v566, 1
  %v1845 = vrot.slane %v599, 1
  %v1846 = vsel %vm1789, %v1844, %v1845
  %v1847 = vrot.slane %v567, 1
  %v1848 = vrot.slane %v600, 1
  %v1849 = vsel %vm1789, %v1847, %v1848
  %v1850 = vrot.slane %v568, 1
  %v1851 = vrot.slane %v601, 1
  %v1852 = vsel %vm1789, %v1850, %v1851
  %v1853 = vrot.slane %v569, 1
  %v1854 = vrot.slane %v602, 1
  %v1855 = vsel %vm1789, %v1853, %v1854
  %v1856 = vrot.slane %v570, 1
  %v1857 = vrot.slane %v603, 1
  %v1858 = vsel %vm1789, %v1856, %v1857
  %v1859 = vrot.slane %v571, 1
  %v1860 = vrot.slane %v604, 1
  %v1861 = vsel %vm1789, %v1859, %v1860
  %v1862 = vrot.slane %v572, 1
  %v1863 = vrot.slane %v605, 1
  %v1864 = vsel %vm1789, %v1862, %v1863
  %v1865 = vrot.slane %v573, 1
  %v1866 = vrot.slane %v606, 1
  %v1867 = vsel %vm1789, %v1865, %v1866
  %v1868 = vrot.slane %v574, 1
  %v1869 = vrot.slane %v607, 1
  %v1870 = vsel %vm1789, %v1868, %v1869
  %v1871 = vrot.slane %v575, 1
  %v1872 = vrot.slane %v608, 1
  %v1873 = vsel %vm1789, %v1871, %v1872
  %v1874 = vrot.slane %v576, 1
  %v1875 = vrot.slane %v609, 1
  %v1876 = vsel %vm1789, %v1874, %v1875
  %v1877 = vrot.slane %v577, 1
  %v1878 = vrot.slane %v610, 1
  %v1879 = vsel %vm1789, %v1877, %v1878
  %v1880 = vrot.slane %v578, 1
  %v1881 = vrot.slane %v611, 1
  %v1882 = vsel %vm1789, %v1880, %v1881
  %v1884 = vsel %vm986, %v1792, 0
  %v1887 = vsel %vm986, %v1795, 0
  %v1890 = vsel %vm986, %v1798, 0
  %v1893 = vsel %vm986, %v1801, 0
  %v1896 = vsel %vm986, %v1804, 0
  %v1899 = vsel %vm986, %v1807, 0
  %v1902 = vsel %vm986, %v1810, 0
  %v1905 = vsel %vm986, %v1813, 0
  %v1908 = vsel %vm986, %v1816, 0
  %v1911 = vsel %vm986, %v1819, 0
  %v1914 = vsel %vm986, %v1822, 0
  %v1917 = vsel %vm986, %v1825, 0
  %v1920 = vsel %vm986, %v1828, 0
  %v1923 = vsel %vm986, %v1831, 0
  %v1926 = vsel %vm986, %v1834, 0
  %v1929 = vsel %vm986, %v1837, 0
  %v1932 = vsel %vm986, %v1840, 0
  %v1935 = vsel %vm986, %v1843, 0
  %v1938 = vsel %vm986, %v1846, 0
  %v1941 = vsel %vm986, %v1849, 0
  %v1944 = vsel %vm986, %v1852, 0
  %v1947 = vsel %vm986, %v1855, 0
  %v1950 = vsel %vm986, %v1858, 0
  %v1953 = vsel %vm986, %v1861, 0
  %v1956 = vsel %vm986, %v1864, 0
  %v1959 = vsel %vm986, %v1867, 0
  %v1962 = vsel %vm986, %v1870, 0
  %v1965 = vsel %vm986, %v1873, 0
  %v1968 = vsel %vm986, %v1876, 0
  %v1971 = vsel %vm986, %v1879, 0
  %v1974 = vsel %vm986, %v1882, 0
  %v1977 = vsel %vm1080, %v80, 0
  %1979 = vmatprep.subr.bf16.mxu0 0
  %1980 = vmatpush1.bf16.msra.mxu0 %v1977
  %1981 = vmatprep.subr.bf16.mxu0 0
  %1982 = vmatpush1.bf16.msra.mxu0 0
  %1983 = vmatprep.subr.bf16.mxu0 0
  %1984 = vmatpush1.bf16.msra.mxu0 0
  %1985 = vmatprep.subr.bf16.mxu0 0
  %1986 = vmatpush1.bf16.msra.mxu0 0
  %1987 = vmatprep.subr.bf16.mxu0 0
  %1988 = vmatpush1.bf16.msra.mxu0 0
  %1989 = vmatprep.subr.bf16.mxu0 0
  %1990 = vmatpush1.bf16.msra.mxu0 0
  %1991 = vmatprep.subr.bf16.mxu0 0
  %1992 = vmatpush1.bf16.msra.mxu0 0
  %1993 = vmatprep.subr.bf16.mxu0 0
  %1994 = vmatpush1.bf16.msra.mxu0 0
  %1995 = vmatprep.subr.bf16.mxu0 0
  %1996 = vmatpush1.bf16.msra.mxu0 0
  %1997 = vmatprep.subr.bf16.mxu0 0
  %1998 = vmatpush1.bf16.msra.mxu0 0
  %1999 = vmatprep.subr.bf16.mxu0 0
  %2000 = vmatpush1.bf16.msra.mxu0 0
  %2001 = vmatprep.subr.bf16.mxu0 0
  %2002 = vmatpush1.bf16.msra.mxu0 0
  %2003 = vmatprep.subr.bf16.mxu0 0
  %2004 = vmatpush1.bf16.msra.mxu0 0
  %2005 = vmatprep.subr.bf16.mxu0 0
  %2006 = vmatpush1.bf16.msra.mxu0 0
  %2007 = vmatprep.subr.bf16.mxu0 0
  %2008 = vmatpush1.bf16.msra.mxu0 0
  %2009 = vmatprep.subr.bf16.mxu0 0
  %2010 = vmatpush1.bf16.msra.mxu0 0
  %2011 = vmatprep.mubr.bf16.mxu0 0
  %2012 = vmatmul.mubr.bf16.gmra.mrb[0].mxu0 %v1884
  %v2013 = vpop.f32.mrb[0].mxu0
  %v2014 = vadd.f32 0.0, %v2013
  %v2015 = vpop.f32.mrb[0].mxu0
  %v2016 = vpop.f32.mrb[0].mxu0
  %v2017 = vadd.f32 0.0, %v2016
  %v2018 = vpop.f32.mrb[0].mxu0
  %2019 = vmatprep.mubr.bf16.mxu0 0
  %2020 = vmatmul.mubr.bf16.gmra.mrb[0].mxu0 %v1887
  %v2021 = vpop.f32.mrb[0].mxu0
  %v2022 = vadd.f32 0.0, %v2021
  %v2023 = vpop.f32.mrb[0].mxu0
  %v2024 = vpop.f32.mrb[0].mxu0
  %v2025 = vadd.f32 0.0, %v2024
  %v2026 = vpop.f32.mrb[0].mxu0
  %2027 = vmatprep.mubr.bf16.mxu0 0
  %2028 = vmatmul.mubr.bf16.gmra.mrb[0].mxu0 %v1890
  %v2029 = vpop.f32.mrb[0].mxu0
  %v2030 = vadd.f32 0.0, %v2029
  %v2031 = vpop.f32.mrb[0].mxu0
  %v2032 = vpop.f32.mrb[0].mxu0
  %v2033 = vadd.f32 0.0, %v2032
  %v2034 = vpop.f32.mrb[0].mxu0
  %2035 = vmatprep.mubr.bf16.mxu0 0
  %2036 = vmatmul.mubr.bf16.gmra.mrb[0].mxu0 %v1893
  %v2037 = vpop.f32.mrb[0].mxu0
  %v2038 = vadd.f32 0.0, %v2037
  %v2039 = vpop.f32.mrb[0].mxu0
  %v2040 = vpop.f32.mrb[0].mxu0
  %v2041 = vadd.f32 0.0, %v2040
  %v2042 = vpop.f32.mrb[0].mxu0
  %2043 = vmatprep.mubr.bf16.mxu0 0
  %2044 = vmatmul.mubr.bf16.gmra.mrb[0].mxu0 %v1896
  %v2045 = vpop.f32.mrb[0].mxu0
  %v2046 = vadd.f32 0.0, %v2045
  %v2047 = vpop.f32.mrb[0].mxu0
  %v2048 = vpop.f32.mrb[0].mxu0
  %v2049 = vadd.f32 0.0, %v2048
  %v2050 = vpop.f32.mrb[0].mxu0
  %2051 = vmatprep.mubr.bf16.mxu0 0
  %2052 = vmatmul.mubr.bf16.gmra.mrb[0].mxu0 %v1899
  %v2053 = vpop.f32.mrb[0].mxu0
  %v2054 = vadd.f32 0.0, %v2053
  %v2055 = vpop.f32.mrb[0].mxu0
  %v2056 = vpop.f32.mrb[0].mxu0
  %v2057 = vadd.f32 0.0, %v2056
  %v2058 = vpop.f32.mrb[0].mxu0
  %2059 = vmatprep.mubr.bf16.mxu0 0
  %2060 = vmatmul.mubr.bf16.gmra.mrb[0].mxu0 %v1902
  %v2061 = vpop.f32.mrb[0].mxu0
  %v2062 = vadd.f32 0.0, %v2061
  %v2063 = vpop.f32.mrb[0].mxu0
  %v2064 = vpop.f32.mrb[0].mxu0
  %v2065 = vadd.f32 0.0, %v2064
  %v2066 = vpop.f32.mrb[0].mxu0
  %2067 = vmatprep.mubr.bf16.mxu0 0
  %2068 = vmatmul.mubr.bf16.gmra.mrb[0].mxu0 %v1905
  %v2069 = vpop.f32.mrb[0].mxu0
  %v2070 = vadd.f32 0.0, %v2069
  %v2071 = vpop.f32.mrb[0].mxu0
  %v2072 = vpop.f32.mrb[0].mxu0
  %v2073 = vadd.f32 0.0, %v2072
  %v2074 = vpop.f32.mrb[0].mxu0
  %2075 = vmatprep.mubr.bf16.mxu0 0
  %2076 = vmatmul.mubr.bf16.gmra.mrb[0].mxu0 %v1908
  %v2077 = vpop.f32.mrb[0].mxu0
  %v2078 = vadd.f32 0.0, %v2077
  %v2079 = vpop.f32.mrb[0].mxu0
  %v2080 = vpop.f32.mrb[0].mxu0
  %v2081 = vadd.f32 0.0, %v2080
  %v2082 = vpop.f32.mrb[0].mxu0
  %2083 = vmatprep.mubr.bf16.mxu0 0
  %2084 = vmatmul.mubr.bf16.gmra.mrb[0].mxu0 %v1911
  %v2085 = vpop.f32.mrb[0].mxu0
  %v2086 = vadd.f32 0.0, %v2085
  %v2087 = vpop.f32.mrb[0].mxu0
  %v2088 = vpop.f32.mrb[0].mxu0
  %v2089 = vadd.f32 0.0, %v2088
  %v2090 = vpop.f32.mrb[0].mxu0
  %2091 = vmatprep.mubr.bf16.mxu0 0
  %2092 = vmatmul.mubr.bf16.gmra.mrb[0].mxu0 %v1914
  %v2093 = vpop.f32.mrb[0].mxu0
  %v2094 = vadd.f32 0.0, %v2093
  %v2095 = vpop.f32.mrb[0].mxu0
  %v2096 = vpop.f32.mrb[0].mxu0
  %v2097 = vadd.f32 0.0, %v2096
  %v2098 = vpop.f32.mrb[0].mxu0
  %2099 = vmatprep.mubr.bf16.mxu0 0
  %2100 = vmatmul.mubr.bf16.gmra.mrb[0].mxu0 %v1917
  %v2101 = vpop.f32.mrb[0].mxu0
  %v2102 = vadd.f32 0.0, %v2101
  %v2103 = vpop.f32.mrb[0].mxu0
  %v2104 = vpop.f32.mrb[0].mxu0
  %v2105 = vadd.f32 0.0, %v2104
  %v2106 = vpop.f32.mrb[0].mxu0
  %2107 = vmatprep.mubr.bf16.mxu0 0
  %2108 = vmatmul.mubr.bf16.gmra.mrb[0].mxu0 %v1920
  %v2109 = vpop.f32.mrb[0].mxu0
  %v2110 = vadd.f32 0.0, %v2109
  %v2111 = vpop.f32.mrb[0].mxu0
  %v2112 = vpop.f32.mrb[0].mxu0
  %v2113 = vadd.f32 0.0, %v2112
  %v2114 = vpop.f32.mrb[0].mxu0
  %2115 = vmatprep.mubr.bf16.mxu0 0
  %2116 = vmatmul.mubr.bf16.gmra.mrb[0].mxu0 %v1923
  %v2117 = vpop.f32.mrb[0].mxu0
  %v2118 = vadd.f32 0.0, %v2117
  %v2119 = vpop.f32.mrb[0].mxu0
  %v2120 = vpop.f32.mrb[0].mxu0
  %v2121 = vadd.f32 0.0, %v2120
  %v2122 = vpop.f32.mrb[0].mxu0
  %2123 = vmatprep.mubr.bf16.mxu0 0
  %2124 = vmatmul.mubr.bf16.gmra.mrb[0].mxu0 %v1926
  %v2125 = vpop.f32.mrb[0].mxu0
  %v2126 = vadd.f32 0.0, %v2125
  %v2127 = vpop.f32.mrb[0].mxu0
  %v2128 = vpop.f32.mrb[0].mxu0
  %v2129 = vadd.f32 0.0, %v2128
  %v2130 = vpop.f32.mrb[0].mxu0
  %2131 = vmatprep.mubr.bf16.mxu0 0
  %2132 = vmatmul.mubr.bf16.gmra.mrb[0].mxu0 %v1929
  %v2133 = vpop.f32.mrb[0].mxu0
  %v2134 = vadd.f32 0.0, %v2133
  %v2135 = vpop.f32.mrb[0].mxu0
  %v2136 = vpop.f32.mrb[0].mxu0
  %v2137 = vadd.f32 0.0, %v2136
  %v2138 = vpop.f32.mrb[0].mxu0
  %2139 = vmatprep.mubr.bf16.mxu0 0
  %2140 = vmatmul.mubr.bf16.gmra.mrb[0].mxu0 %v1884
  %v2141 = vpop.f32.mrb[0].mxu0
  %v2142 = vadd.f32 0.0, %v2141
  %v2143 = vpop.f32.mrb[0].mxu0
  %v2144 = vpop.f32.mrb[0].mxu0
  %v2145 = vadd.f32 0.0, %v2144
  %v2146 = vpop.f32.mrb[0].mxu0
  %2147 = vmatprep.mubr.bf16.mxu0 0
  %2148 = vmatmul.mubr.bf16.gmra.mrb[0].mxu0 %v1932
  %v2149 = vpop.f32.mrb[0].mxu0
  %v2150 = vadd.f32 0.0, %v2149
  %v2151 = vpop.f32.mrb[0].mxu0
  %v2152 = vpop.f32.mrb[0].mxu0
  %v2153 = vadd.f32 0.0, %v2152
  %v2154 = vpop.f32.mrb[0].mxu0
  %2155 = vmatprep.mubr.bf16.mxu0 0
  %2156 = vmatmul.mubr.bf16.gmra.mrb[0].mxu0 %v1935
  %v2157 = vpop.f32.mrb[0].mxu0
  %v2158 = vadd.f32 0.0, %v2157
  %v2159 = vpop.f32.mrb[0].mxu0
  %v2160 = vpop.f32.mrb[0].mxu0
  %v2161 = vadd.f32 0.0, %v2160
  %v2162 = vpop.f32.mrb[0].mxu0
  %2163 = vmatprep.mubr.bf16.mxu0 0
  %2164 = vmatmul.mubr.bf16.gmra.mrb[0].mxu0 %v1938
  %v2165 = vpop.f32.mrb[0].mxu0
  %v2166 = vadd.f32 0.0, %v2165
  %v2167 = vpop.f32.mrb[0].mxu0
  %v2168 = vpop.f32.mrb[0].mxu0
  %v2169 = vadd.f32 0.0, %v2168
  %v2170 = vpop.f32.mrb[0].mxu0
  %2171 = vmatprep.mubr.bf16.mxu0 0
  %2172 = vmatmul.mubr.bf16.gmra.mrb[0].mxu0 %v1941
  %v2173 = vpop.f32.mrb[0].mxu0
  %v2174 = vadd.f32 0.0, %v2173
  %v2175 = vpop.f32.mrb[0].mxu0
  %v2176 = vpop.f32.mrb[0].mxu0
  %v2177 = vadd.f32 0.0, %v2176
  %v2178 = vpop.f32.mrb[0].mxu0
  %2179 = vmatprep.mubr.bf16.mxu0 0
  %2180 = vmatmul.mubr.bf16.gmra.mrb[0].mxu0 %v1944
  %v2181 = vpop.f32.mrb[0].mxu0
  %v2182 = vadd.f32 0.0, %v2181
  %v2183 = vpop.f32.mrb[0].mxu0
  %v2184 = vpop.f32.mrb[0].mxu0
  %v2185 = vadd.f32 0.0, %v2184
  %v2186 = vpop.f32.mrb[0].mxu0
  %2187 = vmatprep.mubr.bf16.mxu0 0
  %2188 = vmatmul.mubr.bf16.gmra.mrb[0].mxu0 %v1947
  %v2189 = vpop.f32.mrb[0].mxu0
  %v2190 = vadd.f32 0.0, %v2189
  %v2191 = vpop.f32.mrb[0].mxu0
  %v2192 = vpop.f32.mrb[0].mxu0
  %v2193 = vadd.f32 0.0, %v2192
  %v2194 = vpop.f32.mrb[0].mxu0
  %2195 = vmatprep.mubr.bf16.mxu0 0
  %2196 = vmatmul.mubr.bf16.gmra.mrb[0].mxu0 %v1950
  %v2197 = vpop.f32.mrb[0].mxu0
  %v2198 = vadd.f32 0.0, %v2197
  %v2199 = vpop.f32.mrb[0].mxu0
  %v2200 = vpop.f32.mrb[0].mxu0
  %v2201 = vadd.f32 0.0, %v2200
  %v2202 = vpop.f32.mrb[0].mxu0
  %2203 = vmatprep.mubr.bf16.mxu0 0
  %2204 = vmatmul.mubr.bf16.gmra.mrb[0].mxu0 %v1953
  %v2205 = vpop.f32.mrb[0].mxu0
  %v2206 = vadd.f32 0.0, %v2205
  %v2207 = vpop.f32.mrb[0].mxu0
  %v2208 = vpop.f32.mrb[0].mxu0
  %v2209 = vadd.f32 0.0, %v2208
  %v2210 = vpop.f32.mrb[0].mxu0
  %2211 = vmatprep.mubr.bf16.mxu0 0
  %2212 = vmatmul.mubr.bf16.gmra.mrb[0].mxu0 %v1956
  %v2213 = vpop.f32.mrb[0].mxu0
  %v2214 = vadd.f32 0.0, %v2213
  %v2215 = vpop.f32.mrb[0].mxu0
  %v2216 = vpop.f32.mrb[0].mxu0
  %v2217 = vadd.f32 0.0, %v2216
  %v2218 = vpop.f32.mrb[0].mxu0
  %2219 = vmatprep.mubr.bf16.mxu0 0
  %2220 = vmatmul.mubr.bf16.gmra.mrb[0].mxu0 %v1959
  %v2221 = vpop.f32.mrb[0].mxu0
  %v2222 = vadd.f32 0.0, %v2221
  %v2223 = vpop.f32.mrb[0].mxu0
  %v2224 = vpop.f32.mrb[0].mxu0
  %v2225 = vadd.f32 0.0, %v2224
  %v2226 = vpop.f32.mrb[0].mxu0
  %2227 = vmatprep.mubr.bf16.mxu0 0
  %2228 = vmatmul.mubr.bf16.gmra.mrb[0].mxu0 %v1962
  %v2229 = vpop.f32.mrb[0].mxu0
  %v2230 = vadd.f32 0.0, %v2229
  %v2231 = vpop.f32.mrb[0].mxu0
  %v2232 = vpop.f32.mrb[0].mxu0
  %v2233 = vadd.f32 0.0, %v2232
  %v2234 = vpop.f32.mrb[0].mxu0
  %2235 = vmatprep.mubr.bf16.mxu0 0
  %2236 = vmatmul.mubr.bf16.gmra.mrb[0].mxu0 %v1965
  %v2237 = vpop.f32.mrb[0].mxu0
  %v2238 = vadd.f32 0.0, %v2237
  %v2239 = vpop.f32.mrb[0].mxu0
  %v2240 = vpop.f32.mrb[0].mxu0
  %v2241 = vadd.f32 0.0, %v2240
  %v2242 = vpop.f32.mrb[0].mxu0
  %2243 = vmatprep.mubr.bf16.mxu0 0
  %2244 = vmatmul.mubr.bf16.gmra.mrb[0].mxu0 %v1968
  %v2245 = vpop.f32.mrb[0].mxu0
  %v2246 = vadd.f32 0.0, %v2245
  %v2247 = vpop.f32.mrb[0].mxu0
  %v2248 = vpop.f32.mrb[0].mxu0
  %v2249 = vadd.f32 0.0, %v2248
  %v2250 = vpop.f32.mrb[0].mxu0
  %2251 = vmatprep.mubr.bf16.mxu0 0
  %2252 = vmatmul.mubr.bf16.gmra.mrb[0].mxu0 %v1971
  %v2253 = vpop.f32.mrb[0].mxu0
  %v2254 = vadd.f32 0.0, %v2253
  %v2255 = vpop.f32.mrb[0].mxu0
  %v2256 = vpop.f32.mrb[0].mxu0
  %v2257 = vadd.f32 0.0, %v2256
  %v2258 = vpop.f32.mrb[0].mxu0
  %2259 = vmatprep.mubr.bf16.mxu0 0
  %2260 = vmatmul.mubr.bf16.gmra.mrb[0].mxu0 %v1974
  %v2261 = vpop.f32.mrb[0].mxu0
  %v2262 = vadd.f32 0.0, %v2261
  %v2263 = vpop.f32.mrb[0].mxu0
  %v2264 = vpop.f32.mrb[0].mxu0
  %v2265 = vadd.f32 0.0, %v2264
  %v2266 = vpop.f32.mrb[0].mxu0
  %2267 = vdwg.mxu0
  %v2268 = vadd.f32 %v1473, %v2014
  %v2269 = vadd.f32 %v1476, %v2017
  %v2270 = vadd.f32 %v1481, %v2022
  %v2271 = vadd.f32 %v1484, %v2025
  %v2272 = vadd.f32 %v1489, %v2030
  %v2273 = vadd.f32 %v1492, %v2033
  %v2274 = vadd.f32 %v1497, %v2038
  %v2275 = vadd.f32 %v1500, %v2041
  %v2276 = vadd.f32 %v1505, %v2046
  %v2277 = vadd.f32 %v1508, %v2049
  %v2278 = vadd.f32 %v1513, %v2054
  %v2279 = vadd.f32 %v1516, %v2057
  %v2280 = vadd.f32 %v1521, %v2062
  %v2281 = vadd.f32 %v1524, %v2065
  %v2282 = vadd.f32 %v1529, %v2070
  %v2283 = vadd.f32 %v1532, %v2073
  %v2284 = vadd.f32 %v1537, %v2078
  %v2285 = vadd.f32 %v1540, %v2081
  %v2286 = vadd.f32 %v1545, %v2086
  %v2287 = vadd.f32 %v1548, %v2089
  %v2288 = vadd.f32 %v1553, %v2094
  %v2289 = vadd.f32 %v1556, %v2097
  %v2290 = vadd.f32 %v1561, %v2102
  %v2291 = vadd.f32 %v1564, %v2105
  %v2292 = vadd.f32 %v1569, %v2110
  %v2293 = vadd.f32 %v1572, %v2113
  %v2294 = vadd.f32 %v1577, %v2118
  %v2295 = vadd.f32 %v1580, %v2121
  %v2296 = vadd.f32 %v1585, %v2126
  %v2297 = vadd.f32 %v1588, %v2129
  %v2298 = vadd.f32 %v1593, %v2134
  %v2299 = vadd.f32 %v1596, %v2137
  %v2300 = vadd.f32 %v1601, %v2142
  %v2301 = vadd.f32 %v1604, %v2145
  %v2302 = vadd.f32 %v1609, %v2150
  %v2303 = vadd.f32 %v1612, %v2153
  %v2304 = vadd.f32 %v1617, %v2158
  %v2305 = vadd.f32 %v1620, %v2161
  %v2306 = vadd.f32 %v1625, %v2166
  %v2307 = vadd.f32 %v1628, %v2169
  %v2308 = vadd.f32 %v1633, %v2174
  %v2309 = vadd.f32 %v1636, %v2177
  %v2310 = vadd.f32 %v1641, %v2182
  %v2311 = vadd.f32 %v1644, %v2185
  %v2312 = vadd.f32 %v1649, %v2190
  %v2313 = vadd.f32 %v1652, %v2193
  %v2314 = vadd.f32 %v1657, %v2198
  %v2315 = vadd.f32 %v1660, %v2201
  %v2316 = vadd.f32 %v1665, %v2206
  %v2317 = vadd.f32 %v1668, %v2209
  %v2318 = vadd.f32 %v1673, %v2214
  %v2319 = vadd.f32 %v1676, %v2217
  %v2320 = vadd.f32 %v1681, %v2222
  %v2321 = vadd.f32 %v1684, %v2225
  %v2322 = vadd.f32 %v1689, %v2230
  %v2323 = vadd.f32 %v1692, %v2233
  %v2324 = vadd.f32 %v1697, %v2238
  %v2325 = vadd.f32 %v1700, %v2241
  %v2326 = vadd.f32 %v1705, %v2246
  %v2327 = vadd.f32 %v1708, %v2249
  %v2328 = vadd.f32 %v1713, %v2254
  %v2329 = vadd.f32 %v1716, %v2257
  %v2330 = vadd.f32 %v1721, %v2262
  %v2331 = vadd.f32 %v1724, %v2265
  %v2333 = vsel %vm986, %v563, 0
  %v2336 = vsel %vm986, %v579, 0
  %v2339 = vsel %vm1080, %v81, 0
  %2341 = vmatprep.subr.bf16.mxu0 0
  %2342 = vmatpush1.bf16.msra.mxu0 %v2339
  %2343 = vmatprep.subr.bf16.mxu0 0
  %2344 = vmatpush1.bf16.msra.mxu0 0
  %2345 = vmatprep.subr.bf16.mxu0 0
  %2346 = vmatpush1.bf16.msra.mxu0 0
  %2347 = vmatprep.subr.bf16.mxu0 0
  %2348 = vmatpush1.bf16.msra.mxu0 0
  %2349 = vmatprep.subr.bf16.mxu0 0
  %2350 = vmatpush1.bf16.msra.mxu0 0
  %2351 = vmatprep.subr.bf16.mxu0 0
  %2352 = vmatpush1.bf16.msra.mxu0 0
  %2353 = vmatprep.subr.bf16.mxu0 0
  %2354 = vmatpush1.bf16.msra.mxu0 0
  %2355 = vmatprep.subr.bf16.mxu0 0
  %2356 = vmatpush1.bf16.msra.mxu0 0
  %2357 = vmatprep.subr.bf16.mxu0 0
  %2358 = vmatpush1.bf16.msra.mxu0 0
  %2359 = vmatprep.subr.bf16.mxu0 0
  %2360 = vmatpush1.bf16.msra.mxu0 0
  %2361 = vmatprep.subr.bf16.mxu0 0
  %2362 = vmatpush1.bf16.msra.mxu0 0
  %2363 = vmatprep.subr.bf16.mxu0 0
  %2364 = vmatpush1.bf16.msra.mxu0 0
  %2365 = vmatprep.subr.bf16.mxu0 0
  %2366 = vmatpush1.bf16.msra.mxu0 0
  %2367 = vmatprep.subr.bf16.mxu0 0
  %2368 = vmatpush1.bf16.msra.mxu0 0
  %2369 = vmatprep.subr.bf16.mxu0 0
  %2370 = vmatpush1.bf16.msra.mxu0 0
  %2371 = vmatprep.subr.bf16.mxu0 0
  %2372 = vmatpush1.bf16.msra.mxu0 0
  %2373 = vmatprep.mubr.bf16.mxu0 0
  %2374 = vmatmul.mubr.bf16.gmra.mrb[0].mxu0 %v1375
  %v2375 = vpop.f32.mrb[0].mxu0
  %v2376 = vadd.f32 0.0, %v2375
  %v2377 = vpop.f32.mrb[0].mxu0
  %v2378 = vpop.f32.mrb[0].mxu0
  %v2379 = vadd.f32 0.0, %v2378
  %v2380 = vpop.f32.mrb[0].mxu0
  %2381 = vmatprep.mubr.bf16.mxu0 0
  %2382 = vmatmul.mubr.bf16.gmra.mrb[0].mxu0 %v1377
  %v2383 = vpop.f32.mrb[0].mxu0
  %v2384 = vadd.f32 0.0, %v2383
  %v2385 = vpop.f32.mrb[0].mxu0
  %v2386 = vpop.f32.mrb[0].mxu0
  %v2387 = vadd.f32 0.0, %v2386
  %v2388 = vpop.f32.mrb[0].mxu0
  %2389 = vmatprep.mubr.bf16.mxu0 0
  %2390 = vmatmul.mubr.bf16.gmra.mrb[0].mxu0 %v1379
  %v2391 = vpop.f32.mrb[0].mxu0
  %v2392 = vadd.f32 0.0, %v2391
  %v2393 = vpop.f32.mrb[0].mxu0
  %v2394 = vpop.f32.mrb[0].mxu0
  %v2395 = vadd.f32 0.0, %v2394
  %v2396 = vpop.f32.mrb[0].mxu0
  %2397 = vmatprep.mubr.bf16.mxu0 0
  %2398 = vmatmul.mubr.bf16.gmra.mrb[0].mxu0 %v1381
  %v2399 = vpop.f32.mrb[0].mxu0
  %v2400 = vadd.f32 0.0, %v2399
  %v2401 = vpop.f32.mrb[0].mxu0
  %v2402 = vpop.f32.mrb[0].mxu0
  %v2403 = vadd.f32 0.0, %v2402
  %v2404 = vpop.f32.mrb[0].mxu0
  %2405 = vmatprep.mubr.bf16.mxu0 0
  %2406 = vmatmul.mubr.bf16.gmra.mrb[0].mxu0 %v1383
  %v2407 = vpop.f32.mrb[0].mxu0
  %v2408 = vadd.f32 0.0, %v2407
  %v2409 = vpop.f32.mrb[0].mxu0
  %v2410 = vpop.f32.mrb[0].mxu0
  %v2411 = vadd.f32 0.0, %v2410
  %v2412 = vpop.f32.mrb[0].mxu0
  %2413 = vmatprep.mubr.bf16.mxu0 0
  %2414 = vmatmul.mubr.bf16.gmra.mrb[0].mxu0 %v1385
  %v2415 = vpop.f32.mrb[0].mxu0
  %v2416 = vadd.f32 0.0, %v2415
  %v2417 = vpop.f32.mrb[0].mxu0
  %v2418 = vpop.f32.mrb[0].mxu0
  %v2419 = vadd.f32 0.0, %v2418
  %v2420 = vpop.f32.mrb[0].mxu0
  %2421 = vmatprep.mubr.bf16.mxu0 0
  %2422 = vmatmul.mubr.bf16.gmra.mrb[0].mxu0 %v1387
  %v2423 = vpop.f32.mrb[0].mxu0
  %v2424 = vadd.f32 0.0, %v2423
  %v2425 = vpop.f32.mrb[0].mxu0
  %v2426 = vpop.f32.mrb[0].mxu0
  %v2427 = vadd.f32 0.0, %v2426
  %v2428 = vpop.f32.mrb[0].mxu0
  %2429 = vmatprep.mubr.bf16.mxu0 0
  %2430 = vmatmul.mubr.bf16.gmra.mrb[0].mxu0 %v1389
  %v2431 = vpop.f32.mrb[0].mxu0
  %v2432 = vadd.f32 0.0, %v2431
  %v2433 = vpop.f32.mrb[0].mxu0
  %v2434 = vpop.f32.mrb[0].mxu0
  %v2435 = vadd.f32 0.0, %v2434
  %v2436 = vpop.f32.mrb[0].mxu0
  %2437 = vmatprep.mubr.bf16.mxu0 0
  %2438 = vmatmul.mubr.bf16.gmra.mrb[0].mxu0 %v1391
  %v2439 = vpop.f32.mrb[0].mxu0
  %v2440 = vadd.f32 0.0, %v2439
  %v2441 = vpop.f32.mrb[0].mxu0
  %v2442 = vpop.f32.mrb[0].mxu0
  %v2443 = vadd.f32 0.0, %v2442
  %v2444 = vpop.f32.mrb[0].mxu0
  %2445 = vmatprep.mubr.bf16.mxu0 0
  %2446 = vmatmul.mubr.bf16.gmra.mrb[0].mxu0 %v1393
  %v2447 = vpop.f32.mrb[0].mxu0
  %v2448 = vadd.f32 0.0, %v2447
  %v2449 = vpop.f32.mrb[0].mxu0
  %v2450 = vpop.f32.mrb[0].mxu0
  %v2451 = vadd.f32 0.0, %v2450
  %v2452 = vpop.f32.mrb[0].mxu0
  %2453 = vmatprep.mubr.bf16.mxu0 0
  %2454 = vmatmul.mubr.bf16.gmra.mrb[0].mxu0 %v1395
  %v2455 = vpop.f32.mrb[0].mxu0
  %v2456 = vadd.f32 0.0, %v2455
  %v2457 = vpop.f32.mrb[0].mxu0
  %v2458 = vpop.f32.mrb[0].mxu0
  %v2459 = vadd.f32 0.0, %v2458
  %v2460 = vpop.f32.mrb[0].mxu0
  %2461 = vmatprep.mubr.bf16.mxu0 0
  %2462 = vmatmul.mubr.bf16.gmra.mrb[0].mxu0 %v1397
  %v2463 = vpop.f32.mrb[0].mxu0
  %v2464 = vadd.f32 0.0, %v2463
  %v2465 = vpop.f32.mrb[0].mxu0
  %v2466 = vpop.f32.mrb[0].mxu0
  %v2467 = vadd.f32 0.0, %v2466
  %v2468 = vpop.f32.mrb[0].mxu0
  %2469 = vmatprep.mubr.bf16.mxu0 0
  %2470 = vmatmul.mubr.bf16.gmra.mrb[0].mxu0 %v1399
  %v2471 = vpop.f32.mrb[0].mxu0
  %v2472 = vadd.f32 0.0, %v2471
  %v2473 = vpop.f32.mrb[0].mxu0
  %v2474 = vpop.f32.mrb[0].mxu0
  %v2475 = vadd.f32 0.0, %v2474
  %v2476 = vpop.f32.mrb[0].mxu0
  %2477 = vmatprep.mubr.bf16.mxu0 0
  %2478 = vmatmul.mubr.bf16.gmra.mrb[0].mxu0 %v1401
  %v2479 = vpop.f32.mrb[0].mxu0
  %v2480 = vadd.f32 0.0, %v2479
  %v2481 = vpop.f32.mrb[0].mxu0
  %v2482 = vpop.f32.mrb[0].mxu0
  %v2483 = vadd.f32 0.0, %v2482
  %v2484 = vpop.f32.mrb[0].mxu0
  %2485 = vmatprep.mubr.bf16.mxu0 0
  %2486 = vmatmul.mubr.bf16.gmra.mrb[0].mxu0 %v1403
  %v2487 = vpop.f32.mrb[0].mxu0
  %v2488 = vadd.f32 0.0, %v2487
  %v2489 = vpop.f32.mrb[0].mxu0
  %v2490 = vpop.f32.mrb[0].mxu0
  %v2491 = vadd.f32 0.0, %v2490
  %v2492 = vpop.f32.mrb[0].mxu0
  %2493 = vmatprep.mubr.bf16.mxu0 0
  %2494 = vmatmul.mubr.bf16.gmra.mrb[0].mxu0 %v2333
  %v2495 = vpop.f32.mrb[0].mxu0
  %v2496 = vadd.f32 0.0, %v2495
  %v2497 = vpop.f32.mrb[0].mxu0
  %v2498 = vpop.f32.mrb[0].mxu0
  %v2499 = vadd.f32 0.0, %v2498
  %v2500 = vpop.f32.mrb[0].mxu0
  %2501 = vmatprep.mubr.bf16.mxu0 0
  %2502 = vmatmul.mubr.bf16.gmra.mrb[0].mxu0 %v1405
  %v2503 = vpop.f32.mrb[0].mxu0
  %v2504 = vadd.f32 0.0, %v2503
  %v2505 = vpop.f32.mrb[0].mxu0
  %v2506 = vpop.f32.mrb[0].mxu0
  %v2507 = vadd.f32 0.0, %v2506
  %v2508 = vpop.f32.mrb[0].mxu0
  %2509 = vmatprep.mubr.bf16.mxu0 0
  %2510 = vmatmul.mubr.bf16.gmra.mrb[0].mxu0 %v1407
  %v2511 = vpop.f32.mrb[0].mxu0
  %v2512 = vadd.f32 0.0, %v2511
  %v2513 = vpop.f32.mrb[0].mxu0
  %v2514 = vpop.f32.mrb[0].mxu0
  %v2515 = vadd.f32 0.0, %v2514
  %v2516 = vpop.f32.mrb[0].mxu0
  %2517 = vmatprep.mubr.bf16.mxu0 0
  %2518 = vmatmul.mubr.bf16.gmra.mrb[0].mxu0 %v1409
  %v2519 = vpop.f32.mrb[0].mxu0
  %v2520 = vadd.f32 0.0, %v2519
  %v2521 = vpop.f32.mrb[0].mxu0
  %v2522 = vpop.f32.mrb[0].mxu0
  %v2523 = vadd.f32 0.0, %v2522
  %v2524 = vpop.f32.mrb[0].mxu0
  %2525 = vmatprep.mubr.bf16.mxu0 0
  %2526 = vmatmul.mubr.bf16.gmra.mrb[0].mxu0 %v1411
  %v2527 = vpop.f32.mrb[0].mxu0
  %v2528 = vadd.f32 0.0, %v2527
  %v2529 = vpop.f32.mrb[0].mxu0
  %v2530 = vpop.f32.mrb[0].mxu0
  %v2531 = vadd.f32 0.0, %v2530
  %v2532 = vpop.f32.mrb[0].mxu0
  %2533 = vmatprep.mubr.bf16.mxu0 0
  %2534 = vmatmul.mubr.bf16.gmra.mrb[0].mxu0 %v1413
  %v2535 = vpop.f32.mrb[0].mxu0
  %v2536 = vadd.f32 0.0, %v2535
  %v2537 = vpop.f32.mrb[0].mxu0
  %v2538 = vpop.f32.mrb[0].mxu0
  %v2539 = vadd.f32 0.0, %v2538
  %v2540 = vpop.f32.mrb[0].mxu0
  %2541 = vmatprep.mubr.bf16.mxu0 0
  %2542 = vmatmul.mubr.bf16.gmra.mrb[0].mxu0 %v1415
  %v2543 = vpop.f32.mrb[0].mxu0
  %v2544 = vadd.f32 0.0, %v2543
  %v2545 = vpop.f32.mrb[0].mxu0
  %v2546 = vpop.f32.mrb[0].mxu0
  %v2547 = vadd.f32 0.0, %v2546
  %v2548 = vpop.f32.mrb[0].mxu0
  %2549 = vmatprep.mubr.bf16.mxu0 0
  %2550 = vmatmul.mubr.bf16.gmra.mrb[0].mxu0 %v1417
  %v2551 = vpop.f32.mrb[0].mxu0
  %v2552 = vadd.f32 0.0, %v2551
  %v2553 = vpop.f32.mrb[0].mxu0
  %v2554 = vpop.f32.mrb[0].mxu0
  %v2555 = vadd.f32 0.0, %v2554
  %v2556 = vpop.f32.mrb[0].mxu0
  %2557 = vmatprep.mubr.bf16.mxu0 0
  %2558 = vmatmul.mubr.bf16.gmra.mrb[0].mxu0 %v1419
  %v2559 = vpop.f32.mrb[0].mxu0
  %v2560 = vadd.f32 0.0, %v2559
  %v2561 = vpop.f32.mrb[0].mxu0
  %v2562 = vpop.f32.mrb[0].mxu0
  %v2563 = vadd.f32 0.0, %v2562
  %v2564 = vpop.f32.mrb[0].mxu0
  %2565 = vmatprep.mubr.bf16.mxu0 0
  %2566 = vmatmul.mubr.bf16.gmra.mrb[0].mxu0 %v1421
  %v2567 = vpop.f32.mrb[0].mxu0
  %v2568 = vadd.f32 0.0, %v2567
  %v2569 = vpop.f32.mrb[0].mxu0
  %v2570 = vpop.f32.mrb[0].mxu0
  %v2571 = vadd.f32 0.0, %v2570
  %v2572 = vpop.f32.mrb[0].mxu0
  %2573 = vmatprep.mubr.bf16.mxu0 0
  %2574 = vmatmul.mubr.bf16.gmra.mrb[0].mxu0 %v1423
  %v2575 = vpop.f32.mrb[0].mxu0
  %v2576 = vadd.f32 0.0, %v2575
  %v2577 = vpop.f32.mrb[0].mxu0
  %v2578 = vpop.f32.mrb[0].mxu0
  %v2579 = vadd.f32 0.0, %v2578
  %v2580 = vpop.f32.mrb[0].mxu0
  %2581 = vmatprep.mubr.bf16.mxu0 0
  %2582 = vmatmul.mubr.bf16.gmra.mrb[0].mxu0 %v1425
  %v2583 = vpop.f32.mrb[0].mxu0
  %v2584 = vadd.f32 0.0, %v2583
  %v2585 = vpop.f32.mrb[0].mxu0
  %v2586 = vpop.f32.mrb[0].mxu0
  %v2587 = vadd.f32 0.0, %v2586
  %v2588 = vpop.f32.mrb[0].mxu0
  %2589 = vmatprep.mubr.bf16.mxu0 0
  %2590 = vmatmul.mubr.bf16.gmra.mrb[0].mxu0 %v1427
  %v2591 = vpop.f32.mrb[0].mxu0
  %v2592 = vadd.f32 0.0, %v2591
  %v2593 = vpop.f32.mrb[0].mxu0
  %v2594 = vpop.f32.mrb[0].mxu0
  %v2595 = vadd.f32 0.0, %v2594
  %v2596 = vpop.f32.mrb[0].mxu0
  %2597 = vmatprep.mubr.bf16.mxu0 0
  %2598 = vmatmul.mubr.bf16.gmra.mrb[0].mxu0 %v1429
  %v2599 = vpop.f32.mrb[0].mxu0
  %v2600 = vadd.f32 0.0, %v2599
  %v2601 = vpop.f32.mrb[0].mxu0
  %v2602 = vpop.f32.mrb[0].mxu0
  %v2603 = vadd.f32 0.0, %v2602
  %v2604 = vpop.f32.mrb[0].mxu0
  %2605 = vmatprep.mubr.bf16.mxu0 0
  %2606 = vmatmul.mubr.bf16.gmra.mrb[0].mxu0 %v1431
  %v2607 = vpop.f32.mrb[0].mxu0
  %v2608 = vadd.f32 0.0, %v2607
  %v2609 = vpop.f32.mrb[0].mxu0
  %v2610 = vpop.f32.mrb[0].mxu0
  %v2611 = vadd.f32 0.0, %v2610
  %v2612 = vpop.f32.mrb[0].mxu0
  %2613 = vmatprep.mubr.bf16.mxu0 0
  %2614 = vmatmul.mubr.bf16.gmra.mrb[0].mxu0 %v1433
  %v2615 = vpop.f32.mrb[0].mxu0
  %v2616 = vadd.f32 0.0, %v2615
  %v2617 = vpop.f32.mrb[0].mxu0
  %v2618 = vpop.f32.mrb[0].mxu0
  %v2619 = vadd.f32 0.0, %v2618
  %v2620 = vpop.f32.mrb[0].mxu0
  %2621 = vmatprep.mubr.bf16.mxu0 0
  %2622 = vmatmul.mubr.bf16.gmra.mrb[0].mxu0 %v2336
  %v2623 = vpop.f32.mrb[0].mxu0
  %v2624 = vadd.f32 0.0, %v2623
  %v2625 = vpop.f32.mrb[0].mxu0
  %v2626 = vpop.f32.mrb[0].mxu0
  %v2627 = vadd.f32 0.0, %v2626
  %v2628 = vpop.f32.mrb[0].mxu0
  %2629 = vdwg.mxu0
  %v2630 = vadd.f32 %v2268, %v2376
  %v2631 = vadd.f32 %v2269, %v2379
  %v2632 = vadd.f32 %v2270, %v2384
  %v2633 = vadd.f32 %v2271, %v2387
  %v2634 = vadd.f32 %v2272, %v2392
  %v2635 = vadd.f32 %v2273, %v2395
  %v2636 = vadd.f32 %v2274, %v2400
  %v2637 = vadd.f32 %v2275, %v2403
  %v2638 = vadd.f32 %v2276, %v2408
  %v2639 = vadd.f32 %v2277, %v2411
  %v2640 = vadd.f32 %v2278, %v2416
  %v2641 = vadd.f32 %v2279, %v2419
  %v2642 = vadd.f32 %v2280, %v2424
  %v2643 = vadd.f32 %v2281, %v2427
  %v2644 = vadd.f32 %v2282, %v2432
  %v2645 = vadd.f32 %v2283, %v2435
  %v2646 = vadd.f32 %v2284, %v2440
  %v2647 = vadd.f32 %v2285, %v2443
  %v2648 = vadd.f32 %v2286, %v2448
  %v2649 = vadd.f32 %v2287, %v2451
  %v2650 = vadd.f32 %v2288, %v2456
  %v2651 = vadd.f32 %v2289, %v2459
  %v2652 = vadd.f32 %v2290, %v2464
  %v2653 = vadd.f32 %v2291, %v2467
  %v2654 = vadd.f32 %v2292, %v2472
  %v2655 = vadd.f32 %v2293, %v2475
  %v2656 = vadd.f32 %v2294, %v2480
  %v2657 = vadd.f32 %v2295, %v2483
  %v2658 = vadd.f32 %v2296, %v2488
  %v2659 = vadd.f32 %v2297, %v2491
  %v2660 = vadd.f32 %v2298, %v2496
  %v2661 = vadd.f32 %v2299, %v2499
  %v2662 = vadd.f32 %v2300, %v2504
  %v2663 = vadd.f32 %v2301, %v2507
  %v2664 = vadd.f32 %v2302, %v2512
  %v2665 = vadd.f32 %v2303, %v2515
  %v2666 = vadd.f32 %v2304, %v2520
  %v2667 = vadd.f32 %v2305, %v2523
  %v2668 = vadd.f32 %v2306, %v2528
  %v2669 = vadd.f32 %v2307, %v2531
  %v2670 = vadd.f32 %v2308, %v2536
  %v2671 = vadd.f32 %v2309, %v2539
  %v2672 = vadd.f32 %v2310, %v2544
  %v2673 = vadd.f32 %v2311, %v2547
  %v2674 = vadd.f32 %v2312, %v2552
  %v2675 = vadd.f32 %v2313, %v2555
  %v2676 = vadd.f32 %v2314, %v2560
  %v2677 = vadd.f32 %v2315, %v2563
  %v2678 = vadd.f32 %v2316, %v2568
  %v2679 = vadd.f32 %v2317, %v2571
  %v2680 = vadd.f32 %v2318, %v2576
  %v2681 = vadd.f32 %v2319, %v2579
  %v2682 = vadd.f32 %v2320, %v2584
  %v2683 = vadd.f32 %v2321, %v2587
  %v2684 = vadd.f32 %v2322, %v2592
  %v2685 = vadd.f32 %v2323, %v2595
  %v2686 = vadd.f32 %v2324, %v2600
  %v2687 = vadd.f32 %v2325, %v2603
  %v2688 = vadd.f32 %v2326, %v2608
  %v2689 = vadd.f32 %v2327, %v2611
  %v2690 = vadd.f32 %v2328, %v2616
  %v2691 = vadd.f32 %v2329, %v2619
  %v2692 = vadd.f32 %v2330, %v2624
  %v2693 = vadd.f32 %v2331, %v2627
  %v2694 = vshrl.u32 %v563, 16
  %v2696 = vshll.u32 %v563, 16
  %v2698 = vrot.slane %v2696, 1
  %v2699 = vor.u32 %v2694, %v2698
  %v2701 = vshll.u32 %v596, 16
  %v2703 = vrot.slane %v2701, 1
  %v2704 = vsel %vm613, %v2699, %v2703
  %v2705 = vshrl.u32 %v579, 16
  %v2707 = vshll.u32 %v579, 16
  %v2709 = vrot.slane %v2707, 1
  %v2710 = vor.u32 %v2705, %v2709
  %v2712 = vshll.u32 %v612, 16
  %v2714 = vrot.slane %v2712, 1
  %v2715 = vsel %vm613, %v2710, %v2714
  %v2717 = vsel %vm986, %v2704, 0
  %v2720 = vsel %vm986, %v2715, 0
  %v2723 = vsel %vm1080, %v82, 0
  %2725 = vmatprep.subr.bf16.mxu0 0
  %2726 = vmatpush1.bf16.msra.mxu0 %v2723
  %2727 = vmatprep.subr.bf16.mxu0 0
  %2728 = vmatpush1.bf16.msra.mxu0 0
  %2729 = vmatprep.subr.bf16.mxu0 0
  %2730 = vmatpush1.bf16.msra.mxu0 0
  %2731 = vmatprep.subr.bf16.mxu0 0
  %2732 = vmatpush1.bf16.msra.mxu0 0
  %2733 = vmatprep.subr.bf16.mxu0 0
  %2734 = vmatpush1.bf16.msra.mxu0 0
  %2735 = vmatprep.subr.bf16.mxu0 0
  %2736 = vmatpush1.bf16.msra.mxu0 0
  %2737 = vmatprep.subr.bf16.mxu0 0
  %2738 = vmatpush1.bf16.msra.mxu0 0
  %2739 = vmatprep.subr.bf16.mxu0 0
  %2740 = vmatpush1.bf16.msra.mxu0 0
  %2741 = vmatprep.subr.bf16.mxu0 0
  %2742 = vmatpush1.bf16.msra.mxu0 0
  %2743 = vmatprep.subr.bf16.mxu0 0
  %2744 = vmatpush1.bf16.msra.mxu0 0
  %2745 = vmatprep.subr.bf16.mxu0 0
  %2746 = vmatpush1.bf16.msra.mxu0 0
  %2747 = vmatprep.subr.bf16.mxu0 0
  %2748 = vmatpush1.bf16.msra.mxu0 0
  %2749 = vmatprep.subr.bf16.mxu0 0
  %2750 = vmatpush1.bf16.msra.mxu0 0
  %2751 = vmatprep.subr.bf16.mxu0 0
  %2752 = vmatpush1.bf16.msra.mxu0 0
  %2753 = vmatprep.subr.bf16.mxu0 0
  %2754 = vmatpush1.bf16.msra.mxu0 0
  %2755 = vmatprep.subr.bf16.mxu0 0
  %2756 = vmatpush1.bf16.msra.mxu0 0
  %2757 = vmatprep.mubr.bf16.mxu0 0
  %2758 = vmatmul.mubr.bf16.gmra.mrb[0].mxu0 %v991
  %v2759 = vpop.f32.mrb[0].mxu0
  %v2760 = vadd.f32 0.0, %v2759
  %v2761 = vpop.f32.mrb[0].mxu0
  %v2762 = vpop.f32.mrb[0].mxu0
  %v2763 = vadd.f32 0.0, %v2762
  %v2764 = vpop.f32.mrb[0].mxu0
  %2765 = vmatprep.mubr.bf16.mxu0 0
  %2766 = vmatmul.mubr.bf16.gmra.mrb[0].mxu0 %v994
  %v2767 = vpop.f32.mrb[0].mxu0
  %v2768 = vadd.f32 0.0, %v2767
  %v2769 = vpop.f32.mrb[0].mxu0
  %v2770 = vpop.f32.mrb[0].mxu0
  %v2771 = vadd.f32 0.0, %v2770
  %v2772 = vpop.f32.mrb[0].mxu0
  %2773 = vmatprep.mubr.bf16.mxu0 0
  %2774 = vmatmul.mubr.bf16.gmra.mrb[0].mxu0 %v997
  %v2775 = vpop.f32.mrb[0].mxu0
  %v2776 = vadd.f32 0.0, %v2775
  %v2777 = vpop.f32.mrb[0].mxu0
  %v2778 = vpop.f32.mrb[0].mxu0
  %v2779 = vadd.f32 0.0, %v2778
  %v2780 = vpop.f32.mrb[0].mxu0
  %2781 = vmatprep.mubr.bf16.mxu0 0
  %2782 = vmatmul.mubr.bf16.gmra.mrb[0].mxu0 %v1000
  %v2783 = vpop.f32.mrb[0].mxu0
  %v2784 = vadd.f32 0.0, %v2783
  %v2785 = vpop.f32.mrb[0].mxu0
  %v2786 = vpop.f32.mrb[0].mxu0
  %v2787 = vadd.f32 0.0, %v2786
  %v2788 = vpop.f32.mrb[0].mxu0
  %2789 = vmatprep.mubr.bf16.mxu0 0
  %2790 = vmatmul.mubr.bf16.gmra.mrb[0].mxu0 %v1003
  %v2791 = vpop.f32.mrb[0].mxu0
  %v2792 = vadd.f32 0.0, %v2791
  %v2793 = vpop.f32.mrb[0].mxu0
  %v2794 = vpop.f32.mrb[0].mxu0
  %v2795 = vadd.f32 0.0, %v2794
  %v2796 = vpop.f32.mrb[0].mxu0
  %2797 = vmatprep.mubr.bf16.mxu0 0
  %2798 = vmatmul.mubr.bf16.gmra.mrb[0].mxu0 %v1006
  %v2799 = vpop.f32.mrb[0].mxu0
  %v2800 = vadd.f32 0.0, %v2799
  %v2801 = vpop.f32.mrb[0].mxu0
  %v2802 = vpop.f32.mrb[0].mxu0
  %v2803 = vadd.f32 0.0, %v2802
  %v2804 = vpop.f32.mrb[0].mxu0
  %2805 = vmatprep.mubr.bf16.mxu0 0
  %2806 = vmatmul.mubr.bf16.gmra.mrb[0].mxu0 %v1009
  %v2807 = vpop.f32.mrb[0].mxu0
  %v2808 = vadd.f32 0.0, %v2807
  %v2809 = vpop.f32.mrb[0].mxu0
  %v2810 = vpop.f32.mrb[0].mxu0
  %v2811 = vadd.f32 0.0, %v2810
  %v2812 = vpop.f32.mrb[0].mxu0
  %2813 = vmatprep.mubr.bf16.mxu0 0
  %2814 = vmatmul.mubr.bf16.gmra.mrb[0].mxu0 %v1012
  %v2815 = vpop.f32.mrb[0].mxu0
  %v2816 = vadd.f32 0.0, %v2815
  %v2817 = vpop.f32.mrb[0].mxu0
  %v2818 = vpop.f32.mrb[0].mxu0
  %v2819 = vadd.f32 0.0, %v2818
  %v2820 = vpop.f32.mrb[0].mxu0
  %2821 = vmatprep.mubr.bf16.mxu0 0
  %2822 = vmatmul.mubr.bf16.gmra.mrb[0].mxu0 %v1015
  %v2823 = vpop.f32.mrb[0].mxu0
  %v2824 = vadd.f32 0.0, %v2823
  %v2825 = vpop.f32.mrb[0].mxu0
  %v2826 = vpop.f32.mrb[0].mxu0
  %v2827 = vadd.f32 0.0, %v2826
  %v2828 = vpop.f32.mrb[0].mxu0
  %2829 = vmatprep.mubr.bf16.mxu0 0
  %2830 = vmatmul.mubr.bf16.gmra.mrb[0].mxu0 %v1018
  %v2831 = vpop.f32.mrb[0].mxu0
  %v2832 = vadd.f32 0.0, %v2831
  %v2833 = vpop.f32.mrb[0].mxu0
  %v2834 = vpop.f32.mrb[0].mxu0
  %v2835 = vadd.f32 0.0, %v2834
  %v2836 = vpop.f32.mrb[0].mxu0
  %2837 = vmatprep.mubr.bf16.mxu0 0
  %2838 = vmatmul.mubr.bf16.gmra.mrb[0].mxu0 %v1021
  %v2839 = vpop.f32.mrb[0].mxu0
  %v2840 = vadd.f32 0.0, %v2839
  %v2841 = vpop.f32.mrb[0].mxu0
  %v2842 = vpop.f32.mrb[0].mxu0
  %v2843 = vadd.f32 0.0, %v2842
  %v2844 = vpop.f32.mrb[0].mxu0
  %2845 = vmatprep.mubr.bf16.mxu0 0
  %2846 = vmatmul.mubr.bf16.gmra.mrb[0].mxu0 %v1024
  %v2847 = vpop.f32.mrb[0].mxu0
  %v2848 = vadd.f32 0.0, %v2847
  %v2849 = vpop.f32.mrb[0].mxu0
  %v2850 = vpop.f32.mrb[0].mxu0
  %v2851 = vadd.f32 0.0, %v2850
  %v2852 = vpop.f32.mrb[0].mxu0
  %2853 = vmatprep.mubr.bf16.mxu0 0
  %2854 = vmatmul.mubr.bf16.gmra.mrb[0].mxu0 %v1027
  %v2855 = vpop.f32.mrb[0].mxu0
  %v2856 = vadd.f32 0.0, %v2855
  %v2857 = vpop.f32.mrb[0].mxu0
  %v2858 = vpop.f32.mrb[0].mxu0
  %v2859 = vadd.f32 0.0, %v2858
  %v2860 = vpop.f32.mrb[0].mxu0
  %2861 = vmatprep.mubr.bf16.mxu0 0
  %2862 = vmatmul.mubr.bf16.gmra.mrb[0].mxu0 %v1030
  %v2863 = vpop.f32.mrb[0].mxu0
  %v2864 = vadd.f32 0.0, %v2863
  %v2865 = vpop.f32.mrb[0].mxu0
  %v2866 = vpop.f32.mrb[0].mxu0
  %v2867 = vadd.f32 0.0, %v2866
  %v2868 = vpop.f32.mrb[0].mxu0
  %2869 = vmatprep.mubr.bf16.mxu0 0
  %2870 = vmatmul.mubr.bf16.gmra.mrb[0].mxu0 %v1033
  %v2871 = vpop.f32.mrb[0].mxu0
  %v2872 = vadd.f32 0.0, %v2871
  %v2873 = vpop.f32.mrb[0].mxu0
  %v2874 = vpop.f32.mrb[0].mxu0
  %v2875 = vadd.f32 0.0, %v2874
  %v2876 = vpop.f32.mrb[0].mxu0
  %2877 = vmatprep.mubr.bf16.mxu0 0
  %2878 = vmatmul.mubr.bf16.gmra.mrb[0].mxu0 %v2717
  %v2879 = vpop.f32.mrb[0].mxu0
  %v2880 = vadd.f32 0.0, %v2879
  %v2881 = vpop.f32.mrb[0].mxu0
  %v2882 = vpop.f32.mrb[0].mxu0
  %v2883 = vadd.f32 0.0, %v2882
  %v2884 = vpop.f32.mrb[0].mxu0
  %2885 = vmatprep.mubr.bf16.mxu0 0
  %2886 = vmatmul.mubr.bf16.gmra.mrb[0].mxu0 %v1036
  %v2887 = vpop.f32.mrb[0].mxu0
  %v2888 = vadd.f32 0.0, %v2887
  %v2889 = vpop.f32.mrb[0].mxu0
  %v2890 = vpop.f32.mrb[0].mxu0
  %v2891 = vadd.f32 0.0, %v2890
  %v2892 = vpop.f32.mrb[0].mxu0
  %2893 = vmatprep.mubr.bf16.mxu0 0
  %2894 = vmatmul.mubr.bf16.gmra.mrb[0].mxu0 %v1039
  %v2895 = vpop.f32.mrb[0].mxu0
  %v2896 = vadd.f32 0.0, %v2895
  %v2897 = vpop.f32.mrb[0].mxu0
  %v2898 = vpop.f32.mrb[0].mxu0
  %v2899 = vadd.f32 0.0, %v2898
  %v2900 = vpop.f32.mrb[0].mxu0
  %2901 = vmatprep.mubr.bf16.mxu0 0
  %2902 = vmatmul.mubr.bf16.gmra.mrb[0].mxu0 %v1042
  %v2903 = vpop.f32.mrb[0].mxu0
  %v2904 = vadd.f32 0.0, %v2903
  %v2905 = vpop.f32.mrb[0].mxu0
  %v2906 = vpop.f32.mrb[0].mxu0
  %v2907 = vadd.f32 0.0, %v2906
  %v2908 = vpop.f32.mrb[0].mxu0
  %2909 = vmatprep.mubr.bf16.mxu0 0
  %2910 = vmatmul.mubr.bf16.gmra.mrb[0].mxu0 %v1045
  %v2911 = vpop.f32.mrb[0].mxu0
  %v2912 = vadd.f32 0.0, %v2911
  %v2913 = vpop.f32.mrb[0].mxu0
  %v2914 = vpop.f32.mrb[0].mxu0
  %v2915 = vadd.f32 0.0, %v2914
  %v2916 = vpop.f32.mrb[0].mxu0
  %2917 = vmatprep.mubr.bf16.mxu0 0
  %2918 = vmatmul.mubr.bf16.gmra.mrb[0].mxu0 %v1048
  %v2919 = vpop.f32.mrb[0].mxu0
  %v2920 = vadd.f32 0.0, %v2919
  %v2921 = vpop.f32.mrb[0].mxu0
  %v2922 = vpop.f32.mrb[0].mxu0
  %v2923 = vadd.f32 0.0, %v2922
  %v2924 = vpop.f32.mrb[0].mxu0
  %2925 = vmatprep.mubr.bf16.mxu0 0
  %2926 = vmatmul.mubr.bf16.gmra.mrb[0].mxu0 %v1051
  %v2927 = vpop.f32.mrb[0].mxu0
  %v2928 = vadd.f32 0.0, %v2927
  %v2929 = vpop.f32.mrb[0].mxu0
  %v2930 = vpop.f32.mrb[0].mxu0
  %v2931 = vadd.f32 0.0, %v2930
  %v2932 = vpop.f32.mrb[0].mxu0
  %2933 = vmatprep.mubr.bf16.mxu0 0
  %2934 = vmatmul.mubr.bf16.gmra.mrb[0].mxu0 %v1054
  %v2935 = vpop.f32.mrb[0].mxu0
  %v2936 = vadd.f32 0.0, %v2935
  %v2937 = vpop.f32.mrb[0].mxu0
  %v2938 = vpop.f32.mrb[0].mxu0
  %v2939 = vadd.f32 0.0, %v2938
  %v2940 = vpop.f32.mrb[0].mxu0
  %2941 = vmatprep.mubr.bf16.mxu0 0
  %2942 = vmatmul.mubr.bf16.gmra.mrb[0].mxu0 %v1057
  %v2943 = vpop.f32.mrb[0].mxu0
  %v2944 = vadd.f32 0.0, %v2943
  %v2945 = vpop.f32.mrb[0].mxu0
  %v2946 = vpop.f32.mrb[0].mxu0
  %v2947 = vadd.f32 0.0, %v2946
  %v2948 = vpop.f32.mrb[0].mxu0
  %2949 = vmatprep.mubr.bf16.mxu0 0
  %2950 = vmatmul.mubr.bf16.gmra.mrb[0].mxu0 %v1060
  %v2951 = vpop.f32.mrb[0].mxu0
  %v2952 = vadd.f32 0.0, %v2951
  %v2953 = vpop.f32.mrb[0].mxu0
  %v2954 = vpop.f32.mrb[0].mxu0
  %v2955 = vadd.f32 0.0, %v2954
  %v2956 = vpop.f32.mrb[0].mxu0
  %2957 = vmatprep.mubr.bf16.mxu0 0
  %2958 = vmatmul.mubr.bf16.gmra.mrb[0].mxu0 %v1063
  %v2959 = vpop.f32.mrb[0].mxu0
  %v2960 = vadd.f32 0.0, %v2959
  %v2961 = vpop.f32.mrb[0].mxu0
  %v2962 = vpop.f32.mrb[0].mxu0
  %v2963 = vadd.f32 0.0, %v2962
  %v2964 = vpop.f32.mrb[0].mxu0
  %2965 = vmatprep.mubr.bf16.mxu0 0
  %2966 = vmatmul.mubr.bf16.gmra.mrb[0].mxu0 %v1066
  %v2967 = vpop.f32.mrb[0].mxu0
  %v2968 = vadd.f32 0.0, %v2967
  %v2969 = vpop.f32.mrb[0].mxu0
  %v2970 = vpop.f32.mrb[0].mxu0
  %v2971 = vadd.f32 0.0, %v2970
  %v2972 = vpop.f32.mrb[0].mxu0
  %2973 = vmatprep.mubr.bf16.mxu0 0
  %2974 = vmatmul.mubr.bf16.gmra.mrb[0].mxu0 %v1069
  %v2975 = vpop.f32.mrb[0].mxu0
  %v2976 = vadd.f32 0.0, %v2975
  %v2977 = vpop.f32.mrb[0].mxu0
  %v2978 = vpop.f32.mrb[0].mxu0
  %v2979 = vadd.f32 0.0, %v2978
  %v2980 = vpop.f32.mrb[0].mxu0
  %2981 = vmatprep.mubr.bf16.mxu0 0
  %2982 = vmatmul.mubr.bf16.gmra.mrb[0].mxu0 %v1072
  %v2983 = vpop.f32.mrb[0].mxu0
  %v2984 = vadd.f32 0.0, %v2983
  %v2985 = vpop.f32.mrb[0].mxu0
  %v2986 = vpop.f32.mrb[0].mxu0
  %v2987 = vadd.f32 0.0, %v2986
  %v2988 = vpop.f32.mrb[0].mxu0
  %2989 = vmatprep.mubr.bf16.mxu0 0
  %2990 = vmatmul.mubr.bf16.gmra.mrb[0].mxu0 %v1075
  %v2991 = vpop.f32.mrb[0].mxu0
  %v2992 = vadd.f32 0.0, %v2991
  %v2993 = vpop.f32.mrb[0].mxu0
  %v2994 = vpop.f32.mrb[0].mxu0
  %v2995 = vadd.f32 0.0, %v2994
  %v2996 = vpop.f32.mrb[0].mxu0
  %2997 = vmatprep.mubr.bf16.mxu0 0
  %2998 = vmatmul.mubr.bf16.gmra.mrb[0].mxu0 %v1078
  %v2999 = vpop.f32.mrb[0].mxu0
  %v3000 = vadd.f32 0.0, %v2999
  %v3001 = vpop.f32.mrb[0].mxu0
  %v3002 = vpop.f32.mrb[0].mxu0
  %v3003 = vadd.f32 0.0, %v3002
  %v3004 = vpop.f32.mrb[0].mxu0
  %3005 = vmatprep.mubr.bf16.mxu0 0
  %3006 = vmatmul.mubr.bf16.gmra.mrb[0].mxu0 %v2720
  %v3007 = vpop.f32.mrb[0].mxu0
  %v3008 = vadd.f32 0.0, %v3007
  %v3009 = vpop.f32.mrb[0].mxu0
  %v3010 = vpop.f32.mrb[0].mxu0
  %v3011 = vadd.f32 0.0, %v3010
  %v3012 = vpop.f32.mrb[0].mxu0
  %3013 = vdwg.mxu0
  %v3014 = vadd.f32 %v2630, %v2760
  %v3015 = vadd.f32 %v2631, %v2763
  %v3016 = vadd.f32 %v2632, %v2768
  %v3017 = vadd.f32 %v2633, %v2771
  %v3018 = vadd.f32 %v2634, %v2776
  %v3019 = vadd.f32 %v2635, %v2779
  %v3020 = vadd.f32 %v2636, %v2784
  %v3021 = vadd.f32 %v2637, %v2787
  %v3022 = vadd.f32 %v2638, %v2792
  %v3023 = vadd.f32 %v2639, %v2795
  %v3024 = vadd.f32 %v2640, %v2800
  %v3025 = vadd.f32 %v2641, %v2803
  %v3026 = vadd.f32 %v2642, %v2808
  %v3027 = vadd.f32 %v2643, %v2811
  %v3028 = vadd.f32 %v2644, %v2816
  %v3029 = vadd.f32 %v2645, %v2819
  %v3030 = vadd.f32 %v2646, %v2824
  %v3031 = vadd.f32 %v2647, %v2827
  %v3032 = vadd.f32 %v2648, %v2832
  %v3033 = vadd.f32 %v2649, %v2835
  %v3034 = vadd.f32 %v2650, %v2840
  %v3035 = vadd.f32 %v2651, %v2843
  %v3036 = vadd.f32 %v2652, %v2848
  %v3037 = vadd.f32 %v2653, %v2851
  %v3038 = vadd.f32 %v2654, %v2856
  %v3039 = vadd.f32 %v2655, %v2859
  %v3040 = vadd.f32 %v2656, %v2864
  %v3041 = vadd.f32 %v2657, %v2867
  %v3042 = vadd.f32 %v2658, %v2872
  %v3043 = vadd.f32 %v2659, %v2875
  %v3044 = vadd.f32 %v2660, %v2880
  %v3045 = vadd.f32 %v2661, %v2883
  %v3046 = vadd.f32 %v2662, %v2888
  %v3047 = vadd.f32 %v2663, %v2891
  %v3048 = vadd.f32 %v2664, %v2896
  %v3049 = vadd.f32 %v2665, %v2899
  %v3050 = vadd.f32 %v2666, %v2904
  %v3051 = vadd.f32 %v2667, %v2907
  %v3052 = vadd.f32 %v2668, %v2912
  %v3053 = vadd.f32 %v2669, %v2915
  %v3054 = vadd.f32 %v2670, %v2920
  %v3055 = vadd.f32 %v2671, %v2923
  %v3056 = vadd.f32 %v2672, %v2928
  %v3057 = vadd.f32 %v2673, %v2931
  %v3058 = vadd.f32 %v2674, %v2936
  %v3059 = vadd.f32 %v2675, %v2939
  %v3060 = vadd.f32 %v2676, %v2944
  %v3061 = vadd.f32 %v2677, %v2947
  %v3062 = vadd.f32 %v2678, %v2952
  %v3063 = vadd.f32 %v2679, %v2955
  %v3064 = vadd.f32 %v2680, %v2960
  %v3065 = vadd.f32 %v2681, %v2963
  %v3066 = vadd.f32 %v2682, %v2968
  %v3067 = vadd.f32 %v2683, %v2971
  %v3068 = vadd.f32 %v2684, %v2976
  %v3069 = vadd.f32 %v2685, %v2979
  %v3070 = vadd.f32 %v2686, %v2984
  %v3071 = vadd.f32 %v2687, %v2987
  %v3072 = vadd.f32 %v2688, %v2992
  %v3073 = vadd.f32 %v2689, %v2995
  %v3074 = vadd.f32 %v2690, %v3000
  %v3075 = vadd.f32 %v2691, %v3003
  %v3076 = vadd.f32 %v2692, %v3008
  %v3077 = vadd.f32 %v2693, %v3011
  %v3082 = vrot.slane %v563, 1
  %v3083 = vrot.slane %v596, 1
  %v3084 = vsel %vm1789, %v3082, %v3083
  %v3085 = vrot.slane %v579, 1
  %v3086 = vrot.slane %v612, 1
  %v3087 = vsel %vm1789, %v3085, %v3086
  %v3089 = vsel %vm986, %v3084, 0
  %v3092 = vsel %vm986, %v3087, 0
  %v3095 = vsel %vm1080, %v83, 0
  %3097 = vmatprep.subr.bf16.mxu0 0
  %3098 = vmatpush1.bf16.msra.mxu0 %v3095
  %3099 = vmatprep.subr.bf16.mxu0 0
  %3100 = vmatpush1.bf16.msra.mxu0 0
  %3101 = vmatprep.subr.bf16.mxu0 0
  %3102 = vmatpush1.bf16.msra.mxu0 0
  %3103 = vmatprep.subr.bf16.mxu0 0
  %3104 = vmatpush1.bf16.msra.mxu0 0
  %3105 = vmatprep.subr.bf16.mxu0 0
  %3106 = vmatpush1.bf16.msra.mxu0 0
  %3107 = vmatprep.subr.bf16.mxu0 0
  %3108 = vmatpush1.bf16.msra.mxu0 0
  %3109 = vmatprep.subr.bf16.mxu0 0
  %3110 = vmatpush1.bf16.msra.mxu0 0
  %3111 = vmatprep.subr.bf16.mxu0 0
  %3112 = vmatpush1.bf16.msra.mxu0 0
  %3113 = vmatprep.subr.bf16.mxu0 0
  %3114 = vmatpush1.bf16.msra.mxu0 0
  %3115 = vmatprep.subr.bf16.mxu0 0
  %3116 = vmatpush1.bf16.msra.mxu0 0
  %3117 = vmatprep.subr.bf16.mxu0 0
  %3118 = vmatpush1.bf16.msra.mxu0 0
  %3119 = vmatprep.subr.bf16.mxu0 0
  %3120 = vmatpush1.bf16.msra.mxu0 0
  %3121 = vmatprep.subr.bf16.mxu0 0
  %3122 = vmatpush1.bf16.msra.mxu0 0
  %3123 = vmatprep.subr.bf16.mxu0 0
  %3124 = vmatpush1.bf16.msra.mxu0 0
  %3125 = vmatprep.subr.bf16.mxu0 0
  %3126 = vmatpush1.bf16.msra.mxu0 0
  %3127 = vmatprep.subr.bf16.mxu0 0
  %3128 = vmatpush1.bf16.msra.mxu0 0
  %3129 = vmatprep.mubr.bf16.mxu0 0
  %3130 = vmatmul.mubr.bf16.gmra.mrb[0].mxu0 %v1887
  %v3131 = vpop.f32.mrb[0].mxu0
  %v3132 = vadd.f32 0.0, %v3131
  %v3133 = vpop.f32.mrb[0].mxu0
  %v3134 = vpop.f32.mrb[0].mxu0
  %v3135 = vadd.f32 0.0, %v3134
  %v3136 = vpop.f32.mrb[0].mxu0
  %3137 = vmatprep.mubr.bf16.mxu0 0
  %3138 = vmatmul.mubr.bf16.gmra.mrb[0].mxu0 %v1890
  %v3139 = vpop.f32.mrb[0].mxu0
  %v3140 = vadd.f32 0.0, %v3139
  %v3141 = vpop.f32.mrb[0].mxu0
  %v3142 = vpop.f32.mrb[0].mxu0
  %v3143 = vadd.f32 0.0, %v3142
  %v3144 = vpop.f32.mrb[0].mxu0
  %3145 = vmatprep.mubr.bf16.mxu0 0
  %3146 = vmatmul.mubr.bf16.gmra.mrb[0].mxu0 %v1893
  %v3147 = vpop.f32.mrb[0].mxu0
  %v3148 = vadd.f32 0.0, %v3147
  %v3149 = vpop.f32.mrb[0].mxu0
  %v3150 = vpop.f32.mrb[0].mxu0
  %v3151 = vadd.f32 0.0, %v3150
  %v3152 = vpop.f32.mrb[0].mxu0
  %3153 = vmatprep.mubr.bf16.mxu0 0
  %3154 = vmatmul.mubr.bf16.gmra.mrb[0].mxu0 %v1896
  %v3155 = vpop.f32.mrb[0].mxu0
  %v3156 = vadd.f32 0.0, %v3155
  %v3157 = vpop.f32.mrb[0].mxu0
  %v3158 = vpop.f32.mrb[0].mxu0
  %v3159 = vadd.f32 0.0, %v3158
  %v3160 = vpop.f32.mrb[0].mxu0
  %3161 = vmatprep.mubr.bf16.mxu0 0
  %3162 = vmatmul.mubr.bf16.gmra.mrb[0].mxu0 %v1899
  %v3163 = vpop.f32.mrb[0].mxu0
  %v3164 = vadd.f32 0.0, %v3163
  %v3165 = vpop.f32.mrb[0].mxu0
  %v3166 = vpop.f32.mrb[0].mxu0
  %v3167 = vadd.f32 0.0, %v3166
  %v3168 = vpop.f32.mrb[0].mxu0
  %3169 = vmatprep.mubr.bf16.mxu0 0
  %3170 = vmatmul.mubr.bf16.gmra.mrb[0].mxu0 %v1902
  %v3171 = vpop.f32.mrb[0].mxu0
  %v3172 = vadd.f32 0.0, %v3171
  %v3173 = vpop.f32.mrb[0].mxu0
  %v3174 = vpop.f32.mrb[0].mxu0
  %v3175 = vadd.f32 0.0, %v3174
  %v3176 = vpop.f32.mrb[0].mxu0
  %3177 = vmatprep.mubr.bf16.mxu0 0
  %3178 = vmatmul.mubr.bf16.gmra.mrb[0].mxu0 %v1905
  %v3179 = vpop.f32.mrb[0].mxu0
  %v3180 = vadd.f32 0.0, %v3179
  %v3181 = vpop.f32.mrb[0].mxu0
  %v3182 = vpop.f32.mrb[0].mxu0
  %v3183 = vadd.f32 0.0, %v3182
  %v3184 = vpop.f32.mrb[0].mxu0
  %3185 = vmatprep.mubr.bf16.mxu0 0
  %3186 = vmatmul.mubr.bf16.gmra.mrb[0].mxu0 %v1908
  %v3187 = vpop.f32.mrb[0].mxu0
  %v3188 = vadd.f32 0.0, %v3187
  %v3189 = vpop.f32.mrb[0].mxu0
  %v3190 = vpop.f32.mrb[0].mxu0
  %v3191 = vadd.f32 0.0, %v3190
  %v3192 = vpop.f32.mrb[0].mxu0
  %3193 = vmatprep.mubr.bf16.mxu0 0
  %3194 = vmatmul.mubr.bf16.gmra.mrb[0].mxu0 %v1911
  %v3195 = vpop.f32.mrb[0].mxu0
  %v3196 = vadd.f32 0.0, %v3195
  %v3197 = vpop.f32.mrb[0].mxu0
  %v3198 = vpop.f32.mrb[0].mxu0
  %v3199 = vadd.f32 0.0, %v3198
  %v3200 = vpop.f32.mrb[0].mxu0
  %3201 = vmatprep.mubr.bf16.mxu0 0
  %3202 = vmatmul.mubr.bf16.gmra.mrb[0].mxu0 %v1914
  %v3203 = vpop.f32.mrb[0].mxu0
  %v3204 = vadd.f32 0.0, %v3203
  %v3205 = vpop.f32.mrb[0].mxu0
  %v3206 = vpop.f32.mrb[0].mxu0
  %v3207 = vadd.f32 0.0, %v3206
  %v3208 = vpop.f32.mrb[0].mxu0
  %3209 = vmatprep.mubr.bf16.mxu0 0
  %3210 = vmatmul.mubr.bf16.gmra.mrb[0].mxu0 %v1917
  %v3211 = vpop.f32.mrb[0].mxu0
  %v3212 = vadd.f32 0.0, %v3211
  %v3213 = vpop.f32.mrb[0].mxu0
  %v3214 = vpop.f32.mrb[0].mxu0
  %v3215 = vadd.f32 0.0, %v3214
  %v3216 = vpop.f32.mrb[0].mxu0
  %3217 = vmatprep.mubr.bf16.mxu0 0
  %3218 = vmatmul.mubr.bf16.gmra.mrb[0].mxu0 %v1920
  %v3219 = vpop.f32.mrb[0].mxu0
  %v3220 = vadd.f32 0.0, %v3219
  %v3221 = vpop.f32.mrb[0].mxu0
  %v3222 = vpop.f32.mrb[0].mxu0
  %v3223 = vadd.f32 0.0, %v3222
  %v3224 = vpop.f32.mrb[0].mxu0
  %3225 = vmatprep.mubr.bf16.mxu0 0
  %3226 = vmatmul.mubr.bf16.gmra.mrb[0].mxu0 %v1923
  %v3227 = vpop.f32.mrb[0].mxu0
  %v3228 = vadd.f32 0.0, %v3227
  %v3229 = vpop.f32.mrb[0].mxu0
  %v3230 = vpop.f32.mrb[0].mxu0
  %v3231 = vadd.f32 0.0, %v3230
  %v3232 = vpop.f32.mrb[0].mxu0
  %3233 = vmatprep.mubr.bf16.mxu0 0
  %3234 = vmatmul.mubr.bf16.gmra.mrb[0].mxu0 %v1926
  %v3235 = vpop.f32.mrb[0].mxu0
  %v3236 = vadd.f32 0.0, %v3235
  %v3237 = vpop.f32.mrb[0].mxu0
  %v3238 = vpop.f32.mrb[0].mxu0
  %v3239 = vadd.f32 0.0, %v3238
  %v3240 = vpop.f32.mrb[0].mxu0
  %3241 = vmatprep.mubr.bf16.mxu0 0
  %3242 = vmatmul.mubr.bf16.gmra.mrb[0].mxu0 %v1929
  %v3243 = vpop.f32.mrb[0].mxu0
  %v3244 = vadd.f32 0.0, %v3243
  %v3245 = vpop.f32.mrb[0].mxu0
  %v3246 = vpop.f32.mrb[0].mxu0
  %v3247 = vadd.f32 0.0, %v3246
  %v3248 = vpop.f32.mrb[0].mxu0
  %3249 = vmatprep.mubr.bf16.mxu0 0
  %3250 = vmatmul.mubr.bf16.gmra.mrb[0].mxu0 %v3089
  %v3251 = vpop.f32.mrb[0].mxu0
  %v3252 = vadd.f32 0.0, %v3251
  %v3253 = vpop.f32.mrb[0].mxu0
  %v3254 = vpop.f32.mrb[0].mxu0
  %v3255 = vadd.f32 0.0, %v3254
  %v3256 = vpop.f32.mrb[0].mxu0
  %3257 = vmatprep.mubr.bf16.mxu0 0
  %3258 = vmatmul.mubr.bf16.gmra.mrb[0].mxu0 %v1932
  %v3259 = vpop.f32.mrb[0].mxu0
  %v3260 = vadd.f32 0.0, %v3259
  %v3261 = vpop.f32.mrb[0].mxu0
  %v3262 = vpop.f32.mrb[0].mxu0
  %v3263 = vadd.f32 0.0, %v3262
  %v3264 = vpop.f32.mrb[0].mxu0
  %3265 = vmatprep.mubr.bf16.mxu0 0
  %3266 = vmatmul.mubr.bf16.gmra.mrb[0].mxu0 %v1935
  %v3267 = vpop.f32.mrb[0].mxu0
  %v3268 = vadd.f32 0.0, %v3267
  %v3269 = vpop.f32.mrb[0].mxu0
  %v3270 = vpop.f32.mrb[0].mxu0
  %v3271 = vadd.f32 0.0, %v3270
  %v3272 = vpop.f32.mrb[0].mxu0
  %3273 = vmatprep.mubr.bf16.mxu0 0
  %3274 = vmatmul.mubr.bf16.gmra.mrb[0].mxu0 %v1938
  %v3275 = vpop.f32.mrb[0].mxu0
  %v3276 = vadd.f32 0.0, %v3275
  %v3277 = vpop.f32.mrb[0].mxu0
  %v3278 = vpop.f32.mrb[0].mxu0
  %v3279 = vadd.f32 0.0, %v3278
  %v3280 = vpop.f32.mrb[0].mxu0
  %3281 = vmatprep.mubr.bf16.mxu0 0
  %3282 = vmatmul.mubr.bf16.gmra.mrb[0].mxu0 %v1941
  %v3283 = vpop.f32.mrb[0].mxu0
  %v3284 = vadd.f32 0.0, %v3283
  %v3285 = vpop.f32.mrb[0].mxu0
  %v3286 = vpop.f32.mrb[0].mxu0
  %v3287 = vadd.f32 0.0, %v3286
  %v3288 = vpop.f32.mrb[0].mxu0
  %3289 = vmatprep.mubr.bf16.mxu0 0
  %3290 = vmatmul.mubr.bf16.gmra.mrb[0].mxu0 %v1944
  %v3291 = vpop.f32.mrb[0].mxu0
  %v3292 = vadd.f32 0.0, %v3291
  %v3293 = vpop.f32.mrb[0].mxu0
  %v3294 = vpop.f32.mrb[0].mxu0
  %v3295 = vadd.f32 0.0, %v3294
  %v3296 = vpop.f32.mrb[0].mxu0
  %3297 = vmatprep.mubr.bf16.mxu0 0
  %3298 = vmatmul.mubr.bf16.gmra.mrb[0].mxu0 %v1947
  %v3299 = vpop.f32.mrb[0].mxu0
  %v3300 = vadd.f32 0.0, %v3299
  %v3301 = vpop.f32.mrb[0].mxu0
  %v3302 = vpop.f32.mrb[0].mxu0
  %v3303 = vadd.f32 0.0, %v3302
  %v3304 = vpop.f32.mrb[0].mxu0
  %3305 = vmatprep.mubr.bf16.mxu0 0
  %3306 = vmatmul.mubr.bf16.gmra.mrb[0].mxu0 %v1950
  %v3307 = vpop.f32.mrb[0].mxu0
  %v3308 = vadd.f32 0.0, %v3307
  %v3309 = vpop.f32.mrb[0].mxu0
  %v3310 = vpop.f32.mrb[0].mxu0
  %v3311 = vadd.f32 0.0, %v3310
  %v3312 = vpop.f32.mrb[0].mxu0
  %3313 = vmatprep.mubr.bf16.mxu0 0
  %3314 = vmatmul.mubr.bf16.gmra.mrb[0].mxu0 %v1953
  %v3315 = vpop.f32.mrb[0].mxu0
  %v3316 = vadd.f32 0.0, %v3315
  %v3317 = vpop.f32.mrb[0].mxu0
  %v3318 = vpop.f32.mrb[0].mxu0
  %v3319 = vadd.f32 0.0, %v3318
  %v3320 = vpop.f32.mrb[0].mxu0
  %3321 = vmatprep.mubr.bf16.mxu0 0
  %3322 = vmatmul.mubr.bf16.gmra.mrb[0].mxu0 %v1956
  %v3323 = vpop.f32.mrb[0].mxu0
  %v3324 = vadd.f32 0.0, %v3323
  %v3325 = vpop.f32.mrb[0].mxu0
  %v3326 = vpop.f32.mrb[0].mxu0
  %v3327 = vadd.f32 0.0, %v3326
  %v3328 = vpop.f32.mrb[0].mxu0
  %3329 = vmatprep.mubr.bf16.mxu0 0
  %3330 = vmatmul.mubr.bf16.gmra.mrb[0].mxu0 %v1959
  %v3331 = vpop.f32.mrb[0].mxu0
  %v3332 = vadd.f32 0.0, %v3331
  %v3333 = vpop.f32.mrb[0].mxu0
  %v3334 = vpop.f32.mrb[0].mxu0
  %v3335 = vadd.f32 0.0, %v3334
  %v3336 = vpop.f32.mrb[0].mxu0
  %3337 = vmatprep.mubr.bf16.mxu0 0
  %3338 = vmatmul.mubr.bf16.gmra.mrb[0].mxu0 %v1962
  %v3339 = vpop.f32.mrb[0].mxu0
  %v3340 = vadd.f32 0.0, %v3339
  %v3341 = vpop.f32.mrb[0].mxu0
  %v3342 = vpop.f32.mrb[0].mxu0
  %v3343 = vadd.f32 0.0, %v3342
  %v3344 = vpop.f32.mrb[0].mxu0
  %3345 = vmatprep.mubr.bf16.mxu0 0
  %3346 = vmatmul.mubr.bf16.gmra.mrb[0].mxu0 %v1965
  %v3347 = vpop.f32.mrb[0].mxu0
  %v3348 = vadd.f32 0.0, %v3347
  %v3349 = vpop.f32.mrb[0].mxu0
  %v3350 = vpop.f32.mrb[0].mxu0
  %v3351 = vadd.f32 0.0, %v3350
  %v3352 = vpop.f32.mrb[0].mxu0
  %3353 = vmatprep.mubr.bf16.mxu0 0
  %3354 = vmatmul.mubr.bf16.gmra.mrb[0].mxu0 %v1968
  %v3355 = vpop.f32.mrb[0].mxu0
  %v3356 = vadd.f32 0.0, %v3355
  %v3357 = vpop.f32.mrb[0].mxu0
  %v3358 = vpop.f32.mrb[0].mxu0
  %v3359 = vadd.f32 0.0, %v3358
  %v3360 = vpop.f32.mrb[0].mxu0
  %3361 = vmatprep.mubr.bf16.mxu0 0
  %3362 = vmatmul.mubr.bf16.gmra.mrb[0].mxu0 %v1971
  %v3363 = vpop.f32.mrb[0].mxu0
  %v3364 = vadd.f32 0.0, %v3363
  %v3365 = vpop.f32.mrb[0].mxu0
  %v3366 = vpop.f32.mrb[0].mxu0
  %v3367 = vadd.f32 0.0, %v3366
  %v3368 = vpop.f32.mrb[0].mxu0
  %3369 = vmatprep.mubr.bf16.mxu0 0
  %3370 = vmatmul.mubr.bf16.gmra.mrb[0].mxu0 %v1974
  %v3371 = vpop.f32.mrb[0].mxu0
  %v3372 = vadd.f32 0.0, %v3371
  %v3373 = vpop.f32.mrb[0].mxu0
  %v3374 = vpop.f32.mrb[0].mxu0
  %v3375 = vadd.f32 0.0, %v3374
  %v3376 = vpop.f32.mrb[0].mxu0
  %3377 = vmatprep.mubr.bf16.mxu0 0
  %3378 = vmatmul.mubr.bf16.gmra.mrb[0].mxu0 %v3092
  %v3379 = vpop.f32.mrb[0].mxu0
  %v3380 = vadd.f32 0.0, %v3379
  %v3381 = vpop.f32.mrb[0].mxu0
  %v3382 = vpop.f32.mrb[0].mxu0
  %v3383 = vadd.f32 0.0, %v3382
  %v3384 = vpop.f32.mrb[0].mxu0
  %3385 = vdwg.mxu0
  %v3386 = vadd.f32 %v3014, %v3132
  %v3387 = vadd.f32 %v3015, %v3135
  %v3388 = vadd.f32 %v3016, %v3140
  %v3389 = vadd.f32 %v3017, %v3143
  %v3390 = vadd.f32 %v3018, %v3148
  %v3391 = vadd.f32 %v3019, %v3151
  %v3392 = vadd.f32 %v3020, %v3156
  %v3393 = vadd.f32 %v3021, %v3159
  %v3394 = vadd.f32 %v3022, %v3164
  %v3395 = vadd.f32 %v3023, %v3167
  %v3396 = vadd.f32 %v3024, %v3172
  %v3397 = vadd.f32 %v3025, %v3175
  %v3398 = vadd.f32 %v3026, %v3180
  %v3399 = vadd.f32 %v3027, %v3183
  %v3400 = vadd.f32 %v3028, %v3188
  %v3401 = vadd.f32 %v3029, %v3191
  %v3402 = vadd.f32 %v3030, %v3196
  %v3403 = vadd.f32 %v3031, %v3199
  %v3404 = vadd.f32 %v3032, %v3204
  %v3405 = vadd.f32 %v3033, %v3207
  %v3406 = vadd.f32 %v3034, %v3212
  %v3407 = vadd.f32 %v3035, %v3215
  %v3408 = vadd.f32 %v3036, %v3220
  %v3409 = vadd.f32 %v3037, %v3223
  %v3410 = vadd.f32 %v3038, %v3228
  %v3411 = vadd.f32 %v3039, %v3231
  %v3412 = vadd.f32 %v3040, %v3236
  %v3413 = vadd.f32 %v3041, %v3239
  %v3414 = vadd.f32 %v3042, %v3244
  %v3415 = vadd.f32 %v3043, %v3247
  %v3416 = vadd.f32 %v3044, %v3252
  %v3417 = vadd.f32 %v3045, %v3255
  %v3418 = vadd.f32 %v3046, %v3260
  %v3419 = vadd.f32 %v3047, %v3263
  %v3420 = vadd.f32 %v3048, %v3268
  %v3421 = vadd.f32 %v3049, %v3271
  %v3422 = vadd.f32 %v3050, %v3276
  %v3423 = vadd.f32 %v3051, %v3279
  %v3424 = vadd.f32 %v3052, %v3284
  %v3425 = vadd.f32 %v3053, %v3287
  %v3426 = vadd.f32 %v3054, %v3292
  %v3427 = vadd.f32 %v3055, %v3295
  %v3428 = vadd.f32 %v3056, %v3300
  %v3429 = vadd.f32 %v3057, %v3303
  %v3430 = vadd.f32 %v3058, %v3308
  %v3431 = vadd.f32 %v3059, %v3311
  %v3432 = vadd.f32 %v3060, %v3316
  %v3433 = vadd.f32 %v3061, %v3319
  %v3434 = vadd.f32 %v3062, %v3324
  %v3435 = vadd.f32 %v3063, %v3327
  %v3436 = vadd.f32 %v3064, %v3332
  %v3437 = vadd.f32 %v3065, %v3335
  %v3438 = vadd.f32 %v3066, %v3340
  %v3439 = vadd.f32 %v3067, %v3343
  %v3440 = vadd.f32 %v3068, %v3348
  %v3441 = vadd.f32 %v3069, %v3351
  %v3442 = vadd.f32 %v3070, %v3356
  %v3443 = vadd.f32 %v3071, %v3359
  %v3444 = vadd.f32 %v3072, %v3364
  %v3445 = vadd.f32 %v3073, %v3367
  %v3446 = vadd.f32 %v3074, %v3372
  %v3447 = vadd.f32 %v3075, %v3375
  %v3448 = vadd.f32 %v3076, %v3380
  %v3449 = vadd.f32 %v3077, %v3383
  %v3451 = vsel %vm1080, %v84, 0
  %3453 = vmatprep.subr.bf16.mxu0 0
  %3454 = vmatpush1.bf16.msra.mxu0 %v3451
  %3455 = vmatprep.subr.bf16.mxu0 0
  %3456 = vmatpush1.bf16.msra.mxu0 0
  %3457 = vmatprep.subr.bf16.mxu0 0
  %3458 = vmatpush1.bf16.msra.mxu0 0
  %3459 = vmatprep.subr.bf16.mxu0 0
  %3460 = vmatpush1.bf16.msra.mxu0 0
  %3461 = vmatprep.subr.bf16.mxu0 0
  %3462 = vmatpush1.bf16.msra.mxu0 0
  %3463 = vmatprep.subr.bf16.mxu0 0
  %3464 = vmatpush1.bf16.msra.mxu0 0
  %3465 = vmatprep.subr.bf16.mxu0 0
  %3466 = vmatpush1.bf16.msra.mxu0 0
  %3467 = vmatprep.subr.bf16.mxu0 0
  %3468 = vmatpush1.bf16.msra.mxu0 0
  %3469 = vmatprep.subr.bf16.mxu0 0
  %3470 = vmatpush1.bf16.msra.mxu0 0
  %3471 = vmatprep.subr.bf16.mxu0 0
  %3472 = vmatpush1.bf16.msra.mxu0 0
  %3473 = vmatprep.subr.bf16.mxu0 0
  %3474 = vmatpush1.bf16.msra.mxu0 0
  %3475 = vmatprep.subr.bf16.mxu0 0
  %3476 = vmatpush1.bf16.msra.mxu0 0
  %3477 = vmatprep.subr.bf16.mxu0 0
  %3478 = vmatpush1.bf16.msra.mxu0 0
  %3479 = vmatprep.subr.bf16.mxu0 0
  %3480 = vmatpush1.bf16.msra.mxu0 0
  %3481 = vmatprep.subr.bf16.mxu0 0
  %3482 = vmatpush1.bf16.msra.mxu0 0
  %3483 = vmatprep.subr.bf16.mxu0 0
  %3484 = vmatpush1.bf16.msra.mxu0 0
  %3485 = vmatprep.mubr.bf16.mxu0 0
  %3486 = vmatmul.mubr.bf16.gmra.mrb[0].mxu0 %v1377
  %v3487 = vpop.f32.mrb[0].mxu0
  %v3488 = vadd.f32 0.0, %v3487
  %v3489 = vpop.f32.mrb[0].mxu0
  %v3490 = vpop.f32.mrb[0].mxu0
  %v3491 = vadd.f32 0.0, %v3490
  %v3492 = vpop.f32.mrb[0].mxu0
  %3493 = vmatprep.mubr.bf16.mxu0 0
  %3494 = vmatmul.mubr.bf16.gmra.mrb[0].mxu0 %v1379
  %v3495 = vpop.f32.mrb[0].mxu0
  %v3496 = vadd.f32 0.0, %v3495
  %v3497 = vpop.f32.mrb[0].mxu0
  %v3498 = vpop.f32.mrb[0].mxu0
  %v3499 = vadd.f32 0.0, %v3498
  %v3500 = vpop.f32.mrb[0].mxu0
  %3501 = vmatprep.mubr.bf16.mxu0 0
  %3502 = vmatmul.mubr.bf16.gmra.mrb[0].mxu0 %v1381
  %v3503 = vpop.f32.mrb[0].mxu0
  %v3504 = vadd.f32 0.0, %v3503
  %v3505 = vpop.f32.mrb[0].mxu0
  %v3506 = vpop.f32.mrb[0].mxu0
  %v3507 = vadd.f32 0.0, %v3506
  %v3508 = vpop.f32.mrb[0].mxu0
  %3509 = vmatprep.mubr.bf16.mxu0 0
  %3510 = vmatmul.mubr.bf16.gmra.mrb[0].mxu0 %v1383
  %v3511 = vpop.f32.mrb[0].mxu0
  %v3512 = vadd.f32 0.0, %v3511
  %v3513 = vpop.f32.mrb[0].mxu0
  %v3514 = vpop.f32.mrb[0].mxu0
  %v3515 = vadd.f32 0.0, %v3514
  %v3516 = vpop.f32.mrb[0].mxu0
  %3517 = vmatprep.mubr.bf16.mxu0 0
  %3518 = vmatmul.mubr.bf16.gmra.mrb[0].mxu0 %v1385
  %v3519 = vpop.f32.mrb[0].mxu0
  %v3520 = vadd.f32 0.0, %v3519
  %v3521 = vpop.f32.mrb[0].mxu0
  %v3522 = vpop.f32.mrb[0].mxu0
  %v3523 = vadd.f32 0.0, %v3522
  %v3524 = vpop.f32.mrb[0].mxu0
  %3525 = vmatprep.mubr.bf16.mxu0 0
  %3526 = vmatmul.mubr.bf16.gmra.mrb[0].mxu0 %v1387
  %v3527 = vpop.f32.mrb[0].mxu0
  %v3528 = vadd.f32 0.0, %v3527
  %v3529 = vpop.f32.mrb[0].mxu0
  %v3530 = vpop.f32.mrb[0].mxu0
  %v3531 = vadd.f32 0.0, %v3530
  %v3532 = vpop.f32.mrb[0].mxu0
  %3533 = vmatprep.mubr.bf16.mxu0 0
  %3534 = vmatmul.mubr.bf16.gmra.mrb[0].mxu0 %v1389
  %v3535 = vpop.f32.mrb[0].mxu0
  %v3536 = vadd.f32 0.0, %v3535
  %v3537 = vpop.f32.mrb[0].mxu0
  %v3538 = vpop.f32.mrb[0].mxu0
  %v3539 = vadd.f32 0.0, %v3538
  %v3540 = vpop.f32.mrb[0].mxu0
  %3541 = vmatprep.mubr.bf16.mxu0 0
  %3542 = vmatmul.mubr.bf16.gmra.mrb[0].mxu0 %v1391
  %v3543 = vpop.f32.mrb[0].mxu0
  %v3544 = vadd.f32 0.0, %v3543
  %v3545 = vpop.f32.mrb[0].mxu0
  %v3546 = vpop.f32.mrb[0].mxu0
  %v3547 = vadd.f32 0.0, %v3546
  %v3548 = vpop.f32.mrb[0].mxu0
  %3549 = vmatprep.mubr.bf16.mxu0 0
  %3550 = vmatmul.mubr.bf16.gmra.mrb[0].mxu0 %v1393
  %v3551 = vpop.f32.mrb[0].mxu0
  %v3552 = vadd.f32 0.0, %v3551
  %v3553 = vpop.f32.mrb[0].mxu0
  %v3554 = vpop.f32.mrb[0].mxu0
  %v3555 = vadd.f32 0.0, %v3554
  %v3556 = vpop.f32.mrb[0].mxu0
  %3557 = vmatprep.mubr.bf16.mxu0 0
  %3558 = vmatmul.mubr.bf16.gmra.mrb[0].mxu0 %v1395
  %v3559 = vpop.f32.mrb[0].mxu0
  %v3560 = vadd.f32 0.0, %v3559
  %v3561 = vpop.f32.mrb[0].mxu0
  %v3562 = vpop.f32.mrb[0].mxu0
  %v3563 = vadd.f32 0.0, %v3562
  %v3564 = vpop.f32.mrb[0].mxu0
  %3565 = vmatprep.mubr.bf16.mxu0 0
  %3566 = vmatmul.mubr.bf16.gmra.mrb[0].mxu0 %v1397
  %v3567 = vpop.f32.mrb[0].mxu0
  %v3568 = vadd.f32 0.0, %v3567
  %v3569 = vpop.f32.mrb[0].mxu0
  %v3570 = vpop.f32.mrb[0].mxu0
  %v3571 = vadd.f32 0.0, %v3570
  %v3572 = vpop.f32.mrb[0].mxu0
  %3573 = vmatprep.mubr.bf16.mxu0 0
  %3574 = vmatmul.mubr.bf16.gmra.mrb[0].mxu0 %v1399
  %v3575 = vpop.f32.mrb[0].mxu0
  %v3576 = vadd.f32 0.0, %v3575
  %v3577 = vpop.f32.mrb[0].mxu0
  %v3578 = vpop.f32.mrb[0].mxu0
  %v3579 = vadd.f32 0.0, %v3578
  %v3580 = vpop.f32.mrb[0].mxu0
  %3581 = vmatprep.mubr.bf16.mxu0 0
  %3582 = vmatmul.mubr.bf16.gmra.mrb[0].mxu0 %v1401
  %v3583 = vpop.f32.mrb[0].mxu0
  %v3584 = vadd.f32 0.0, %v3583
  %v3585 = vpop.f32.mrb[0].mxu0
  %v3586 = vpop.f32.mrb[0].mxu0
  %v3587 = vadd.f32 0.0, %v3586
  %v3588 = vpop.f32.mrb[0].mxu0
  %3589 = vmatprep.mubr.bf16.mxu0 0
  %3590 = vmatmul.mubr.bf16.gmra.mrb[0].mxu0 %v1403
  %v3591 = vpop.f32.mrb[0].mxu0
  %v3592 = vadd.f32 0.0, %v3591
  %v3593 = vpop.f32.mrb[0].mxu0
  %v3594 = vpop.f32.mrb[0].mxu0
  %v3595 = vadd.f32 0.0, %v3594
  %v3596 = vpop.f32.mrb[0].mxu0
  %3597 = vmatprep.mubr.bf16.mxu0 0
  %3598 = vmatmul.mubr.bf16.gmra.mrb[0].mxu0 %v2333
  %v3599 = vpop.f32.mrb[0].mxu0
  %v3600 = vadd.f32 0.0, %v3599
  %v3601 = vpop.f32.mrb[0].mxu0
  %v3602 = vpop.f32.mrb[0].mxu0
  %v3603 = vadd.f32 0.0, %v3602
  %v3604 = vpop.f32.mrb[0].mxu0
  %3605 = vmatprep.mubr.bf16.mxu0 0
  %3606 = vmatmul.mubr.bf16.gmra.mrb[0].mxu0 %v1373
  %v3607 = vpop.f32.mrb[0].mxu0
  %v3608 = vadd.f32 0.0, %v3607
  %v3609 = vpop.f32.mrb[0].mxu0
  %v3610 = vpop.f32.mrb[0].mxu0
  %v3611 = vadd.f32 0.0, %v3610
  %v3612 = vpop.f32.mrb[0].mxu0
  %3613 = vmatprep.mubr.bf16.mxu0 0
  %3614 = vmatmul.mubr.bf16.gmra.mrb[0].mxu0 %v1407
  %v3615 = vpop.f32.mrb[0].mxu0
  %v3616 = vadd.f32 0.0, %v3615
  %v3617 = vpop.f32.mrb[0].mxu0
  %v3618 = vpop.f32.mrb[0].mxu0
  %v3619 = vadd.f32 0.0, %v3618
  %v3620 = vpop.f32.mrb[0].mxu0
  %3621 = vmatprep.mubr.bf16.mxu0 0
  %3622 = vmatmul.mubr.bf16.gmra.mrb[0].mxu0 %v1409
  %v3623 = vpop.f32.mrb[0].mxu0
  %v3624 = vadd.f32 0.0, %v3623
  %v3625 = vpop.f32.mrb[0].mxu0
  %v3626 = vpop.f32.mrb[0].mxu0
  %v3627 = vadd.f32 0.0, %v3626
  %v3628 = vpop.f32.mrb[0].mxu0
  %3629 = vmatprep.mubr.bf16.mxu0 0
  %3630 = vmatmul.mubr.bf16.gmra.mrb[0].mxu0 %v1411
  %v3631 = vpop.f32.mrb[0].mxu0
  %v3632 = vadd.f32 0.0, %v3631
  %v3633 = vpop.f32.mrb[0].mxu0
  %v3634 = vpop.f32.mrb[0].mxu0
  %v3635 = vadd.f32 0.0, %v3634
  %v3636 = vpop.f32.mrb[0].mxu0
  %3637 = vmatprep.mubr.bf16.mxu0 0
  %3638 = vmatmul.mubr.bf16.gmra.mrb[0].mxu0 %v1413
  %v3639 = vpop.f32.mrb[0].mxu0
  %v3640 = vadd.f32 0.0, %v3639
  %v3641 = vpop.f32.mrb[0].mxu0
  %v3642 = vpop.f32.mrb[0].mxu0
  %v3643 = vadd.f32 0.0, %v3642
  %v3644 = vpop.f32.mrb[0].mxu0
  %3645 = vmatprep.mubr.bf16.mxu0 0
  %3646 = vmatmul.mubr.bf16.gmra.mrb[0].mxu0 %v1415
  %v3647 = vpop.f32.mrb[0].mxu0
  %v3648 = vadd.f32 0.0, %v3647
  %v3649 = vpop.f32.mrb[0].mxu0
  %v3650 = vpop.f32.mrb[0].mxu0
  %v3651 = vadd.f32 0.0, %v3650
  %v3652 = vpop.f32.mrb[0].mxu0
  %3653 = vmatprep.mubr.bf16.mxu0 0
  %3654 = vmatmul.mubr.bf16.gmra.mrb[0].mxu0 %v1417
  %v3655 = vpop.f32.mrb[0].mxu0
  %v3656 = vadd.f32 0.0, %v3655
  %v3657 = vpop.f32.mrb[0].mxu0
  %v3658 = vpop.f32.mrb[0].mxu0
  %v3659 = vadd.f32 0.0, %v3658
  %v3660 = vpop.f32.mrb[0].mxu0
  %3661 = vmatprep.mubr.bf16.mxu0 0
  %3662 = vmatmul.mubr.bf16.gmra.mrb[0].mxu0 %v1419
  %v3663 = vpop.f32.mrb[0].mxu0
  %v3664 = vadd.f32 0.0, %v3663
  %v3665 = vpop.f32.mrb[0].mxu0
  %v3666 = vpop.f32.mrb[0].mxu0
  %v3667 = vadd.f32 0.0, %v3666
  %v3668 = vpop.f32.mrb[0].mxu0
  %3669 = vmatprep.mubr.bf16.mxu0 0
  %3670 = vmatmul.mubr.bf16.gmra.mrb[0].mxu0 %v1421
  %v3671 = vpop.f32.mrb[0].mxu0
  %v3672 = vadd.f32 0.0, %v3671
  %v3673 = vpop.f32.mrb[0].mxu0
  %v3674 = vpop.f32.mrb[0].mxu0
  %v3675 = vadd.f32 0.0, %v3674
  %v3676 = vpop.f32.mrb[0].mxu0
  %3677 = vmatprep.mubr.bf16.mxu0 0
  %3678 = vmatmul.mubr.bf16.gmra.mrb[0].mxu0 %v1423
  %v3679 = vpop.f32.mrb[0].mxu0
  %v3680 = vadd.f32 0.0, %v3679
  %v3681 = vpop.f32.mrb[0].mxu0
  %v3682 = vpop.f32.mrb[0].mxu0
  %v3683 = vadd.f32 0.0, %v3682
  %v3684 = vpop.f32.mrb[0].mxu0
  %3685 = vmatprep.mubr.bf16.mxu0 0
  %3686 = vmatmul.mubr.bf16.gmra.mrb[0].mxu0 %v1425
  %v3687 = vpop.f32.mrb[0].mxu0
  %v3688 = vadd.f32 0.0, %v3687
  %v3689 = vpop.f32.mrb[0].mxu0
  %v3690 = vpop.f32.mrb[0].mxu0
  %v3691 = vadd.f32 0.0, %v3690
  %v3692 = vpop.f32.mrb[0].mxu0
  %3693 = vmatprep.mubr.bf16.mxu0 0
  %3694 = vmatmul.mubr.bf16.gmra.mrb[0].mxu0 %v1427
  %v3695 = vpop.f32.mrb[0].mxu0
  %v3696 = vadd.f32 0.0, %v3695
  %v3697 = vpop.f32.mrb[0].mxu0
  %v3698 = vpop.f32.mrb[0].mxu0
  %v3699 = vadd.f32 0.0, %v3698
  %v3700 = vpop.f32.mrb[0].mxu0
  %3701 = vmatprep.mubr.bf16.mxu0 0
  %3702 = vmatmul.mubr.bf16.gmra.mrb[0].mxu0 %v1429
  %v3703 = vpop.f32.mrb[0].mxu0
  %v3704 = vadd.f32 0.0, %v3703
  %v3705 = vpop.f32.mrb[0].mxu0
  %v3706 = vpop.f32.mrb[0].mxu0
  %v3707 = vadd.f32 0.0, %v3706
  %v3708 = vpop.f32.mrb[0].mxu0
  %3709 = vmatprep.mubr.bf16.mxu0 0
  %3710 = vmatmul.mubr.bf16.gmra.mrb[0].mxu0 %v1431
  %v3711 = vpop.f32.mrb[0].mxu0
  %v3712 = vadd.f32 0.0, %v3711
  %v3713 = vpop.f32.mrb[0].mxu0
  %v3714 = vpop.f32.mrb[0].mxu0
  %v3715 = vadd.f32 0.0, %v3714
  %v3716 = vpop.f32.mrb[0].mxu0
  %3717 = vmatprep.mubr.bf16.mxu0 0
  %3718 = vmatmul.mubr.bf16.gmra.mrb[0].mxu0 %v1433
  %v3719 = vpop.f32.mrb[0].mxu0
  %v3720 = vadd.f32 0.0, %v3719
  %v3721 = vpop.f32.mrb[0].mxu0
  %v3722 = vpop.f32.mrb[0].mxu0
  %v3723 = vadd.f32 0.0, %v3722
  %v3724 = vpop.f32.mrb[0].mxu0
  %3725 = vmatprep.mubr.bf16.mxu0 0
  %3726 = vmatmul.mubr.bf16.gmra.mrb[0].mxu0 %v2336
  %v3727 = vpop.f32.mrb[0].mxu0
  %v3728 = vadd.f32 0.0, %v3727
  %v3729 = vpop.f32.mrb[0].mxu0
  %v3730 = vpop.f32.mrb[0].mxu0
  %v3731 = vadd.f32 0.0, %v3730
  %v3732 = vpop.f32.mrb[0].mxu0
  %3733 = vmatprep.mubr.bf16.mxu0 0
  %3734 = vmatmul.mubr.bf16.gmra.mrb[0].mxu0 %v1373
  %v3735 = vpop.f32.mrb[0].mxu0
  %v3736 = vadd.f32 0.0, %v3735
  %v3737 = vpop.f32.mrb[0].mxu0
  %v3738 = vpop.f32.mrb[0].mxu0
  %v3739 = vadd.f32 0.0, %v3738
  %v3740 = vpop.f32.mrb[0].mxu0
  %3741 = vdwg.mxu0
  %v3742 = vadd.f32 %v3386, %v3488
  %v3743 = vadd.f32 %v3387, %v3491
  %v3744 = vadd.f32 %v3388, %v3496
  %v3745 = vadd.f32 %v3389, %v3499
  %v3746 = vadd.f32 %v3390, %v3504
  %v3747 = vadd.f32 %v3391, %v3507
  %v3748 = vadd.f32 %v3392, %v3512
  %v3749 = vadd.f32 %v3393, %v3515
  %v3750 = vadd.f32 %v3394, %v3520
  %v3751 = vadd.f32 %v3395, %v3523
  %v3752 = vadd.f32 %v3396, %v3528
  %v3753 = vadd.f32 %v3397, %v3531
  %v3754 = vadd.f32 %v3398, %v3536
  %v3755 = vadd.f32 %v3399, %v3539
  %v3756 = vadd.f32 %v3400, %v3544
  %v3757 = vadd.f32 %v3401, %v3547
  %v3758 = vadd.f32 %v3402, %v3552
  %v3759 = vadd.f32 %v3403, %v3555
  %v3760 = vadd.f32 %v3404, %v3560
  %v3761 = vadd.f32 %v3405, %v3563
  %v3762 = vadd.f32 %v3406, %v3568
  %v3763 = vadd.f32 %v3407, %v3571
  %v3764 = vadd.f32 %v3408, %v3576
  %v3765 = vadd.f32 %v3409, %v3579
  %v3766 = vadd.f32 %v3410, %v3584
  %v3767 = vadd.f32 %v3411, %v3587
  %v3768 = vadd.f32 %v3412, %v3592
  %v3769 = vadd.f32 %v3413, %v3595
  %v3770 = vadd.f32 %v3414, %v3600
  %v3771 = vadd.f32 %v3415, %v3603
  %v3772 = vadd.f32 %v3416, %v3608
  %v3773 = vadd.f32 %v3417, %v3611
  %v3774 = vadd.f32 %v3418, %v3616
  %v3775 = vadd.f32 %v3419, %v3619
  %v3776 = vadd.f32 %v3420, %v3624
  %v3777 = vadd.f32 %v3421, %v3627
  %v3778 = vadd.f32 %v3422, %v3632
  %v3779 = vadd.f32 %v3423, %v3635
  %v3780 = vadd.f32 %v3424, %v3640
  %v3781 = vadd.f32 %v3425, %v3643
  %v3782 = vadd.f32 %v3426, %v3648
  %v3783 = vadd.f32 %v3427, %v3651
  %v3784 = vadd.f32 %v3428, %v3656
  %v3785 = vadd.f32 %v3429, %v3659
  %v3786 = vadd.f32 %v3430, %v3664
  %v3787 = vadd.f32 %v3431, %v3667
  %v3788 = vadd.f32 %v3432, %v3672
  %v3789 = vadd.f32 %v3433, %v3675
  %v3790 = vadd.f32 %v3434, %v3680
  %v3791 = vadd.f32 %v3435, %v3683
  %v3792 = vadd.f32 %v3436, %v3688
  %v3793 = vadd.f32 %v3437, %v3691
  %v3794 = vadd.f32 %v3438, %v3696
  %v3795 = vadd.f32 %v3439, %v3699
  %v3796 = vadd.f32 %v3440, %v3704
  %v3797 = vadd.f32 %v3441, %v3707
  %v3798 = vadd.f32 %v3442, %v3712
  %v3799 = vadd.f32 %v3443, %v3715
  %v3800 = vadd.f32 %v3444, %v3720
  %v3801 = vadd.f32 %v3445, %v3723
  %v3802 = vadd.f32 %v3446, %v3728
  %v3803 = vadd.f32 %v3447, %v3731
  %v3804 = vadd.f32 %v3448, %v3736
  %v3805 = vadd.f32 %v3449, %v3739
  %v3807 = vsel %vm1080, %v85, 0
  %3809 = vmatprep.subr.bf16.mxu0 0
  %3810 = vmatpush1.bf16.msra.mxu0 %v3807
  %3811 = vmatprep.subr.bf16.mxu0 0
  %3812 = vmatpush1.bf16.msra.mxu0 0
  %3813 = vmatprep.subr.bf16.mxu0 0
  %3814 = vmatpush1.bf16.msra.mxu0 0
  %3815 = vmatprep.subr.bf16.mxu0 0
  %3816 = vmatpush1.bf16.msra.mxu0 0
  %3817 = vmatprep.subr.bf16.mxu0 0
  %3818 = vmatpush1.bf16.msra.mxu0 0
  %3819 = vmatprep.subr.bf16.mxu0 0
  %3820 = vmatpush1.bf16.msra.mxu0 0
  %3821 = vmatprep.subr.bf16.mxu0 0
  %3822 = vmatpush1.bf16.msra.mxu0 0
  %3823 = vmatprep.subr.bf16.mxu0 0
  %3824 = vmatpush1.bf16.msra.mxu0 0
  %3825 = vmatprep.subr.bf16.mxu0 0
  %3826 = vmatpush1.bf16.msra.mxu0 0
  %3827 = vmatprep.subr.bf16.mxu0 0
  %3828 = vmatpush1.bf16.msra.mxu0 0
  %3829 = vmatprep.subr.bf16.mxu0 0
  %3830 = vmatpush1.bf16.msra.mxu0 0
  %3831 = vmatprep.subr.bf16.mxu0 0
  %3832 = vmatpush1.bf16.msra.mxu0 0
  %3833 = vmatprep.subr.bf16.mxu0 0
  %3834 = vmatpush1.bf16.msra.mxu0 0
  %3835 = vmatprep.subr.bf16.mxu0 0
  %3836 = vmatpush1.bf16.msra.mxu0 0
  %3837 = vmatprep.subr.bf16.mxu0 0
  %3838 = vmatpush1.bf16.msra.mxu0 0
  %3839 = vmatprep.subr.bf16.mxu0 0
  %3840 = vmatpush1.bf16.msra.mxu0 0
  %3841 = vmatprep.mubr.bf16.mxu0 0
  %3842 = vmatmul.mubr.bf16.gmra.mrb[0].mxu0 %v994
  %v3843 = vpop.f32.mrb[0].mxu0
  %v3844 = vadd.f32 0.0, %v3843
  %v3845 = vpop.f32.mrb[0].mxu0
  %v3846 = vpop.f32.mrb[0].mxu0
  %v3847 = vadd.f32 0.0, %v3846
  %v3848 = vpop.f32.mrb[0].mxu0
  %3849 = vmatprep.mubr.bf16.mxu0 0
  %3850 = vmatmul.mubr.bf16.gmra.mrb[0].mxu0 %v997
  %v3851 = vpop.f32.mrb[0].mxu0
  %v3852 = vadd.f32 0.0, %v3851
  %v3853 = vpop.f32.mrb[0].mxu0
  %v3854 = vpop.f32.mrb[0].mxu0
  %v3855 = vadd.f32 0.0, %v3854
  %v3856 = vpop.f32.mrb[0].mxu0
  %3857 = vmatprep.mubr.bf16.mxu0 0
  %3858 = vmatmul.mubr.bf16.gmra.mrb[0].mxu0 %v1000
  %v3859 = vpop.f32.mrb[0].mxu0
  %v3860 = vadd.f32 0.0, %v3859
  %v3861 = vpop.f32.mrb[0].mxu0
  %v3862 = vpop.f32.mrb[0].mxu0
  %v3863 = vadd.f32 0.0, %v3862
  %v3864 = vpop.f32.mrb[0].mxu0
  %3865 = vmatprep.mubr.bf16.mxu0 0
  %3866 = vmatmul.mubr.bf16.gmra.mrb[0].mxu0 %v1003
  %v3867 = vpop.f32.mrb[0].mxu0
  %v3868 = vadd.f32 0.0, %v3867
  %v3869 = vpop.f32.mrb[0].mxu0
  %v3870 = vpop.f32.mrb[0].mxu0
  %v3871 = vadd.f32 0.0, %v3870
  %v3872 = vpop.f32.mrb[0].mxu0
  %3873 = vmatprep.mubr.bf16.mxu0 0
  %3874 = vmatmul.mubr.bf16.gmra.mrb[0].mxu0 %v1006
  %v3875 = vpop.f32.mrb[0].mxu0
  %v3876 = vadd.f32 0.0, %v3875
  %v3877 = vpop.f32.mrb[0].mxu0
  %v3878 = vpop.f32.mrb[0].mxu0
  %v3879 = vadd.f32 0.0, %v3878
  %v3880 = vpop.f32.mrb[0].mxu0
  %3881 = vmatprep.mubr.bf16.mxu0 0
  %3882 = vmatmul.mubr.bf16.gmra.mrb[0].mxu0 %v1009
  %v3883 = vpop.f32.mrb[0].mxu0
  %v3884 = vadd.f32 0.0, %v3883
  %v3885 = vpop.f32.mrb[0].mxu0
  %v3886 = vpop.f32.mrb[0].mxu0
  %v3887 = vadd.f32 0.0, %v3886
  %v3888 = vpop.f32.mrb[0].mxu0
  %3889 = vmatprep.mubr.bf16.mxu0 0
  %3890 = vmatmul.mubr.bf16.gmra.mrb[0].mxu0 %v1012
  %v3891 = vpop.f32.mrb[0].mxu0
  %v3892 = vadd.f32 0.0, %v3891
  %v3893 = vpop.f32.mrb[0].mxu0
  %v3894 = vpop.f32.mrb[0].mxu0
  %v3895 = vadd.f32 0.0, %v3894
  %v3896 = vpop.f32.mrb[0].mxu0
  %3897 = vmatprep.mubr.bf16.mxu0 0
  %3898 = vmatmul.mubr.bf16.gmra.mrb[0].mxu0 %v1015
  %v3899 = vpop.f32.mrb[0].mxu0
  %v3900 = vadd.f32 0.0, %v3899
  %v3901 = vpop.f32.mrb[0].mxu0
  %v3902 = vpop.f32.mrb[0].mxu0
  %v3903 = vadd.f32 0.0, %v3902
  %v3904 = vpop.f32.mrb[0].mxu0
  %3905 = vmatprep.mubr.bf16.mxu0 0
  %3906 = vmatmul.mubr.bf16.gmra.mrb[0].mxu0 %v1018
  %v3907 = vpop.f32.mrb[0].mxu0
  %v3908 = vadd.f32 0.0, %v3907
  %v3909 = vpop.f32.mrb[0].mxu0
  %v3910 = vpop.f32.mrb[0].mxu0
  %v3911 = vadd.f32 0.0, %v3910
  %v3912 = vpop.f32.mrb[0].mxu0
  %3913 = vmatprep.mubr.bf16.mxu0 0
  %3914 = vmatmul.mubr.bf16.gmra.mrb[0].mxu0 %v1021
  %v3915 = vpop.f32.mrb[0].mxu0
  %v3916 = vadd.f32 0.0, %v3915
  %v3917 = vpop.f32.mrb[0].mxu0
  %v3918 = vpop.f32.mrb[0].mxu0
  %v3919 = vadd.f32 0.0, %v3918
  %v3920 = vpop.f32.mrb[0].mxu0
  %3921 = vmatprep.mubr.bf16.mxu0 0
  %3922 = vmatmul.mubr.bf16.gmra.mrb[0].mxu0 %v1024
  %v3923 = vpop.f32.mrb[0].mxu0
  %v3924 = vadd.f32 0.0, %v3923
  %v3925 = vpop.f32.mrb[0].mxu0
  %v3926 = vpop.f32.mrb[0].mxu0
  %v3927 = vadd.f32 0.0, %v3926
  %v3928 = vpop.f32.mrb[0].mxu0
  %3929 = vmatprep.mubr.bf16.mxu0 0
  %3930 = vmatmul.mubr.bf16.gmra.mrb[0].mxu0 %v1027
  %v3931 = vpop.f32.mrb[0].mxu0
  %v3932 = vadd.f32 0.0, %v3931
  %v3933 = vpop.f32.mrb[0].mxu0
  %v3934 = vpop.f32.mrb[0].mxu0
  %v3935 = vadd.f32 0.0, %v3934
  %v3936 = vpop.f32.mrb[0].mxu0
  %3937 = vmatprep.mubr.bf16.mxu0 0
  %3938 = vmatmul.mubr.bf16.gmra.mrb[0].mxu0 %v1030
  %v3939 = vpop.f32.mrb[0].mxu0
  %v3940 = vadd.f32 0.0, %v3939
  %v3941 = vpop.f32.mrb[0].mxu0
  %v3942 = vpop.f32.mrb[0].mxu0
  %v3943 = vadd.f32 0.0, %v3942
  %v3944 = vpop.f32.mrb[0].mxu0
  %3945 = vmatprep.mubr.bf16.mxu0 0
  %3946 = vmatmul.mubr.bf16.gmra.mrb[0].mxu0 %v1033
  %v3947 = vpop.f32.mrb[0].mxu0
  %v3948 = vadd.f32 0.0, %v3947
  %v3949 = vpop.f32.mrb[0].mxu0
  %v3950 = vpop.f32.mrb[0].mxu0
  %v3951 = vadd.f32 0.0, %v3950
  %v3952 = vpop.f32.mrb[0].mxu0
  %3953 = vmatprep.mubr.bf16.mxu0 0
  %3954 = vmatmul.mubr.bf16.gmra.mrb[0].mxu0 %v2717
  %v3955 = vpop.f32.mrb[0].mxu0
  %v3956 = vadd.f32 0.0, %v3955
  %v3957 = vpop.f32.mrb[0].mxu0
  %v3958 = vpop.f32.mrb[0].mxu0
  %v3959 = vadd.f32 0.0, %v3958
  %v3960 = vpop.f32.mrb[0].mxu0
  %3961 = vmatprep.mubr.bf16.mxu0 0
  %3962 = vmatmul.mubr.bf16.gmra.mrb[0].mxu0 %v988
  %v3963 = vpop.f32.mrb[0].mxu0
  %v3964 = vadd.f32 0.0, %v3963
  %v3965 = vpop.f32.mrb[0].mxu0
  %v3966 = vpop.f32.mrb[0].mxu0
  %v3967 = vadd.f32 0.0, %v3966
  %v3968 = vpop.f32.mrb[0].mxu0
  %3969 = vmatprep.mubr.bf16.mxu0 0
  %3970 = vmatmul.mubr.bf16.gmra.mrb[0].mxu0 %v1039
  %v3971 = vpop.f32.mrb[0].mxu0
  %v3972 = vadd.f32 0.0, %v3971
  %v3973 = vpop.f32.mrb[0].mxu0
  %v3974 = vpop.f32.mrb[0].mxu0
  %v3975 = vadd.f32 0.0, %v3974
  %v3976 = vpop.f32.mrb[0].mxu0
  %3977 = vmatprep.mubr.bf16.mxu0 0
  %3978 = vmatmul.mubr.bf16.gmra.mrb[0].mxu0 %v1042
  %v3979 = vpop.f32.mrb[0].mxu0
  %v3980 = vadd.f32 0.0, %v3979
  %v3981 = vpop.f32.mrb[0].mxu0
  %v3982 = vpop.f32.mrb[0].mxu0
  %v3983 = vadd.f32 0.0, %v3982
  %v3984 = vpop.f32.mrb[0].mxu0
  %3985 = vmatprep.mubr.bf16.mxu0 0
  %3986 = vmatmul.mubr.bf16.gmra.mrb[0].mxu0 %v1045
  %v3987 = vpop.f32.mrb[0].mxu0
  %v3988 = vadd.f32 0.0, %v3987
  %v3989 = vpop.f32.mrb[0].mxu0
  %v3990 = vpop.f32.mrb[0].mxu0
  %v3991 = vadd.f32 0.0, %v3990
  %v3992 = vpop.f32.mrb[0].mxu0
  %3993 = vmatprep.mubr.bf16.mxu0 0
  %3994 = vmatmul.mubr.bf16.gmra.mrb[0].mxu0 %v1048
  %v3995 = vpop.f32.mrb[0].mxu0
  %v3996 = vadd.f32 0.0, %v3995
  %v3997 = vpop.f32.mrb[0].mxu0
  %v3998 = vpop.f32.mrb[0].mxu0
  %v3999 = vadd.f32 0.0, %v3998
  %v4000 = vpop.f32.mrb[0].mxu0
  %4001 = vmatprep.mubr.bf16.mxu0 0
  %4002 = vmatmul.mubr.bf16.gmra.mrb[0].mxu0 %v1051
  %v4003 = vpop.f32.mrb[0].mxu0
  %v4004 = vadd.f32 0.0, %v4003
  %v4005 = vpop.f32.mrb[0].mxu0
  %v4006 = vpop.f32.mrb[0].mxu0
  %v4007 = vadd.f32 0.0, %v4006
  %v4008 = vpop.f32.mrb[0].mxu0
  %4009 = vmatprep.mubr.bf16.mxu0 0
  %4010 = vmatmul.mubr.bf16.gmra.mrb[0].mxu0 %v1054
  %v4011 = vpop.f32.mrb[0].mxu0
  %v4012 = vadd.f32 0.0, %v4011
  %v4013 = vpop.f32.mrb[0].mxu0
  %v4014 = vpop.f32.mrb[0].mxu0
  %v4015 = vadd.f32 0.0, %v4014
  %v4016 = vpop.f32.mrb[0].mxu0
  %4017 = vmatprep.mubr.bf16.mxu0 0
  %4018 = vmatmul.mubr.bf16.gmra.mrb[0].mxu0 %v1057
  %v4019 = vpop.f32.mrb[0].mxu0
  %v4020 = vadd.f32 0.0, %v4019
  %v4021 = vpop.f32.mrb[0].mxu0
  %v4022 = vpop.f32.mrb[0].mxu0
  %v4023 = vadd.f32 0.0, %v4022
  %v4024 = vpop.f32.mrb[0].mxu0
  %4025 = vmatprep.mubr.bf16.mxu0 0
  %4026 = vmatmul.mubr.bf16.gmra.mrb[0].mxu0 %v1060
  %v4027 = vpop.f32.mrb[0].mxu0
  %v4028 = vadd.f32 0.0, %v4027
  %v4029 = vpop.f32.mrb[0].mxu0
  %v4030 = vpop.f32.mrb[0].mxu0
  %v4031 = vadd.f32 0.0, %v4030
  %v4032 = vpop.f32.mrb[0].mxu0
  %4033 = vmatprep.mubr.bf16.mxu0 0
  %4034 = vmatmul.mubr.bf16.gmra.mrb[0].mxu0 %v1063
  %v4035 = vpop.f32.mrb[0].mxu0
  %v4036 = vadd.f32 0.0, %v4035
  %v4037 = vpop.f32.mrb[0].mxu0
  %v4038 = vpop.f32.mrb[0].mxu0
  %v4039 = vadd.f32 0.0, %v4038
  %v4040 = vpop.f32.mrb[0].mxu0
  %4041 = vmatprep.mubr.bf16.mxu0 0
  %4042 = vmatmul.mubr.bf16.gmra.mrb[0].mxu0 %v1066
  %v4043 = vpop.f32.mrb[0].mxu0
  %v4044 = vadd.f32 0.0, %v4043
  %v4045 = vpop.f32.mrb[0].mxu0
  %v4046 = vpop.f32.mrb[0].mxu0
  %v4047 = vadd.f32 0.0, %v4046
  %v4048 = vpop.f32.mrb[0].mxu0
  %4049 = vmatprep.mubr.bf16.mxu0 0
  %4050 = vmatmul.mubr.bf16.gmra.mrb[0].mxu0 %v1069
  %v4051 = vpop.f32.mrb[0].mxu0
  %v4052 = vadd.f32 0.0, %v4051
  %v4053 = vpop.f32.mrb[0].mxu0
  %v4054 = vpop.f32.mrb[0].mxu0
  %v4055 = vadd.f32 0.0, %v4054
  %v4056 = vpop.f32.mrb[0].mxu0
  %4057 = vmatprep.mubr.bf16.mxu0 0
  %4058 = vmatmul.mubr.bf16.gmra.mrb[0].mxu0 %v1072
  %v4059 = vpop.f32.mrb[0].mxu0
  %v4060 = vadd.f32 0.0, %v4059
  %v4061 = vpop.f32.mrb[0].mxu0
  %v4062 = vpop.f32.mrb[0].mxu0
  %v4063 = vadd.f32 0.0, %v4062
  %v4064 = vpop.f32.mrb[0].mxu0
  %4065 = vmatprep.mubr.bf16.mxu0 0
  %4066 = vmatmul.mubr.bf16.gmra.mrb[0].mxu0 %v1075
  %v4067 = vpop.f32.mrb[0].mxu0
  %v4068 = vadd.f32 0.0, %v4067
  %v4069 = vpop.f32.mrb[0].mxu0
  %v4070 = vpop.f32.mrb[0].mxu0
  %v4071 = vadd.f32 0.0, %v4070
  %v4072 = vpop.f32.mrb[0].mxu0
  %4073 = vmatprep.mubr.bf16.mxu0 0
  %4074 = vmatmul.mubr.bf16.gmra.mrb[0].mxu0 %v1078
  %v4075 = vpop.f32.mrb[0].mxu0
  %v4076 = vadd.f32 0.0, %v4075
  %v4077 = vpop.f32.mrb[0].mxu0
  %v4078 = vpop.f32.mrb[0].mxu0
  %v4079 = vadd.f32 0.0, %v4078
  %v4080 = vpop.f32.mrb[0].mxu0
  %4081 = vmatprep.mubr.bf16.mxu0 0
  %4082 = vmatmul.mubr.bf16.gmra.mrb[0].mxu0 %v2720
  %v4083 = vpop.f32.mrb[0].mxu0
  %v4084 = vadd.f32 0.0, %v4083
  %v4085 = vpop.f32.mrb[0].mxu0
  %v4086 = vpop.f32.mrb[0].mxu0
  %v4087 = vadd.f32 0.0, %v4086
  %v4088 = vpop.f32.mrb[0].mxu0
  %4089 = vmatprep.mubr.bf16.mxu0 0
  %4090 = vmatmul.mubr.bf16.gmra.mrb[0].mxu0 %v988
  %v4091 = vpop.f32.mrb[0].mxu0
  %v4092 = vadd.f32 0.0, %v4091
  %v4093 = vpop.f32.mrb[0].mxu0
  %v4094 = vpop.f32.mrb[0].mxu0
  %v4095 = vadd.f32 0.0, %v4094
  %v4096 = vpop.f32.mrb[0].mxu0
  %4097 = vdwg.mxu0
  %v4098 = vadd.f32 %v3742, %v3844
  %v4099 = vadd.f32 %v3743, %v3847
  %v4100 = vadd.f32 %v3744, %v3852
  %v4101 = vadd.f32 %v3745, %v3855
  %v4102 = vadd.f32 %v3746, %v3860
  %v4103 = vadd.f32 %v3747, %v3863
  %v4104 = vadd.f32 %v3748, %v3868
  %v4105 = vadd.f32 %v3749, %v3871
  %v4106 = vadd.f32 %v3750, %v3876
  %v4107 = vadd.f32 %v3751, %v3879
  %v4108 = vadd.f32 %v3752, %v3884
  %v4109 = vadd.f32 %v3753, %v3887
  %v4110 = vadd.f32 %v3754, %v3892
  %v4111 = vadd.f32 %v3755, %v3895
  %v4112 = vadd.f32 %v3756, %v3900
  %v4113 = vadd.f32 %v3757, %v3903
  %v4114 = vadd.f32 %v3758, %v3908
  %v4115 = vadd.f32 %v3759, %v3911
  %v4116 = vadd.f32 %v3760, %v3916
  %v4117 = vadd.f32 %v3761, %v3919
  %v4118 = vadd.f32 %v3762, %v3924
  %v4119 = vadd.f32 %v3763, %v3927
  %v4120 = vadd.f32 %v3764, %v3932
  %v4121 = vadd.f32 %v3765, %v3935
  %v4122 = vadd.f32 %v3766, %v3940
  %v4123 = vadd.f32 %v3767, %v3943
  %v4124 = vadd.f32 %v3768, %v3948
  %v4125 = vadd.f32 %v3769, %v3951
  %v4126 = vadd.f32 %v3770, %v3956
  %v4127 = vadd.f32 %v3771, %v3959
  %v4128 = vadd.f32 %v3772, %v3964
  %v4129 = vadd.f32 %v3773, %v3967
  %v4130 = vadd.f32 %v3774, %v3972
  %v4131 = vadd.f32 %v3775, %v3975
  %v4132 = vadd.f32 %v3776, %v3980
  %v4133 = vadd.f32 %v3777, %v3983
  %v4134 = vadd.f32 %v3778, %v3988
  %v4135 = vadd.f32 %v3779, %v3991
  %v4136 = vadd.f32 %v3780, %v3996
  %v4137 = vadd.f32 %v3781, %v3999
  %v4138 = vadd.f32 %v3782, %v4004
  %v4139 = vadd.f32 %v3783, %v4007
  %v4140 = vadd.f32 %v3784, %v4012
  %v4141 = vadd.f32 %v3785, %v4015
  %v4142 = vadd.f32 %v3786, %v4020
  %v4143 = vadd.f32 %v3787, %v4023
  %v4144 = vadd.f32 %v3788, %v4028
  %v4145 = vadd.f32 %v3789, %v4031
  %v4146 = vadd.f32 %v3790, %v4036
  %v4147 = vadd.f32 %v3791, %v4039
  %v4148 = vadd.f32 %v3792, %v4044
  %v4149 = vadd.f32 %v3793, %v4047
  %v4150 = vadd.f32 %v3794, %v4052
  %v4151 = vadd.f32 %v3795, %v4055
  %v4152 = vadd.f32 %v3796, %v4060
  %v4153 = vadd.f32 %v3797, %v4063
  %v4154 = vadd.f32 %v3798, %v4068
  %v4155 = vadd.f32 %v3799, %v4071
  %v4156 = vadd.f32 %v3800, %v4076
  %v4157 = vadd.f32 %v3801, %v4079
  %v4158 = vadd.f32 %v3802, %v4084
  %v4159 = vadd.f32 %v3803, %v4087
  %v4160 = vadd.f32 %v3804, %v4092
  %v4161 = vadd.f32 %v3805, %v4095
  %v4163 = vsel %vm1080, %v86, 0
  %4165 = vmatprep.subr.bf16.mxu0 0
  %4166 = vmatpush1.bf16.msra.mxu0 %v4163
  %4167 = vmatprep.subr.bf16.mxu0 0
  %4168 = vmatpush1.bf16.msra.mxu0 0
  %4169 = vmatprep.subr.bf16.mxu0 0
  %4170 = vmatpush1.bf16.msra.mxu0 0
  %4171 = vmatprep.subr.bf16.mxu0 0
  %4172 = vmatpush1.bf16.msra.mxu0 0
  %4173 = vmatprep.subr.bf16.mxu0 0
  %4174 = vmatpush1.bf16.msra.mxu0 0
  %4175 = vmatprep.subr.bf16.mxu0 0
  %4176 = vmatpush1.bf16.msra.mxu0 0
  %4177 = vmatprep.subr.bf16.mxu0 0
  %4178 = vmatpush1.bf16.msra.mxu0 0
  %4179 = vmatprep.subr.bf16.mxu0 0
  %4180 = vmatpush1.bf16.msra.mxu0 0
  %4181 = vmatprep.subr.bf16.mxu0 0
  %4182 = vmatpush1.bf16.msra.mxu0 0
  %4183 = vmatprep.subr.bf16.mxu0 0
  %4184 = vmatpush1.bf16.msra.mxu0 0
  %4185 = vmatprep.subr.bf16.mxu0 0
  %4186 = vmatpush1.bf16.msra.mxu0 0
  %4187 = vmatprep.subr.bf16.mxu0 0
  %4188 = vmatpush1.bf16.msra.mxu0 0
  %4189 = vmatprep.subr.bf16.mxu0 0
  %4190 = vmatpush1.bf16.msra.mxu0 0
  %4191 = vmatprep.subr.bf16.mxu0 0
  %4192 = vmatpush1.bf16.msra.mxu0 0
  %4193 = vmatprep.subr.bf16.mxu0 0
  %4194 = vmatpush1.bf16.msra.mxu0 0
  %4195 = vmatprep.subr.bf16.mxu0 0
  %4196 = vmatpush1.bf16.msra.mxu0 0
  %4197 = vmatprep.mubr.bf16.mxu0 0
  %4198 = vmatmul.mubr.bf16.gmra.mrb[0].mxu0 %v1890
  %v4199 = vpop.f32.mrb[0].mxu0
  %v4200 = vadd.f32 0.0, %v4199
  %v4201 = vpop.f32.mrb[0].mxu0
  %v4202 = vpop.f32.mrb[0].mxu0
  %v4203 = vadd.f32 0.0, %v4202
  %v4204 = vpop.f32.mrb[0].mxu0
  %4205 = vmatprep.mubr.bf16.mxu0 0
  %4206 = vmatmul.mubr.bf16.gmra.mrb[0].mxu0 %v1893
  %v4207 = vpop.f32.mrb[0].mxu0
  %v4208 = vadd.f32 0.0, %v4207
  %v4209 = vpop.f32.mrb[0].mxu0
  %v4210 = vpop.f32.mrb[0].mxu0
  %v4211 = vadd.f32 0.0, %v4210
  %v4212 = vpop.f32.mrb[0].mxu0
  %4213 = vmatprep.mubr.bf16.mxu0 0
  %4214 = vmatmul.mubr.bf16.gmra.mrb[0].mxu0 %v1896
  %v4215 = vpop.f32.mrb[0].mxu0
  %v4216 = vadd.f32 0.0, %v4215
  %v4217 = vpop.f32.mrb[0].mxu0
  %v4218 = vpop.f32.mrb[0].mxu0
  %v4219 = vadd.f32 0.0, %v4218
  %v4220 = vpop.f32.mrb[0].mxu0
  %4221 = vmatprep.mubr.bf16.mxu0 0
  %4222 = vmatmul.mubr.bf16.gmra.mrb[0].mxu0 %v1899
  %v4223 = vpop.f32.mrb[0].mxu0
  %v4224 = vadd.f32 0.0, %v4223
  %v4225 = vpop.f32.mrb[0].mxu0
  %v4226 = vpop.f32.mrb[0].mxu0
  %v4227 = vadd.f32 0.0, %v4226
  %v4228 = vpop.f32.mrb[0].mxu0
  %4229 = vmatprep.mubr.bf16.mxu0 0
  %4230 = vmatmul.mubr.bf16.gmra.mrb[0].mxu0 %v1902
  %v4231 = vpop.f32.mrb[0].mxu0
  %v4232 = vadd.f32 0.0, %v4231
  %v4233 = vpop.f32.mrb[0].mxu0
  %v4234 = vpop.f32.mrb[0].mxu0
  %v4235 = vadd.f32 0.0, %v4234
  %v4236 = vpop.f32.mrb[0].mxu0
  %4237 = vmatprep.mubr.bf16.mxu0 0
  %4238 = vmatmul.mubr.bf16.gmra.mrb[0].mxu0 %v1905
  %v4239 = vpop.f32.mrb[0].mxu0
  %v4240 = vadd.f32 0.0, %v4239
  %v4241 = vpop.f32.mrb[0].mxu0
  %v4242 = vpop.f32.mrb[0].mxu0
  %v4243 = vadd.f32 0.0, %v4242
  %v4244 = vpop.f32.mrb[0].mxu0
  %4245 = vmatprep.mubr.bf16.mxu0 0
  %4246 = vmatmul.mubr.bf16.gmra.mrb[0].mxu0 %v1908
  %v4247 = vpop.f32.mrb[0].mxu0
  %v4248 = vadd.f32 0.0, %v4247
  %v4249 = vpop.f32.mrb[0].mxu0
  %v4250 = vpop.f32.mrb[0].mxu0
  %v4251 = vadd.f32 0.0, %v4250
  %v4252 = vpop.f32.mrb[0].mxu0
  %4253 = vmatprep.mubr.bf16.mxu0 0
  %4254 = vmatmul.mubr.bf16.gmra.mrb[0].mxu0 %v1911
  %v4255 = vpop.f32.mrb[0].mxu0
  %v4256 = vadd.f32 0.0, %v4255
  %v4257 = vpop.f32.mrb[0].mxu0
  %v4258 = vpop.f32.mrb[0].mxu0
  %v4259 = vadd.f32 0.0, %v4258
  %v4260 = vpop.f32.mrb[0].mxu0
  %4261 = vmatprep.mubr.bf16.mxu0 0
  %4262 = vmatmul.mubr.bf16.gmra.mrb[0].mxu0 %v1914
  %v4263 = vpop.f32.mrb[0].mxu0
  %v4264 = vadd.f32 0.0, %v4263
  %v4265 = vpop.f32.mrb[0].mxu0
  %v4266 = vpop.f32.mrb[0].mxu0
  %v4267 = vadd.f32 0.0, %v4266
  %v4268 = vpop.f32.mrb[0].mxu0
  %4269 = vmatprep.mubr.bf16.mxu0 0
  %4270 = vmatmul.mubr.bf16.gmra.mrb[0].mxu0 %v1917
  %v4271 = vpop.f32.mrb[0].mxu0
  %v4272 = vadd.f32 0.0, %v4271
  %v4273 = vpop.f32.mrb[0].mxu0
  %v4274 = vpop.f32.mrb[0].mxu0
  %v4275 = vadd.f32 0.0, %v4274
  %v4276 = vpop.f32.mrb[0].mxu0
  %4277 = vmatprep.mubr.bf16.mxu0 0
  %4278 = vmatmul.mubr.bf16.gmra.mrb[0].mxu0 %v1920
  %v4279 = vpop.f32.mrb[0].mxu0
  %v4280 = vadd.f32 0.0, %v4279
  %v4281 = vpop.f32.mrb[0].mxu0
  %v4282 = vpop.f32.mrb[0].mxu0
  %v4283 = vadd.f32 0.0, %v4282
  %v4284 = vpop.f32.mrb[0].mxu0
  %4285 = vmatprep.mubr.bf16.mxu0 0
  %4286 = vmatmul.mubr.bf16.gmra.mrb[0].mxu0 %v1923
  %v4287 = vpop.f32.mrb[0].mxu0
  %v4288 = vadd.f32 0.0, %v4287
  %v4289 = vpop.f32.mrb[0].mxu0
  %v4290 = vpop.f32.mrb[0].mxu0
  %v4291 = vadd.f32 0.0, %v4290
  %v4292 = vpop.f32.mrb[0].mxu0
  %4293 = vmatprep.mubr.bf16.mxu0 0
  %4294 = vmatmul.mubr.bf16.gmra.mrb[0].mxu0 %v1926
  %v4295 = vpop.f32.mrb[0].mxu0
  %v4296 = vadd.f32 0.0, %v4295
  %v4297 = vpop.f32.mrb[0].mxu0
  %v4298 = vpop.f32.mrb[0].mxu0
  %v4299 = vadd.f32 0.0, %v4298
  %v4300 = vpop.f32.mrb[0].mxu0
  %4301 = vmatprep.mubr.bf16.mxu0 0
  %4302 = vmatmul.mubr.bf16.gmra.mrb[0].mxu0 %v1929
  %v4303 = vpop.f32.mrb[0].mxu0
  %v4304 = vadd.f32 0.0, %v4303
  %v4305 = vpop.f32.mrb[0].mxu0
  %v4306 = vpop.f32.mrb[0].mxu0
  %v4307 = vadd.f32 0.0, %v4306
  %v4308 = vpop.f32.mrb[0].mxu0
  %4309 = vmatprep.mubr.bf16.mxu0 0
  %4310 = vmatmul.mubr.bf16.gmra.mrb[0].mxu0 %v3089
  %v4311 = vpop.f32.mrb[0].mxu0
  %v4312 = vadd.f32 0.0, %v4311
  %v4313 = vpop.f32.mrb[0].mxu0
  %v4314 = vpop.f32.mrb[0].mxu0
  %v4315 = vadd.f32 0.0, %v4314
  %v4316 = vpop.f32.mrb[0].mxu0
  %4317 = vmatprep.mubr.bf16.mxu0 0
  %4318 = vmatmul.mubr.bf16.gmra.mrb[0].mxu0 %v1884
  %v4319 = vpop.f32.mrb[0].mxu0
  %v4320 = vadd.f32 0.0, %v4319
  %v4321 = vpop.f32.mrb[0].mxu0
  %v4322 = vpop.f32.mrb[0].mxu0
  %v4323 = vadd.f32 0.0, %v4322
  %v4324 = vpop.f32.mrb[0].mxu0
  %4325 = vmatprep.mubr.bf16.mxu0 0
  %4326 = vmatmul.mubr.bf16.gmra.mrb[0].mxu0 %v1935
  %v4327 = vpop.f32.mrb[0].mxu0
  %v4328 = vadd.f32 0.0, %v4327
  %v4329 = vpop.f32.mrb[0].mxu0
  %v4330 = vpop.f32.mrb[0].mxu0
  %v4331 = vadd.f32 0.0, %v4330
  %v4332 = vpop.f32.mrb[0].mxu0
  %4333 = vmatprep.mubr.bf16.mxu0 0
  %4334 = vmatmul.mubr.bf16.gmra.mrb[0].mxu0 %v1938
  %v4335 = vpop.f32.mrb[0].mxu0
  %v4336 = vadd.f32 0.0, %v4335
  %v4337 = vpop.f32.mrb[0].mxu0
  %v4338 = vpop.f32.mrb[0].mxu0
  %v4339 = vadd.f32 0.0, %v4338
  %v4340 = vpop.f32.mrb[0].mxu0
  %4341 = vmatprep.mubr.bf16.mxu0 0
  %4342 = vmatmul.mubr.bf16.gmra.mrb[0].mxu0 %v1941
  %v4343 = vpop.f32.mrb[0].mxu0
  %v4344 = vadd.f32 0.0, %v4343
  %v4345 = vpop.f32.mrb[0].mxu0
  %v4346 = vpop.f32.mrb[0].mxu0
  %v4347 = vadd.f32 0.0, %v4346
  %v4348 = vpop.f32.mrb[0].mxu0
  %4349 = vmatprep.mubr.bf16.mxu0 0
  %4350 = vmatmul.mubr.bf16.gmra.mrb[0].mxu0 %v1944
  %v4351 = vpop.f32.mrb[0].mxu0
  %v4352 = vadd.f32 0.0, %v4351
  %v4353 = vpop.f32.mrb[0].mxu0
  %v4354 = vpop.f32.mrb[0].mxu0
  %v4355 = vadd.f32 0.0, %v4354
  %v4356 = vpop.f32.mrb[0].mxu0
  %4357 = vmatprep.mubr.bf16.mxu0 0
  %4358 = vmatmul.mubr.bf16.gmra.mrb[0].mxu0 %v1947
  %v4359 = vpop.f32.mrb[0].mxu0
  %v4360 = vadd.f32 0.0, %v4359
  %v4361 = vpop.f32.mrb[0].mxu0
  %v4362 = vpop.f32.mrb[0].mxu0
  %v4363 = vadd.f32 0.0, %v4362
  %v4364 = vpop.f32.mrb[0].mxu0
  %4365 = vmatprep.mubr.bf16.mxu0 0
  %4366 = vmatmul.mubr.bf16.gmra.mrb[0].mxu0 %v1950
  %v4367 = vpop.f32.mrb[0].mxu0
  %v4368 = vadd.f32 0.0, %v4367
  %v4369 = vpop.f32.mrb[0].mxu0
  %v4370 = vpop.f32.mrb[0].mxu0
  %v4371 = vadd.f32 0.0, %v4370
  %v4372 = vpop.f32.mrb[0].mxu0
  %4373 = vmatprep.mubr.bf16.mxu0 0
  %4374 = vmatmul.mubr.bf16.gmra.mrb[0].mxu0 %v1953
  %v4375 = vpop.f32.mrb[0].mxu0
  %v4376 = vadd.f32 0.0, %v4375
  %v4377 = vpop.f32.mrb[0].mxu0
  %v4378 = vpop.f32.mrb[0].mxu0
  %v4379 = vadd.f32 0.0, %v4378
  %v4380 = vpop.f32.mrb[0].mxu0
  %4381 = vmatprep.mubr.bf16.mxu0 0
  %4382 = vmatmul.mubr.bf16.gmra.mrb[0].mxu0 %v1956
  %v4383 = vpop.f32.mrb[0].mxu0
  %v4384 = vadd.f32 0.0, %v4383
  %v4385 = vpop.f32.mrb[0].mxu0
  %v4386 = vpop.f32.mrb[0].mxu0
  %v4387 = vadd.f32 0.0, %v4386
  %v4388 = vpop.f32.mrb[0].mxu0
  %4389 = vmatprep.mubr.bf16.mxu0 0
  %4390 = vmatmul.mubr.bf16.gmra.mrb[0].mxu0 %v1959
  %v4391 = vpop.f32.mrb[0].mxu0
  %v4392 = vadd.f32 0.0, %v4391
  %v4393 = vpop.f32.mrb[0].mxu0
  %v4394 = vpop.f32.mrb[0].mxu0
  %v4395 = vadd.f32 0.0, %v4394
  %v4396 = vpop.f32.mrb[0].mxu0
  %4397 = vmatprep.mubr.bf16.mxu0 0
  %4398 = vmatmul.mubr.bf16.gmra.mrb[0].mxu0 %v1962
  %v4399 = vpop.f32.mrb[0].mxu0
  %v4400 = vadd.f32 0.0, %v4399
  %v4401 = vpop.f32.mrb[0].mxu0
  %v4402 = vpop.f32.mrb[0].mxu0
  %v4403 = vadd.f32 0.0, %v4402
  %v4404 = vpop.f32.mrb[0].mxu0
  %4405 = vmatprep.mubr.bf16.mxu0 0
  %4406 = vmatmul.mubr.bf16.gmra.mrb[0].mxu0 %v1965
  %v4407 = vpop.f32.mrb[0].mxu0
  %v4408 = vadd.f32 0.0, %v4407
  %v4409 = vpop.f32.mrb[0].mxu0
  %v4410 = vpop.f32.mrb[0].mxu0
  %v4411 = vadd.f32 0.0, %v4410
  %v4412 = vpop.f32.mrb[0].mxu0
  %4413 = vmatprep.mubr.bf16.mxu0 0
  %4414 = vmatmul.mubr.bf16.gmra.mrb[0].mxu0 %v1968
  %v4415 = vpop.f32.mrb[0].mxu0
  %v4416 = vadd.f32 0.0, %v4415
  %v4417 = vpop.f32.mrb[0].mxu0
  %v4418 = vpop.f32.mrb[0].mxu0
  %v4419 = vadd.f32 0.0, %v4418
  %v4420 = vpop.f32.mrb[0].mxu0
  %4421 = vmatprep.mubr.bf16.mxu0 0
  %4422 = vmatmul.mubr.bf16.gmra.mrb[0].mxu0 %v1971
  %v4423 = vpop.f32.mrb[0].mxu0
  %v4424 = vadd.f32 0.0, %v4423
  %v4425 = vpop.f32.mrb[0].mxu0
  %v4426 = vpop.f32.mrb[0].mxu0
  %v4427 = vadd.f32 0.0, %v4426
  %v4428 = vpop.f32.mrb[0].mxu0
  %4429 = vmatprep.mubr.bf16.mxu0 0
  %4430 = vmatmul.mubr.bf16.gmra.mrb[0].mxu0 %v1974
  %v4431 = vpop.f32.mrb[0].mxu0
  %v4432 = vadd.f32 0.0, %v4431
  %v4433 = vpop.f32.mrb[0].mxu0
  %v4434 = vpop.f32.mrb[0].mxu0
  %v4435 = vadd.f32 0.0, %v4434
  %v4436 = vpop.f32.mrb[0].mxu0
  %4437 = vmatprep.mubr.bf16.mxu0 0
  %4438 = vmatmul.mubr.bf16.gmra.mrb[0].mxu0 %v3092
  %v4439 = vpop.f32.mrb[0].mxu0
  %v4440 = vadd.f32 0.0, %v4439
  %v4441 = vpop.f32.mrb[0].mxu0
  %v4442 = vpop.f32.mrb[0].mxu0
  %v4443 = vadd.f32 0.0, %v4442
  %v4444 = vpop.f32.mrb[0].mxu0
  %4445 = vmatprep.mubr.bf16.mxu0 0
  %4446 = vmatmul.mubr.bf16.gmra.mrb[0].mxu0 %v1884
  %v4447 = vpop.f32.mrb[0].mxu0
  %v4448 = vadd.f32 0.0, %v4447
  %v4449 = vpop.f32.mrb[0].mxu0
  %v4450 = vpop.f32.mrb[0].mxu0
  %v4451 = vadd.f32 0.0, %v4450
  %v4452 = vpop.f32.mrb[0].mxu0
  %4453 = vdwg.mxu0
  %v4454 = vadd.f32 %v4098, %v4200
  %v4455 = vadd.f32 %v4099, %v4203
  %v4456 = vadd.f32 %v4100, %v4208
  %v4457 = vadd.f32 %v4101, %v4211
  %v4458 = vadd.f32 %v4102, %v4216
  %v4459 = vadd.f32 %v4103, %v4219
  %v4460 = vadd.f32 %v4104, %v4224
  %v4461 = vadd.f32 %v4105, %v4227
  %v4462 = vadd.f32 %v4106, %v4232
  %v4463 = vadd.f32 %v4107, %v4235
  %v4464 = vadd.f32 %v4108, %v4240
  %v4465 = vadd.f32 %v4109, %v4243
  %v4466 = vadd.f32 %v4110, %v4248
  %v4467 = vadd.f32 %v4111, %v4251
  %v4468 = vadd.f32 %v4112, %v4256
  %v4469 = vadd.f32 %v4113, %v4259
  %v4470 = vadd.f32 %v4114, %v4264
  %v4471 = vadd.f32 %v4115, %v4267
  %v4472 = vadd.f32 %v4116, %v4272
  %v4473 = vadd.f32 %v4117, %v4275
  %v4474 = vadd.f32 %v4118, %v4280
  %v4475 = vadd.f32 %v4119, %v4283
  %v4476 = vadd.f32 %v4120, %v4288
  %v4477 = vadd.f32 %v4121, %v4291
  %v4478 = vadd.f32 %v4122, %v4296
  %v4479 = vadd.f32 %v4123, %v4299
  %v4480 = vadd.f32 %v4124, %v4304
  %v4481 = vadd.f32 %v4125, %v4307
  %v4482 = vadd.f32 %v4126, %v4312
  %v4483 = vadd.f32 %v4127, %v4315
  %v4484 = vadd.f32 %v4128, %v4320
  %v4485 = vadd.f32 %v4129, %v4323
  %v4486 = vadd.f32 %v4130, %v4328
  %v4487 = vadd.f32 %v4131, %v4331
  %v4488 = vadd.f32 %v4132, %v4336
  %v4489 = vadd.f32 %v4133, %v4339
  %v4490 = vadd.f32 %v4134, %v4344
  %v4491 = vadd.f32 %v4135, %v4347
  %v4492 = vadd.f32 %v4136, %v4352
  %v4493 = vadd.f32 %v4137, %v4355
  %v4494 = vadd.f32 %v4138, %v4360
  %v4495 = vadd.f32 %v4139, %v4363
  %v4496 = vadd.f32 %v4140, %v4368
  %v4497 = vadd.f32 %v4141, %v4371
  %v4498 = vadd.f32 %v4142, %v4376
  %v4499 = vadd.f32 %v4143, %v4379
  %v4500 = vadd.f32 %v4144, %v4384
  %v4501 = vadd.f32 %v4145, %v4387
  %v4502 = vadd.f32 %v4146, %v4392
  %v4503 = vadd.f32 %v4147, %v4395
  %v4504 = vadd.f32 %v4148, %v4400
  %v4505 = vadd.f32 %v4149, %v4403
  %v4506 = vadd.f32 %v4150, %v4408
  %v4507 = vadd.f32 %v4151, %v4411
  %v4508 = vadd.f32 %v4152, %v4416
  %v4509 = vadd.f32 %v4153, %v4419
  %v4510 = vadd.f32 %v4154, %v4424
  %v4511 = vadd.f32 %v4155, %v4427
  %v4512 = vadd.f32 %v4156, %v4432
  %v4513 = vadd.f32 %v4157, %v4435
  %v4514 = vadd.f32 %v4158, %v4440
  %v4515 = vadd.f32 %v4159, %v4443
  %v4516 = vadd.f32 %v4160, %v4448
  %v4517 = vadd.f32 %v4161, %v4451
  %v4518 = vpack.c.bf16 %v4455, %v4454
  %v4519 = vpack.c.bf16 %v4457, %v4456
  %v4520 = vpack.c.bf16 %v4459, %v4458
  %v4521 = vpack.c.bf16 %v4461, %v4460
  %v4522 = vpack.c.bf16 %v4463, %v4462
  %v4523 = vpack.c.bf16 %v4465, %v4464
  %v4524 = vpack.c.bf16 %v4467, %v4466
  %v4525 = vpack.c.bf16 %v4469, %v4468
  %v4526 = vpack.c.bf16 %v4471, %v4470
  %v4527 = vpack.c.bf16 %v4473, %v4472
  %v4528 = vpack.c.bf16 %v4475, %v4474
  %v4529 = vpack.c.bf16 %v4477, %v4476
  %v4530 = vpack.c.bf16 %v4479, %v4478
  %v4531 = vpack.c.bf16 %v4481, %v4480
  %v4532 = vpack.c.bf16 %v4483, %v4482
  %v4533 = vpack.c.bf16 %v4485, %v4484
  %v4534 = vpack.c.bf16 %v4487, %v4486
  %v4535 = vpack.c.bf16 %v4489, %v4488
  %v4536 = vpack.c.bf16 %v4491, %v4490
  %v4537 = vpack.c.bf16 %v4493, %v4492
  %v4538 = vpack.c.bf16 %v4495, %v4494
  %v4539 = vpack.c.bf16 %v4497, %v4496
  %v4540 = vpack.c.bf16 %v4499, %v4498
  %v4541 = vpack.c.bf16 %v4501, %v4500
  %v4542 = vpack.c.bf16 %v4503, %v4502
  %v4543 = vpack.c.bf16 %v4505, %v4504
  %v4544 = vpack.c.bf16 %v4507, %v4506
  %v4545 = vpack.c.bf16 %v4509, %v4508
  %v4546 = vpack.c.bf16 %v4511, %v4510
  %v4547 = vpack.c.bf16 %v4513, %v4512
  %v4548 = vpack.c.bf16 %v4515, %v4514
  %v4549 = vpack.c.bf16 %v4517, %v4516
  %v4582 = vunpack.c.l.b16 %v4518
  %v4583 = vunpack.c.h.b16 %v4518
  %v4584 = vunpack.c.l.b16 %v4519
  %v4585 = vunpack.c.h.b16 %v4519
  %v4586 = vunpack.c.l.b16 %v4520
  %v4587 = vunpack.c.h.b16 %v4520
  %v4588 = vunpack.c.l.b16 %v4521
  %v4589 = vunpack.c.h.b16 %v4521
  %v4590 = vunpack.c.l.b16 %v4522
  %v4591 = vunpack.c.h.b16 %v4522
  %v4592 = vunpack.c.l.b16 %v4523
  %v4593 = vunpack.c.h.b16 %v4523
  %v4594 = vunpack.c.l.b16 %v4524
  %v4595 = vunpack.c.h.b16 %v4524
  %v4596 = vunpack.c.l.b16 %v4525
  %v4597 = vunpack.c.h.b16 %v4525
  %v4598 = vunpack.c.l.b16 %v4526
  %v4599 = vunpack.c.h.b16 %v4526
  %v4600 = vunpack.c.l.b16 %v4527
  %v4601 = vunpack.c.h.b16 %v4527
  %v4602 = vunpack.c.l.b16 %v4528
  %v4603 = vunpack.c.h.b16 %v4528
  %v4604 = vunpack.c.l.b16 %v4529
  %v4605 = vunpack.c.h.b16 %v4529
  %v4606 = vunpack.c.l.b16 %v4530
  %v4607 = vunpack.c.h.b16 %v4530
  %v4608 = vunpack.c.l.b16 %v4531
  %v4609 = vunpack.c.h.b16 %v4531
  %v4610 = vunpack.c.l.b16 %v4532
  %v4611 = vunpack.c.h.b16 %v4532
  %v4612 = vunpack.c.l.b16 %v4533
  %v4613 = vunpack.c.h.b16 %v4533
  %v4614 = vunpack.c.l.b16 %v4534
  %v4615 = vunpack.c.h.b16 %v4534
  %v4616 = vunpack.c.l.b16 %v4535
  %v4617 = vunpack.c.h.b16 %v4535
  %v4618 = vunpack.c.l.b16 %v4536
  %v4619 = vunpack.c.h.b16 %v4536
  %v4620 = vunpack.c.l.b16 %v4537
  %v4621 = vunpack.c.h.b16 %v4537
  %v4622 = vunpack.c.l.b16 %v4538
  %v4623 = vunpack.c.h.b16 %v4538
  %v4624 = vunpack.c.l.b16 %v4539
  %v4625 = vunpack.c.h.b16 %v4539
  %v4626 = vunpack.c.l.b16 %v4540
  %v4627 = vunpack.c.h.b16 %v4540
  %v4628 = vunpack.c.l.b16 %v4541
  %v4629 = vunpack.c.h.b16 %v4541
  %v4630 = vunpack.c.l.b16 %v4542
  %v4631 = vunpack.c.h.b16 %v4542
  %v4632 = vunpack.c.l.b16 %v4543
  %v4633 = vunpack.c.h.b16 %v4543
  %v4634 = vunpack.c.l.b16 %v4544
  %v4635 = vunpack.c.h.b16 %v4544
  %v4636 = vunpack.c.l.b16 %v4545
  %v4637 = vunpack.c.h.b16 %v4545
  %v4638 = vunpack.c.l.b16 %v4546
  %v4639 = vunpack.c.h.b16 %v4546
  %v4640 = vunpack.c.l.b16 %v4547
  %v4641 = vunpack.c.h.b16 %v4547
  %v4642 = vunpack.c.l.b16 %v4548
  %v4643 = vunpack.c.h.b16 %v4548
  %v4644 = vunpack.c.l.b16 %v4549
  %v4645 = vunpack.c.h.b16 %v4549
  %v4646 = vpack.c.b16 %v4582, %v4582
  %v4647 = vpack.c.b16 %v4583, %v4583
  %v4648 = vpack.c.b16 %v4584, %v4584
  %v4649 = vpack.c.b16 %v4585, %v4585
  %v4650 = vpack.c.b16 %v4586, %v4586
  %v4651 = vpack.c.b16 %v4587, %v4587
  %v4652 = vpack.c.b16 %v4588, %v4588
  %v4653 = vpack.c.b16 %v4589, %v4589
  %v4654 = vpack.c.b16 %v4590, %v4590
  %v4655 = vpack.c.b16 %v4591, %v4591
  %v4656 = vpack.c.b16 %v4592, %v4592
  %v4657 = vpack.c.b16 %v4593, %v4593
  %v4658 = vpack.c.b16 %v4594, %v4594
  %v4659 = vpack.c.b16 %v4595, %v4595
  %v4660 = vpack.c.b16 %v4596, %v4596
  %v4661 = vpack.c.b16 %v4597, %v4597
  %v4662 = vpack.c.b16 %v4598, %v4598
  %v4663 = vpack.c.b16 %v4599, %v4599
  %v4664 = vpack.c.b16 %v4600, %v4600
  %v4665 = vpack.c.b16 %v4601, %v4601
  %v4666 = vpack.c.b16 %v4602, %v4602
  %v4667 = vpack.c.b16 %v4603, %v4603
  %v4668 = vpack.c.b16 %v4604, %v4604
  %v4669 = vpack.c.b16 %v4605, %v4605
  %v4670 = vpack.c.b16 %v4606, %v4606
  %v4671 = vpack.c.b16 %v4607, %v4607
  %v4672 = vpack.c.b16 %v4608, %v4608
  %v4673 = vpack.c.b16 %v4609, %v4609
  %v4674 = vpack.c.b16 %v4610, %v4610
  %v4675 = vpack.c.b16 %v4611, %v4611
  %v4676 = vpack.c.b16 %v4612, %v4612
  %v4677 = vpack.c.b16 %v4613, %v4613
  %v4678 = vpack.c.b16 %v4614, %v4614
  %v4679 = vpack.c.b16 %v4615, %v4615
  %v4680 = vpack.c.b16 %v4616, %v4616
  %v4681 = vpack.c.b16 %v4617, %v4617
  %v4682 = vpack.c.b16 %v4618, %v4618
  %v4683 = vpack.c.b16 %v4619, %v4619
  %v4684 = vpack.c.b16 %v4620, %v4620
  %v4685 = vpack.c.b16 %v4621, %v4621
  %v4686 = vpack.c.b16 %v4622, %v4622
  %v4687 = vpack.c.b16 %v4623, %v4623
  %v4688 = vpack.c.b16 %v4624, %v4624
  %v4689 = vpack.c.b16 %v4625, %v4625
  %v4690 = vpack.c.b16 %v4626, %v4626
  %v4691 = vpack.c.b16 %v4627, %v4627
  %v4692 = vpack.c.b16 %v4628, %v4628
  %v4693 = vpack.c.b16 %v4629, %v4629
  %v4694 = vpack.c.b16 %v4630, %v4630
  %v4695 = vpack.c.b16 %v4631, %v4631
  %v4696 = vpack.c.b16 %v4632, %v4632
  %v4697 = vpack.c.b16 %v4633, %v4633
  %v4698 = vpack.c.b16 %v4634, %v4634
  %v4699 = vpack.c.b16 %v4635, %v4635
  %v4700 = vpack.c.b16 %v4636, %v4636
  %v4701 = vpack.c.b16 %v4637, %v4637
  %v4702 = vpack.c.b16 %v4638, %v4638
  %v4703 = vpack.c.b16 %v4639, %v4639
  %v4704 = vpack.c.b16 %v4640, %v4640
  %v4705 = vpack.c.b16 %v4641, %v4641
  %v4706 = vpack.c.b16 %v4642, %v4642
  %v4707 = vpack.c.b16 %v4643, %v4643
  %v4708 = vpack.c.b16 %v4644, %v4644
  %v4709 = vpack.c.b16 %v4645, %v4645
  %vm4774 = vcmask 60416
  %4775 = vst.msk [vmem:[%s2] sm:$0xf] %vm4774, %v4646
  %4776 = vst.msk [vmem:[%s2 + $0x4] sm:$0xf] %vm4774, %v4647
  %4777 = vst.msk [vmem:[%s2 + $0x8] sm:$0xf] %vm4774, %v4648
  %4778 = vst.msk [vmem:[%s2 + $0xc] sm:$0xf] %vm4774, %v4649
  %4779 = vst.msk [vmem:[%s2 + $0x10] sm:$0xf] %vm4774, %v4650
  %4780 = vst.msk [vmem:[%s2 + $0x14] sm:$0xf] %vm4774, %v4651
  %4781 = vst.msk [vmem:[%s2 + $0x18] sm:$0xf] %vm4774, %v4652
  %4782 = vst.msk [vmem:[%s2 + $0x1c] sm:$0xf] %vm4774, %v4653
  %4783 = vst.msk [vmem:[%s2 + $0x20] sm:$0xf] %vm4774, %v4654
  %4784 = vst.msk [vmem:[%s2 + $0x24] sm:$0xf] %vm4774, %v4655
  %4785 = vst.msk [vmem:[%s2 + $0x28] sm:$0xf] %vm4774, %v4656
  %4786 = vst.msk [vmem:[%s2 + $0x2c] sm:$0xf] %vm4774, %v4657
  %4787 = vst.msk [vmem:[%s2 + $0x30] sm:$0xf] %vm4774, %v4658
  %4788 = vst.msk [vmem:[%s2 + $0x34] sm:$0xf] %vm4774, %v4659
  %4789 = vst.msk [vmem:[%s2 + $0x38] sm:$0xf] %vm4774, %v4660
  %4790 = vst.msk [vmem:[%s2 + $0x3c] sm:$0xf] %vm4774, %v4661
  %4791 = vst.msk [vmem:[%s2 + $0x40] sm:$0xf] %vm4774, %v4662
  %4792 = vst.msk [vmem:[%s2 + $0x44] sm:$0xf] %vm4774, %v4663
  %4793 = vst.msk [vmem:[%s2 + $0x48] sm:$0xf] %vm4774, %v4664
  %4794 = vst.msk [vmem:[%s2 + $0x4c] sm:$0xf] %vm4774, %v4665
  %4795 = vst.msk [vmem:[%s2 + $0x50] sm:$0xf] %vm4774, %v4666
  %4796 = vst.msk [vmem:[%s2 + $0x54] sm:$0xf] %vm4774, %v4667
  %4797 = vst.msk [vmem:[%s2 + $0x58] sm:$0xf] %vm4774, %v4668
  %4798 = vst.msk [vmem:[%s2 + $0x5c] sm:$0xf] %vm4774, %v4669
  %4799 = vst.msk [vmem:[%s2 + $0x60] sm:$0xf] %vm4774, %v4670
  %4800 = vst.msk [vmem:[%s2 + $0x64] sm:$0xf] %vm4774, %v4671
  %4801 = vst.msk [vmem:[%s2 + $0x68] sm:$0xf] %vm4774, %v4672
  %4802 = vst.msk [vmem:[%s2 + $0x6c] sm:$0xf] %vm4774, %v4673
  %4803 = vst.msk [vmem:[%s2 + $0x70] sm:$0xf] %vm4774, %v4674
  %4804 = vst.msk [vmem:[%s2 + $0x74] sm:$0xf] %vm4774, %v4675
  %4805 = vst.msk [vmem:[%s2 + $0x78] sm:$0xf] %vm4774, %v4676
  %4806 = vst.msk [vmem:[%s2 + $0x7c] sm:$0xf] %vm4774, %v4677
  %4807 = vst.msk [vmem:[%s2 + $0x80] sm:$0xf] %vm4774, %v4678
  %4808 = vst.msk [vmem:[%s2 + $0x84] sm:$0xf] %vm4774, %v4679
  %4809 = vst.msk [vmem:[%s2 + $0x88] sm:$0xf] %vm4774, %v4680
  %4810 = vst.msk [vmem:[%s2 + $0x8c] sm:$0xf] %vm4774, %v4681
  %4811 = vst.msk [vmem:[%s2 + $0x90] sm:$0xf] %vm4774, %v4682
  %4812 = vst.msk [vmem:[%s2 + $0x94] sm:$0xf] %vm4774, %v4683
  %4813 = vst.msk [vmem:[%s2 + $0x98] sm:$0xf] %vm4774, %v4684
  %4814 = vst.msk [vmem:[%s2 + $0x9c] sm:$0xf] %vm4774, %v4685
  %4815 = vst.msk [vmem:[%s2 + $0xa0] sm:$0xf] %vm4774, %v4686
  %4816 = vst.msk [vmem:[%s2 + $0xa4] sm:$0xf] %vm4774, %v4687
  %4817 = vst.msk [vmem:[%s2 + $0xa8] sm:$0xf] %vm4774, %v4688
  %4818 = vst.msk [vmem:[%s2 + $0xac] sm:$0xf] %vm4774, %v4689
  %4819 = vst.msk [vmem:[%s2 + $0xb0] sm:$0xf] %vm4774, %v4690
  %4820 = vst.msk [vmem:[%s2 + $0xb4] sm:$0xf] %vm4774, %v4691
  %4821 = vst.msk [vmem:[%s2 + $0xb8] sm:$0xf] %vm4774, %v4692
  %4822 = vst.msk [vmem:[%s2 + $0xbc] sm:$0xf] %vm4774, %v4693
  %4823 = vst.msk [vmem:[%s2 + $0xc0] sm:$0xf] %vm4774, %v4694
  %4824 = vst.msk [vmem:[%s2 + $0xc4] sm:$0xf] %vm4774, %v4695
  %4825 = vst.msk [vmem:[%s2 + $0xc8] sm:$0xf] %vm4774, %v4696
  %4826 = vst.msk [vmem:[%s2 + $0xcc] sm:$0xf] %vm4774, %v4697
  %4827 = vst.msk [vmem:[%s2 + $0xd0] sm:$0xf] %vm4774, %v4698
  %4828 = vst.msk [vmem:[%s2 + $0xd4] sm:$0xf] %vm4774, %v4699
  %4829 = vst.msk [vmem:[%s2 + $0xd8] sm:$0xf] %vm4774, %v4700
  %4830 = vst.msk [vmem:[%s2 + $0xdc] sm:$0xf] %vm4774, %v4701
  %4831 = vst.msk [vmem:[%s2 + $0xe0] sm:$0xf] %vm4774, %v4702
  %4832 = vst.msk [vmem:[%s2 + $0xe4] sm:$0xf] %vm4774, %v4703
  %4833 = vst.msk [vmem:[%s2 + $0xe8] sm:$0xf] %vm4774, %v4704
  %4834 = vst.msk [vmem:[%s2 + $0xec] sm:$0xf] %vm4774, %v4705
  %4835 = vst.msk [vmem:[%s2 + $0xf0] sm:$0xf] %vm4774, %v4706
  %4836 = vst.msk [vmem:[%s2 + $0xf4] sm:$0xf] %vm4774, %v4707
  %4837 = vst.msk [vmem:[%s2 + $0xf8] sm:$0xf] %vm4774, %v4708
  %4838 = vst.msk [vmem:[%s2 + $0xfc] sm:$0xf] %vm4774, %v4709
  %v4839 = vsel %vm986, %v4454, 0.0
  %v4840 = vsel %vm986, %v4455, 0.0
  %v4841 = vadd.f32 %v4839, %v4840
  %v4842 = vsel %vm986, %v4456, 0.0
  %v4843 = vadd.f32 %v4841, %v4842
  %v4844 = vsel %vm986, %v4457, 0.0
  %v4845 = vadd.f32 %v4843, %v4844
  %v4846 = vsel %vm986, %v4458, 0.0
  %v4847 = vadd.f32 %v4845, %v4846
  %v4848 = vsel %vm986, %v4459, 0.0
  %v4849 = vadd.f32 %v4847, %v4848
  %v4850 = vsel %vm986, %v4460, 0.0
  %v4851 = vadd.f32 %v4849, %v4850
  %v4852 = vsel %vm986, %v4461, 0.0
  %v4853 = vadd.f32 %v4851, %v4852
  %v4854 = vsel %vm986, %v4462, 0.0
  %v4855 = vadd.f32 %v4853, %v4854
  %v4856 = vsel %vm986, %v4463, 0.0
  %v4857 = vadd.f32 %v4855, %v4856
  %v4858 = vsel %vm986, %v4464, 0.0
  %v4859 = vadd.f32 %v4857, %v4858
  %v4860 = vsel %vm986, %v4465, 0.0
  %v4861 = vadd.f32 %v4859, %v4860
  %v4862 = vsel %vm986, %v4466, 0.0
  %v4863 = vadd.f32 %v4861, %v4862
  %v4864 = vsel %vm986, %v4467, 0.0
  %v4865 = vadd.f32 %v4863, %v4864
  %v4866 = vsel %vm986, %v4468, 0.0
  %v4867 = vadd.f32 %v4865, %v4866
  %v4868 = vsel %vm986, %v4469, 0.0
  %v4869 = vadd.f32 %v4867, %v4868
  %v4870 = vsel %vm986, %v4470, 0.0
  %v4871 = vadd.f32 %v4869, %v4870
  %v4872 = vsel %vm986, %v4471, 0.0
  %v4873 = vadd.f32 %v4871, %v4872
  %v4874 = vsel %vm986, %v4472, 0.0
  %v4875 = vadd.f32 %v4873, %v4874
  %v4876 = vsel %vm986, %v4473, 0.0
  %v4877 = vadd.f32 %v4875, %v4876
  %v4878 = vsel %vm986, %v4474, 0.0
  %v4879 = vadd.f32 %v4877, %v4878
  %v4880 = vsel %vm986, %v4475, 0.0
  %v4881 = vadd.f32 %v4879, %v4880
  %v4882 = vsel %vm986, %v4476, 0.0
  %v4883 = vadd.f32 %v4881, %v4882
  %v4884 = vsel %vm986, %v4477, 0.0
  %v4885 = vadd.f32 %v4883, %v4884
  %v4886 = vsel %vm986, %v4478, 0.0
  %v4887 = vadd.f32 %v4885, %v4886
  %v4888 = vsel %vm986, %v4479, 0.0
  %v4889 = vadd.f32 %v4887, %v4888
  %v4890 = vsel %vm986, %v4480, 0.0
  %v4891 = vadd.f32 %v4889, %v4890
  %v4892 = vsel %vm986, %v4481, 0.0
  %v4893 = vadd.f32 %v4891, %v4892
  %v4894 = vsel %vm986, %v4482, 0.0
  %v4895 = vadd.f32 %v4893, %v4894
  %v4896 = vsel %vm986, %v4483, 0.0
  %v4897 = vadd.f32 %v4895, %v4896
  %v4898 = vsel %vm986, %v4484, 0.0
  %v4899 = vadd.f32 %v4897, %v4898
  %v4900 = vsel %vm986, %v4485, 0.0
  %v4901 = vadd.f32 %v4899, %v4900
  %v4902 = vsel %vm986, %v4486, 0.0
  %v4903 = vadd.f32 %v4901, %v4902
  %v4904 = vsel %vm986, %v4487, 0.0
  %v4905 = vadd.f32 %v4903, %v4904
  %v4906 = vsel %vm986, %v4488, 0.0
  %v4907 = vadd.f32 %v4905, %v4906
  %v4908 = vsel %vm986, %v4489, 0.0
  %v4909 = vadd.f32 %v4907, %v4908
  %v4910 = vsel %vm986, %v4490, 0.0
  %v4911 = vadd.f32 %v4909, %v4910
  %v4912 = vsel %vm986, %v4491, 0.0
  %v4913 = vadd.f32 %v4911, %v4912
  %v4914 = vsel %vm986, %v4492, 0.0
  %v4915 = vadd.f32 %v4913, %v4914
  %v4916 = vsel %vm986, %v4493, 0.0
  %v4917 = vadd.f32 %v4915, %v4916
  %v4918 = vsel %vm986, %v4494, 0.0
  %v4919 = vadd.f32 %v4917, %v4918
  %v4920 = vsel %vm986, %v4495, 0.0
  %v4921 = vadd.f32 %v4919, %v4920
  %v4922 = vsel %vm986, %v4496, 0.0
  %v4923 = vadd.f32 %v4921, %v4922
  %v4924 = vsel %vm986, %v4497, 0.0
  %v4925 = vadd.f32 %v4923, %v4924
  %v4926 = vsel %vm986, %v4498, 0.0
  %v4927 = vadd.f32 %v4925, %v4926
  %v4928 = vsel %vm986, %v4499, 0.0
  %v4929 = vadd.f32 %v4927, %v4928
  %v4930 = vsel %vm986, %v4500, 0.0
  %v4931 = vadd.f32 %v4929, %v4930
  %v4932 = vsel %vm986, %v4501, 0.0
  %v4933 = vadd.f32 %v4931, %v4932
  %v4934 = vsel %vm986, %v4502, 0.0
  %v4935 = vadd.f32 %v4933, %v4934
  %v4936 = vsel %vm986, %v4503, 0.0
  %v4937 = vadd.f32 %v4935, %v4936
  %v4938 = vsel %vm986, %v4504, 0.0
  %v4939 = vadd.f32 %v4937, %v4938
  %v4940 = vsel %vm986, %v4505, 0.0
  %v4941 = vadd.f32 %v4939, %v4940
  %v4942 = vsel %vm986, %v4506, 0.0
  %v4943 = vadd.f32 %v4941, %v4942
  %v4944 = vsel %vm986, %v4507, 0.0
  %v4945 = vadd.f32 %v4943, %v4944
  %v4946 = vsel %vm986, %v4508, 0.0
  %v4947 = vadd.f32 %v4945, %v4946
  %v4948 = vsel %vm986, %v4509, 0.0
  %v4949 = vadd.f32 %v4947, %v4948
  %v4950 = vsel %vm986, %v4510, 0.0
  %v4951 = vadd.f32 %v4949, %v4950
  %v4952 = vsel %vm986, %v4511, 0.0
  %v4953 = vadd.f32 %v4951, %v4952
  %v4954 = vsel %vm986, %v4512, 0.0
  %v4955 = vadd.f32 %v4953, %v4954
  %v4956 = vsel %vm986, %v4513, 0.0
  %v4957 = vadd.f32 %v4955, %v4956
  %v4958 = vsel %vm986, %v4514, 0.0
  %v4959 = vadd.f32 %v4957, %v4958
  %v4960 = vsel %vm986, %v4515, 0.0
  %v4961 = vadd.f32 %v4959, %v4960
  %v4962 = vsel %vm986, %v4516, 0.0
  %v4963 = vadd.f32 %v4961, %v4962
  %v4964 = vsel %vm986, %v4517, 0.0
  %v4965 = vadd.f32 %v4963, %v4964
  %v4966 = vrot.slane %v4965, 4
  %v4967 = vadd.f32 %v4965, %v4966
  %v4968 = vrot.slane %v4967, 2
  %v4969 = vadd.f32 %v4967, %v4968
  %v4970 = vrot.slane %v4969, 1
  %v4971 = vadd.f32 %v4969, %v4970
  %v4972 = vmul.f32 %v4971, 0.001953125
  %v4973 = vsub.f32 %v4454, %v4972
  %v4974 = vsub.f32 %v4455, %v4972
  %v4975 = vsub.f32 %v4456, %v4972
  %v4976 = vsub.f32 %v4457, %v4972
  %v4977 = vsub.f32 %v4458, %v4972
  %v4978 = vsub.f32 %v4459, %v4972
  %v4979 = vsub.f32 %v4460, %v4972
  %v4980 = vsub.f32 %v4461, %v4972
  %v4981 = vsub.f32 %v4462, %v4972
  %v4982 = vsub.f32 %v4463, %v4972
  %v4983 = vsub.f32 %v4464, %v4972
  %v4984 = vsub.f32 %v4465, %v4972
  %v4985 = vsub.f32 %v4466, %v4972
  %v4986 = vsub.f32 %v4467, %v4972
  %v4987 = vsub.f32 %v4468, %v4972
  %v4988 = vsub.f32 %v4469, %v4972
  %v4989 = vsub.f32 %v4470, %v4972
  %v4990 = vsub.f32 %v4471, %v4972
  %v4991 = vsub.f32 %v4472, %v4972
  %v4992 = vsub.f32 %v4473, %v4972
  %v4993 = vsub.f32 %v4474, %v4972
  %v4994 = vsub.f32 %v4475, %v4972
  %v4995 = vsub.f32 %v4476, %v4972
  %v4996 = vsub.f32 %v4477, %v4972
  %v4997 = vsub.f32 %v4478, %v4972
  %v4998 = vsub.f32 %v4479, %v4972
  %v4999 = vsub.f32 %v4480, %v4972
  %v5000 = vsub.f32 %v4481, %v4972
  %v5001 = vsub.f32 %v4482, %v4972
  %v5002 = vsub.f32 %v4483, %v4972
  %v5003 = vsub.f32 %v4484, %v4972
  %v5004 = vsub.f32 %v4485, %v4972
  %v5005 = vsub.f32 %v4486, %v4972
  %v5006 = vsub.f32 %v4487, %v4972
  %v5007 = vsub.f32 %v4488, %v4972
  %v5008 = vsub.f32 %v4489, %v4972
  %v5009 = vsub.f32 %v4490, %v4972
  %v5010 = vsub.f32 %v4491, %v4972
  %v5011 = vsub.f32 %v4492, %v4972
  %v5012 = vsub.f32 %v4493, %v4972
  %v5013 = vsub.f32 %v4494, %v4972
  %v5014 = vsub.f32 %v4495, %v4972
  %v5015 = vsub.f32 %v4496, %v4972
  %v5016 = vsub.f32 %v4497, %v4972
  %v5017 = vsub.f32 %v4498, %v4972
  %v5018 = vsub.f32 %v4499, %v4972
  %v5019 = vsub.f32 %v4500, %v4972
  %v5020 = vsub.f32 %v4501, %v4972
  %v5021 = vsub.f32 %v4502, %v4972
  %v5022 = vsub.f32 %v4503, %v4972
  %v5023 = vsub.f32 %v4504, %v4972
  %v5024 = vsub.f32 %v4505, %v4972
  %v5025 = vsub.f32 %v4506, %v4972
  %v5026 = vsub.f32 %v4507, %v4972
  %v5027 = vsub.f32 %v4508, %v4972
  %v5028 = vsub.f32 %v4509, %v4972
  %v5029 = vsub.f32 %v4510, %v4972
  %v5030 = vsub.f32 %v4511, %v4972
  %v5031 = vsub.f32 %v4512, %v4972
  %v5032 = vsub.f32 %v4513, %v4972
  %v5033 = vsub.f32 %v4514, %v4972
  %v5034 = vsub.f32 %v4515, %v4972
  %v5035 = vsub.f32 %v4516, %v4972
  %v5036 = vsub.f32 %v4517, %v4972
  %v5037 = vmul.f32 %v4973, %v4973
  %v5038 = vmul.f32 %v4974, %v4974
  %v5039 = vmul.f32 %v4975, %v4975
  %v5040 = vmul.f32 %v4976, %v4976
  %v5041 = vmul.f32 %v4977, %v4977
  %v5042 = vmul.f32 %v4978, %v4978
  %v5043 = vmul.f32 %v4979, %v4979
  %v5044 = vmul.f32 %v4980, %v4980
  %v5045 = vmul.f32 %v4981, %v4981
  %v5046 = vmul.f32 %v4982, %v4982
  %v5047 = vmul.f32 %v4983, %v4983
  %v5048 = vmul.f32 %v4984, %v4984
  %v5049 = vmul.f32 %v4985, %v4985
  %v5050 = vmul.f32 %v4986, %v4986
  %v5051 = vmul.f32 %v4987, %v4987
  %v5052 = vmul.f32 %v4988, %v4988
  %v5053 = vmul.f32 %v4989, %v4989
  %v5054 = vmul.f32 %v4990, %v4990
  %v5055 = vmul.f32 %v4991, %v4991
  %v5056 = vmul.f32 %v4992, %v4992
  %v5057 = vmul.f32 %v4993, %v4993
  %v5058 = vmul.f32 %v4994, %v4994
  %v5059 = vmul.f32 %v4995, %v4995
  %v5060 = vmul.f32 %v4996, %v4996
  %v5061 = vmul.f32 %v4997, %v4997
  %v5062 = vmul.f32 %v4998, %v4998
  %v5063 = vmul.f32 %v4999, %v4999
  %v5064 = vmul.f32 %v5000, %v5000
  %v5065 = vmul.f32 %v5001, %v5001
  %v5066 = vmul.f32 %v5002, %v5002
  %v5067 = vmul.f32 %v5003, %v5003
  %v5068 = vmul.f32 %v5004, %v5004
  %v5069 = vmul.f32 %v5005, %v5005
  %v5070 = vmul.f32 %v5006, %v5006
  %v5071 = vmul.f32 %v5007, %v5007
  %v5072 = vmul.f32 %v5008, %v5008
  %v5073 = vmul.f32 %v5009, %v5009
  %v5074 = vmul.f32 %v5010, %v5010
  %v5075 = vmul.f32 %v5011, %v5011
  %v5076 = vmul.f32 %v5012, %v5012
  %v5077 = vmul.f32 %v5013, %v5013
  %v5078 = vmul.f32 %v5014, %v5014
  %v5079 = vmul.f32 %v5015, %v5015
  %v5080 = vmul.f32 %v5016, %v5016
  %v5081 = vmul.f32 %v5017, %v5017
  %v5082 = vmul.f32 %v5018, %v5018
  %v5083 = vmul.f32 %v5019, %v5019
  %v5084 = vmul.f32 %v5020, %v5020
  %v5085 = vmul.f32 %v5021, %v5021
  %v5086 = vmul.f32 %v5022, %v5022
  %v5087 = vmul.f32 %v5023, %v5023
  %v5088 = vmul.f32 %v5024, %v5024
  %v5089 = vmul.f32 %v5025, %v5025
  %v5090 = vmul.f32 %v5026, %v5026
  %v5091 = vmul.f32 %v5027, %v5027
  %v5092 = vmul.f32 %v5028, %v5028
  %v5093 = vmul.f32 %v5029, %v5029
  %v5094 = vmul.f32 %v5030, %v5030
  %v5095 = vmul.f32 %v5031, %v5031
  %v5096 = vmul.f32 %v5032, %v5032
  %v5097 = vmul.f32 %v5033, %v5033
  %v5098 = vmul.f32 %v5034, %v5034
  %v5099 = vmul.f32 %v5035, %v5035
  %v5100 = vmul.f32 %v5036, %v5036
  %v5101 = vsel %vm986, %v5037, 0.0
  %v5102 = vsel %vm986, %v5038, 0.0
  %v5103 = vadd.f32 %v5101, %v5102
  %v5104 = vsel %vm986, %v5039, 0.0
  %v5105 = vadd.f32 %v5103, %v5104
  %v5106 = vsel %vm986, %v5040, 0.0
  %v5107 = vadd.f32 %v5105, %v5106
  %v5108 = vsel %vm986, %v5041, 0.0
  %v5109 = vadd.f32 %v5107, %v5108
  %v5110 = vsel %vm986, %v5042, 0.0
  %v5111 = vadd.f32 %v5109, %v5110
  %v5112 = vsel %vm986, %v5043, 0.0
  %v5113 = vadd.f32 %v5111, %v5112
  %v5114 = vsel %vm986, %v5044, 0.0
  %v5115 = vadd.f32 %v5113, %v5114
  %v5116 = vsel %vm986, %v5045, 0.0
  %v5117 = vadd.f32 %v5115, %v5116
  %v5118 = vsel %vm986, %v5046, 0.0
  %v5119 = vadd.f32 %v5117, %v5118
  %v5120 = vsel %vm986, %v5047, 0.0
  %v5121 = vadd.f32 %v5119, %v5120
  %v5122 = vsel %vm986, %v5048, 0.0
  %v5123 = vadd.f32 %v5121, %v5122
  %v5124 = vsel %vm986, %v5049, 0.0
  %v5125 = vadd.f32 %v5123, %v5124
  %v5126 = vsel %vm986, %v5050, 0.0
  %v5127 = vadd.f32 %v5125, %v5126
  %v5128 = vsel %vm986, %v5051, 0.0
  %v5129 = vadd.f32 %v5127, %v5128
  %v5130 = vsel %vm986, %v5052, 0.0
  %v5131 = vadd.f32 %v5129, %v5130
  %v5132 = vsel %vm986, %v5053, 0.0
  %v5133 = vadd.f32 %v5131, %v5132
  %v5134 = vsel %vm986, %v5054, 0.0
  %v5135 = vadd.f32 %v5133, %v5134
  %v5136 = vsel %vm986, %v5055, 0.0
  %v5137 = vadd.f32 %v5135, %v5136
  %v5138 = vsel %vm986, %v5056, 0.0
  %v5139 = vadd.f32 %v5137, %v5138
  %v5140 = vsel %vm986, %v5057, 0.0
  %v5141 = vadd.f32 %v5139, %v5140
  %v5142 = vsel %vm986, %v5058, 0.0
  %v5143 = vadd.f32 %v5141, %v5142
  %v5144 = vsel %vm986, %v5059, 0.0
  %v5145 = vadd.f32 %v5143, %v5144
  %v5146 = vsel %vm986, %v5060, 0.0
  %v5147 = vadd.f32 %v5145, %v5146
  %v5148 = vsel %vm986, %v5061, 0.0
  %v5149 = vadd.f32 %v5147, %v5148
  %v5150 = vsel %vm986, %v5062, 0.0
  %v5151 = vadd.f32 %v5149, %v5150
  %v5152 = vsel %vm986, %v5063, 0.0
  %v5153 = vadd.f32 %v5151, %v5152
  %v5154 = vsel %vm986, %v5064, 0.0
  %v5155 = vadd.f32 %v5153, %v5154
  %v5156 = vsel %vm986, %v5065, 0.0
  %v5157 = vadd.f32 %v5155, %v5156
  %v5158 = vsel %vm986, %v5066, 0.0
  %v5159 = vadd.f32 %v5157, %v5158
  %v5160 = vsel %vm986, %v5067, 0.0
  %v5161 = vadd.f32 %v5159, %v5160
  %v5162 = vsel %vm986, %v5068, 0.0
  %v5163 = vadd.f32 %v5161, %v5162
  %v5164 = vsel %vm986, %v5069, 0.0
  %v5165 = vadd.f32 %v5163, %v5164
  %v5166 = vsel %vm986, %v5070, 0.0
  %v5167 = vadd.f32 %v5165, %v5166
  %v5168 = vsel %vm986, %v5071, 0.0
  %v5169 = vadd.f32 %v5167, %v5168
  %v5170 = vsel %vm986, %v5072, 0.0
  %v5171 = vadd.f32 %v5169, %v5170
  %v5172 = vsel %vm986, %v5073, 0.0
  %v5173 = vadd.f32 %v5171, %v5172
  %v5174 = vsel %vm986, %v5074, 0.0
  %v5175 = vadd.f32 %v5173, %v5174
  %v5176 = vsel %vm986, %v5075, 0.0
  %v5177 = vadd.f32 %v5175, %v5176
  %v5178 = vsel %vm986, %v5076, 0.0
  %v5179 = vadd.f32 %v5177, %v5178
  %v5180 = vsel %vm986, %v5077, 0.0
  %v5181 = vadd.f32 %v5179, %v5180
  %v5182 = vsel %vm986, %v5078, 0.0
  %v5183 = vadd.f32 %v5181, %v5182
  %v5184 = vsel %vm986, %v5079, 0.0
  %v5185 = vadd.f32 %v5183, %v5184
  %v5186 = vsel %vm986, %v5080, 0.0
  %v5187 = vadd.f32 %v5185, %v5186
  %v5188 = vsel %vm986, %v5081, 0.0
  %v5189 = vadd.f32 %v5187, %v5188
  %v5190 = vsel %vm986, %v5082, 0.0
  %v5191 = vadd.f32 %v5189, %v5190
  %v5192 = vsel %vm986, %v5083, 0.0
  %v5193 = vadd.f32 %v5191, %v5192
  %v5194 = vsel %vm986, %v5084, 0.0
  %v5195 = vadd.f32 %v5193, %v5194
  %v5196 = vsel %vm986, %v5085, 0.0
  %v5197 = vadd.f32 %v5195, %v5196
  %v5198 = vsel %vm986, %v5086, 0.0
  %v5199 = vadd.f32 %v5197, %v5198
  %v5200 = vsel %vm986, %v5087, 0.0
  %v5201 = vadd.f32 %v5199, %v5200
  %v5202 = vsel %vm986, %v5088, 0.0
  %v5203 = vadd.f32 %v5201, %v5202
  %v5204 = vsel %vm986, %v5089, 0.0
  %v5205 = vadd.f32 %v5203, %v5204
  %v5206 = vsel %vm986, %v5090, 0.0
  %v5207 = vadd.f32 %v5205, %v5206
  %v5208 = vsel %vm986, %v5091, 0.0
  %v5209 = vadd.f32 %v5207, %v5208
  %v5210 = vsel %vm986, %v5092, 0.0
  %v5211 = vadd.f32 %v5209, %v5210
  %v5212 = vsel %vm986, %v5093, 0.0
  %v5213 = vadd.f32 %v5211, %v5212
  %v5214 = vsel %vm986, %v5094, 0.0
  %v5215 = vadd.f32 %v5213, %v5214
  %v5216 = vsel %vm986, %v5095, 0.0
  %v5217 = vadd.f32 %v5215, %v5216
  %v5218 = vsel %vm986, %v5096, 0.0
  %v5219 = vadd.f32 %v5217, %v5218
  %v5220 = vsel %vm986, %v5097, 0.0
  %v5221 = vadd.f32 %v5219, %v5220
  %v5222 = vsel %vm986, %v5098, 0.0
  %v5223 = vadd.f32 %v5221, %v5222
  %v5224 = vsel %vm986, %v5099, 0.0
  %v5225 = vadd.f32 %v5223, %v5224
  %v5226 = vsel %vm986, %v5100, 0.0
  %v5227 = vadd.f32 %v5225, %v5226
  %v5228 = vrot.slane %v5227, 4
  %v5229 = vadd.f32 %v5227, %v5228
  %v5230 = vrot.slane %v5229, 2
  %v5231 = vadd.f32 %v5229, %v5230
  %v5232 = vrot.slane %v5231, 1
  %v5233 = vadd.f32 %v5231, %v5232
  %vm5234 = vcmask 1040384
  %v5235 = vsel %vm5234, %v4971, %v5233
  %vm5236 = vcmask 58368
  %5237 = vst.msk [vmem:[%s3] sm:$0x3] %vm5236, %v5235
  // Predicated region
  $region10: #{basic_block_forward.3} parent=0 // pred_check
    _
  $region11: #{basic_block_forward.3} parent=0 // pred_check_branch
    %5239 = sbr.rel (0) target = $region13
  $region12: #{basic_block_forward.3} parent=0 // pred_region
    _
  $region13: #{basic_block_forward.3} parent=0 // pred_fallthru
    _
  // Predicated region
  $region14: #{basic_block_forward.3} parent=0 // pred_check
    _
  $region15: #{basic_block_forward.3} parent=0 // pred_check_branch
    %5241 = sbr.rel (0) target = $region17
  $region16: #{basic_block_forward.3} parent=0 // pred_region
    _
  $region17: #{basic_block_forward.3} parent=0 // pred_fallthru
    _
  // Predicated region
  $region18: #{basic_block_forward.3} parent=0 // pred_check
    _
  $region19: #{basic_block_forward.3} parent=0 // pred_check_branch
    %5243 = sbr.rel (0) target = $region21
  $region20: #{basic_block_forward.3} parent=0 // pred_region
    _
  $region21: #{basic_block_forward.3} parent=0 // pred_fallthru
    _
  // Predicated region
  $region22: #{basic_block_forward.3} parent=0 // pred_check
    _
  $region23: #{basic_block_forward.3} parent=0 // pred_check_branch
    %5245 = sbr.rel (0) target = $region25
  $region24: #{basic_block_forward.3} parent=0 // pred_region
    _
  $region25: #{basic_block_forward.3} parent=0 // pred_fallthru
    _

// kernel: basic_block_forward.4
$region0: #{basic_block_forward.4}
  #allocation0 [shape = 'u32[]', space=smem, size = 0x4, offset = 0x4, fixed_abs, tag = 'smem constant byte address 0x4 - core index']
  #allocation1 [shape = 'u32[144,128]{1,0:T(1,128)}', space=vmem, size = 0x12000, scoped, tag = 'internal scratch']
  %s0 = inlined_call_operand.vmem [shape: bf16[2,16,16,8], index: 0, kind: input, shape index: {}]
  %s1 = inlined_call_operand.vmem [shape: f32[1,8], index: 1, kind: input, shape index: {}]
  %s2 = inlined_call_operand.vmem [shape: f32[1,8], index: 2, kind: input, shape index: {}]
  %s3 = inlined_call_operand.vmem [shape: bf16[72,8], index: 3, kind: input, shape index: {}]
  %s4 = inlined_call_operand.vmem [shape: bf16[2,16,16,8], index: 4, kind: output, shape index: {0}]
  %s5 = inlined_call_operand.vmem [shape: f32[1,2,8], index: 5, kind: output, shape index: {1}]
  %6 = xla_tuple %s4, %s5
  %s7 = sld [smem:[#allocation0]]
  $region34: #{basic_block_forward.4} parent=0
    _
  %s9 = ssub.s32 1, %s7
  %s10 = scalar_select 0, %s9, %s7
  // Predicated region
  $region2: #{basic_block_forward.4} parent=0 // pred_check
    _
  $region3: #{basic_block_forward.4} parent=0 // pred_check_branch
    %12 = sbr.rel (0) target = $region5
  $region4: #{basic_block_forward.4} parent=0 // pred_region
    _
  $region5: #{basic_block_forward.4} parent=0 // pred_fallthru
    _
  // Predicated region
  $region6: #{basic_block_forward.4} parent=0 // pred_check
    _
  $region7: #{basic_block_forward.4} parent=0 // pred_check_branch
    %14 = sbr.rel (0) target = $region9
  $region8: #{basic_block_forward.4} parent=0 // pred_region
    _
  $region9: #{basic_block_forward.4} parent=0 // pred_fallthru
    _
  // Predicated region
  $region10: #{basic_block_forward.4} parent=0 // pred_check
    _
  $region11: #{basic_block_forward.4} parent=0 // pred_check_branch
    %16 = sbr.rel (0) target = $region13
  $region12: #{basic_block_forward.4} parent=0 // pred_region
    _
  $region13: #{basic_block_forward.4} parent=0 // pred_fallthru
    _
  // Predicated region
  $region14: #{basic_block_forward.4} parent=0 // pred_check
    _
  $region15: #{basic_block_forward.4} parent=0 // pred_check_branch
    %18 = sbr.rel (0) target = $region17
  $region16: #{basic_block_forward.4} parent=0 // pred_region
    _
  $region17: #{basic_block_forward.4} parent=0 // pred_fallthru
    _
  %v20 = vld [vmem:[%s0] sm:$0xf]
  %v21 = vld [vmem:[%s0 + $0x4] sm:$0xf]
  %v22 = vld [vmem:[%s0 + $0x8] sm:$0xf]
  %v23 = vld [vmem:[%s0 + $0xc] sm:$0xf]
  %v24 = vld [vmem:[%s0 + $0x10] sm:$0xf]
  %v25 = vld [vmem:[%s0 + $0x14] sm:$0xf]
  %v26 = vld [vmem:[%s0 + $0x18] sm:$0xf]
  %v27 = vld [vmem:[%s0 + $0x1c] sm:$0xf]
  %v28 = vld [vmem:[%s0 + $0x20] sm:$0xf]
  %v29 = vld [vmem:[%s0 + $0x24] sm:$0xf]
  %v30 = vld [vmem:[%s0 + $0x28] sm:$0xf]
  %v31 = vld [vmem:[%s0 + $0x2c] sm:$0xf]
  %v32 = vld [vmem:[%s0 + $0x30] sm:$0xf]
  %v33 = vld [vmem:[%s0 + $0x34] sm:$0xf]
  %v34 = vld [vmem:[%s0 + $0x38] sm:$0xf]
  %v35 = vld [vmem:[%s0 + $0x3c] sm:$0xf]
  %v36 = vld [vmem:[%s0 + $0x40] sm:$0xf]
  %v37 = vld [vmem:[%s0 + $0x44] sm:$0xf]
  %v38 = vld [vmem:[%s0 + $0x48] sm:$0xf]
  %v39 = vld [vmem:[%s0 + $0x4c] sm:$0xf]
  %v40 = vld [vmem:[%s0 + $0x50] sm:$0xf]
  %v41 = vld [vmem:[%s0 + $0x54] sm:$0xf]
  %v42 = vld [vmem:[%s0 + $0x58] sm:$0xf]
  %v43 = vld [vmem:[%s0 + $0x5c] sm:$0xf]
  %v44 = vld [vmem:[%s0 + $0x60] sm:$0xf]
  %v45 = vld [vmem:[%s0 + $0x64] sm:$0xf]
  %v46 = vld [vmem:[%s0 + $0x68] sm:$0xf]
  %v47 = vld [vmem:[%s0 + $0x6c] sm:$0xf]
  %v48 = vld [vmem:[%s0 + $0x70] sm:$0xf]
  %v49 = vld [vmem:[%s0 + $0x74] sm:$0xf]
  %v50 = vld [vmem:[%s0 + $0x78] sm:$0xf]
  %v51 = vld [vmem:[%s0 + $0x7c] sm:$0xf]
  %v52 = vld [vmem:[%s0 + $0x80] sm:$0xf]
  %v53 = vld [vmem:[%s0 + $0x84] sm:$0xf]
  %v54 = vld [vmem:[%s0 + $0x88] sm:$0xf]
  %v55 = vld [vmem:[%s0 + $0x8c] sm:$0xf]
  %v56 = vld [vmem:[%s0 + $0x90] sm:$0xf]
  %v57 = vld [vmem:[%s0 + $0x94] sm:$0xf]
  %v58 = vld [vmem:[%s0 + $0x98] sm:$0xf]
  %v59 = vld [vmem:[%s0 + $0x9c] sm:$0xf]
  %v60 = vld [vmem:[%s0 + $0xa0] sm:$0xf]
  %v61 = vld [vmem:[%s0 + $0xa4] sm:$0xf]
  %v62 = vld [vmem:[%s0 + $0xa8] sm:$0xf]
  %v63 = vld [vmem:[%s0 + $0xac] sm:$0xf]
  %v64 = vld [vmem:[%s0 + $0xb0] sm:$0xf]
  %v65 = vld [vmem:[%s0 + $0xb4] sm:$0xf]
  %v66 = vld [vmem:[%s0 + $0xb8] sm:$0xf]
  %v67 = vld [vmem:[%s0 + $0xbc] sm:$0xf]
  %v68 = vld [vmem:[%s0 + $0xc0] sm:$0xf]
  %v69 = vld [vmem:[%s0 + $0xc4] sm:$0xf]
  %v70 = vld [vmem:[%s0 + $0xc8] sm:$0xf]
  %v71 = vld [vmem:[%s0 + $0xcc] sm:$0xf]
  %v72 = vld [vmem:[%s0 + $0xd0] sm:$0xf]
  %v73 = vld [vmem:[%s0 + $0xd4] sm:$0xf]
  %v74 = vld [vmem:[%s0 + $0xd8] sm:$0xf]
  %v75 = vld [vmem:[%s0 + $0xdc] sm:$0xf]
  %v76 = vld [vmem:[%s0 + $0xe0] sm:$0xf]
  %v77 = vld [vmem:[%s0 + $0xe4] sm:$0xf]
  %v78 = vld [vmem:[%s0 + $0xe8] sm:$0xf]
  %v79 = vld [vmem:[%s0 + $0xec] sm:$0xf]
  %v80 = vld [vmem:[%s0 + $0xf0] sm:$0xf]
  %v81 = vld [vmem:[%s0 + $0xf4] sm:$0xf]
  %v82 = vld [vmem:[%s0 + $0xf8] sm:$0xf]
  %v83 = vld [vmem:[%s0 + $0xfc] sm:$0xf]
  %v84 = vunpack.c.l.bf16 %v20
  %v85 = vunpack.c.l.bf16 %v21
  %v86 = vunpack.c.l.bf16 %v22
  %v87 = vunpack.c.l.bf16 %v23
  %v88 = vunpack.c.l.bf16 %v24
  %v89 = vunpack.c.l.bf16 %v25
  %v90 = vunpack.c.l.bf16 %v26
  %v91 = vunpack.c.l.bf16 %v27
  %v92 = vunpack.c.l.bf16 %v28
  %v93 = vunpack.c.l.bf16 %v29
  %v94 = vunpack.c.l.bf16 %v30
  %v95 = vunpack.c.l.bf16 %v31
  %v96 = vunpack.c.l.bf16 %v32
  %v97 = vunpack.c.l.bf16 %v33
  %v98 = vunpack.c.l.bf16 %v34
  %v99 = vunpack.c.l.bf16 %v35
  %v100 = vunpack.c.l.bf16 %v36
  %v101 = vunpack.c.l.bf16 %v37
  %v102 = vunpack.c.l.bf16 %v38
  %v103 = vunpack.c.l.bf16 %v39
  %v104 = vunpack.c.l.bf16 %v40
  %v105 = vunpack.c.l.bf16 %v41
  %v106 = vunpack.c.l.bf16 %v42
  %v107 = vunpack.c.l.bf16 %v43
  %v108 = vunpack.c.l.bf16 %v44
  %v109 = vunpack.c.l.bf16 %v45
  %v110 = vunpack.c.l.bf16 %v46
  %v111 = vunpack.c.l.bf16 %v47
  %v112 = vunpack.c.l.bf16 %v48
  %v113 = vunpack.c.l.bf16 %v49
  %v114 = vunpack.c.l.bf16 %v50
  %v115 = vunpack.c.l.bf16 %v51
  %v116 = vunpack.c.l.bf16 %v52
  %v117 = vunpack.c.l.bf16 %v53
  %v118 = vunpack.c.l.bf16 %v54
  %v119 = vunpack.c.l.bf16 %v55
  %v120 = vunpack.c.l.bf16 %v56
  %v121 = vunpack.c.l.bf16 %v57
  %v122 = vunpack.c.l.bf16 %v58
  %v123 = vunpack.c.l.bf16 %v59
  %v124 = vunpack.c.l.bf16 %v60
  %v125 = vunpack.c.l.bf16 %v61
  %v126 = vunpack.c.l.bf16 %v62
  %v127 = vunpack.c.l.bf16 %v63
  %v128 = vunpack.c.l.bf16 %v64
  %v129 = vunpack.c.l.bf16 %v65
  %v130 = vunpack.c.l.bf16 %v66
  %v131 = vunpack.c.l.bf16 %v67
  %v132 = vunpack.c.l.bf16 %v68
  %v133 = vunpack.c.l.bf16 %v69
  %v134 = vunpack.c.l.bf16 %v70
  %v135 = vunpack.c.l.bf16 %v71
  %v136 = vunpack.c.l.bf16 %v72
  %v137 = vunpack.c.l.bf16 %v73
  %v138 = vunpack.c.l.bf16 %v74
  %v139 = vunpack.c.l.bf16 %v75
  %v140 = vunpack.c.l.bf16 %v76
  %v141 = vunpack.c.l.bf16 %v77
  %v142 = vunpack.c.l.bf16 %v78
  %v143 = vunpack.c.l.bf16 %v79
  %v144 = vunpack.c.l.bf16 %v80
  %v145 = vunpack.c.l.bf16 %v81
  %v146 = vunpack.c.l.bf16 %v82
  %v147 = vunpack.c.l.bf16 %v83
  %v148 = vld [vmem:[%s1] sm:$0x1]
  %v150 = vlaneseq
  %v151 = vshrl.u32 %v150, 7
  %v152 = vsub.s32 0, %v151
  %v153 = vrot.slane %v148, %v152
  %v155 = vmul.f32 %v84, %v153
  %v156 = vmul.f32 %v85, %v153
  %v157 = vmul.f32 %v86, %v153
  %v158 = vmul.f32 %v87, %v153
  %v159 = vmul.f32 %v88, %v153
  %v160 = vmul.f32 %v89, %v153
  %v161 = vmul.f32 %v90, %v153
  %v162 = vmul.f32 %v91, %v153
  %v163 = vmul.f32 %v92, %v153
  %v164 = vmul.f32 %v93, %v153
  %v165 = vmul.f32 %v94, %v153
  %v166 = vmul.f32 %v95, %v153
  %v167 = vmul.f32 %v96, %v153
  %v168 = vmul.f32 %v97, %v153
  %v169 = vmul.f32 %v98, %v153
  %v170 = vmul.f32 %v99, %v153
  %v171 = vmul.f32 %v100, %v153
  %v172 = vmul.f32 %v101, %v153
  %v173 = vmul.f32 %v102, %v153
  %v174 = vmul.f32 %v103, %v153
  %v175 = vmul.f32 %v104, %v153
  %v176 = vmul.f32 %v105, %v153
  %v177 = vmul.f32 %v106, %v153
  %v178 = vmul.f32 %v107, %v153
  %v179 = vmul.f32 %v108, %v153
  %v180 = vmul.f32 %v109, %v153
  %v181 = vmul.f32 %v110, %v153
  %v182 = vmul.f32 %v111, %v153
  %v183 = vmul.f32 %v112, %v153
  %v184 = vmul.f32 %v113, %v153
  %v185 = vmul.f32 %v114, %v153
  %v186 = vmul.f32 %v115, %v153
  %v187 = vmul.f32 %v116, %v153
  %v188 = vmul.f32 %v117, %v153
  %v189 = vmul.f32 %v118, %v153
  %v190 = vmul.f32 %v119, %v153
  %v191 = vmul.f32 %v120, %v153
  %v192 = vmul.f32 %v121, %v153
  %v193 = vmul.f32 %v122, %v153
  %v194 = vmul.f32 %v123, %v153
  %v195 = vmul.f32 %v124, %v153
  %v196 = vmul.f32 %v125, %v153
  %v197 = vmul.f32 %v126, %v153
  %v198 = vmul.f32 %v127, %v153
  %v199 = vmul.f32 %v128, %v153
  %v200 = vmul.f32 %v129, %v153
  %v201 = vmul.f32 %v130, %v153
  %v202 = vmul.f32 %v131, %v153
  %v203 = vmul.f32 %v132, %v153
  %v204 = vmul.f32 %v133, %v153
  %v205 = vmul.f32 %v134, %v153
  %v206 = vmul.f32 %v135, %v153
  %v207 = vmul.f32 %v136, %v153
  %v208 = vmul.f32 %v137, %v153
  %v209 = vmul.f32 %v138, %v153
  %v210 = vmul.f32 %v139, %v153
  %v211 = vmul.f32 %v140, %v153
  %v212 = vmul.f32 %v141, %v153
  %v213 = vmul.f32 %v142, %v153
  %v214 = vmul.f32 %v143, %v153
  %v215 = vmul.f32 %v144, %v153
  %v216 = vmul.f32 %v145, %v153
  %v217 = vmul.f32 %v146, %v153
  %v218 = vmul.f32 %v147, %v153
  %v219 = vld [vmem:[%s2] sm:$0x1]
  %v221 = vlaneseq
  %v222 = vshrl.u32 %v221, 7
  %v223 = vsub.s32 0, %v222
  %v224 = vrot.slane %v219, %v223
  %v226 = vadd.f32 %v155, %v224
  %v227 = vadd.f32 %v156, %v224
  %v228 = vadd.f32 %v157, %v224
  %v229 = vadd.f32 %v158, %v224
  %v230 = vadd.f32 %v159, %v224
  %v231 = vadd.f32 %v160, %v224
  %v232 = vadd.f32 %v161, %v224
  %v233 = vadd.f32 %v162, %v224
  %v234 = vadd.f32 %v163, %v224
  %v235 = vadd.f32 %v164, %v224
  %v236 = vadd.f32 %v165, %v224
  %v237 = vadd.f32 %v166, %v224
  %v238 = vadd.f32 %v167, %v224
  %v239 = vadd.f32 %v168, %v224
  %v240 = vadd.f32 %v169, %v224
  %v241 = vadd.f32 %v170, %v224
  %v242 = vadd.f32 %v171, %v224
  %v243 = vadd.f32 %v172, %v224
  %v244 = vadd.f32 %v173, %v224
  %v245 = vadd.f32 %v174, %v224
  %v246 = vadd.f32 %v175, %v224
  %v247 = vadd.f32 %v176, %v224
  %v248 = vadd.f32 %v177, %v224
  %v249 = vadd.f32 %v178, %v224
  %v250 = vadd.f32 %v179, %v224
  %v251 = vadd.f32 %v180, %v224
  %v252 = vadd.f32 %v181, %v224
  %v253 = vadd.f32 %v182, %v224
  %v254 = vadd.f32 %v183, %v224
  %v255 = vadd.f32 %v184, %v224
  %v256 = vadd.f32 %v185, %v224
  %v257 = vadd.f32 %v186, %v224
  %v258 = vadd.f32 %v187, %v224
  %v259 = vadd.f32 %v188, %v224
  %v260 = vadd.f32 %v189, %v224
  %v261 = vadd.f32 %v190, %v224
  %v262 = vadd.f32 %v191, %v224
  %v263 = vadd.f32 %v192, %v224
  %v264 = vadd.f32 %v193, %v224
  %v265 = vadd.f32 %v194, %v224
  %v266 = vadd.f32 %v195, %v224
  %v267 = vadd.f32 %v196, %v224
  %v268 = vadd.f32 %v197, %v224
  %v269 = vadd.f32 %v198, %v224
  %v270 = vadd.f32 %v199, %v224
  %v271 = vadd.f32 %v200, %v224
  %v272 = vadd.f32 %v201, %v224
  %v273 = vadd.f32 %v202, %v224
  %v274 = vadd.f32 %v203, %v224
  %v275 = vadd.f32 %v204, %v224
  %v276 = vadd.f32 %v205, %v224
  %v277 = vadd.f32 %v206, %v224
  %v278 = vadd.f32 %v207, %v224
  %v279 = vadd.f32 %v208, %v224
  %v280 = vadd.f32 %v209, %v224
  %v281 = vadd.f32 %v210, %v224
  %v282 = vadd.f32 %v211, %v224
  %v283 = vadd.f32 %v212, %v224
  %v284 = vadd.f32 %v213, %v224
  %v285 = vadd.f32 %v214, %v224
  %v286 = vadd.f32 %v215, %v224
  %v287 = vadd.f32 %v216, %v224
  %v288 = vadd.f32 %v217, %v224
  %v289 = vadd.f32 %v218, %v224
  %v290 = vmax.f32 %v226, 0.0
  %v291 = vmax.f32 %v227, 0.0
  %v292 = vmax.f32 %v228, 0.0
  %v293 = vmax.f32 %v229, 0.0
  %v294 = vmax.f32 %v230, 0.0
  %v295 = vmax.f32 %v231, 0.0
  %v296 = vmax.f32 %v232, 0.0
  %v297 = vmax.f32 %v233, 0.0
  %v298 = vmax.f32 %v234, 0.0
  %v299 = vmax.f32 %v235, 0.0
  %v300 = vmax.f32 %v236, 0.0
  %v301 = vmax.f32 %v237, 0.0
  %v302 = vmax.f32 %v238, 0.0
  %v303 = vmax.f32 %v239, 0.0
  %v304 = vmax.f32 %v240, 0.0
  %v305 = vmax.f32 %v241, 0.0
  %v306 = vmax.f32 %v242, 0.0
  %v307 = vmax.f32 %v243, 0.0
  %v308 = vmax.f32 %v244, 0.0
  %v309 = vmax.f32 %v245, 0.0
  %v310 = vmax.f32 %v246, 0.0
  %v311 = vmax.f32 %v247, 0.0
  %v312 = vmax.f32 %v248, 0.0
  %v313 = vmax.f32 %v249, 0.0
  %v314 = vmax.f32 %v250, 0.0
  %v315 = vmax.f32 %v251, 0.0
  %v316 = vmax.f32 %v252, 0.0
  %v317 = vmax.f32 %v253, 0.0
  %v318 = vmax.f32 %v254, 0.0
  %v319 = vmax.f32 %v255, 0.0
  %v320 = vmax.f32 %v256, 0.0
  %v321 = vmax.f32 %v257, 0.0
  %v322 = vmax.f32 %v258, 0.0
  %v323 = vmax.f32 %v259, 0.0
  %v324 = vmax.f32 %v260, 0.0
  %v325 = vmax.f32 %v261, 0.0
  %v326 = vmax.f32 %v262, 0.0
  %v327 = vmax.f32 %v263, 0.0
  %v328 = vmax.f32 %v264, 0.0
  %v329 = vmax.f32 %v265, 0.0
  %v330 = vmax.f32 %v266, 0.0
  %v331 = vmax.f32 %v267, 0.0
  %v332 = vmax.f32 %v268, 0.0
  %v333 = vmax.f32 %v269, 0.0
  %v334 = vmax.f32 %v270, 0.0
  %v335 = vmax.f32 %v271, 0.0
  %v336 = vmax.f32 %v272, 0.0
  %v337 = vmax.f32 %v273, 0.0
  %v338 = vmax.f32 %v274, 0.0
  %v339 = vmax.f32 %v275, 0.0
  %v340 = vmax.f32 %v276, 0.0
  %v341 = vmax.f32 %v277, 0.0
  %v342 = vmax.f32 %v278, 0.0
  %v343 = vmax.f32 %v279, 0.0
  %v344 = vmax.f32 %v280, 0.0
  %v345 = vmax.f32 %v281, 0.0
  %v346 = vmax.f32 %v282, 0.0
  %v347 = vmax.f32 %v283, 0.0
  %v348 = vmax.f32 %v284, 0.0
  %v349 = vmax.f32 %v285, 0.0
  %v350 = vmax.f32 %v286, 0.0
  %v351 = vmax.f32 %v287, 0.0
  %v352 = vmax.f32 %v288, 0.0
  %v353 = vmax.f32 %v289, 0.0
  %v354 = vpack.c.bf16 %v291, %v290
  %v355 = vpack.c.bf16 %v293, %v292
  %v356 = vpack.c.bf16 %v295, %v294
  %v357 = vpack.c.bf16 %v297, %v296
  %v358 = vpack.c.bf16 %v299, %v298
  %v359 = vpack.c.bf16 %v301, %v300
  %v360 = vpack.c.bf16 %v303, %v302
  %v361 = vpack.c.bf16 %v305, %v304
  %v362 = vpack.c.bf16 %v307, %v306
  %v363 = vpack.c.bf16 %v309, %v308
  %v364 = vpack.c.bf16 %v311, %v310
  %v365 = vpack.c.bf16 %v313, %v312
  %v366 = vpack.c.bf16 %v315, %v314
  %v367 = vpack.c.bf16 %v317, %v316
  %v368 = vpack.c.bf16 %v319, %v318
  %v369 = vpack.c.bf16 %v321, %v320
  %v370 = vpack.c.bf16 %v323, %v322
  %v371 = vpack.c.bf16 %v325, %v324
  %v372 = vpack.c.bf16 %v327, %v326
  %v373 = vpack.c.bf16 %v329, %v328
  %v374 = vpack.c.bf16 %v331, %v330
  %v375 = vpack.c.bf16 %v333, %v332
  %v376 = vpack.c.bf16 %v335, %v334
  %v377 = vpack.c.bf16 %v337, %v336
  %v378 = vpack.c.bf16 %v339, %v338
  %v379 = vpack.c.bf16 %v341, %v340
  %v380 = vpack.c.bf16 %v343, %v342
  %v381 = vpack.c.bf16 %v345, %v344
  %v382 = vpack.c.bf16 %v347, %v346
  %v383 = vpack.c.bf16 %v349, %v348
  %v384 = vpack.c.bf16 %v351, %v350
  %v385 = vpack.c.bf16 %v353, %v352
  %v386 = vld [vmem:[%s3] sm:$0xf]
  %v387 = vld [vmem:[%s3 + $0x4] sm:$0xf]
  %v388 = vld [vmem:[%s3 + $0x8] sm:$0xf]
  %v389 = vld [vmem:[%s3 + $0xc] sm:$0xf]
  %v390 = vld [vmem:[%s3 + $0x10] sm:$0xf]
  %v391 = vld [vmem:[%s3 + $0x14] sm:$0xf]
  %v392 = vld [vmem:[%s3 + $0x18] sm:$0xf]
  %v393 = vld [vmem:[%s3 + $0x1c] sm:$0xf]
  %v394 = vld [vmem:[%s3 + $0x20] sm:$0xf]
  %v396 = vshrl.u32 0, 16
  %v398 = vrot.slane %v396, 7
  %v399 = vshll.u32 0, 16
  %v401 = vor.u32 %v398, %v399
  %v403 = vshrl.u32 %v354, 16
  %v405 = vrot.slane %v403, 7
  %v406 = vshll.u32 %v354, 16
  %v408 = vor.u32 %v405, %v406
  %v410 = vshrl.u32 %v355, 16
  %v412 = vrot.slane %v410, 7
  %v413 = vshll.u32 %v355, 16
  %v415 = vor.u32 %v412, %v413
  %v417 = vshrl.u32 %v356, 16
  %v419 = vrot.slane %v417, 7
  %v420 = vshll.u32 %v356, 16
  %v422 = vor.u32 %v419, %v420
  %v424 = vshrl.u32 %v357, 16
  %v426 = vrot.slane %v424, 7
  %v427 = vshll.u32 %v357, 16
  %v429 = vor.u32 %v426, %v427
  %v431 = vshrl.u32 %v358, 16
  %v433 = vrot.slane %v431, 7
  %v434 = vshll.u32 %v358, 16
  %v436 = vor.u32 %v433, %v434
  %v438 = vshrl.u32 %v359, 16
  %v440 = vrot.slane %v438, 7
  %v441 = vshll.u32 %v359, 16
  %v443 = vor.u32 %v440, %v441
  %v445 = vshrl.u32 %v360, 16
  %v447 = vrot.slane %v445, 7
  %v448 = vshll.u32 %v360, 16
  %v450 = vor.u32 %v447, %v448
  %v452 = vshrl.u32 %v361, 16
  %v454 = vrot.slane %v452, 7
  %v455 = vshll.u32 %v361, 16
  %v457 = vor.u32 %v454, %v455
  %v459 = vshrl.u32 %v362, 16
  %v461 = vrot.slane %v459, 7
  %v462 = vshll.u32 %v362, 16
  %v464 = vor.u32 %v461, %v462
  %v466 = vshrl.u32 %v363, 16
  %v468 = vrot.slane %v466, 7
  %v469 = vshll.u32 %v363, 16
  %v471 = vor.u32 %v468, %v469
  %v473 = vshrl.u32 %v364, 16
  %v475 = vrot.slane %v473, 7
  %v476 = vshll.u32 %v364, 16
  %v478 = vor.u32 %v475, %v476
  %v480 = vshrl.u32 %v365, 16
  %v482 = vrot.slane %v480, 7
  %v483 = vshll.u32 %v365, 16
  %v485 = vor.u32 %v482, %v483
  %v487 = vshrl.u32 %v366, 16
  %v489 = vrot.slane %v487, 7
  %v490 = vshll.u32 %v366, 16
  %v492 = vor.u32 %v489, %v490
  %v494 = vshrl.u32 %v367, 16
  %v496 = vrot.slane %v494, 7
  %v497 = vshll.u32 %v367, 16
  %v499 = vor.u32 %v496, %v497
  %v501 = vshrl.u32 %v368, 16
  %v503 = vrot.slane %v501, 7
  %v504 = vshll.u32 %v368, 16
  %v506 = vor.u32 %v503, %v504
  %v508 = vshrl.u32 %v369, 16
  %v510 = vrot.slane %v508, 7
  %v511 = vshll.u32 %v369, 16
  %v513 = vor.u32 %v510, %v511
  %v515 = vshrl.u32 %v370, 16
  %v517 = vrot.slane %v515, 7
  %v518 = vshll.u32 %v370, 16
  %v520 = vor.u32 %v517, %v518
  %v522 = vshrl.u32 %v371, 16
  %v524 = vrot.slane %v522, 7
  %v525 = vshll.u32 %v371, 16
  %v527 = vor.u32 %v524, %v525
  %v529 = vshrl.u32 %v372, 16
  %v531 = vrot.slane %v529, 7
  %v532 = vshll.u32 %v372, 16
  %v534 = vor.u32 %v531, %v532
  %v536 = vshrl.u32 %v373, 16
  %v538 = vrot.slane %v536, 7
  %v539 = vshll.u32 %v373, 16
  %v541 = vor.u32 %v538, %v539
  %v543 = vshrl.u32 %v374, 16
  %v545 = vrot.slane %v543, 7
  %v546 = vshll.u32 %v374, 16
  %v548 = vor.u32 %v545, %v546
  %v550 = vshrl.u32 %v375, 16
  %v552 = vrot.slane %v550, 7
  %v553 = vshll.u32 %v375, 16
  %v555 = vor.u32 %v552, %v553
  %v557 = vshrl.u32 %v376, 16
  %v559 = vrot.slane %v557, 7
  %v560 = vshll.u32 %v376, 16
  %v562 = vor.u32 %v559, %v560
  %v564 = vshrl.u32 %v377, 16
  %v566 = vrot.slane %v564, 7
  %v567 = vshll.u32 %v377, 16
  %v569 = vor.u32 %v566, %v567
  %v571 = vshrl.u32 %v378, 16
  %v573 = vrot.slane %v571, 7
  %v574 = vshll.u32 %v378, 16
  %v576 = vor.u32 %v573, %v574
  %v578 = vshrl.u32 %v379, 16
  %v580 = vrot.slane %v578, 7
  %v581 = vshll.u32 %v379, 16
  %v583 = vor.u32 %v580, %v581
  %v585 = vshrl.u32 %v380, 16
  %v587 = vrot.slane %v585, 7
  %v588 = vshll.u32 %v380, 16
  %v590 = vor.u32 %v587, %v588
  %v592 = vshrl.u32 %v381, 16
  %v594 = vrot.slane %v592, 7
  %v595 = vshll.u32 %v381, 16
  %v597 = vor.u32 %v594, %v595
  %v599 = vshrl.u32 %v382, 16
  %v601 = vrot.slane %v599, 7
  %v602 = vshll.u32 %v382, 16
  %v604 = vor.u32 %v601, %v602
  %v606 = vshrl.u32 %v383, 16
  %v608 = vrot.slane %v606, 7
  %v609 = vshll.u32 %v383, 16
  %v611 = vor.u32 %v608, %v609
  %v613 = vshrl.u32 %v384, 16
  %v615 = vrot.slane %v613, 7
  %v616 = vshll.u32 %v384, 16
  %v618 = vor.u32 %v615, %v616
  %v620 = vshrl.u32 %v385, 16
  %v622 = vrot.slane %v620, 7
  %v623 = vshll.u32 %v385, 16
  %v625 = vor.u32 %v622, %v623
  %vm692 = vcmask 1040384
  %vm693 = vsmask.f32 256
  %vm694 = vmand %vm692, %vm693
  %v695 = vsel %vm694, 0, %v401
  %v696 = vsel %vm694, 0, %v408
  %v697 = vsel %vm694, 0, %v415
  %v698 = vsel %vm694, 0, %v422
  %v699 = vsel %vm694, 0, %v429
  %v700 = vsel %vm694, 0, %v436
  %v701 = vsel %vm694, 0, %v443
  %v702 = vsel %vm694, 0, %v450
  %v703 = vsel %vm694, 0, %v457
  %v704 = vsel %vm694, 0, %v464
  %v705 = vsel %vm694, 0, %v471
  %v706 = vsel %vm694, 0, %v478
  %v707 = vsel %vm694, 0, %v485
  %v708 = vsel %vm694, 0, %v492
  %v709 = vsel %vm694, 0, %v499
  %v710 = vsel %vm694, 0, %v506
  %v711 = vsel %vm694, 0, %v513
  %v712 = vsel %vm694, 0, %v520
  %v713 = vsel %vm694, 0, %v527
  %v714 = vsel %vm694, 0, %v534
  %v715 = vsel %vm694, 0, %v541
  %v716 = vsel %vm694, 0, %v548
  %v717 = vsel %vm694, 0, %v555
  %v718 = vsel %vm694, 0, %v562
  %v719 = vsel %vm694, 0, %v569
  %v720 = vsel %vm694, 0, %v576
  %v721 = vsel %vm694, 0, %v583
  %v722 = vsel %vm694, 0, %v590
  %v723 = vsel %vm694, 0, %v597
  %v724 = vsel %vm694, 0, %v604
  %v725 = vsel %vm694, 0, %v611
  %v726 = vsel %vm694, 0, %v618
  %v727 = vsel %vm694, 0, %v625
  %v728 = vsel %vm694, %v398, 0
  %v729 = vsel %vm694, %v405, 0
  %v730 = vsel %vm694, %v412, 0
  %v731 = vsel %vm694, %v419, 0
  %v732 = vsel %vm694, %v426, 0
  %v733 = vsel %vm694, %v433, 0
  %v734 = vsel %vm694, %v440, 0
  %v735 = vsel %vm694, %v447, 0
  %v736 = vsel %vm694, %v454, 0
  %v737 = vsel %vm694, %v461, 0
  %v738 = vsel %vm694, %v468, 0
  %v739 = vsel %vm694, %v475, 0
  %v740 = vsel %vm694, %v482, 0
  %v741 = vsel %vm694, %v489, 0
  %v742 = vsel %vm694, %v496, 0
  %v743 = vsel %vm694, %v503, 0
  %v744 = vsel %vm694, %v510, 0
  %v745 = vsel %vm694, %v517, 0
  %v746 = vsel %vm694, %v524, 0
  %v747 = vsel %vm694, %v531, 0
  %v748 = vsel %vm694, %v538, 0
  %v749 = vsel %vm694, %v545, 0
  %v750 = vsel %vm694, %v552, 0
  %v751 = vsel %vm694, %v559, 0
  %v752 = vsel %vm694, %v566, 0
  %v753 = vsel %vm694, %v573, 0
  %v754 = vsel %vm694, %v580, 0
  %v755 = vsel %vm694, %v587, 0
  %v756 = vsel %vm694, %v594, 0
  %v757 = vsel %vm694, %v601, 0
  %v758 = vsel %vm694, %v608, 0
  %v759 = vsel %vm694, %v615, 0
  %v760 = vsel %vm694, %v622, 0
  %vm761 = vsmask.f32 7424
  %v763 = vshrl.u32 %v695, 16
  %v765 = vshll.u32 %v695, 16
  %v767 = vrot.slane %v765, 1
  %v768 = vor.u32 %v763, %v767
  %v770 = vshll.u32 %v728, 16
  %v772 = vrot.slane %v770, 1
  %v773 = vsel %vm761, %v768, %v772
  %v775 = vshrl.u32 %v696, 16
  %v777 = vshll.u32 %v696, 16
  %v779 = vrot.slane %v777, 1
  %v780 = vor.u32 %v775, %v779
  %v782 = vshll.u32 %v729, 16
  %v784 = vrot.slane %v782, 1
  %v785 = vsel %vm761, %v780, %v784
  %v787 = vshrl.u32 %v697, 16
  %v789 = vshll.u32 %v697, 16
  %v791 = vrot.slane %v789, 1
  %v792 = vor.u32 %v787, %v791
  %v794 = vshll.u32 %v730, 16
  %v796 = vrot.slane %v794, 1
  %v797 = vsel %vm761, %v792, %v796
  %v799 = vshrl.u32 %v698, 16
  %v801 = vshll.u32 %v698, 16
  %v803 = vrot.slane %v801, 1
  %v804 = vor.u32 %v799, %v803
  %v806 = vshll.u32 %v731, 16
  %v808 = vrot.slane %v806, 1
  %v809 = vsel %vm761, %v804, %v808
  %v811 = vshrl.u32 %v699, 16
  %v813 = vshll.u32 %v699, 16
  %v815 = vrot.slane %v813, 1
  %v816 = vor.u32 %v811, %v815
  %v818 = vshll.u32 %v732, 16
  %v820 = vrot.slane %v818, 1
  %v821 = vsel %vm761, %v816, %v820
  %v823 = vshrl.u32 %v700, 16
  %v825 = vshll.u32 %v700, 16
  %v827 = vrot.slane %v825, 1
  %v828 = vor.u32 %v823, %v827
  %v830 = vshll.u32 %v733, 16
  %v832 = vrot.slane %v830, 1
  %v833 = vsel %vm761, %v828, %v832
  %v835 = vshrl.u32 %v701, 16
  %v837 = vshll.u32 %v701, 16
  %v839 = vrot.slane %v837, 1
  %v840 = vor.u32 %v835, %v839
  %v842 = vshll.u32 %v734, 16
  %v844 = vrot.slane %v842, 1
  %v845 = vsel %vm761, %v840, %v844
  %v847 = vshrl.u32 %v702, 16
  %v849 = vshll.u32 %v702, 16
  %v851 = vrot.slane %v849, 1
  %v852 = vor.u32 %v847, %v851
  %v854 = vshll.u32 %v735, 16
  %v856 = vrot.slane %v854, 1
  %v857 = vsel %vm761, %v852, %v856
  %v859 = vshrl.u32 %v703, 16
  %v861 = vshll.u32 %v703, 16
  %v863 = vrot.slane %v861, 1
  %v864 = vor.u32 %v859, %v863
  %v866 = vshll.u32 %v736, 16
  %v868 = vrot.slane %v866, 1
  %v869 = vsel %vm761, %v864, %v868
  %v871 = vshrl.u32 %v704, 16
  %v873 = vshll.u32 %v704, 16
  %v875 = vrot.slane %v873, 1
  %v876 = vor.u32 %v871, %v875
  %v878 = vshll.u32 %v737, 16
  %v880 = vrot.slane %v878, 1
  %v881 = vsel %vm761, %v876, %v880
  %v883 = vshrl.u32 %v705, 16
  %v885 = vshll.u32 %v705, 16
  %v887 = vrot.slane %v885, 1
  %v888 = vor.u32 %v883, %v887
  %v890 = vshll.u32 %v738, 16
  %v892 = vrot.slane %v890, 1
  %v893 = vsel %vm761, %v888, %v892
  %v895 = vshrl.u32 %v706, 16
  %v897 = vshll.u32 %v706, 16
  %v899 = vrot.slane %v897, 1
  %v900 = vor.u32 %v895, %v899
  %v902 = vshll.u32 %v739, 16
  %v904 = vrot.slane %v902, 1
  %v905 = vsel %vm761, %v900, %v904
  %v907 = vshrl.u32 %v707, 16
  %v909 = vshll.u32 %v707, 16
  %v911 = vrot.slane %v909, 1
  %v912 = vor.u32 %v907, %v911
  %v914 = vshll.u32 %v740, 16
  %v916 = vrot.slane %v914, 1
  %v917 = vsel %vm761, %v912, %v916
  %v919 = vshrl.u32 %v708, 16
  %v921 = vshll.u32 %v708, 16
  %v923 = vrot.slane %v921, 1
  %v924 = vor.u32 %v919, %v923
  %v926 = vshll.u32 %v741, 16
  %v928 = vrot.slane %v926, 1
  %v929 = vsel %vm761, %v924, %v928
  %v931 = vshrl.u32 %v709, 16
  %v933 = vshll.u32 %v709, 16
  %v935 = vrot.slane %v933, 1
  %v936 = vor.u32 %v931, %v935
  %v938 = vshll.u32 %v742, 16
  %v940 = vrot.slane %v938, 1
  %v941 = vsel %vm761, %v936, %v940
  %v943 = vshrl.u32 %v710, 16
  %v945 = vshll.u32 %v710, 16
  %v947 = vrot.slane %v945, 1
  %v948 = vor.u32 %v943, %v947
  %v950 = vshll.u32 %v743, 16
  %v952 = vrot.slane %v950, 1
  %v953 = vsel %vm761, %v948, %v952
  %v955 = vshrl.u32 %v712, 16
  %v957 = vshll.u32 %v712, 16
  %v959 = vrot.slane %v957, 1
  %v960 = vor.u32 %v955, %v959
  %v962 = vshll.u32 %v745, 16
  %v964 = vrot.slane %v962, 1
  %v965 = vsel %vm761, %v960, %v964
  %v967 = vshrl.u32 %v713, 16
  %v969 = vshll.u32 %v713, 16
  %v971 = vrot.slane %v969, 1
  %v972 = vor.u32 %v967, %v971
  %v974 = vshll.u32 %v746, 16
  %v976 = vrot.slane %v974, 1
  %v977 = vsel %vm761, %v972, %v976
  %v979 = vshrl.u32 %v714, 16
  %v981 = vshll.u32 %v714, 16
  %v983 = vrot.slane %v981, 1
  %v984 = vor.u32 %v979, %v983
  %v986 = vshll.u32 %v747, 16
  %v988 = vrot.slane %v986, 1
  %v989 = vsel %vm761, %v984, %v988
  %v991 = vshrl.u32 %v715, 16
  %v993 = vshll.u32 %v715, 16
  %v995 = vrot.slane %v993, 1
  %v996 = vor.u32 %v991, %v995
  %v998 = vshll.u32 %v748, 16
  %v1000 = vrot.slane %v998, 1
  %v1001 = vsel %vm761, %v996, %v1000
  %v1003 = vshrl.u32 %v716, 16
  %v1005 = vshll.u32 %v716, 16
  %v1007 = vrot.slane %v1005, 1
  %v1008 = vor.u32 %v1003, %v1007
  %v1010 = vshll.u32 %v749, 16
  %v1012 = vrot.slane %v1010, 1
  %v1013 = vsel %vm761, %v1008, %v1012
  %v1015 = vshrl.u32 %v717, 16
  %v1017 = vshll.u32 %v717, 16
  %v1019 = vrot.slane %v1017, 1
  %v1020 = vor.u32 %v1015, %v1019
  %v1022 = vshll.u32 %v750, 16
  %v1024 = vrot.slane %v1022, 1
  %v1025 = vsel %vm761, %v1020, %v1024
  %v1027 = vshrl.u32 %v718, 16
  %v1029 = vshll.u32 %v718, 16
  %v1031 = vrot.slane %v1029, 1
  %v1032 = vor.u32 %v1027, %v1031
  %v1034 = vshll.u32 %v751, 16
  %v1036 = vrot.slane %v1034, 1
  %v1037 = vsel %vm761, %v1032, %v1036
  %v1039 = vshrl.u32 %v719, 16
  %v1041 = vshll.u32 %v719, 16
  %v1043 = vrot.slane %v1041, 1
  %v1044 = vor.u32 %v1039, %v1043
  %v1046 = vshll.u32 %v752, 16
  %v1048 = vrot.slane %v1046, 1
  %v1049 = vsel %vm761, %v1044, %v1048
  %v1051 = vshrl.u32 %v720, 16
  %v1053 = vshll.u32 %v720, 16
  %v1055 = vrot.slane %v1053, 1
  %v1056 = vor.u32 %v1051, %v1055
  %v1058 = vshll.u32 %v753, 16
  %v1060 = vrot.slane %v1058, 1
  %v1061 = vsel %vm761, %v1056, %v1060
  %v1063 = vshrl.u32 %v721, 16
  %v1065 = vshll.u32 %v721, 16
  %v1067 = vrot.slane %v1065, 1
  %v1068 = vor.u32 %v1063, %v1067
  %v1070 = vshll.u32 %v754, 16
  %v1072 = vrot.slane %v1070, 1
  %v1073 = vsel %vm761, %v1068, %v1072
  %v1075 = vshrl.u32 %v722, 16
  %v1077 = vshll.u32 %v722, 16
  %v1079 = vrot.slane %v1077, 1
  %v1080 = vor.u32 %v1075, %v1079
  %v1082 = vshll.u32 %v755, 16
  %v1084 = vrot.slane %v1082, 1
  %v1085 = vsel %vm761, %v1080, %v1084
  %v1087 = vshrl.u32 %v723, 16
  %v1089 = vshll.u32 %v723, 16
  %v1091 = vrot.slane %v1089, 1
  %v1092 = vor.u32 %v1087, %v1091
  %v1094 = vshll.u32 %v756, 16
  %v1096 = vrot.slane %v1094, 1
  %v1097 = vsel %vm761, %v1092, %v1096
  %v1099 = vshrl.u32 %v724, 16
  %v1101 = vshll.u32 %v724, 16
  %v1103 = vrot.slane %v1101, 1
  %v1104 = vor.u32 %v1099, %v1103
  %v1106 = vshll.u32 %v757, 16
  %v1108 = vrot.slane %v1106, 1
  %v1109 = vsel %vm761, %v1104, %v1108
  %v1111 = vshrl.u32 %v725, 16
  %v1113 = vshll.u32 %v725, 16
  %v1115 = vrot.slane %v1113, 1
  %v1116 = vor.u32 %v1111, %v1115
  %v1118 = vshll.u32 %v758, 16
  %v1120 = vrot.slane %v1118, 1
  %v1121 = vsel %vm761, %v1116, %v1120
  %v1123 = vshrl.u32 %v726, 16
  %v1125 = vshll.u32 %v726, 16
  %v1127 = vrot.slane %v1125, 1
  %v1128 = vor.u32 %v1123, %v1127
  %v1130 = vshll.u32 %v759, 16
  %v1132 = vrot.slane %v1130, 1
  %v1133 = vsel %vm761, %v1128, %v1132
  %vm1134 = vcmask 64512
  %v1136 = vsel %vm1134, %v773, 0
  %v1139 = vsel %vm1134, %v785, 0
  %v1142 = vsel %vm1134, %v797, 0
  %v1145 = vsel %vm1134, %v809, 0
  %v1148 = vsel %vm1134, %v821, 0
  %v1151 = vsel %vm1134, %v833, 0
  %v1154 = vsel %vm1134, %v845, 0
  %v1157 = vsel %vm1134, %v857, 0
  %v1160 = vsel %vm1134, %v869, 0
  %v1163 = vsel %vm1134, %v881, 0
  %v1166 = vsel %vm1134, %v893, 0
  %v1169 = vsel %vm1134, %v905, 0
  %v1172 = vsel %vm1134, %v917, 0
  %v1175 = vsel %vm1134, %v929, 0
  %v1178 = vsel %vm1134, %v941, 0
  %v1181 = vsel %vm1134, %v953, 0
  %v1184 = vsel %vm1134, %v965, 0
  %v1187 = vsel %vm1134, %v977, 0
  %v1190 = vsel %vm1134, %v989, 0
  %v1193 = vsel %vm1134, %v1001, 0
  %v1196 = vsel %vm1134, %v1013, 0
  %v1199 = vsel %vm1134, %v1025, 0
  %v1202 = vsel %vm1134, %v1037, 0
  %v1205 = vsel %vm1134, %v1049, 0
  %v1208 = vsel %vm1134, %v1061, 0
  %v1211 = vsel %vm1134, %v1073, 0
  %v1214 = vsel %vm1134, %v1085, 0
  %v1217 = vsel %vm1134, %v1097, 0
  %v1220 = vsel %vm1134, %v1109, 0
  %v1223 = vsel %vm1134, %v1121, 0
  %v1226 = vsel %vm1134, %v1133, 0
  %vm1228 = vcmask 1043456
  %v1230 = vsel %vm1228, %v387, 0
  %1232 = vmatprep.subr.bf16.mxu0 0
  %1233 = vmatpush1.bf16.msra.mxu0 %v1230
  %1234 = vmatprep.subr.bf16.mxu0 0
  %1235 = vmatpush1.bf16.msra.mxu0 0
  %1236 = vmatprep.subr.bf16.mxu0 0
  %1237 = vmatpush1.bf16.msra.mxu0 0
  %1238 = vmatprep.subr.bf16.mxu0 0
  %1239 = vmatpush1.bf16.msra.mxu0 0
  %1240 = vmatprep.subr.bf16.mxu0 0
  %1241 = vmatpush1.bf16.msra.mxu0 0
  %1242 = vmatprep.subr.bf16.mxu0 0
  %1243 = vmatpush1.bf16.msra.mxu0 0
  %1244 = vmatprep.subr.bf16.mxu0 0
  %1245 = vmatpush1.bf16.msra.mxu0 0
  %1246 = vmatprep.subr.bf16.mxu0 0
  %1247 = vmatpush1.bf16.msra.mxu0 0
  %1248 = vmatprep.subr.bf16.mxu0 0
  %1249 = vmatpush1.bf16.msra.mxu0 0
  %1250 = vmatprep.subr.bf16.mxu0 0
  %1251 = vmatpush1.bf16.msra.mxu0 0
  %1252 = vmatprep.subr.bf16.mxu0 0
  %1253 = vmatpush1.bf16.msra.mxu0 0
  %1254 = vmatprep.subr.bf16.mxu0 0
  %1255 = vmatpush1.bf16.msra.mxu0 0
  %1256 = vmatprep.subr.bf16.mxu0 0
  %1257 = vmatpush1.bf16.msra.mxu0 0
  %1258 = vmatprep.subr.bf16.mxu0 0
  %1259 = vmatpush1.bf16.msra.mxu0 0
  %1260 = vmatprep.subr.bf16.mxu0 0
  %1261 = vmatpush1.bf16.msra.mxu0 0
  %1262 = vmatprep.subr.bf16.mxu0 0
  %1263 = vmatpush1.bf16.msra.mxu0 0
  %1264 = vmatprep.mubr.bf16.mxu0 0
  %1265 = vmatmul.mubr.bf16.gmra.mrb[0].mxu0 %v1136
  %v1266 = vpop.f32.mrb[0].mxu0
  %v1267 = vadd.f32 0.0, %v1266
  %v1268 = vpop.f32.mrb[0].mxu0
  %v1269 = vpop.f32.mrb[0].mxu0
  %v1270 = vadd.f32 0.0, %v1269
  %v1271 = vpop.f32.mrb[0].mxu0
  %1272 = vmatprep.mubr.bf16.mxu0 0
  %1273 = vmatmul.mubr.bf16.gmra.mrb[0].mxu0 %v1139
  %v1274 = vpop.f32.mrb[0].mxu0
  %v1275 = vadd.f32 0.0, %v1274
  %v1276 = vpop.f32.mrb[0].mxu0
  %v1277 = vpop.f32.mrb[0].mxu0
  %v1278 = vadd.f32 0.0, %v1277
  %v1279 = vpop.f32.mrb[0].mxu0
  %1280 = vmatprep.mubr.bf16.mxu0 0
  %1281 = vmatmul.mubr.bf16.gmra.mrb[0].mxu0 %v1142
  %v1282 = vpop.f32.mrb[0].mxu0
  %v1283 = vadd.f32 0.0, %v1282
  %v1284 = vpop.f32.mrb[0].mxu0
  %v1285 = vpop.f32.mrb[0].mxu0
  %v1286 = vadd.f32 0.0, %v1285
  %v1287 = vpop.f32.mrb[0].mxu0
  %1288 = vmatprep.mubr.bf16.mxu0 0
  %1289 = vmatmul.mubr.bf16.gmra.mrb[0].mxu0 %v1145
  %v1290 = vpop.f32.mrb[0].mxu0
  %v1291 = vadd.f32 0.0, %v1290
  %v1292 = vpop.f32.mrb[0].mxu0
  %v1293 = vpop.f32.mrb[0].mxu0
  %v1294 = vadd.f32 0.0, %v1293
  %v1295 = vpop.f32.mrb[0].mxu0
  %1296 = vmatprep.mubr.bf16.mxu0 0
  %1297 = vmatmul.mubr.bf16.gmra.mrb[0].mxu0 %v1148
  %v1298 = vpop.f32.mrb[0].mxu0
  %v1299 = vadd.f32 0.0, %v1298
  %v1300 = vpop.f32.mrb[0].mxu0
  %v1301 = vpop.f32.mrb[0].mxu0
  %v1302 = vadd.f32 0.0, %v1301
  %v1303 = vpop.f32.mrb[0].mxu0
  %1304 = vmatprep.mubr.bf16.mxu0 0
  %1305 = vmatmul.mubr.bf16.gmra.mrb[0].mxu0 %v1151
  %v1306 = vpop.f32.mrb[0].mxu0
  %v1307 = vadd.f32 0.0, %v1306
  %v1308 = vpop.f32.mrb[0].mxu0
  %v1309 = vpop.f32.mrb[0].mxu0
  %v1310 = vadd.f32 0.0, %v1309
  %v1311 = vpop.f32.mrb[0].mxu0
  %1312 = vmatprep.mubr.bf16.mxu0 0
  %1313 = vmatmul.mubr.bf16.gmra.mrb[0].mxu0 %v1154
  %v1314 = vpop.f32.mrb[0].mxu0
  %v1315 = vadd.f32 0.0, %v1314
  %v1316 = vpop.f32.mrb[0].mxu0
  %v1317 = vpop.f32.mrb[0].mxu0
  %v1318 = vadd.f32 0.0, %v1317
  %v1319 = vpop.f32.mrb[0].mxu0
  %1320 = vmatprep.mubr.bf16.mxu0 0
  %1321 = vmatmul.mubr.bf16.gmra.mrb[0].mxu0 %v1157
  %v1322 = vpop.f32.mrb[0].mxu0
  %v1323 = vadd.f32 0.0, %v1322
  %v1324 = vpop.f32.mrb[0].mxu0
  %v1325 = vpop.f32.mrb[0].mxu0
  %v1326 = vadd.f32 0.0, %v1325
  %v1327 = vpop.f32.mrb[0].mxu0
  %1328 = vmatprep.mubr.bf16.mxu0 0
  %1329 = vmatmul.mubr.bf16.gmra.mrb[0].mxu0 %v1160
  %v1330 = vpop.f32.mrb[0].mxu0
  %v1331 = vadd.f32 0.0, %v1330
  %v1332 = vpop.f32.mrb[0].mxu0
  %v1333 = vpop.f32.mrb[0].mxu0
  %v1334 = vadd.f32 0.0, %v1333
  %v1335 = vpop.f32.mrb[0].mxu0
  %1336 = vmatprep.mubr.bf16.mxu0 0
  %1337 = vmatmul.mubr.bf16.gmra.mrb[0].mxu0 %v1163
  %v1338 = vpop.f32.mrb[0].mxu0
  %v1339 = vadd.f32 0.0, %v1338
  %v1340 = vpop.f32.mrb[0].mxu0
  %v1341 = vpop.f32.mrb[0].mxu0
  %v1342 = vadd.f32 0.0, %v1341
  %v1343 = vpop.f32.mrb[0].mxu0
  %1344 = vmatprep.mubr.bf16.mxu0 0
  %1345 = vmatmul.mubr.bf16.gmra.mrb[0].mxu0 %v1166
  %v1346 = vpop.f32.mrb[0].mxu0
  %v1347 = vadd.f32 0.0, %v1346
  %v1348 = vpop.f32.mrb[0].mxu0
  %v1349 = vpop.f32.mrb[0].mxu0
  %v1350 = vadd.f32 0.0, %v1349
  %v1351 = vpop.f32.mrb[0].mxu0
  %1352 = vmatprep.mubr.bf16.mxu0 0
  %1353 = vmatmul.mubr.bf16.gmra.mrb[0].mxu0 %v1169
  %v1354 = vpop.f32.mrb[0].mxu0
  %v1355 = vadd.f32 0.0, %v1354
  %v1356 = vpop.f32.mrb[0].mxu0
  %v1357 = vpop.f32.mrb[0].mxu0
  %v1358 = vadd.f32 0.0, %v1357
  %v1359 = vpop.f32.mrb[0].mxu0
  %1360 = vmatprep.mubr.bf16.mxu0 0
  %1361 = vmatmul.mubr.bf16.gmra.mrb[0].mxu0 %v1172
  %v1362 = vpop.f32.mrb[0].mxu0
  %v1363 = vadd.f32 0.0, %v1362
  %v1364 = vpop.f32.mrb[0].mxu0
  %v1365 = vpop.f32.mrb[0].mxu0
  %v1366 = vadd.f32 0.0, %v1365
  %v1367 = vpop.f32.mrb[0].mxu0
  %1368 = vmatprep.mubr.bf16.mxu0 0
  %1369 = vmatmul.mubr.bf16.gmra.mrb[0].mxu0 %v1175
  %v1370 = vpop.f32.mrb[0].mxu0
  %v1371 = vadd.f32 0.0, %v1370
  %v1372 = vpop.f32.mrb[0].mxu0
  %v1373 = vpop.f32.mrb[0].mxu0
  %v1374 = vadd.f32 0.0, %v1373
  %v1375 = vpop.f32.mrb[0].mxu0
  %1376 = vmatprep.mubr.bf16.mxu0 0
  %1377 = vmatmul.mubr.bf16.gmra.mrb[0].mxu0 %v1178
  %v1378 = vpop.f32.mrb[0].mxu0
  %v1379 = vadd.f32 0.0, %v1378
  %v1380 = vpop.f32.mrb[0].mxu0
  %v1381 = vpop.f32.mrb[0].mxu0
  %v1382 = vadd.f32 0.0, %v1381
  %v1383 = vpop.f32.mrb[0].mxu0
  %1384 = vmatprep.mubr.bf16.mxu0 0
  %1385 = vmatmul.mubr.bf16.gmra.mrb[0].mxu0 %v1181
  %v1386 = vpop.f32.mrb[0].mxu0
  %v1387 = vadd.f32 0.0, %v1386
  %v1388 = vpop.f32.mrb[0].mxu0
  %v1389 = vpop.f32.mrb[0].mxu0
  %v1390 = vadd.f32 0.0, %v1389
  %v1391 = vpop.f32.mrb[0].mxu0
  %1392 = vmatprep.mubr.bf16.mxu0 0
  %1393 = vmatmul.mubr.bf16.gmra.mrb[0].mxu0 %v1136
  %v1394 = vpop.f32.mrb[0].mxu0
  %v1395 = vadd.f32 0.0, %v1394
  %v1396 = vpop.f32.mrb[0].mxu0
  %v1397 = vpop.f32.mrb[0].mxu0
  %v1398 = vadd.f32 0.0, %v1397
  %v1399 = vpop.f32.mrb[0].mxu0
  %1400 = vmatprep.mubr.bf16.mxu0 0
  %1401 = vmatmul.mubr.bf16.gmra.mrb[0].mxu0 %v1184
  %v1402 = vpop.f32.mrb[0].mxu0
  %v1403 = vadd.f32 0.0, %v1402
  %v1404 = vpop.f32.mrb[0].mxu0
  %v1405 = vpop.f32.mrb[0].mxu0
  %v1406 = vadd.f32 0.0, %v1405
  %v1407 = vpop.f32.mrb[0].mxu0
  %1408 = vmatprep.mubr.bf16.mxu0 0
  %1409 = vmatmul.mubr.bf16.gmra.mrb[0].mxu0 %v1187
  %v1410 = vpop.f32.mrb[0].mxu0
  %v1411 = vadd.f32 0.0, %v1410
  %v1412 = vpop.f32.mrb[0].mxu0
  %v1413 = vpop.f32.mrb[0].mxu0
  %v1414 = vadd.f32 0.0, %v1413
  %v1415 = vpop.f32.mrb[0].mxu0
  %1416 = vmatprep.mubr.bf16.mxu0 0
  %1417 = vmatmul.mubr.bf16.gmra.mrb[0].mxu0 %v1190
  %v1418 = vpop.f32.mrb[0].mxu0
  %v1419 = vadd.f32 0.0, %v1418
  %v1420 = vpop.f32.mrb[0].mxu0
  %v1421 = vpop.f32.mrb[0].mxu0
  %v1422 = vadd.f32 0.0, %v1421
  %v1423 = vpop.f32.mrb[0].mxu0
  %1424 = vmatprep.mubr.bf16.mxu0 0
  %1425 = vmatmul.mubr.bf16.gmra.mrb[0].mxu0 %v1193
  %v1426 = vpop.f32.mrb[0].mxu0
  %v1427 = vadd.f32 0.0, %v1426
  %v1428 = vpop.f32.mrb[0].mxu0
  %v1429 = vpop.f32.mrb[0].mxu0
  %v1430 = vadd.f32 0.0, %v1429
  %v1431 = vpop.f32.mrb[0].mxu0
  %1432 = vmatprep.mubr.bf16.mxu0 0
  %1433 = vmatmul.mubr.bf16.gmra.mrb[0].mxu0 %v1196
  %v1434 = vpop.f32.mrb[0].mxu0
  %v1435 = vadd.f32 0.0, %v1434
  %v1436 = vpop.f32.mrb[0].mxu0
  %v1437 = vpop.f32.mrb[0].mxu0
  %v1438 = vadd.f32 0.0, %v1437
  %v1439 = vpop.f32.mrb[0].mxu0
  %1440 = vmatprep.mubr.bf16.mxu0 0
  %1441 = vmatmul.mubr.bf16.gmra.mrb[0].mxu0 %v1199
  %v1442 = vpop.f32.mrb[0].mxu0
  %v1443 = vadd.f32 0.0, %v1442
  %v1444 = vpop.f32.mrb[0].mxu0
  %v1445 = vpop.f32.mrb[0].mxu0
  %v1446 = vadd.f32 0.0, %v1445
  %v1447 = vpop.f32.mrb[0].mxu0
  %1448 = vmatprep.mubr.bf16.mxu0 0
  %1449 = vmatmul.mubr.bf16.gmra.mrb[0].mxu0 %v1202
  %v1450 = vpop.f32.mrb[0].mxu0
  %v1451 = vadd.f32 0.0, %v1450
  %v1452 = vpop.f32.mrb[0].mxu0
  %v1453 = vpop.f32.mrb[0].mxu0
  %v1454 = vadd.f32 0.0, %v1453
  %v1455 = vpop.f32.mrb[0].mxu0
  %1456 = vmatprep.mubr.bf16.mxu0 0
  %1457 = vmatmul.mubr.bf16.gmra.mrb[0].mxu0 %v1205
  %v1458 = vpop.f32.mrb[0].mxu0
  %v1459 = vadd.f32 0.0, %v1458
  %v1460 = vpop.f32.mrb[0].mxu0
  %v1461 = vpop.f32.mrb[0].mxu0
  %v1462 = vadd.f32 0.0, %v1461
  %v1463 = vpop.f32.mrb[0].mxu0
  %1464 = vmatprep.mubr.bf16.mxu0 0
  %1465 = vmatmul.mubr.bf16.gmra.mrb[0].mxu0 %v1208
  %v1466 = vpop.f32.mrb[0].mxu0
  %v1467 = vadd.f32 0.0, %v1466
  %v1468 = vpop.f32.mrb[0].mxu0
  %v1469 = vpop.f32.mrb[0].mxu0
  %v1470 = vadd.f32 0.0, %v1469
  %v1471 = vpop.f32.mrb[0].mxu0
  %1472 = vmatprep.mubr.bf16.mxu0 0
  %1473 = vmatmul.mubr.bf16.gmra.mrb[0].mxu0 %v1211
  %v1474 = vpop.f32.mrb[0].mxu0
  %v1475 = vadd.f32 0.0, %v1474
  %v1476 = vpop.f32.mrb[0].mxu0
  %v1477 = vpop.f32.mrb[0].mxu0
  %v1478 = vadd.f32 0.0, %v1477
  %v1479 = vpop.f32.mrb[0].mxu0
  %1480 = vmatprep.mubr.bf16.mxu0 0
  %1481 = vmatmul.mubr.bf16.gmra.mrb[0].mxu0 %v1214
  %v1482 = vpop.f32.mrb[0].mxu0
  %v1483 = vadd.f32 0.0, %v1482
  %v1484 = vpop.f32.mrb[0].mxu0
  %v1485 = vpop.f32.mrb[0].mxu0
  %v1486 = vadd.f32 0.0, %v1485
  %v1487 = vpop.f32.mrb[0].mxu0
  %1488 = vmatprep.mubr.bf16.mxu0 0
  %1489 = vmatmul.mubr.bf16.gmra.mrb[0].mxu0 %v1217
  %v1490 = vpop.f32.mrb[0].mxu0
  %v1491 = vadd.f32 0.0, %v1490
  %v1492 = vpop.f32.mrb[0].mxu0
  %v1493 = vpop.f32.mrb[0].mxu0
  %v1494 = vadd.f32 0.0, %v1493
  %v1495 = vpop.f32.mrb[0].mxu0
  %1496 = vmatprep.mubr.bf16.mxu0 0
  %1497 = vmatmul.mubr.bf16.gmra.mrb[0].mxu0 %v1220
  %v1498 = vpop.f32.mrb[0].mxu0
  %v1499 = vadd.f32 0.0, %v1498
  %v1500 = vpop.f32.mrb[0].mxu0
  %v1501 = vpop.f32.mrb[0].mxu0
  %v1502 = vadd.f32 0.0, %v1501
  %v1503 = vpop.f32.mrb[0].mxu0
  %1504 = vmatprep.mubr.bf16.mxu0 0
  %1505 = vmatmul.mubr.bf16.gmra.mrb[0].mxu0 %v1223
  %v1506 = vpop.f32.mrb[0].mxu0
  %v1507 = vadd.f32 0.0, %v1506
  %v1508 = vpop.f32.mrb[0].mxu0
  %v1509 = vpop.f32.mrb[0].mxu0
  %v1510 = vadd.f32 0.0, %v1509
  %v1511 = vpop.f32.mrb[0].mxu0
  %1512 = vmatprep.mubr.bf16.mxu0 0
  %1513 = vmatmul.mubr.bf16.gmra.mrb[0].mxu0 %v1226
  %v1514 = vpop.f32.mrb[0].mxu0
  %v1515 = vadd.f32 0.0, %v1514
  %v1516 = vpop.f32.mrb[0].mxu0
  %v1517 = vpop.f32.mrb[0].mxu0
  %v1518 = vadd.f32 0.0, %v1517
  %v1519 = vpop.f32.mrb[0].mxu0
  %1520 = vdwg.mxu0
  %v1521 = vsel %vm1134, %v695, 0
  %v1523 = vsel %vm1134, %v696, 0
  %v1525 = vsel %vm1134, %v697, 0
  %v1527 = vsel %vm1134, %v698, 0
  %v1529 = vsel %vm1134, %v699, 0
  %v1531 = vsel %vm1134, %v700, 0
  %v1533 = vsel %vm1134, %v701, 0
  %v1535 = vsel %vm1134, %v702, 0
  %v1537 = vsel %vm1134, %v703, 0
  %v1539 = vsel %vm1134, %v704, 0
  %v1541 = vsel %vm1134, %v705, 0
  %v1543 = vsel %vm1134, %v706, 0
  %v1545 = vsel %vm1134, %v707, 0
  %v1547 = vsel %vm1134, %v708, 0
  %v1549 = vsel %vm1134, %v709, 0
  %v1551 = vsel %vm1134, %v710, 0
  %v1553 = vsel %vm1134, %v712, 0
  %v1555 = vsel %vm1134, %v713, 0
  %v1557 = vsel %vm1134, %v714, 0
  %v1559 = vsel %vm1134, %v715, 0
  %v1561 = vsel %vm1134, %v716, 0
  %v1563 = vsel %vm1134, %v717, 0
  %v1565 = vsel %vm1134, %v718, 0
  %v1567 = vsel %vm1134, %v719, 0
  %v1569 = vsel %vm1134, %v720, 0
  %v1571 = vsel %vm1134, %v721, 0
  %v1573 = vsel %vm1134, %v722, 0
  %v1575 = vsel %vm1134, %v723, 0
  %v1577 = vsel %vm1134, %v724, 0
  %v1579 = vsel %vm1134, %v725, 0
  %v1581 = vsel %vm1134, %v726, 0
  %v1584 = vsel %vm1228, %v386, 0
  %1586 = vmatprep.subr.bf16.mxu0 0
  %1587 = vmatpush1.bf16.msra.mxu0 %v1584
  %1588 = vmatprep.subr.bf16.mxu0 0
  %1589 = vmatpush1.bf16.msra.mxu0 0
  %1590 = vmatprep.subr.bf16.mxu0 0
  %1591 = vmatpush1.bf16.msra.mxu0 0
  %1592 = vmatprep.subr.bf16.mxu0 0
  %1593 = vmatpush1.bf16.msra.mxu0 0
  %1594 = vmatprep.subr.bf16.mxu0 0
  %1595 = vmatpush1.bf16.msra.mxu0 0
  %1596 = vmatprep.subr.bf16.mxu0 0
  %1597 = vmatpush1.bf16.msra.mxu0 0
  %1598 = vmatprep.subr.bf16.mxu0 0
  %1599 = vmatpush1.bf16.msra.mxu0 0
  %1600 = vmatprep.subr.bf16.mxu0 0
  %1601 = vmatpush1.bf16.msra.mxu0 0
  %1602 = vmatprep.subr.bf16.mxu0 0
  %1603 = vmatpush1.bf16.msra.mxu0 0
  %1604 = vmatprep.subr.bf16.mxu0 0
  %1605 = vmatpush1.bf16.msra.mxu0 0
  %1606 = vmatprep.subr.bf16.mxu0 0
  %1607 = vmatpush1.bf16.msra.mxu0 0
  %1608 = vmatprep.subr.bf16.mxu0 0
  %1609 = vmatpush1.bf16.msra.mxu0 0
  %1610 = vmatprep.subr.bf16.mxu0 0
  %1611 = vmatpush1.bf16.msra.mxu0 0
  %1612 = vmatprep.subr.bf16.mxu0 0
  %1613 = vmatpush1.bf16.msra.mxu0 0
  %1614 = vmatprep.subr.bf16.mxu0 0
  %1615 = vmatpush1.bf16.msra.mxu0 0
  %1616 = vmatprep.subr.bf16.mxu0 0
  %1617 = vmatpush1.bf16.msra.mxu0 0
  %1618 = vmatprep.mubr.bf16.mxu0 0
  %1619 = vmatmul.mubr.bf16.gmra.mrb[0].mxu0 %v1521
  %v1620 = vpop.f32.mrb[0].mxu0
  %v1621 = vadd.f32 %v1267, %v1620
  %v1622 = vpop.f32.mrb[0].mxu0
  %v1623 = vpop.f32.mrb[0].mxu0
  %v1624 = vadd.f32 %v1270, %v1623
  %v1625 = vpop.f32.mrb[0].mxu0
  %1626 = vmatprep.mubr.bf16.mxu0 0
  %1627 = vmatmul.mubr.bf16.gmra.mrb[0].mxu0 %v1523
  %v1628 = vpop.f32.mrb[0].mxu0
  %v1629 = vadd.f32 %v1275, %v1628
  %v1630 = vpop.f32.mrb[0].mxu0
  %v1631 = vpop.f32.mrb[0].mxu0
  %v1632 = vadd.f32 %v1278, %v1631
  %v1633 = vpop.f32.mrb[0].mxu0
  %1634 = vmatprep.mubr.bf16.mxu0 0
  %1635 = vmatmul.mubr.bf16.gmra.mrb[0].mxu0 %v1525
  %v1636 = vpop.f32.mrb[0].mxu0
  %v1637 = vadd.f32 %v1283, %v1636
  %v1638 = vpop.f32.mrb[0].mxu0
  %v1639 = vpop.f32.mrb[0].mxu0
  %v1640 = vadd.f32 %v1286, %v1639
  %v1641 = vpop.f32.mrb[0].mxu0
  %1642 = vmatprep.mubr.bf16.mxu0 0
  %1643 = vmatmul.mubr.bf16.gmra.mrb[0].mxu0 %v1527
  %v1644 = vpop.f32.mrb[0].mxu0
  %v1645 = vadd.f32 %v1291, %v1644
  %v1646 = vpop.f32.mrb[0].mxu0
  %v1647 = vpop.f32.mrb[0].mxu0
  %v1648 = vadd.f32 %v1294, %v1647
  %v1649 = vpop.f32.mrb[0].mxu0
  %1650 = vmatprep.mubr.bf16.mxu0 0
  %1651 = vmatmul.mubr.bf16.gmra.mrb[0].mxu0 %v1529
  %v1652 = vpop.f32.mrb[0].mxu0
  %v1653 = vadd.f32 %v1299, %v1652
  %v1654 = vpop.f32.mrb[0].mxu0
  %v1655 = vpop.f32.mrb[0].mxu0
  %v1656 = vadd.f32 %v1302, %v1655
  %v1657 = vpop.f32.mrb[0].mxu0
  %1658 = vmatprep.mubr.bf16.mxu0 0
  %1659 = vmatmul.mubr.bf16.gmra.mrb[0].mxu0 %v1531
  %v1660 = vpop.f32.mrb[0].mxu0
  %v1661 = vadd.f32 %v1307, %v1660
  %v1662 = vpop.f32.mrb[0].mxu0
  %v1663 = vpop.f32.mrb[0].mxu0
  %v1664 = vadd.f32 %v1310, %v1663
  %v1665 = vpop.f32.mrb[0].mxu0
  %1666 = vmatprep.mubr.bf16.mxu0 0
  %1667 = vmatmul.mubr.bf16.gmra.mrb[0].mxu0 %v1533
  %v1668 = vpop.f32.mrb[0].mxu0
  %v1669 = vadd.f32 %v1315, %v1668
  %v1670 = vpop.f32.mrb[0].mxu0
  %v1671 = vpop.f32.mrb[0].mxu0
  %v1672 = vadd.f32 %v1318, %v1671
  %v1673 = vpop.f32.mrb[0].mxu0
  %1674 = vmatprep.mubr.bf16.mxu0 0
  %1675 = vmatmul.mubr.bf16.gmra.mrb[0].mxu0 %v1535
  %v1676 = vpop.f32.mrb[0].mxu0
  %v1677 = vadd.f32 %v1323, %v1676
  %v1678 = vpop.f32.mrb[0].mxu0
  %v1679 = vpop.f32.mrb[0].mxu0
  %v1680 = vadd.f32 %v1326, %v1679
  %v1681 = vpop.f32.mrb[0].mxu0
  %1682 = vmatprep.mubr.bf16.mxu0 0
  %1683 = vmatmul.mubr.bf16.gmra.mrb[0].mxu0 %v1537
  %v1684 = vpop.f32.mrb[0].mxu0
  %v1685 = vadd.f32 %v1331, %v1684
  %v1686 = vpop.f32.mrb[0].mxu0
  %v1687 = vpop.f32.mrb[0].mxu0
  %v1688 = vadd.f32 %v1334, %v1687
  %v1689 = vpop.f32.mrb[0].mxu0
  %1690 = vmatprep.mubr.bf16.mxu0 0
  %1691 = vmatmul.mubr.bf16.gmra.mrb[0].mxu0 %v1539
  %v1692 = vpop.f32.mrb[0].mxu0
  %v1693 = vadd.f32 %v1339, %v1692
  %v1694 = vpop.f32.mrb[0].mxu0
  %v1695 = vpop.f32.mrb[0].mxu0
  %v1696 = vadd.f32 %v1342, %v1695
  %v1697 = vpop.f32.mrb[0].mxu0
  %1698 = vmatprep.mubr.bf16.mxu0 0
  %1699 = vmatmul.mubr.bf16.gmra.mrb[0].mxu0 %v1541
  %v1700 = vpop.f32.mrb[0].mxu0
  %v1701 = vadd.f32 %v1347, %v1700
  %v1702 = vpop.f32.mrb[0].mxu0
  %v1703 = vpop.f32.mrb[0].mxu0
  %v1704 = vadd.f32 %v1350, %v1703
  %v1705 = vpop.f32.mrb[0].mxu0
  %1706 = vmatprep.mubr.bf16.mxu0 0
  %1707 = vmatmul.mubr.bf16.gmra.mrb[0].mxu0 %v1543
  %v1708 = vpop.f32.mrb[0].mxu0
  %v1709 = vadd.f32 %v1355, %v1708
  %v1710 = vpop.f32.mrb[0].mxu0
  %v1711 = vpop.f32.mrb[0].mxu0
  %v1712 = vadd.f32 %v1358, %v1711
  %v1713 = vpop.f32.mrb[0].mxu0
  %1714 = vmatprep.mubr.bf16.mxu0 0
  %1715 = vmatmul.mubr.bf16.gmra.mrb[0].mxu0 %v1545
  %v1716 = vpop.f32.mrb[0].mxu0
  %v1717 = vadd.f32 %v1363, %v1716
  %v1718 = vpop.f32.mrb[0].mxu0
  %v1719 = vpop.f32.mrb[0].mxu0
  %v1720 = vadd.f32 %v1366, %v1719
  %v1721 = vpop.f32.mrb[0].mxu0
  %1722 = vmatprep.mubr.bf16.mxu0 0
  %1723 = vmatmul.mubr.bf16.gmra.mrb[0].mxu0 %v1547
  %v1724 = vpop.f32.mrb[0].mxu0
  %v1725 = vadd.f32 %v1371, %v1724
  %v1726 = vpop.f32.mrb[0].mxu0
  %v1727 = vpop.f32.mrb[0].mxu0
  %v1728 = vadd.f32 %v1374, %v1727
  %v1729 = vpop.f32.mrb[0].mxu0
  %1730 = vmatprep.mubr.bf16.mxu0 0
  %1731 = vmatmul.mubr.bf16.gmra.mrb[0].mxu0 %v1549
  %v1732 = vpop.f32.mrb[0].mxu0
  %v1733 = vadd.f32 %v1379, %v1732
  %v1734 = vpop.f32.mrb[0].mxu0
  %v1735 = vpop.f32.mrb[0].mxu0
  %v1736 = vadd.f32 %v1382, %v1735
  %v1737 = vpop.f32.mrb[0].mxu0
  %1738 = vmatprep.mubr.bf16.mxu0 0
  %1739 = vmatmul.mubr.bf16.gmra.mrb[0].mxu0 %v1551
  %v1740 = vpop.f32.mrb[0].mxu0
  %v1741 = vadd.f32 %v1387, %v1740
  %v1742 = vpop.f32.mrb[0].mxu0
  %v1743 = vpop.f32.mrb[0].mxu0
  %v1744 = vadd.f32 %v1390, %v1743
  %v1745 = vpop.f32.mrb[0].mxu0
  %1746 = vmatprep.mubr.bf16.mxu0 0
  %1747 = vmatmul.mubr.bf16.gmra.mrb[0].mxu0 %v1521
  %v1748 = vpop.f32.mrb[0].mxu0
  %v1749 = vadd.f32 %v1395, %v1748
  %v1750 = vpop.f32.mrb[0].mxu0
  %v1751 = vpop.f32.mrb[0].mxu0
  %v1752 = vadd.f32 %v1398, %v1751
  %v1753 = vpop.f32.mrb[0].mxu0
  %1754 = vmatprep.mubr.bf16.mxu0 0
  %1755 = vmatmul.mubr.bf16.gmra.mrb[0].mxu0 %v1553
  %v1756 = vpop.f32.mrb[0].mxu0
  %v1757 = vadd.f32 %v1403, %v1756
  %v1758 = vpop.f32.mrb[0].mxu0
  %v1759 = vpop.f32.mrb[0].mxu0
  %v1760 = vadd.f32 %v1406, %v1759
  %v1761 = vpop.f32.mrb[0].mxu0
  %1762 = vmatprep.mubr.bf16.mxu0 0
  %1763 = vmatmul.mubr.bf16.gmra.mrb[0].mxu0 %v1555
  %v1764 = vpop.f32.mrb[0].mxu0
  %v1765 = vadd.f32 %v1411, %v1764
  %v1766 = vpop.f32.mrb[0].mxu0
  %v1767 = vpop.f32.mrb[0].mxu0
  %v1768 = vadd.f32 %v1414, %v1767
  %v1769 = vpop.f32.mrb[0].mxu0
  %1770 = vmatprep.mubr.bf16.mxu0 0
  %1771 = vmatmul.mubr.bf16.gmra.mrb[0].mxu0 %v1557
  %v1772 = vpop.f32.mrb[0].mxu0
  %v1773 = vadd.f32 %v1419, %v1772
  %v1774 = vpop.f32.mrb[0].mxu0
  %v1775 = vpop.f32.mrb[0].mxu0
  %v1776 = vadd.f32 %v1422, %v1775
  %v1777 = vpop.f32.mrb[0].mxu0
  %1778 = vmatprep.mubr.bf16.mxu0 0
  %1779 = vmatmul.mubr.bf16.gmra.mrb[0].mxu0 %v1559
  %v1780 = vpop.f32.mrb[0].mxu0
  %v1781 = vadd.f32 %v1427, %v1780
  %v1782 = vpop.f32.mrb[0].mxu0
  %v1783 = vpop.f32.mrb[0].mxu0
  %v1784 = vadd.f32 %v1430, %v1783
  %v1785 = vpop.f32.mrb[0].mxu0
  %1786 = vmatprep.mubr.bf16.mxu0 0
  %1787 = vmatmul.mubr.bf16.gmra.mrb[0].mxu0 %v1561
  %v1788 = vpop.f32.mrb[0].mxu0
  %v1789 = vadd.f32 %v1435, %v1788
  %v1790 = vpop.f32.mrb[0].mxu0
  %v1791 = vpop.f32.mrb[0].mxu0
  %v1792 = vadd.f32 %v1438, %v1791
  %v1793 = vpop.f32.mrb[0].mxu0
  %1794 = vmatprep.mubr.bf16.mxu0 0
  %1795 = vmatmul.mubr.bf16.gmra.mrb[0].mxu0 %v1563
  %v1796 = vpop.f32.mrb[0].mxu0
  %v1797 = vadd.f32 %v1443, %v1796
  %v1798 = vpop.f32.mrb[0].mxu0
  %v1799 = vpop.f32.mrb[0].mxu0
  %v1800 = vadd.f32 %v1446, %v1799
  %v1801 = vpop.f32.mrb[0].mxu0
  %1802 = vmatprep.mubr.bf16.mxu0 0
  %1803 = vmatmul.mubr.bf16.gmra.mrb[0].mxu0 %v1565
  %v1804 = vpop.f32.mrb[0].mxu0
  %v1805 = vadd.f32 %v1451, %v1804
  %v1806 = vpop.f32.mrb[0].mxu0
  %v1807 = vpop.f32.mrb[0].mxu0
  %v1808 = vadd.f32 %v1454, %v1807
  %v1809 = vpop.f32.mrb[0].mxu0
  %1810 = vmatprep.mubr.bf16.mxu0 0
  %1811 = vmatmul.mubr.bf16.gmra.mrb[0].mxu0 %v1567
  %v1812 = vpop.f32.mrb[0].mxu0
  %v1813 = vadd.f32 %v1459, %v1812
  %v1814 = vpop.f32.mrb[0].mxu0
  %v1815 = vpop.f32.mrb[0].mxu0
  %v1816 = vadd.f32 %v1462, %v1815
  %v1817 = vpop.f32.mrb[0].mxu0
  %1818 = vmatprep.mubr.bf16.mxu0 0
  %1819 = vmatmul.mubr.bf16.gmra.mrb[0].mxu0 %v1569
  %v1820 = vpop.f32.mrb[0].mxu0
  %v1821 = vadd.f32 %v1467, %v1820
  %v1822 = vpop.f32.mrb[0].mxu0
  %v1823 = vpop.f32.mrb[0].mxu0
  %v1824 = vadd.f32 %v1470, %v1823
  %v1825 = vpop.f32.mrb[0].mxu0
  %1826 = vmatprep.mubr.bf16.mxu0 0
  %1827 = vmatmul.mubr.bf16.gmra.mrb[0].mxu0 %v1571
  %v1828 = vpop.f32.mrb[0].mxu0
  %v1829 = vadd.f32 %v1475, %v1828
  %v1830 = vpop.f32.mrb[0].mxu0
  %v1831 = vpop.f32.mrb[0].mxu0
  %v1832 = vadd.f32 %v1478, %v1831
  %v1833 = vpop.f32.mrb[0].mxu0
  %1834 = vmatprep.mubr.bf16.mxu0 0
  %1835 = vmatmul.mubr.bf16.gmra.mrb[0].mxu0 %v1573
  %v1836 = vpop.f32.mrb[0].mxu0
  %v1837 = vadd.f32 %v1483, %v1836
  %v1838 = vpop.f32.mrb[0].mxu0
  %v1839 = vpop.f32.mrb[0].mxu0
  %v1840 = vadd.f32 %v1486, %v1839
  %v1841 = vpop.f32.mrb[0].mxu0
  %1842 = vmatprep.mubr.bf16.mxu0 0
  %1843 = vmatmul.mubr.bf16.gmra.mrb[0].mxu0 %v1575
  %v1844 = vpop.f32.mrb[0].mxu0
  %v1845 = vadd.f32 %v1491, %v1844
  %v1846 = vpop.f32.mrb[0].mxu0
  %v1847 = vpop.f32.mrb[0].mxu0
  %v1848 = vadd.f32 %v1494, %v1847
  %v1849 = vpop.f32.mrb[0].mxu0
  %1850 = vmatprep.mubr.bf16.mxu0 0
  %1851 = vmatmul.mubr.bf16.gmra.mrb[0].mxu0 %v1577
  %v1852 = vpop.f32.mrb[0].mxu0
  %v1853 = vadd.f32 %v1499, %v1852
  %v1854 = vpop.f32.mrb[0].mxu0
  %v1855 = vpop.f32.mrb[0].mxu0
  %v1856 = vadd.f32 %v1502, %v1855
  %v1857 = vpop.f32.mrb[0].mxu0
  %1858 = vmatprep.mubr.bf16.mxu0 0
  %1859 = vmatmul.mubr.bf16.gmra.mrb[0].mxu0 %v1579
  %v1860 = vpop.f32.mrb[0].mxu0
  %v1861 = vadd.f32 %v1507, %v1860
  %v1862 = vpop.f32.mrb[0].mxu0
  %v1863 = vpop.f32.mrb[0].mxu0
  %v1864 = vadd.f32 %v1510, %v1863
  %v1865 = vpop.f32.mrb[0].mxu0
  %1866 = vmatprep.mubr.bf16.mxu0 0
  %1867 = vmatmul.mubr.bf16.gmra.mrb[0].mxu0 %v1581
  %v1868 = vpop.f32.mrb[0].mxu0
  %v1869 = vadd.f32 %v1515, %v1868
  %v1870 = vpop.f32.mrb[0].mxu0
  %v1871 = vpop.f32.mrb[0].mxu0
  %v1872 = vadd.f32 %v1518, %v1871
  %v1873 = vpop.f32.mrb[0].mxu0
  %1874 = vdwg.mxu0
  %vm1937 = vcmask 1046528
  %v1938 = vrot.slane %v695, 1
  %v1939 = vrot.slane %v728, 1
  %v1940 = vsel %vm1937, %v1938, %v1939
  %v1941 = vrot.slane %v696, 1
  %v1942 = vrot.slane %v729, 1
  %v1943 = vsel %vm1937, %v1941, %v1942
  %v1944 = vrot.slane %v697, 1
  %v1945 = vrot.slane %v730, 1
  %v1946 = vsel %vm1937, %v1944, %v1945
  %v1947 = vrot.slane %v698, 1
  %v1948 = vrot.slane %v731, 1
  %v1949 = vsel %vm1937, %v1947, %v1948
  %v1950 = vrot.slane %v699, 1
  %v1951 = vrot.slane %v732, 1
  %v1952 = vsel %vm1937, %v1950, %v1951
  %v1953 = vrot.slane %v700, 1
  %v1954 = vrot.slane %v733, 1
  %v1955 = vsel %vm1937, %v1953, %v1954
  %v1956 = vrot.slane %v701, 1
  %v1957 = vrot.slane %v734, 1
  %v1958 = vsel %vm1937, %v1956, %v1957
  %v1959 = vrot.slane %v702, 1
  %v1960 = vrot.slane %v735, 1
  %v1961 = vsel %vm1937, %v1959, %v1960
  %v1962 = vrot.slane %v703, 1
  %v1963 = vrot.slane %v736, 1
  %v1964 = vsel %vm1937, %v1962, %v1963
  %v1965 = vrot.slane %v704, 1
  %v1966 = vrot.slane %v737, 1
  %v1967 = vsel %vm1937, %v1965, %v1966
  %v1968 = vrot.slane %v705, 1
  %v1969 = vrot.slane %v738, 1
  %v1970 = vsel %vm1937, %v1968, %v1969
  %v1971 = vrot.slane %v706, 1
  %v1972 = vrot.slane %v739, 1
  %v1973 = vsel %vm1937, %v1971, %v1972
  %v1974 = vrot.slane %v707, 1
  %v1975 = vrot.slane %v740, 1
  %v1976 = vsel %vm1937, %v1974, %v1975
  %v1977 = vrot.slane %v708, 1
  %v1978 = vrot.slane %v741, 1
  %v1979 = vsel %vm1937, %v1977, %v1978
  %v1980 = vrot.slane %v709, 1
  %v1981 = vrot.slane %v742, 1
  %v1982 = vsel %vm1937, %v1980, %v1981
  %v1983 = vrot.slane %v710, 1
  %v1984 = vrot.slane %v743, 1
  %v1985 = vsel %vm1937, %v1983, %v1984
  %v1986 = vrot.slane %v712, 1
  %v1987 = vrot.slane %v745, 1
  %v1988 = vsel %vm1937, %v1986, %v1987
  %v1989 = vrot.slane %v713, 1
  %v1990 = vrot.slane %v746, 1
  %v1991 = vsel %vm1937, %v1989, %v1990
  %v1992 = vrot.slane %v714, 1
  %v1993 = vrot.slane %v747, 1
  %v1994 = vsel %vm1937, %v1992, %v1993
  %v1995 = vrot.slane %v715, 1
  %v1996 = vrot.slane %v748, 1
  %v1997 = vsel %vm1937, %v1995, %v1996
  %v1998 = vrot.slane %v716, 1
  %v1999 = vrot.slane %v749, 1
  %v2000 = vsel %vm1937, %v1998, %v1999
  %v2001 = vrot.slane %v717, 1
  %v2002 = vrot.slane %v750, 1
  %v2003 = vsel %vm1937, %v2001, %v2002
  %v2004 = vrot.slane %v718, 1
  %v2005 = vrot.slane %v751, 1
  %v2006 = vsel %vm1937, %v2004, %v2005
  %v2007 = vrot.slane %v719, 1
  %v2008 = vrot.slane %v752, 1
  %v2009 = vsel %vm1937, %v2007, %v2008
  %v2010 = vrot.slane %v720, 1
  %v2011 = vrot.slane %v753, 1
  %v2012 = vsel %vm1937, %v2010, %v2011
  %v2013 = vrot.slane %v721, 1
  %v2014 = vrot.slane %v754, 1
  %v2015 = vsel %vm1937, %v2013, %v2014
  %v2016 = vrot.slane %v722, 1
  %v2017 = vrot.slane %v755, 1
  %v2018 = vsel %vm1937, %v2016, %v2017
  %v2019 = vrot.slane %v723, 1
  %v2020 = vrot.slane %v756, 1
  %v2021 = vsel %vm1937, %v2019, %v2020
  %v2022 = vrot.slane %v724, 1
  %v2023 = vrot.slane %v757, 1
  %v2024 = vsel %vm1937, %v2022, %v2023
  %v2025 = vrot.slane %v725, 1
  %v2026 = vrot.slane %v758, 1
  %v2027 = vsel %vm1937, %v2025, %v2026
  %v2028 = vrot.slane %v726, 1
  %v2029 = vrot.slane %v759, 1
  %v2030 = vsel %vm1937, %v2028, %v2029
  %v2032 = vsel %vm1134, %v1940, 0
  %v2035 = vsel %vm1134, %v1943, 0
  %v2038 = vsel %vm1134, %v1946, 0
  %v2041 = vsel %vm1134, %v1949, 0
  %v2044 = vsel %vm1134, %v1952, 0
  %v2047 = vsel %vm1134, %v1955, 0
  %v2050 = vsel %vm1134, %v1958, 0
  %v2053 = vsel %vm1134, %v1961, 0
  %v2056 = vsel %vm1134, %v1964, 0
  %v2059 = vsel %vm1134, %v1967, 0
  %v2062 = vsel %vm1134, %v1970, 0
  %v2065 = vsel %vm1134, %v1973, 0
  %v2068 = vsel %vm1134, %v1976, 0
  %v2071 = vsel %vm1134, %v1979, 0
  %v2074 = vsel %vm1134, %v1982, 0
  %v2077 = vsel %vm1134, %v1985, 0
  %v2080 = vsel %vm1134, %v1988, 0
  %v2083 = vsel %vm1134, %v1991, 0
  %v2086 = vsel %vm1134, %v1994, 0
  %v2089 = vsel %vm1134, %v1997, 0
  %v2092 = vsel %vm1134, %v2000, 0
  %v2095 = vsel %vm1134, %v2003, 0
  %v2098 = vsel %vm1134, %v2006, 0
  %v2101 = vsel %vm1134, %v2009, 0
  %v2104 = vsel %vm1134, %v2012, 0
  %v2107 = vsel %vm1134, %v2015, 0
  %v2110 = vsel %vm1134, %v2018, 0
  %v2113 = vsel %vm1134, %v2021, 0
  %v2116 = vsel %vm1134, %v2024, 0
  %v2119 = vsel %vm1134, %v2027, 0
  %v2122 = vsel %vm1134, %v2030, 0
  %v2125 = vsel %vm1228, %v388, 0
  %2127 = vmatprep.subr.bf16.mxu0 0
  %2128 = vmatpush1.bf16.msra.mxu0 %v2125
  %2129 = vmatprep.subr.bf16.mxu0 0
  %2130 = vmatpush1.bf16.msra.mxu0 0
  %2131 = vmatprep.subr.bf16.mxu0 0
  %2132 = vmatpush1.bf16.msra.mxu0 0
  %2133 = vmatprep.subr.bf16.mxu0 0
  %2134 = vmatpush1.bf16.msra.mxu0 0
  %2135 = vmatprep.subr.bf16.mxu0 0
  %2136 = vmatpush1.bf16.msra.mxu0 0
  %2137 = vmatprep.subr.bf16.mxu0 0
  %2138 = vmatpush1.bf16.msra.mxu0 0
  %2139 = vmatprep.subr.bf16.mxu0 0
  %2140 = vmatpush1.bf16.msra.mxu0 0
  %2141 = vmatprep.subr.bf16.mxu0 0
  %2142 = vmatpush1.bf16.msra.mxu0 0
  %2143 = vmatprep.subr.bf16.mxu0 0
  %2144 = vmatpush1.bf16.msra.mxu0 0
  %2145 = vmatprep.subr.bf16.mxu0 0
  %2146 = vmatpush1.bf16.msra.mxu0 0
  %2147 = vmatprep.subr.bf16.mxu0 0
  %2148 = vmatpush1.bf16.msra.mxu0 0
  %2149 = vmatprep.subr.bf16.mxu0 0
  %2150 = vmatpush1.bf16.msra.mxu0 0
  %2151 = vmatprep.subr.bf16.mxu0 0
  %2152 = vmatpush1.bf16.msra.mxu0 0
  %2153 = vmatprep.subr.bf16.mxu0 0
  %2154 = vmatpush1.bf16.msra.mxu0 0
  %2155 = vmatprep.subr.bf16.mxu0 0
  %2156 = vmatpush1.bf16.msra.mxu0 0
  %2157 = vmatprep.subr.bf16.mxu0 0
  %2158 = vmatpush1.bf16.msra.mxu0 0
  %2159 = vmatprep.mubr.bf16.mxu0 0
  %2160 = vmatmul.mubr.bf16.gmra.mrb[0].mxu0 %v2032
  %v2161 = vpop.f32.mrb[0].mxu0
  %v2162 = vadd.f32 0.0, %v2161
  %v2163 = vpop.f32.mrb[0].mxu0
  %v2164 = vpop.f32.mrb[0].mxu0
  %v2165 = vadd.f32 0.0, %v2164
  %v2166 = vpop.f32.mrb[0].mxu0
  %2167 = vmatprep.mubr.bf16.mxu0 0
  %2168 = vmatmul.mubr.bf16.gmra.mrb[0].mxu0 %v2035
  %v2169 = vpop.f32.mrb[0].mxu0
  %v2170 = vadd.f32 0.0, %v2169
  %v2171 = vpop.f32.mrb[0].mxu0
  %v2172 = vpop.f32.mrb[0].mxu0
  %v2173 = vadd.f32 0.0, %v2172
  %v2174 = vpop.f32.mrb[0].mxu0
  %2175 = vmatprep.mubr.bf16.mxu0 0
  %2176 = vmatmul.mubr.bf16.gmra.mrb[0].mxu0 %v2038
  %v2177 = vpop.f32.mrb[0].mxu0
  %v2178 = vadd.f32 0.0, %v2177
  %v2179 = vpop.f32.mrb[0].mxu0
  %v2180 = vpop.f32.mrb[0].mxu0
  %v2181 = vadd.f32 0.0, %v2180
  %v2182 = vpop.f32.mrb[0].mxu0
  %2183 = vmatprep.mubr.bf16.mxu0 0
  %2184 = vmatmul.mubr.bf16.gmra.mrb[0].mxu0 %v2041
  %v2185 = vpop.f32.mrb[0].mxu0
  %v2186 = vadd.f32 0.0, %v2185
  %v2187 = vpop.f32.mrb[0].mxu0
  %v2188 = vpop.f32.mrb[0].mxu0
  %v2189 = vadd.f32 0.0, %v2188
  %v2190 = vpop.f32.mrb[0].mxu0
  %2191 = vmatprep.mubr.bf16.mxu0 0
  %2192 = vmatmul.mubr.bf16.gmra.mrb[0].mxu0 %v2044
  %v2193 = vpop.f32.mrb[0].mxu0
  %v2194 = vadd.f32 0.0, %v2193
  %v2195 = vpop.f32.mrb[0].mxu0
  %v2196 = vpop.f32.mrb[0].mxu0
  %v2197 = vadd.f32 0.0, %v2196
  %v2198 = vpop.f32.mrb[0].mxu0
  %2199 = vmatprep.mubr.bf16.mxu0 0
  %2200 = vmatmul.mubr.bf16.gmra.mrb[0].mxu0 %v2047
  %v2201 = vpop.f32.mrb[0].mxu0
  %v2202 = vadd.f32 0.0, %v2201
  %v2203 = vpop.f32.mrb[0].mxu0
  %v2204 = vpop.f32.mrb[0].mxu0
  %v2205 = vadd.f32 0.0, %v2204
  %v2206 = vpop.f32.mrb[0].mxu0
  %2207 = vmatprep.mubr.bf16.mxu0 0
  %2208 = vmatmul.mubr.bf16.gmra.mrb[0].mxu0 %v2050
  %v2209 = vpop.f32.mrb[0].mxu0
  %v2210 = vadd.f32 0.0, %v2209
  %v2211 = vpop.f32.mrb[0].mxu0
  %v2212 = vpop.f32.mrb[0].mxu0
  %v2213 = vadd.f32 0.0, %v2212
  %v2214 = vpop.f32.mrb[0].mxu0
  %2215 = vmatprep.mubr.bf16.mxu0 0
  %2216 = vmatmul.mubr.bf16.gmra.mrb[0].mxu0 %v2053
  %v2217 = vpop.f32.mrb[0].mxu0
  %v2218 = vadd.f32 0.0, %v2217
  %v2219 = vpop.f32.mrb[0].mxu0
  %v2220 = vpop.f32.mrb[0].mxu0
  %v2221 = vadd.f32 0.0, %v2220
  %v2222 = vpop.f32.mrb[0].mxu0
  %2223 = vmatprep.mubr.bf16.mxu0 0
  %2224 = vmatmul.mubr.bf16.gmra.mrb[0].mxu0 %v2056
  %v2225 = vpop.f32.mrb[0].mxu0
  %v2226 = vadd.f32 0.0, %v2225
  %v2227 = vpop.f32.mrb[0].mxu0
  %v2228 = vpop.f32.mrb[0].mxu0
  %v2229 = vadd.f32 0.0, %v2228
  %v2230 = vpop.f32.mrb[0].mxu0
  %2231 = vmatprep.mubr.bf16.mxu0 0
  %2232 = vmatmul.mubr.bf16.gmra.mrb[0].mxu0 %v2059
  %v2233 = vpop.f32.mrb[0].mxu0
  %v2234 = vadd.f32 0.0, %v2233
  %v2235 = vpop.f32.mrb[0].mxu0
  %v2236 = vpop.f32.mrb[0].mxu0
  %v2237 = vadd.f32 0.0, %v2236
  %v2238 = vpop.f32.mrb[0].mxu0
  %2239 = vmatprep.mubr.bf16.mxu0 0
  %2240 = vmatmul.mubr.bf16.gmra.mrb[0].mxu0 %v2062
  %v2241 = vpop.f32.mrb[0].mxu0
  %v2242 = vadd.f32 0.0, %v2241
  %v2243 = vpop.f32.mrb[0].mxu0
  %v2244 = vpop.f32.mrb[0].mxu0
  %v2245 = vadd.f32 0.0, %v2244
  %v2246 = vpop.f32.mrb[0].mxu0
  %2247 = vmatprep.mubr.bf16.mxu0 0
  %2248 = vmatmul.mubr.bf16.gmra.mrb[0].mxu0 %v2065
  %v2249 = vpop.f32.mrb[0].mxu0
  %v2250 = vadd.f32 0.0, %v2249
  %v2251 = vpop.f32.mrb[0].mxu0
  %v2252 = vpop.f32.mrb[0].mxu0
  %v2253 = vadd.f32 0.0, %v2252
  %v2254 = vpop.f32.mrb[0].mxu0
  %2255 = vmatprep.mubr.bf16.mxu0 0
  %2256 = vmatmul.mubr.bf16.gmra.mrb[0].mxu0 %v2068
  %v2257 = vpop.f32.mrb[0].mxu0
  %v2258 = vadd.f32 0.0, %v2257
  %v2259 = vpop.f32.mrb[0].mxu0
  %v2260 = vpop.f32.mrb[0].mxu0
  %v2261 = vadd.f32 0.0, %v2260
  %v2262 = vpop.f32.mrb[0].mxu0
  %2263 = vmatprep.mubr.bf16.mxu0 0
  %2264 = vmatmul.mubr.bf16.gmra.mrb[0].mxu0 %v2071
  %v2265 = vpop.f32.mrb[0].mxu0
  %v2266 = vadd.f32 0.0, %v2265
  %v2267 = vpop.f32.mrb[0].mxu0
  %v2268 = vpop.f32.mrb[0].mxu0
  %v2269 = vadd.f32 0.0, %v2268
  %v2270 = vpop.f32.mrb[0].mxu0
  %2271 = vmatprep.mubr.bf16.mxu0 0
  %2272 = vmatmul.mubr.bf16.gmra.mrb[0].mxu0 %v2074
  %v2273 = vpop.f32.mrb[0].mxu0
  %v2274 = vadd.f32 0.0, %v2273
  %v2275 = vpop.f32.mrb[0].mxu0
  %v2276 = vpop.f32.mrb[0].mxu0
  %v2277 = vadd.f32 0.0, %v2276
  %v2278 = vpop.f32.mrb[0].mxu0
  %2279 = vmatprep.mubr.bf16.mxu0 0
  %2280 = vmatmul.mubr.bf16.gmra.mrb[0].mxu0 %v2077
  %v2281 = vpop.f32.mrb[0].mxu0
  %v2282 = vadd.f32 0.0, %v2281
  %v2283 = vpop.f32.mrb[0].mxu0
  %v2284 = vpop.f32.mrb[0].mxu0
  %v2285 = vadd.f32 0.0, %v2284
  %v2286 = vpop.f32.mrb[0].mxu0
  %2287 = vmatprep.mubr.bf16.mxu0 0
  %2288 = vmatmul.mubr.bf16.gmra.mrb[0].mxu0 %v2032
  %v2289 = vpop.f32.mrb[0].mxu0
  %v2290 = vadd.f32 0.0, %v2289
  %v2291 = vpop.f32.mrb[0].mxu0
  %v2292 = vpop.f32.mrb[0].mxu0
  %v2293 = vadd.f32 0.0, %v2292
  %v2294 = vpop.f32.mrb[0].mxu0
  %2295 = vmatprep.mubr.bf16.mxu0 0
  %2296 = vmatmul.mubr.bf16.gmra.mrb[0].mxu0 %v2080
  %v2297 = vpop.f32.mrb[0].mxu0
  %v2298 = vadd.f32 0.0, %v2297
  %v2299 = vpop.f32.mrb[0].mxu0
  %v2300 = vpop.f32.mrb[0].mxu0
  %v2301 = vadd.f32 0.0, %v2300
  %v2302 = vpop.f32.mrb[0].mxu0
  %2303 = vmatprep.mubr.bf16.mxu0 0
  %2304 = vmatmul.mubr.bf16.gmra.mrb[0].mxu0 %v2083
  %v2305 = vpop.f32.mrb[0].mxu0
  %v2306 = vadd.f32 0.0, %v2305
  %v2307 = vpop.f32.mrb[0].mxu0
  %v2308 = vpop.f32.mrb[0].mxu0
  %v2309 = vadd.f32 0.0, %v2308
  %v2310 = vpop.f32.mrb[0].mxu0
  %2311 = vmatprep.mubr.bf16.mxu0 0
  %2312 = vmatmul.mubr.bf16.gmra.mrb[0].mxu0 %v2086
  %v2313 = vpop.f32.mrb[0].mxu0
  %v2314 = vadd.f32 0.0, %v2313
  %v2315 = vpop.f32.mrb[0].mxu0
  %v2316 = vpop.f32.mrb[0].mxu0
  %v2317 = vadd.f32 0.0, %v2316
  %v2318 = vpop.f32.mrb[0].mxu0
  %2319 = vmatprep.mubr.bf16.mxu0 0
  %2320 = vmatmul.mubr.bf16.gmra.mrb[0].mxu0 %v2089
  %v2321 = vpop.f32.mrb[0].mxu0
  %v2322 = vadd.f32 0.0, %v2321
  %v2323 = vpop.f32.mrb[0].mxu0
  %v2324 = vpop.f32.mrb[0].mxu0
  %v2325 = vadd.f32 0.0, %v2324
  %v2326 = vpop.f32.mrb[0].mxu0
  %2327 = vmatprep.mubr.bf16.mxu0 0
  %2328 = vmatmul.mubr.bf16.gmra.mrb[0].mxu0 %v2092
  %v2329 = vpop.f32.mrb[0].mxu0
  %v2330 = vadd.f32 0.0, %v2329
  %v2331 = vpop.f32.mrb[0].mxu0
  %v2332 = vpop.f32.mrb[0].mxu0
  %v2333 = vadd.f32 0.0, %v2332
  %v2334 = vpop.f32.mrb[0].mxu0
  %2335 = vmatprep.mubr.bf16.mxu0 0
  %2336 = vmatmul.mubr.bf16.gmra.mrb[0].mxu0 %v2095
  %v2337 = vpop.f32.mrb[0].mxu0
  %v2338 = vadd.f32 0.0, %v2337
  %v2339 = vpop.f32.mrb[0].mxu0
  %v2340 = vpop.f32.mrb[0].mxu0
  %v2341 = vadd.f32 0.0, %v2340
  %v2342 = vpop.f32.mrb[0].mxu0
  %2343 = vmatprep.mubr.bf16.mxu0 0
  %2344 = vmatmul.mubr.bf16.gmra.mrb[0].mxu0 %v2098
  %v2345 = vpop.f32.mrb[0].mxu0
  %v2346 = vadd.f32 0.0, %v2345
  %v2347 = vpop.f32.mrb[0].mxu0
  %v2348 = vpop.f32.mrb[0].mxu0
  %v2349 = vadd.f32 0.0, %v2348
  %v2350 = vpop.f32.mrb[0].mxu0
  %2351 = vmatprep.mubr.bf16.mxu0 0
  %2352 = vmatmul.mubr.bf16.gmra.mrb[0].mxu0 %v2101
  %v2353 = vpop.f32.mrb[0].mxu0
  %v2354 = vadd.f32 0.0, %v2353
  %v2355 = vpop.f32.mrb[0].mxu0
  %v2356 = vpop.f32.mrb[0].mxu0
  %v2357 = vadd.f32 0.0, %v2356
  %v2358 = vpop.f32.mrb[0].mxu0
  %2359 = vmatprep.mubr.bf16.mxu0 0
  %2360 = vmatmul.mubr.bf16.gmra.mrb[0].mxu0 %v2104
  %v2361 = vpop.f32.mrb[0].mxu0
  %v2362 = vadd.f32 0.0, %v2361
  %v2363 = vpop.f32.mrb[0].mxu0
  %v2364 = vpop.f32.mrb[0].mxu0
  %v2365 = vadd.f32 0.0, %v2364
  %v2366 = vpop.f32.mrb[0].mxu0
  %2367 = vmatprep.mubr.bf16.mxu0 0
  %2368 = vmatmul.mubr.bf16.gmra.mrb[0].mxu0 %v2107
  %v2369 = vpop.f32.mrb[0].mxu0
  %v2370 = vadd.f32 0.0, %v2369
  %v2371 = vpop.f32.mrb[0].mxu0
  %v2372 = vpop.f32.mrb[0].mxu0
  %v2373 = vadd.f32 0.0, %v2372
  %v2374 = vpop.f32.mrb[0].mxu0
  %2375 = vmatprep.mubr.bf16.mxu0 0
  %2376 = vmatmul.mubr.bf16.gmra.mrb[0].mxu0 %v2110
  %v2377 = vpop.f32.mrb[0].mxu0
  %v2378 = vadd.f32 0.0, %v2377
  %v2379 = vpop.f32.mrb[0].mxu0
  %v2380 = vpop.f32.mrb[0].mxu0
  %v2381 = vadd.f32 0.0, %v2380
  %v2382 = vpop.f32.mrb[0].mxu0
  %2383 = vmatprep.mubr.bf16.mxu0 0
  %2384 = vmatmul.mubr.bf16.gmra.mrb[0].mxu0 %v2113
  %v2385 = vpop.f32.mrb[0].mxu0
  %v2386 = vadd.f32 0.0, %v2385
  %v2387 = vpop.f32.mrb[0].mxu0
  %v2388 = vpop.f32.mrb[0].mxu0
  %v2389 = vadd.f32 0.0, %v2388
  %v2390 = vpop.f32.mrb[0].mxu0
  %2391 = vmatprep.mubr.bf16.mxu0 0
  %2392 = vmatmul.mubr.bf16.gmra.mrb[0].mxu0 %v2116
  %v2393 = vpop.f32.mrb[0].mxu0
  %v2394 = vadd.f32 0.0, %v2393
  %v2395 = vpop.f32.mrb[0].mxu0
  %v2396 = vpop.f32.mrb[0].mxu0
  %v2397 = vadd.f32 0.0, %v2396
  %v2398 = vpop.f32.mrb[0].mxu0
  %2399 = vmatprep.mubr.bf16.mxu0 0
  %2400 = vmatmul.mubr.bf16.gmra.mrb[0].mxu0 %v2119
  %v2401 = vpop.f32.mrb[0].mxu0
  %v2402 = vadd.f32 0.0, %v2401
  %v2403 = vpop.f32.mrb[0].mxu0
  %v2404 = vpop.f32.mrb[0].mxu0
  %v2405 = vadd.f32 0.0, %v2404
  %v2406 = vpop.f32.mrb[0].mxu0
  %2407 = vmatprep.mubr.bf16.mxu0 0
  %2408 = vmatmul.mubr.bf16.gmra.mrb[0].mxu0 %v2122
  %v2409 = vpop.f32.mrb[0].mxu0
  %v2410 = vadd.f32 0.0, %v2409
  %v2411 = vpop.f32.mrb[0].mxu0
  %v2412 = vpop.f32.mrb[0].mxu0
  %v2413 = vadd.f32 0.0, %v2412
  %v2414 = vpop.f32.mrb[0].mxu0
  %2415 = vdwg.mxu0
  %v2416 = vadd.f32 %v1621, %v2162
  %v2417 = vadd.f32 %v1624, %v2165
  %v2418 = vadd.f32 %v1629, %v2170
  %v2419 = vadd.f32 %v1632, %v2173
  %v2420 = vadd.f32 %v1637, %v2178
  %v2421 = vadd.f32 %v1640, %v2181
  %v2422 = vadd.f32 %v1645, %v2186
  %v2423 = vadd.f32 %v1648, %v2189
  %v2424 = vadd.f32 %v1653, %v2194
  %v2425 = vadd.f32 %v1656, %v2197
  %v2426 = vadd.f32 %v1661, %v2202
  %v2427 = vadd.f32 %v1664, %v2205
  %v2428 = vadd.f32 %v1669, %v2210
  %v2429 = vadd.f32 %v1672, %v2213
  %v2430 = vadd.f32 %v1677, %v2218
  %v2431 = vadd.f32 %v1680, %v2221
  %v2432 = vadd.f32 %v1685, %v2226
  %v2433 = vadd.f32 %v1688, %v2229
  %v2434 = vadd.f32 %v1693, %v2234
  %v2435 = vadd.f32 %v1696, %v2237
  %v2436 = vadd.f32 %v1701, %v2242
  %v2437 = vadd.f32 %v1704, %v2245
  %v2438 = vadd.f32 %v1709, %v2250
  %v2439 = vadd.f32 %v1712, %v2253
  %v2440 = vadd.f32 %v1717, %v2258
  %v2441 = vadd.f32 %v1720, %v2261
  %v2442 = vadd.f32 %v1725, %v2266
  %v2443 = vadd.f32 %v1728, %v2269
  %v2444 = vadd.f32 %v1733, %v2274
  %v2445 = vadd.f32 %v1736, %v2277
  %v2446 = vadd.f32 %v1741, %v2282
  %v2447 = vadd.f32 %v1744, %v2285
  %v2448 = vadd.f32 %v1749, %v2290
  %v2449 = vadd.f32 %v1752, %v2293
  %v2450 = vadd.f32 %v1757, %v2298
  %v2451 = vadd.f32 %v1760, %v2301
  %v2452 = vadd.f32 %v1765, %v2306
  %v2453 = vadd.f32 %v1768, %v2309
  %v2454 = vadd.f32 %v1773, %v2314
  %v2455 = vadd.f32 %v1776, %v2317
  %v2456 = vadd.f32 %v1781, %v2322
  %v2457 = vadd.f32 %v1784, %v2325
  %v2458 = vadd.f32 %v1789, %v2330
  %v2459 = vadd.f32 %v1792, %v2333
  %v2460 = vadd.f32 %v1797, %v2338
  %v2461 = vadd.f32 %v1800, %v2341
  %v2462 = vadd.f32 %v1805, %v2346
  %v2463 = vadd.f32 %v1808, %v2349
  %v2464 = vadd.f32 %v1813, %v2354
  %v2465 = vadd.f32 %v1816, %v2357
  %v2466 = vadd.f32 %v1821, %v2362
  %v2467 = vadd.f32 %v1824, %v2365
  %v2468 = vadd.f32 %v1829, %v2370
  %v2469 = vadd.f32 %v1832, %v2373
  %v2470 = vadd.f32 %v1837, %v2378
  %v2471 = vadd.f32 %v1840, %v2381
  %v2472 = vadd.f32 %v1845, %v2386
  %v2473 = vadd.f32 %v1848, %v2389
  %v2474 = vadd.f32 %v1853, %v2394
  %v2475 = vadd.f32 %v1856, %v2397
  %v2476 = vadd.f32 %v1861, %v2402
  %v2477 = vadd.f32 %v1864, %v2405
  %v2478 = vadd.f32 %v1869, %v2410
  %v2479 = vadd.f32 %v1872, %v2413
  %v2481 = vsel %vm1134, %v711, 0
  %v2484 = vsel %vm1134, %v727, 0
  %v2487 = vsel %vm1228, %v389, 0
  %2489 = vmatprep.subr.bf16.mxu0 0
  %2490 = vmatpush1.bf16.msra.mxu0 %v2487
  %2491 = vmatprep.subr.bf16.mxu0 0
  %2492 = vmatpush1.bf16.msra.mxu0 0
  %2493 = vmatprep.subr.bf16.mxu0 0
  %2494 = vmatpush1.bf16.msra.mxu0 0
  %2495 = vmatprep.subr.bf16.mxu0 0
  %2496 = vmatpush1.bf16.msra.mxu0 0
  %2497 = vmatprep.subr.bf16.mxu0 0
  %2498 = vmatpush1.bf16.msra.mxu0 0
  %2499 = vmatprep.subr.bf16.mxu0 0
  %2500 = vmatpush1.bf16.msra.mxu0 0
  %2501 = vmatprep.subr.bf16.mxu0 0
  %2502 = vmatpush1.bf16.msra.mxu0 0
  %2503 = vmatprep.subr.bf16.mxu0 0
  %2504 = vmatpush1.bf16.msra.mxu0 0
  %2505 = vmatprep.subr.bf16.mxu0 0
  %2506 = vmatpush1.bf16.msra.mxu0 0
  %2507 = vmatprep.subr.bf16.mxu0 0
  %2508 = vmatpush1.bf16.msra.mxu0 0
  %2509 = vmatprep.subr.bf16.mxu0 0
  %2510 = vmatpush1.bf16.msra.mxu0 0
  %2511 = vmatprep.subr.bf16.mxu0 0
  %2512 = vmatpush1.bf16.msra.mxu0 0
  %2513 = vmatprep.subr.bf16.mxu0 0
  %2514 = vmatpush1.bf16.msra.mxu0 0
  %2515 = vmatprep.subr.bf16.mxu0 0
  %2516 = vmatpush1.bf16.msra.mxu0 0
  %2517 = vmatprep.subr.bf16.mxu0 0
  %2518 = vmatpush1.bf16.msra.mxu0 0
  %2519 = vmatprep.subr.bf16.mxu0 0
  %2520 = vmatpush1.bf16.msra.mxu0 0
  %2521 = vmatprep.mubr.bf16.mxu0 0
  %2522 = vmatmul.mubr.bf16.gmra.mrb[0].mxu0 %v1523
  %v2523 = vpop.f32.mrb[0].mxu0
  %v2524 = vadd.f32 0.0, %v2523
  %v2525 = vpop.f32.mrb[0].mxu0
  %v2526 = vpop.f32.mrb[0].mxu0
  %v2527 = vadd.f32 0.0, %v2526
  %v2528 = vpop.f32.mrb[0].mxu0
  %2529 = vmatprep.mubr.bf16.mxu0 0
  %2530 = vmatmul.mubr.bf16.gmra.mrb[0].mxu0 %v1525
  %v2531 = vpop.f32.mrb[0].mxu0
  %v2532 = vadd.f32 0.0, %v2531
  %v2533 = vpop.f32.mrb[0].mxu0
  %v2534 = vpop.f32.mrb[0].mxu0
  %v2535 = vadd.f32 0.0, %v2534
  %v2536 = vpop.f32.mrb[0].mxu0
  %2537 = vmatprep.mubr.bf16.mxu0 0
  %2538 = vmatmul.mubr.bf16.gmra.mrb[0].mxu0 %v1527
  %v2539 = vpop.f32.mrb[0].mxu0
  %v2540 = vadd.f32 0.0, %v2539
  %v2541 = vpop.f32.mrb[0].mxu0
  %v2542 = vpop.f32.mrb[0].mxu0
  %v2543 = vadd.f32 0.0, %v2542
  %v2544 = vpop.f32.mrb[0].mxu0
  %2545 = vmatprep.mubr.bf16.mxu0 0
  %2546 = vmatmul.mubr.bf16.gmra.mrb[0].mxu0 %v1529
  %v2547 = vpop.f32.mrb[0].mxu0
  %v2548 = vadd.f32 0.0, %v2547
  %v2549 = vpop.f32.mrb[0].mxu0
  %v2550 = vpop.f32.mrb[0].mxu0
  %v2551 = vadd.f32 0.0, %v2550
  %v2552 = vpop.f32.mrb[0].mxu0
  %2553 = vmatprep.mubr.bf16.mxu0 0
  %2554 = vmatmul.mubr.bf16.gmra.mrb[0].mxu0 %v1531
  %v2555 = vpop.f32.mrb[0].mxu0
  %v2556 = vadd.f32 0.0, %v2555
  %v2557 = vpop.f32.mrb[0].mxu0
  %v2558 = vpop.f32.mrb[0].mxu0
  %v2559 = vadd.f32 0.0, %v2558
  %v2560 = vpop.f32.mrb[0].mxu0
  %2561 = vmatprep.mubr.bf16.mxu0 0
  %2562 = vmatmul.mubr.bf16.gmra.mrb[0].mxu0 %v1533
  %v2563 = vpop.f32.mrb[0].mxu0
  %v2564 = vadd.f32 0.0, %v2563
  %v2565 = vpop.f32.mrb[0].mxu0
  %v2566 = vpop.f32.mrb[0].mxu0
  %v2567 = vadd.f32 0.0, %v2566
  %v2568 = vpop.f32.mrb[0].mxu0
  %2569 = vmatprep.mubr.bf16.mxu0 0
  %2570 = vmatmul.mubr.bf16.gmra.mrb[0].mxu0 %v1535
  %v2571 = vpop.f32.mrb[0].mxu0
  %v2572 = vadd.f32 0.0, %v2571
  %v2573 = vpop.f32.mrb[0].mxu0
  %v2574 = vpop.f32.mrb[0].mxu0
  %v2575 = vadd.f32 0.0, %v2574
  %v2576 = vpop.f32.mrb[0].mxu0
  %2577 = vmatprep.mubr.bf16.mxu0 0
  %2578 = vmatmul.mubr.bf16.gmra.mrb[0].mxu0 %v1537
  %v2579 = vpop.f32.mrb[0].mxu0
  %v2580 = vadd.f32 0.0, %v2579
  %v2581 = vpop.f32.mrb[0].mxu0
  %v2582 = vpop.f32.mrb[0].mxu0
  %v2583 = vadd.f32 0.0, %v2582
  %v2584 = vpop.f32.mrb[0].mxu0
  %2585 = vmatprep.mubr.bf16.mxu0 0
  %2586 = vmatmul.mubr.bf16.gmra.mrb[0].mxu0 %v1539
  %v2587 = vpop.f32.mrb[0].mxu0
  %v2588 = vadd.f32 0.0, %v2587
  %v2589 = vpop.f32.mrb[0].mxu0
  %v2590 = vpop.f32.mrb[0].mxu0
  %v2591 = vadd.f32 0.0, %v2590
  %v2592 = vpop.f32.mrb[0].mxu0
  %2593 = vmatprep.mubr.bf16.mxu0 0
  %2594 = vmatmul.mubr.bf16.gmra.mrb[0].mxu0 %v1541
  %v2595 = vpop.f32.mrb[0].mxu0
  %v2596 = vadd.f32 0.0, %v2595
  %v2597 = vpop.f32.mrb[0].mxu0
  %v2598 = vpop.f32.mrb[0].mxu0
  %v2599 = vadd.f32 0.0, %v2598
  %v2600 = vpop.f32.mrb[0].mxu0
  %2601 = vmatprep.mubr.bf16.mxu0 0
  %2602 = vmatmul.mubr.bf16.gmra.mrb[0].mxu0 %v1543
  %v2603 = vpop.f32.mrb[0].mxu0
  %v2604 = vadd.f32 0.0, %v2603
  %v2605 = vpop.f32.mrb[0].mxu0
  %v2606 = vpop.f32.mrb[0].mxu0
  %v2607 = vadd.f32 0.0, %v2606
  %v2608 = vpop.f32.mrb[0].mxu0
  %2609 = vmatprep.mubr.bf16.mxu0 0
  %2610 = vmatmul.mubr.bf16.gmra.mrb[0].mxu0 %v1545
  %v2611 = vpop.f32.mrb[0].mxu0
  %v2612 = vadd.f32 0.0, %v2611
  %v2613 = vpop.f32.mrb[0].mxu0
  %v2614 = vpop.f32.mrb[0].mxu0
  %v2615 = vadd.f32 0.0, %v2614
  %v2616 = vpop.f32.mrb[0].mxu0
  %2617 = vmatprep.mubr.bf16.mxu0 0
  %2618 = vmatmul.mubr.bf16.gmra.mrb[0].mxu0 %v1547
  %v2619 = vpop.f32.mrb[0].mxu0
  %v2620 = vadd.f32 0.0, %v2619
  %v2621 = vpop.f32.mrb[0].mxu0
  %v2622 = vpop.f32.mrb[0].mxu0
  %v2623 = vadd.f32 0.0, %v2622
  %v2624 = vpop.f32.mrb[0].mxu0
  %2625 = vmatprep.mubr.bf16.mxu0 0
  %2626 = vmatmul.mubr.bf16.gmra.mrb[0].mxu0 %v1549
  %v2627 = vpop.f32.mrb[0].mxu0
  %v2628 = vadd.f32 0.0, %v2627
  %v2629 = vpop.f32.mrb[0].mxu0
  %v2630 = vpop.f32.mrb[0].mxu0
  %v2631 = vadd.f32 0.0, %v2630
  %v2632 = vpop.f32.mrb[0].mxu0
  %2633 = vmatprep.mubr.bf16.mxu0 0
  %2634 = vmatmul.mubr.bf16.gmra.mrb[0].mxu0 %v1551
  %v2635 = vpop.f32.mrb[0].mxu0
  %v2636 = vadd.f32 0.0, %v2635
  %v2637 = vpop.f32.mrb[0].mxu0
  %v2638 = vpop.f32.mrb[0].mxu0
  %v2639 = vadd.f32 0.0, %v2638
  %v2640 = vpop.f32.mrb[0].mxu0
  %2641 = vmatprep.mubr.bf16.mxu0 0
  %2642 = vmatmul.mubr.bf16.gmra.mrb[0].mxu0 %v2481
  %v2643 = vpop.f32.mrb[0].mxu0
  %v2644 = vadd.f32 0.0, %v2643
  %v2645 = vpop.f32.mrb[0].mxu0
  %v2646 = vpop.f32.mrb[0].mxu0
  %v2647 = vadd.f32 0.0, %v2646
  %v2648 = vpop.f32.mrb[0].mxu0
  %2649 = vmatprep.mubr.bf16.mxu0 0
  %2650 = vmatmul.mubr.bf16.gmra.mrb[0].mxu0 %v1553
  %v2651 = vpop.f32.mrb[0].mxu0
  %v2652 = vadd.f32 0.0, %v2651
  %v2653 = vpop.f32.mrb[0].mxu0
  %v2654 = vpop.f32.mrb[0].mxu0
  %v2655 = vadd.f32 0.0, %v2654
  %v2656 = vpop.f32.mrb[0].mxu0
  %2657 = vmatprep.mubr.bf16.mxu0 0
  %2658 = vmatmul.mubr.bf16.gmra.mrb[0].mxu0 %v1555
  %v2659 = vpop.f32.mrb[0].mxu0
  %v2660 = vadd.f32 0.0, %v2659
  %v2661 = vpop.f32.mrb[0].mxu0
  %v2662 = vpop.f32.mrb[0].mxu0
  %v2663 = vadd.f32 0.0, %v2662
  %v2664 = vpop.f32.mrb[0].mxu0
  %2665 = vmatprep.mubr.bf16.mxu0 0
  %2666 = vmatmul.mubr.bf16.gmra.mrb[0].mxu0 %v1557
  %v2667 = vpop.f32.mrb[0].mxu0
  %v2668 = vadd.f32 0.0, %v2667
  %v2669 = vpop.f32.mrb[0].mxu0
  %v2670 = vpop.f32.mrb[0].mxu0
  %v2671 = vadd.f32 0.0, %v2670
  %v2672 = vpop.f32.mrb[0].mxu0
  %2673 = vmatprep.mubr.bf16.mxu0 0
  %2674 = vmatmul.mubr.bf16.gmra.mrb[0].mxu0 %v1559
  %v2675 = vpop.f32.mrb[0].mxu0
  %v2676 = vadd.f32 0.0, %v2675
  %v2677 = vpop.f32.mrb[0].mxu0
  %v2678 = vpop.f32.mrb[0].mxu0
  %v2679 = vadd.f32 0.0, %v2678
  %v2680 = vpop.f32.mrb[0].mxu0
  %2681 = vmatprep.mubr.bf16.mxu0 0
  %2682 = vmatmul.mubr.bf16.gmra.mrb[0].mxu0 %v1561
  %v2683 = vpop.f32.mrb[0].mxu0
  %v2684 = vadd.f32 0.0, %v2683
  %v2685 = vpop.f32.mrb[0].mxu0
  %v2686 = vpop.f32.mrb[0].mxu0
  %v2687 = vadd.f32 0.0, %v2686
  %v2688 = vpop.f32.mrb[0].mxu0
  %2689 = vmatprep.mubr.bf16.mxu0 0
  %2690 = vmatmul.mubr.bf16.gmra.mrb[0].mxu0 %v1563
  %v2691 = vpop.f32.mrb[0].mxu0
  %v2692 = vadd.f32 0.0, %v2691
  %v2693 = vpop.f32.mrb[0].mxu0
  %v2694 = vpop.f32.mrb[0].mxu0
  %v2695 = vadd.f32 0.0, %v2694
  %v2696 = vpop.f32.mrb[0].mxu0
  %2697 = vmatprep.mubr.bf16.mxu0 0
  %2698 = vmatmul.mubr.bf16.gmra.mrb[0].mxu0 %v1565
  %v2699 = vpop.f32.mrb[0].mxu0
  %v2700 = vadd.f32 0.0, %v2699
  %v2701 = vpop.f32.mrb[0].mxu0
  %v2702 = vpop.f32.mrb[0].mxu0
  %v2703 = vadd.f32 0.0, %v2702
  %v2704 = vpop.f32.mrb[0].mxu0
  %2705 = vmatprep.mubr.bf16.mxu0 0
  %2706 = vmatmul.mubr.bf16.gmra.mrb[0].mxu0 %v1567
  %v2707 = vpop.f32.mrb[0].mxu0
  %v2708 = vadd.f32 0.0, %v2707
  %v2709 = vpop.f32.mrb[0].mxu0
  %v2710 = vpop.f32.mrb[0].mxu0
  %v2711 = vadd.f32 0.0, %v2710
  %v2712 = vpop.f32.mrb[0].mxu0
  %2713 = vmatprep.mubr.bf16.mxu0 0
  %2714 = vmatmul.mubr.bf16.gmra.mrb[0].mxu0 %v1569
  %v2715 = vpop.f32.mrb[0].mxu0
  %v2716 = vadd.f32 0.0, %v2715
  %v2717 = vpop.f32.mrb[0].mxu0
  %v2718 = vpop.f32.mrb[0].mxu0
  %v2719 = vadd.f32 0.0, %v2718
  %v2720 = vpop.f32.mrb[0].mxu0
  %2721 = vmatprep.mubr.bf16.mxu0 0
  %2722 = vmatmul.mubr.bf16.gmra.mrb[0].mxu0 %v1571
  %v2723 = vpop.f32.mrb[0].mxu0
  %v2724 = vadd.f32 0.0, %v2723
  %v2725 = vpop.f32.mrb[0].mxu0
  %v2726 = vpop.f32.mrb[0].mxu0
  %v2727 = vadd.f32 0.0, %v2726
  %v2728 = vpop.f32.mrb[0].mxu0
  %2729 = vmatprep.mubr.bf16.mxu0 0
  %2730 = vmatmul.mubr.bf16.gmra.mrb[0].mxu0 %v1573
  %v2731 = vpop.f32.mrb[0].mxu0
  %v2732 = vadd.f32 0.0, %v2731
  %v2733 = vpop.f32.mrb[0].mxu0
  %v2734 = vpop.f32.mrb[0].mxu0
  %v2735 = vadd.f32 0.0, %v2734
  %v2736 = vpop.f32.mrb[0].mxu0
  %2737 = vmatprep.mubr.bf16.mxu0 0
  %2738 = vmatmul.mubr.bf16.gmra.mrb[0].mxu0 %v1575
  %v2739 = vpop.f32.mrb[0].mxu0
  %v2740 = vadd.f32 0.0, %v2739
  %v2741 = vpop.f32.mrb[0].mxu0
  %v2742 = vpop.f32.mrb[0].mxu0
  %v2743 = vadd.f32 0.0, %v2742
  %v2744 = vpop.f32.mrb[0].mxu0
  %2745 = vmatprep.mubr.bf16.mxu0 0
  %2746 = vmatmul.mubr.bf16.gmra.mrb[0].mxu0 %v1577
  %v2747 = vpop.f32.mrb[0].mxu0
  %v2748 = vadd.f32 0.0, %v2747
  %v2749 = vpop.f32.mrb[0].mxu0
  %v2750 = vpop.f32.mrb[0].mxu0
  %v2751 = vadd.f32 0.0, %v2750
  %v2752 = vpop.f32.mrb[0].mxu0
  %2753 = vmatprep.mubr.bf16.mxu0 0
  %2754 = vmatmul.mubr.bf16.gmra.mrb[0].mxu0 %v1579
  %v2755 = vpop.f32.mrb[0].mxu0
  %v2756 = vadd.f32 0.0, %v2755
  %v2757 = vpop.f32.mrb[0].mxu0
  %v2758 = vpop.f32.mrb[0].mxu0
  %v2759 = vadd.f32 0.0, %v2758
  %v2760 = vpop.f32.mrb[0].mxu0
  %2761 = vmatprep.mubr.bf16.mxu0 0
  %2762 = vmatmul.mubr.bf16.gmra.mrb[0].mxu0 %v1581
  %v2763 = vpop.f32.mrb[0].mxu0
  %v2764 = vadd.f32 0.0, %v2763
  %v2765 = vpop.f32.mrb[0].mxu0
  %v2766 = vpop.f32.mrb[0].mxu0
  %v2767 = vadd.f32 0.0, %v2766
  %v2768 = vpop.f32.mrb[0].mxu0
  %2769 = vmatprep.mubr.bf16.mxu0 0
  %2770 = vmatmul.mubr.bf16.gmra.mrb[0].mxu0 %v2484
  %v2771 = vpop.f32.mrb[0].mxu0
  %v2772 = vadd.f32 0.0, %v2771
  %v2773 = vpop.f32.mrb[0].mxu0
  %v2774 = vpop.f32.mrb[0].mxu0
  %v2775 = vadd.f32 0.0, %v2774
  %v2776 = vpop.f32.mrb[0].mxu0
  %2777 = vdwg.mxu0
  %v2778 = vadd.f32 %v2416, %v2524
  %v2779 = vadd.f32 %v2417, %v2527
  %v2780 = vadd.f32 %v2418, %v2532
  %v2781 = vadd.f32 %v2419, %v2535
  %v2782 = vadd.f32 %v2420, %v2540
  %v2783 = vadd.f32 %v2421, %v2543
  %v2784 = vadd.f32 %v2422, %v2548
  %v2785 = vadd.f32 %v2423, %v2551
  %v2786 = vadd.f32 %v2424, %v2556
  %v2787 = vadd.f32 %v2425, %v2559
  %v2788 = vadd.f32 %v2426, %v2564
  %v2789 = vadd.f32 %v2427, %v2567
  %v2790 = vadd.f32 %v2428, %v2572
  %v2791 = vadd.f32 %v2429, %v2575
  %v2792 = vadd.f32 %v2430, %v2580
  %v2793 = vadd.f32 %v2431, %v2583
  %v2794 = vadd.f32 %v2432, %v2588
  %v2795 = vadd.f32 %v2433, %v2591
  %v2796 = vadd.f32 %v2434, %v2596
  %v2797 = vadd.f32 %v2435, %v2599
  %v2798 = vadd.f32 %v2436, %v2604
  %v2799 = vadd.f32 %v2437, %v2607
  %v2800 = vadd.f32 %v2438, %v2612
  %v2801 = vadd.f32 %v2439, %v2615
  %v2802 = vadd.f32 %v2440, %v2620
  %v2803 = vadd.f32 %v2441, %v2623
  %v2804 = vadd.f32 %v2442, %v2628
  %v2805 = vadd.f32 %v2443, %v2631
  %v2806 = vadd.f32 %v2444, %v2636
  %v2807 = vadd.f32 %v2445, %v2639
  %v2808 = vadd.f32 %v2446, %v2644
  %v2809 = vadd.f32 %v2447, %v2647
  %v2810 = vadd.f32 %v2448, %v2652
  %v2811 = vadd.f32 %v2449, %v2655
  %v2812 = vadd.f32 %v2450, %v2660
  %v2813 = vadd.f32 %v2451, %v2663
  %v2814 = vadd.f32 %v2452, %v2668
  %v2815 = vadd.f32 %v2453, %v2671
  %v2816 = vadd.f32 %v2454, %v2676
  %v2817 = vadd.f32 %v2455, %v2679
  %v2818 = vadd.f32 %v2456, %v2684
  %v2819 = vadd.f32 %v2457, %v2687
  %v2820 = vadd.f32 %v2458, %v2692
  %v2821 = vadd.f32 %v2459, %v2695
  %v2822 = vadd.f32 %v2460, %v2700
  %v2823 = vadd.f32 %v2461, %v2703
  %v2824 = vadd.f32 %v2462, %v2708
  %v2825 = vadd.f32 %v2463, %v2711
  %v2826 = vadd.f32 %v2464, %v2716
  %v2827 = vadd.f32 %v2465, %v2719
  %v2828 = vadd.f32 %v2466, %v2724
  %v2829 = vadd.f32 %v2467, %v2727
  %v2830 = vadd.f32 %v2468, %v2732
  %v2831 = vadd.f32 %v2469, %v2735
  %v2832 = vadd.f32 %v2470, %v2740
  %v2833 = vadd.f32 %v2471, %v2743
  %v2834 = vadd.f32 %v2472, %v2748
  %v2835 = vadd.f32 %v2473, %v2751
  %v2836 = vadd.f32 %v2474, %v2756
  %v2837 = vadd.f32 %v2475, %v2759
  %v2838 = vadd.f32 %v2476, %v2764
  %v2839 = vadd.f32 %v2477, %v2767
  %v2840 = vadd.f32 %v2478, %v2772
  %v2841 = vadd.f32 %v2479, %v2775
  %v2842 = vshrl.u32 %v711, 16
  %v2844 = vshll.u32 %v711, 16
  %v2846 = vrot.slane %v2844, 1
  %v2847 = vor.u32 %v2842, %v2846
  %v2849 = vshll.u32 %v744, 16
  %v2851 = vrot.slane %v2849, 1
  %v2852 = vsel %vm761, %v2847, %v2851
  %v2853 = vshrl.u32 %v727, 16
  %v2855 = vshll.u32 %v727, 16
  %v2857 = vrot.slane %v2855, 1
  %v2858 = vor.u32 %v2853, %v2857
  %v2860 = vshll.u32 %v760, 16
  %v2862 = vrot.slane %v2860, 1
  %v2863 = vsel %vm761, %v2858, %v2862
  %v2865 = vsel %vm1134, %v2852, 0
  %v2868 = vsel %vm1134, %v2863, 0
  %v2871 = vsel %vm1228, %v390, 0
  %2873 = vmatprep.subr.bf16.mxu0 0
  %2874 = vmatpush1.bf16.msra.mxu0 %v2871
  %2875 = vmatprep.subr.bf16.mxu0 0
  %2876 = vmatpush1.bf16.msra.mxu0 0
  %2877 = vmatprep.subr.bf16.mxu0 0
  %2878 = vmatpush1.bf16.msra.mxu0 0
  %2879 = vmatprep.subr.bf16.mxu0 0
  %2880 = vmatpush1.bf16.msra.mxu0 0
  %2881 = vmatprep.subr.bf16.mxu0 0
  %2882 = vmatpush1.bf16.msra.mxu0 0
  %2883 = vmatprep.subr.bf16.mxu0 0
  %2884 = vmatpush1.bf16.msra.mxu0 0
  %2885 = vmatprep.subr.bf16.mxu0 0
  %2886 = vmatpush1.bf16.msra.mxu0 0
  %2887 = vmatprep.subr.bf16.mxu0 0
  %2888 = vmatpush1.bf16.msra.mxu0 0
  %2889 = vmatprep.subr.bf16.mxu0 0
  %2890 = vmatpush1.bf16.msra.mxu0 0
  %2891 = vmatprep.subr.bf16.mxu0 0
  %2892 = vmatpush1.bf16.msra.mxu0 0
  %2893 = vmatprep.subr.bf16.mxu0 0
  %2894 = vmatpush1.bf16.msra.mxu0 0
  %2895 = vmatprep.subr.bf16.mxu0 0
  %2896 = vmatpush1.bf16.msra.mxu0 0
  %2897 = vmatprep.subr.bf16.mxu0 0
  %2898 = vmatpush1.bf16.msra.mxu0 0
  %2899 = vmatprep.subr.bf16.mxu0 0
  %2900 = vmatpush1.bf16.msra.mxu0 0
  %2901 = vmatprep.subr.bf16.mxu0 0
  %2902 = vmatpush1.bf16.msra.mxu0 0
  %2903 = vmatprep.subr.bf16.mxu0 0
  %2904 = vmatpush1.bf16.msra.mxu0 0
  %2905 = vmatprep.mubr.bf16.mxu0 0
  %2906 = vmatmul.mubr.bf16.gmra.mrb[0].mxu0 %v1139
  %v2907 = vpop.f32.mrb[0].mxu0
  %v2908 = vadd.f32 0.0, %v2907
  %v2909 = vpop.f32.mrb[0].mxu0
  %v2910 = vpop.f32.mrb[0].mxu0
  %v2911 = vadd.f32 0.0, %v2910
  %v2912 = vpop.f32.mrb[0].mxu0
  %2913 = vmatprep.mubr.bf16.mxu0 0
  %2914 = vmatmul.mubr.bf16.gmra.mrb[0].mxu0 %v1142
  %v2915 = vpop.f32.mrb[0].mxu0
  %v2916 = vadd.f32 0.0, %v2915
  %v2917 = vpop.f32.mrb[0].mxu0
  %v2918 = vpop.f32.mrb[0].mxu0
  %v2919 = vadd.f32 0.0, %v2918
  %v2920 = vpop.f32.mrb[0].mxu0
  %2921 = vmatprep.mubr.bf16.mxu0 0
  %2922 = vmatmul.mubr.bf16.gmra.mrb[0].mxu0 %v1145
  %v2923 = vpop.f32.mrb[0].mxu0
  %v2924 = vadd.f32 0.0, %v2923
  %v2925 = vpop.f32.mrb[0].mxu0
  %v2926 = vpop.f32.mrb[0].mxu0
  %v2927 = vadd.f32 0.0, %v2926
  %v2928 = vpop.f32.mrb[0].mxu0
  %2929 = vmatprep.mubr.bf16.mxu0 0
  %2930 = vmatmul.mubr.bf16.gmra.mrb[0].mxu0 %v1148
  %v2931 = vpop.f32.mrb[0].mxu0
  %v2932 = vadd.f32 0.0, %v2931
  %v2933 = vpop.f32.mrb[0].mxu0
  %v2934 = vpop.f32.mrb[0].mxu0
  %v2935 = vadd.f32 0.0, %v2934
  %v2936 = vpop.f32.mrb[0].mxu0
  %2937 = vmatprep.mubr.bf16.mxu0 0
  %2938 = vmatmul.mubr.bf16.gmra.mrb[0].mxu0 %v1151
  %v2939 = vpop.f32.mrb[0].mxu0
  %v2940 = vadd.f32 0.0, %v2939
  %v2941 = vpop.f32.mrb[0].mxu0
  %v2942 = vpop.f32.mrb[0].mxu0
  %v2943 = vadd.f32 0.0, %v2942
  %v2944 = vpop.f32.mrb[0].mxu0
  %2945 = vmatprep.mubr.bf16.mxu0 0
  %2946 = vmatmul.mubr.bf16.gmra.mrb[0].mxu0 %v1154
  %v2947 = vpop.f32.mrb[0].mxu0
  %v2948 = vadd.f32 0.0, %v2947
  %v2949 = vpop.f32.mrb[0].mxu0
  %v2950 = vpop.f32.mrb[0].mxu0
  %v2951 = vadd.f32 0.0, %v2950
  %v2952 = vpop.f32.mrb[0].mxu0
  %2953 = vmatprep.mubr.bf16.mxu0 0
  %2954 = vmatmul.mubr.bf16.gmra.mrb[0].mxu0 %v1157
  %v2955 = vpop.f32.mrb[0].mxu0
  %v2956 = vadd.f32 0.0, %v2955
  %v2957 = vpop.f32.mrb[0].mxu0
  %v2958 = vpop.f32.mrb[0].mxu0
  %v2959 = vadd.f32 0.0, %v2958
  %v2960 = vpop.f32.mrb[0].mxu0
  %2961 = vmatprep.mubr.bf16.mxu0 0
  %2962 = vmatmul.mubr.bf16.gmra.mrb[0].mxu0 %v1160
  %v2963 = vpop.f32.mrb[0].mxu0
  %v2964 = vadd.f32 0.0, %v2963
  %v2965 = vpop.f32.mrb[0].mxu0
  %v2966 = vpop.f32.mrb[0].mxu0
  %v2967 = vadd.f32 0.0, %v2966
  %v2968 = vpop.f32.mrb[0].mxu0
  %2969 = vmatprep.mubr.bf16.mxu0 0
  %2970 = vmatmul.mubr.bf16.gmra.mrb[0].mxu0 %v1163
  %v2971 = vpop.f32.mrb[0].mxu0
  %v2972 = vadd.f32 0.0, %v2971
  %v2973 = vpop.f32.mrb[0].mxu0
  %v2974 = vpop.f32.mrb[0].mxu0
  %v2975 = vadd.f32 0.0, %v2974
  %v2976 = vpop.f32.mrb[0].mxu0
  %2977 = vmatprep.mubr.bf16.mxu0 0
  %2978 = vmatmul.mubr.bf16.gmra.mrb[0].mxu0 %v1166
  %v2979 = vpop.f32.mrb[0].mxu0
  %v2980 = vadd.f32 0.0, %v2979
  %v2981 = vpop.f32.mrb[0].mxu0
  %v2982 = vpop.f32.mrb[0].mxu0
  %v2983 = vadd.f32 0.0, %v2982
  %v2984 = vpop.f32.mrb[0].mxu0
  %2985 = vmatprep.mubr.bf16.mxu0 0
  %2986 = vmatmul.mubr.bf16.gmra.mrb[0].mxu0 %v1169
  %v2987 = vpop.f32.mrb[0].mxu0
  %v2988 = vadd.f32 0.0, %v2987
  %v2989 = vpop.f32.mrb[0].mxu0
  %v2990 = vpop.f32.mrb[0].mxu0
  %v2991 = vadd.f32 0.0, %v2990
  %v2992 = vpop.f32.mrb[0].mxu0
  %2993 = vmatprep.mubr.bf16.mxu0 0
  %2994 = vmatmul.mubr.bf16.gmra.mrb[0].mxu0 %v1172
  %v2995 = vpop.f32.mrb[0].mxu0
  %v2996 = vadd.f32 0.0, %v2995
  %v2997 = vpop.f32.mrb[0].mxu0
  %v2998 = vpop.f32.mrb[0].mxu0
  %v2999 = vadd.f32 0.0, %v2998
  %v3000 = vpop.f32.mrb[0].mxu0
  %3001 = vmatprep.mubr.bf16.mxu0 0
  %3002 = vmatmul.mubr.bf16.gmra.mrb[0].mxu0 %v1175
  %v3003 = vpop.f32.mrb[0].mxu0
  %v3004 = vadd.f32 0.0, %v3003
  %v3005 = vpop.f32.mrb[0].mxu0
  %v3006 = vpop.f32.mrb[0].mxu0
  %v3007 = vadd.f32 0.0, %v3006
  %v3008 = vpop.f32.mrb[0].mxu0
  %3009 = vmatprep.mubr.bf16.mxu0 0
  %3010 = vmatmul.mubr.bf16.gmra.mrb[0].mxu0 %v1178
  %v3011 = vpop.f32.mrb[0].mxu0
  %v3012 = vadd.f32 0.0, %v3011
  %v3013 = vpop.f32.mrb[0].mxu0
  %v3014 = vpop.f32.mrb[0].mxu0
  %v3015 = vadd.f32 0.0, %v3014
  %v3016 = vpop.f32.mrb[0].mxu0
  %3017 = vmatprep.mubr.bf16.mxu0 0
  %3018 = vmatmul.mubr.bf16.gmra.mrb[0].mxu0 %v1181
  %v3019 = vpop.f32.mrb[0].mxu0
  %v3020 = vadd.f32 0.0, %v3019
  %v3021 = vpop.f32.mrb[0].mxu0
  %v3022 = vpop.f32.mrb[0].mxu0
  %v3023 = vadd.f32 0.0, %v3022
  %v3024 = vpop.f32.mrb[0].mxu0
  %3025 = vmatprep.mubr.bf16.mxu0 0
  %3026 = vmatmul.mubr.bf16.gmra.mrb[0].mxu0 %v2865
  %v3027 = vpop.f32.mrb[0].mxu0
  %v3028 = vadd.f32 0.0, %v3027
  %v3029 = vpop.f32.mrb[0].mxu0
  %v3030 = vpop.f32.mrb[0].mxu0
  %v3031 = vadd.f32 0.0, %v3030
  %v3032 = vpop.f32.mrb[0].mxu0
  %3033 = vmatprep.mubr.bf16.mxu0 0
  %3034 = vmatmul.mubr.bf16.gmra.mrb[0].mxu0 %v1184
  %v3035 = vpop.f32.mrb[0].mxu0
  %v3036 = vadd.f32 0.0, %v3035
  %v3037 = vpop.f32.mrb[0].mxu0
  %v3038 = vpop.f32.mrb[0].mxu0
  %v3039 = vadd.f32 0.0, %v3038
  %v3040 = vpop.f32.mrb[0].mxu0
  %3041 = vmatprep.mubr.bf16.mxu0 0
  %3042 = vmatmul.mubr.bf16.gmra.mrb[0].mxu0 %v1187
  %v3043 = vpop.f32.mrb[0].mxu0
  %v3044 = vadd.f32 0.0, %v3043
  %v3045 = vpop.f32.mrb[0].mxu0
  %v3046 = vpop.f32.mrb[0].mxu0
  %v3047 = vadd.f32 0.0, %v3046
  %v3048 = vpop.f32.mrb[0].mxu0
  %3049 = vmatprep.mubr.bf16.mxu0 0
  %3050 = vmatmul.mubr.bf16.gmra.mrb[0].mxu0 %v1190
  %v3051 = vpop.f32.mrb[0].mxu0
  %v3052 = vadd.f32 0.0, %v3051
  %v3053 = vpop.f32.mrb[0].mxu0
  %v3054 = vpop.f32.mrb[0].mxu0
  %v3055 = vadd.f32 0.0, %v3054
  %v3056 = vpop.f32.mrb[0].mxu0
  %3057 = vmatprep.mubr.bf16.mxu0 0
  %3058 = vmatmul.mubr.bf16.gmra.mrb[0].mxu0 %v1193
  %v3059 = vpop.f32.mrb[0].mxu0
  %v3060 = vadd.f32 0.0, %v3059
  %v3061 = vpop.f32.mrb[0].mxu0
  %v3062 = vpop.f32.mrb[0].mxu0
  %v3063 = vadd.f32 0.0, %v3062
  %v3064 = vpop.f32.mrb[0].mxu0
  %3065 = vmatprep.mubr.bf16.mxu0 0
  %3066 = vmatmul.mubr.bf16.gmra.mrb[0].mxu0 %v1196
  %v3067 = vpop.f32.mrb[0].mxu0
  %v3068 = vadd.f32 0.0, %v3067
  %v3069 = vpop.f32.mrb[0].mxu0
  %v3070 = vpop.f32.mrb[0].mxu0
  %v3071 = vadd.f32 0.0, %v3070
  %v3072 = vpop.f32.mrb[0].mxu0
  %3073 = vmatprep.mubr.bf16.mxu0 0
  %3074 = vmatmul.mubr.bf16.gmra.mrb[0].mxu0 %v1199
  %v3075 = vpop.f32.mrb[0].mxu0
  %v3076 = vadd.f32 0.0, %v3075
  %v3077 = vpop.f32.mrb[0].mxu0
  %v3078 = vpop.f32.mrb[0].mxu0
  %v3079 = vadd.f32 0.0, %v3078
  %v3080 = vpop.f32.mrb[0].mxu0
  %3081 = vmatprep.mubr.bf16.mxu0 0
  %3082 = vmatmul.mubr.bf16.gmra.mrb[0].mxu0 %v1202
  %v3083 = vpop.f32.mrb[0].mxu0
  %v3084 = vadd.f32 0.0, %v3083
  %v3085 = vpop.f32.mrb[0].mxu0
  %v3086 = vpop.f32.mrb[0].mxu0
  %v3087 = vadd.f32 0.0, %v3086
  %v3088 = vpop.f32.mrb[0].mxu0
  %3089 = vmatprep.mubr.bf16.mxu0 0
  %3090 = vmatmul.mubr.bf16.gmra.mrb[0].mxu0 %v1205
  %v3091 = vpop.f32.mrb[0].mxu0
  %v3092 = vadd.f32 0.0, %v3091
  %v3093 = vpop.f32.mrb[0].mxu0
  %v3094 = vpop.f32.mrb[0].mxu0
  %v3095 = vadd.f32 0.0, %v3094
  %v3096 = vpop.f32.mrb[0].mxu0
  %3097 = vmatprep.mubr.bf16.mxu0 0
  %3098 = vmatmul.mubr.bf16.gmra.mrb[0].mxu0 %v1208
  %v3099 = vpop.f32.mrb[0].mxu0
  %v3100 = vadd.f32 0.0, %v3099
  %v3101 = vpop.f32.mrb[0].mxu0
  %v3102 = vpop.f32.mrb[0].mxu0
  %v3103 = vadd.f32 0.0, %v3102
  %v3104 = vpop.f32.mrb[0].mxu0
  %3105 = vmatprep.mubr.bf16.mxu0 0
  %3106 = vmatmul.mubr.bf16.gmra.mrb[0].mxu0 %v1211
  %v3107 = vpop.f32.mrb[0].mxu0
  %v3108 = vadd.f32 0.0, %v3107
  %v3109 = vpop.f32.mrb[0].mxu0
  %v3110 = vpop.f32.mrb[0].mxu0
  %v3111 = vadd.f32 0.0, %v3110
  %v3112 = vpop.f32.mrb[0].mxu0
  %3113 = vmatprep.mubr.bf16.mxu0 0
  %3114 = vmatmul.mubr.bf16.gmra.mrb[0].mxu0 %v1214
  %v3115 = vpop.f32.mrb[0].mxu0
  %v3116 = vadd.f32 0.0, %v3115
  %v3117 = vpop.f32.mrb[0].mxu0
  %v3118 = vpop.f32.mrb[0].mxu0
  %v3119 = vadd.f32 0.0, %v3118
  %v3120 = vpop.f32.mrb[0].mxu0
  %3121 = vmatprep.mubr.bf16.mxu0 0
  %3122 = vmatmul.mubr.bf16.gmra.mrb[0].mxu0 %v1217
  %v3123 = vpop.f32.mrb[0].mxu0
  %v3124 = vadd.f32 0.0, %v3123
  %v3125 = vpop.f32.mrb[0].mxu0
  %v3126 = vpop.f32.mrb[0].mxu0
  %v3127 = vadd.f32 0.0, %v3126
  %v3128 = vpop.f32.mrb[0].mxu0
  %3129 = vmatprep.mubr.bf16.mxu0 0
  %3130 = vmatmul.mubr.bf16.gmra.mrb[0].mxu0 %v1220
  %v3131 = vpop.f32.mrb[0].mxu0
  %v3132 = vadd.f32 0.0, %v3131
  %v3133 = vpop.f32.mrb[0].mxu0
  %v3134 = vpop.f32.mrb[0].mxu0
  %v3135 = vadd.f32 0.0, %v3134
  %v3136 = vpop.f32.mrb[0].mxu0
  %3137 = vmatprep.mubr.bf16.mxu0 0
  %3138 = vmatmul.mubr.bf16.gmra.mrb[0].mxu0 %v1223
  %v3139 = vpop.f32.mrb[0].mxu0
  %v3140 = vadd.f32 0.0, %v3139
  %v3141 = vpop.f32.mrb[0].mxu0
  %v3142 = vpop.f32.mrb[0].mxu0
  %v3143 = vadd.f32 0.0, %v3142
  %v3144 = vpop.f32.mrb[0].mxu0
  %3145 = vmatprep.mubr.bf16.mxu0 0
  %3146 = vmatmul.mubr.bf16.gmra.mrb[0].mxu0 %v1226
  %v3147 = vpop.f32.mrb[0].mxu0
  %v3148 = vadd.f32 0.0, %v3147
  %v3149 = vpop.f32.mrb[0].mxu0
  %v3150 = vpop.f32.mrb[0].mxu0
  %v3151 = vadd.f32 0.0, %v3150
  %v3152 = vpop.f32.mrb[0].mxu0
  %3153 = vmatprep.mubr.bf16.mxu0 0
  %3154 = vmatmul.mubr.bf16.gmra.mrb[0].mxu0 %v2868
  %v3155 = vpop.f32.mrb[0].mxu0
  %v3156 = vadd.f32 0.0, %v3155
  %v3157 = vpop.f32.mrb[0].mxu0
  %v3158 = vpop.f32.mrb[0].mxu0
  %v3159 = vadd.f32 0.0, %v3158
  %v3160 = vpop.f32.mrb[0].mxu0
  %3161 = vdwg.mxu0
  %v3162 = vadd.f32 %v2778, %v2908
  %v3163 = vadd.f32 %v2779, %v2911
  %v3164 = vadd.f32 %v2780, %v2916
  %v3165 = vadd.f32 %v2781, %v2919
  %v3166 = vadd.f32 %v2782, %v2924
  %v3167 = vadd.f32 %v2783, %v2927
  %v3168 = vadd.f32 %v2784, %v2932
  %v3169 = vadd.f32 %v2785, %v2935
  %v3170 = vadd.f32 %v2786, %v2940
  %v3171 = vadd.f32 %v2787, %v2943
  %v3172 = vadd.f32 %v2788, %v2948
  %v3173 = vadd.f32 %v2789, %v2951
  %v3174 = vadd.f32 %v2790, %v2956
  %v3175 = vadd.f32 %v2791, %v2959
  %v3176 = vadd.f32 %v2792, %v2964
  %v3177 = vadd.f32 %v2793, %v2967
  %v3178 = vadd.f32 %v2794, %v2972
  %v3179 = vadd.f32 %v2795, %v2975
  %v3180 = vadd.f32 %v2796, %v2980
  %v3181 = vadd.f32 %v2797, %v2983
  %v3182 = vadd.f32 %v2798, %v2988
  %v3183 = vadd.f32 %v2799, %v2991
  %v3184 = vadd.f32 %v2800, %v2996
  %v3185 = vadd.f32 %v2801, %v2999
  %v3186 = vadd.f32 %v2802, %v3004
  %v3187 = vadd.f32 %v2803, %v3007
  %v3188 = vadd.f32 %v2804, %v3012
  %v3189 = vadd.f32 %v2805, %v3015
  %v3190 = vadd.f32 %v2806, %v3020
  %v3191 = vadd.f32 %v2807, %v3023
  %v3192 = vadd.f32 %v2808, %v3028
  %v3193 = vadd.f32 %v2809, %v3031
  %v3194 = vadd.f32 %v2810, %v3036
  %v3195 = vadd.f32 %v2811, %v3039
  %v3196 = vadd.f32 %v2812, %v3044
  %v3197 = vadd.f32 %v2813, %v3047
  %v3198 = vadd.f32 %v2814, %v3052
  %v3199 = vadd.f32 %v2815, %v3055
  %v3200 = vadd.f32 %v2816, %v3060
  %v3201 = vadd.f32 %v2817, %v3063
  %v3202 = vadd.f32 %v2818, %v3068
  %v3203 = vadd.f32 %v2819, %v3071
  %v3204 = vadd.f32 %v2820, %v3076
  %v3205 = vadd.f32 %v2821, %v3079
  %v3206 = vadd.f32 %v2822, %v3084
  %v3207 = vadd.f32 %v2823, %v3087
  %v3208 = vadd.f32 %v2824, %v3092
  %v3209 = vadd.f32 %v2825, %v3095
  %v3210 = vadd.f32 %v2826, %v3100
  %v3211 = vadd.f32 %v2827, %v3103
  %v3212 = vadd.f32 %v2828, %v3108
  %v3213 = vadd.f32 %v2829, %v3111
  %v3214 = vadd.f32 %v2830, %v3116
  %v3215 = vadd.f32 %v2831, %v3119
  %v3216 = vadd.f32 %v2832, %v3124
  %v3217 = vadd.f32 %v2833, %v3127
  %v3218 = vadd.f32 %v2834, %v3132
  %v3219 = vadd.f32 %v2835, %v3135
  %v3220 = vadd.f32 %v2836, %v3140
  %v3221 = vadd.f32 %v2837, %v3143
  %v3222 = vadd.f32 %v2838, %v3148
  %v3223 = vadd.f32 %v2839, %v3151
  %v3224 = vadd.f32 %v2840, %v3156
  %v3225 = vadd.f32 %v2841, %v3159
  %v3230 = vrot.slane %v711, 1
  %v3231 = vrot.slane %v744, 1
  %v3232 = vsel %vm1937, %v3230, %v3231
  %v3233 = vrot.slane %v727, 1
  %v3234 = vrot.slane %v760, 1
  %v3235 = vsel %vm1937, %v3233, %v3234
  %v3237 = vsel %vm1134, %v3232, 0
  %v3240 = vsel %vm1134, %v3235, 0
  %v3243 = vsel %vm1228, %v391, 0
  %3245 = vmatprep.subr.bf16.mxu0 0
  %3246 = vmatpush1.bf16.msra.mxu0 %v3243
  %3247 = vmatprep.subr.bf16.mxu0 0
  %3248 = vmatpush1.bf16.msra.mxu0 0
  %3249 = vmatprep.subr.bf16.mxu0 0
  %3250 = vmatpush1.bf16.msra.mxu0 0
  %3251 = vmatprep.subr.bf16.mxu0 0
  %3252 = vmatpush1.bf16.msra.mxu0 0
  %3253 = vmatprep.subr.bf16.mxu0 0
  %3254 = vmatpush1.bf16.msra.mxu0 0
  %3255 = vmatprep.subr.bf16.mxu0 0
  %3256 = vmatpush1.bf16.msra.mxu0 0
  %3257 = vmatprep.subr.bf16.mxu0 0
  %3258 = vmatpush1.bf16.msra.mxu0 0
  %3259 = vmatprep.subr.bf16.mxu0 0
  %3260 = vmatpush1.bf16.msra.mxu0 0
  %3261 = vmatprep.subr.bf16.mxu0 0
  %3262 = vmatpush1.bf16.msra.mxu0 0
  %3263 = vmatprep.subr.bf16.mxu0 0
  %3264 = vmatpush1.bf16.msra.mxu0 0
  %3265 = vmatprep.subr.bf16.mxu0 0
  %3266 = vmatpush1.bf16.msra.mxu0 0
  %3267 = vmatprep.subr.bf16.mxu0 0
  %3268 = vmatpush1.bf16.msra.mxu0 0
  %3269 = vmatprep.subr.bf16.mxu0 0
  %3270 = vmatpush1.bf16.msra.mxu0 0
  %3271 = vmatprep.subr.bf16.mxu0 0
  %3272 = vmatpush1.bf16.msra.mxu0 0
  %3273 = vmatprep.subr.bf16.mxu0 0
  %3274 = vmatpush1.bf16.msra.mxu0 0
  %3275 = vmatprep.subr.bf16.mxu0 0
  %3276 = vmatpush1.bf16.msra.mxu0 0
  %3277 = vmatprep.mubr.bf16.mxu0 0
  %3278 = vmatmul.mubr.bf16.gmra.mrb[0].mxu0 %v2035
  %v3279 = vpop.f32.mrb[0].mxu0
  %v3280 = vadd.f32 0.0, %v3279
  %v3281 = vpop.f32.mrb[0].mxu0
  %v3282 = vpop.f32.mrb[0].mxu0
  %v3283 = vadd.f32 0.0, %v3282
  %v3284 = vpop.f32.mrb[0].mxu0
  %3285 = vmatprep.mubr.bf16.mxu0 0
  %3286 = vmatmul.mubr.bf16.gmra.mrb[0].mxu0 %v2038
  %v3287 = vpop.f32.mrb[0].mxu0
  %v3288 = vadd.f32 0.0, %v3287
  %v3289 = vpop.f32.mrb[0].mxu0
  %v3290 = vpop.f32.mrb[0].mxu0
  %v3291 = vadd.f32 0.0, %v3290
  %v3292 = vpop.f32.mrb[0].mxu0
  %3293 = vmatprep.mubr.bf16.mxu0 0
  %3294 = vmatmul.mubr.bf16.gmra.mrb[0].mxu0 %v2041
  %v3295 = vpop.f32.mrb[0].mxu0
  %v3296 = vadd.f32 0.0, %v3295
  %v3297 = vpop.f32.mrb[0].mxu0
  %v3298 = vpop.f32.mrb[0].mxu0
  %v3299 = vadd.f32 0.0, %v3298
  %v3300 = vpop.f32.mrb[0].mxu0
  %3301 = vmatprep.mubr.bf16.mxu0 0
  %3302 = vmatmul.mubr.bf16.gmra.mrb[0].mxu0 %v2044
  %v3303 = vpop.f32.mrb[0].mxu0
  %v3304 = vadd.f32 0.0, %v3303
  %v3305 = vpop.f32.mrb[0].mxu0
  %v3306 = vpop.f32.mrb[0].mxu0
  %v3307 = vadd.f32 0.0, %v3306
  %v3308 = vpop.f32.mrb[0].mxu0
  %3309 = vmatprep.mubr.bf16.mxu0 0
  %3310 = vmatmul.mubr.bf16.gmra.mrb[0].mxu0 %v2047
  %v3311 = vpop.f32.mrb[0].mxu0
  %v3312 = vadd.f32 0.0, %v3311
  %v3313 = vpop.f32.mrb[0].mxu0
  %v3314 = vpop.f32.mrb[0].mxu0
  %v3315 = vadd.f32 0.0, %v3314
  %v3316 = vpop.f32.mrb[0].mxu0
  %3317 = vmatprep.mubr.bf16.mxu0 0
  %3318 = vmatmul.mubr.bf16.gmra.mrb[0].mxu0 %v2050
  %v3319 = vpop.f32.mrb[0].mxu0
  %v3320 = vadd.f32 0.0, %v3319
  %v3321 = vpop.f32.mrb[0].mxu0
  %v3322 = vpop.f32.mrb[0].mxu0
  %v3323 = vadd.f32 0.0, %v3322
  %v3324 = vpop.f32.mrb[0].mxu0
  %3325 = vmatprep.mubr.bf16.mxu0 0
  %3326 = vmatmul.mubr.bf16.gmra.mrb[0].mxu0 %v2053
  %v3327 = vpop.f32.mrb[0].mxu0
  %v3328 = vadd.f32 0.0, %v3327
  %v3329 = vpop.f32.mrb[0].mxu0
  %v3330 = vpop.f32.mrb[0].mxu0
  %v3331 = vadd.f32 0.0, %v3330
  %v3332 = vpop.f32.mrb[0].mxu0
  %3333 = vmatprep.mubr.bf16.mxu0 0
  %3334 = vmatmul.mubr.bf16.gmra.mrb[0].mxu0 %v2056
  %v3335 = vpop.f32.mrb[0].mxu0
  %v3336 = vadd.f32 0.0, %v3335
  %v3337 = vpop.f32.mrb[0].mxu0
  %v3338 = vpop.f32.mrb[0].mxu0
  %v3339 = vadd.f32 0.0, %v3338
  %v3340 = vpop.f32.mrb[0].mxu0
  %3341 = vmatprep.mubr.bf16.mxu0 0
  %3342 = vmatmul.mubr.bf16.gmra.mrb[0].mxu0 %v2059
  %v3343 = vpop.f32.mrb[0].mxu0
  %v3344 = vadd.f32 0.0, %v3343
  %v3345 = vpop.f32.mrb[0].mxu0
  %v3346 = vpop.f32.mrb[0].mxu0
  %v3347 = vadd.f32 0.0, %v3346
  %v3348 = vpop.f32.mrb[0].mxu0
  %3349 = vmatprep.mubr.bf16.mxu0 0
  %3350 = vmatmul.mubr.bf16.gmra.mrb[0].mxu0 %v2062
  %v3351 = vpop.f32.mrb[0].mxu0
  %v3352 = vadd.f32 0.0, %v3351
  %v3353 = vpop.f32.mrb[0].mxu0
  %v3354 = vpop.f32.mrb[0].mxu0
  %v3355 = vadd.f32 0.0, %v3354
  %v3356 = vpop.f32.mrb[0].mxu0
  %3357 = vmatprep.mubr.bf16.mxu0 0
  %3358 = vmatmul.mubr.bf16.gmra.mrb[0].mxu0 %v2065
  %v3359 = vpop.f32.mrb[0].mxu0
  %v3360 = vadd.f32 0.0, %v3359
  %v3361 = vpop.f32.mrb[0].mxu0
  %v3362 = vpop.f32.mrb[0].mxu0
  %v3363 = vadd.f32 0.0, %v3362
  %v3364 = vpop.f32.mrb[0].mxu0
  %3365 = vmatprep.mubr.bf16.mxu0 0
  %3366 = vmatmul.mubr.bf16.gmra.mrb[0].mxu0 %v2068
  %v3367 = vpop.f32.mrb[0].mxu0
  %v3368 = vadd.f32 0.0, %v3367
  %v3369 = vpop.f32.mrb[0].mxu0
  %v3370 = vpop.f32.mrb[0].mxu0
  %v3371 = vadd.f32 0.0, %v3370
  %v3372 = vpop.f32.mrb[0].mxu0
  %3373 = vmatprep.mubr.bf16.mxu0 0
  %3374 = vmatmul.mubr.bf16.gmra.mrb[0].mxu0 %v2071
  %v3375 = vpop.f32.mrb[0].mxu0
  %v3376 = vadd.f32 0.0, %v3375
  %v3377 = vpop.f32.mrb[0].mxu0
  %v3378 = vpop.f32.mrb[0].mxu0
  %v3379 = vadd.f32 0.0, %v3378
  %v3380 = vpop.f32.mrb[0].mxu0
  %3381 = vmatprep.mubr.bf16.mxu0 0
  %3382 = vmatmul.mubr.bf16.gmra.mrb[0].mxu0 %v2074
  %v3383 = vpop.f32.mrb[0].mxu0
  %v3384 = vadd.f32 0.0, %v3383
  %v3385 = vpop.f32.mrb[0].mxu0
  %v3386 = vpop.f32.mrb[0].mxu0
  %v3387 = vadd.f32 0.0, %v3386
  %v3388 = vpop.f32.mrb[0].mxu0
  %3389 = vmatprep.mubr.bf16.mxu0 0
  %3390 = vmatmul.mubr.bf16.gmra.mrb[0].mxu0 %v2077
  %v3391 = vpop.f32.mrb[0].mxu0
  %v3392 = vadd.f32 0.0, %v3391
  %v3393 = vpop.f32.mrb[0].mxu0
  %v3394 = vpop.f32.mrb[0].mxu0
  %v3395 = vadd.f32 0.0, %v3394
  %v3396 = vpop.f32.mrb[0].mxu0
  %3397 = vmatprep.mubr.bf16.mxu0 0
  %3398 = vmatmul.mubr.bf16.gmra.mrb[0].mxu0 %v3237
  %v3399 = vpop.f32.mrb[0].mxu0
  %v3400 = vadd.f32 0.0, %v3399
  %v3401 = vpop.f32.mrb[0].mxu0
  %v3402 = vpop.f32.mrb[0].mxu0
  %v3403 = vadd.f32 0.0, %v3402
  %v3404 = vpop.f32.mrb[0].mxu0
  %3405 = vmatprep.mubr.bf16.mxu0 0
  %3406 = vmatmul.mubr.bf16.gmra.mrb[0].mxu0 %v2080
  %v3407 = vpop.f32.mrb[0].mxu0
  %v3408 = vadd.f32 0.0, %v3407
  %v3409 = vpop.f32.mrb[0].mxu0
  %v3410 = vpop.f32.mrb[0].mxu0
  %v3411 = vadd.f32 0.0, %v3410
  %v3412 = vpop.f32.mrb[0].mxu0
  %3413 = vmatprep.mubr.bf16.mxu0 0
  %3414 = vmatmul.mubr.bf16.gmra.mrb[0].mxu0 %v2083
  %v3415 = vpop.f32.mrb[0].mxu0
  %v3416 = vadd.f32 0.0, %v3415
  %v3417 = vpop.f32.mrb[0].mxu0
  %v3418 = vpop.f32.mrb[0].mxu0
  %v3419 = vadd.f32 0.0, %v3418
  %v3420 = vpop.f32.mrb[0].mxu0
  %3421 = vmatprep.mubr.bf16.mxu0 0
  %3422 = vmatmul.mubr.bf16.gmra.mrb[0].mxu0 %v2086
  %v3423 = vpop.f32.mrb[0].mxu0
  %v3424 = vadd.f32 0.0, %v3423
  %v3425 = vpop.f32.mrb[0].mxu0
  %v3426 = vpop.f32.mrb[0].mxu0
  %v3427 = vadd.f32 0.0, %v3426
  %v3428 = vpop.f32.mrb[0].mxu0
  %3429 = vmatprep.mubr.bf16.mxu0 0
  %3430 = vmatmul.mubr.bf16.gmra.mrb[0].mxu0 %v2089
  %v3431 = vpop.f32.mrb[0].mxu0
  %v3432 = vadd.f32 0.0, %v3431
  %v3433 = vpop.f32.mrb[0].mxu0
  %v3434 = vpop.f32.mrb[0].mxu0
  %v3435 = vadd.f32 0.0, %v3434
  %v3436 = vpop.f32.mrb[0].mxu0
  %3437 = vmatprep.mubr.bf16.mxu0 0
  %3438 = vmatmul.mubr.bf16.gmra.mrb[0].mxu0 %v2092
  %v3439 = vpop.f32.mrb[0].mxu0
  %v3440 = vadd.f32 0.0, %v3439
  %v3441 = vpop.f32.mrb[0].mxu0
  %v3442 = vpop.f32.mrb[0].mxu0
  %v3443 = vadd.f32 0.0, %v3442
  %v3444 = vpop.f32.mrb[0].mxu0
  %3445 = vmatprep.mubr.bf16.mxu0 0
  %3446 = vmatmul.mubr.bf16.gmra.mrb[0].mxu0 %v2095
  %v3447 = vpop.f32.mrb[0].mxu0
  %v3448 = vadd.f32 0.0, %v3447
  %v3449 = vpop.f32.mrb[0].mxu0
  %v3450 = vpop.f32.mrb[0].mxu0
  %v3451 = vadd.f32 0.0, %v3450
  %v3452 = vpop.f32.mrb[0].mxu0
  %3453 = vmatprep.mubr.bf16.mxu0 0
  %3454 = vmatmul.mubr.bf16.gmra.mrb[0].mxu0 %v2098
  %v3455 = vpop.f32.mrb[0].mxu0
  %v3456 = vadd.f32 0.0, %v3455
  %v3457 = vpop.f32.mrb[0].mxu0
  %v3458 = vpop.f32.mrb[0].mxu0
  %v3459 = vadd.f32 0.0, %v3458
  %v3460 = vpop.f32.mrb[0].mxu0
  %3461 = vmatprep.mubr.bf16.mxu0 0
  %3462 = vmatmul.mubr.bf16.gmra.mrb[0].mxu0 %v2101
  %v3463 = vpop.f32.mrb[0].mxu0
  %v3464 = vadd.f32 0.0, %v3463
  %v3465 = vpop.f32.mrb[0].mxu0
  %v3466 = vpop.f32.mrb[0].mxu0
  %v3467 = vadd.f32 0.0, %v3466
  %v3468 = vpop.f32.mrb[0].mxu0
  %3469 = vmatprep.mubr.bf16.mxu0 0
  %3470 = vmatmul.mubr.bf16.gmra.mrb[0].mxu0 %v2104
  %v3471 = vpop.f32.mrb[0].mxu0
  %v3472 = vadd.f32 0.0, %v3471
  %v3473 = vpop.f32.mrb[0].mxu0
  %v3474 = vpop.f32.mrb[0].mxu0
  %v3475 = vadd.f32 0.0, %v3474
  %v3476 = vpop.f32.mrb[0].mxu0
  %3477 = vmatprep.mubr.bf16.mxu0 0
  %3478 = vmatmul.mubr.bf16.gmra.mrb[0].mxu0 %v2107
  %v3479 = vpop.f32.mrb[0].mxu0
  %v3480 = vadd.f32 0.0, %v3479
  %v3481 = vpop.f32.mrb[0].mxu0
  %v3482 = vpop.f32.mrb[0].mxu0
  %v3483 = vadd.f32 0.0, %v3482
  %v3484 = vpop.f32.mrb[0].mxu0
  %3485 = vmatprep.mubr.bf16.mxu0 0
  %3486 = vmatmul.mubr.bf16.gmra.mrb[0].mxu0 %v2110
  %v3487 = vpop.f32.mrb[0].mxu0
  %v3488 = vadd.f32 0.0, %v3487
  %v3489 = vpop.f32.mrb[0].mxu0
  %v3490 = vpop.f32.mrb[0].mxu0
  %v3491 = vadd.f32 0.0, %v3490
  %v3492 = vpop.f32.mrb[0].mxu0
  %3493 = vmatprep.mubr.bf16.mxu0 0
  %3494 = vmatmul.mubr.bf16.gmra.mrb[0].mxu0 %v2113
  %v3495 = vpop.f32.mrb[0].mxu0
  %v3496 = vadd.f32 0.0, %v3495
  %v3497 = vpop.f32.mrb[0].mxu0
  %v3498 = vpop.f32.mrb[0].mxu0
  %v3499 = vadd.f32 0.0, %v3498
  %v3500 = vpop.f32.mrb[0].mxu0
  %3501 = vmatprep.mubr.bf16.mxu0 0
  %3502 = vmatmul.mubr.bf16.gmra.mrb[0].mxu0 %v2116
  %v3503 = vpop.f32.mrb[0].mxu0
  %v3504 = vadd.f32 0.0, %v3503
  %v3505 = vpop.f32.mrb[0].mxu0
  %v3506 = vpop.f32.mrb[0].mxu0
  %v3507 = vadd.f32 0.0, %v3506
  %v3508 = vpop.f32.mrb[0].mxu0
  %3509 = vmatprep.mubr.bf16.mxu0 0
  %3510 = vmatmul.mubr.bf16.gmra.mrb[0].mxu0 %v2119
  %v3511 = vpop.f32.mrb[0].mxu0
  %v3512 = vadd.f32 0.0, %v3511
  %v3513 = vpop.f32.mrb[0].mxu0
  %v3514 = vpop.f32.mrb[0].mxu0
  %v3515 = vadd.f32 0.0, %v3514
  %v3516 = vpop.f32.mrb[0].mxu0
  %3517 = vmatprep.mubr.bf16.mxu0 0
  %3518 = vmatmul.mubr.bf16.gmra.mrb[0].mxu0 %v2122
  %v3519 = vpop.f32.mrb[0].mxu0
  %v3520 = vadd.f32 0.0, %v3519
  %v3521 = vpop.f32.mrb[0].mxu0
  %v3522 = vpop.f32.mrb[0].mxu0
  %v3523 = vadd.f32 0.0, %v3522
  %v3524 = vpop.f32.mrb[0].mxu0
  %3525 = vmatprep.mubr.bf16.mxu0 0
  %3526 = vmatmul.mubr.bf16.gmra.mrb[0].mxu0 %v3240
  %v3527 = vpop.f32.mrb[0].mxu0
  %v3528 = vadd.f32 0.0, %v3527
  %v3529 = vpop.f32.mrb[0].mxu0
  %v3530 = vpop.f32.mrb[0].mxu0
  %v3531 = vadd.f32 0.0, %v3530
  %v3532 = vpop.f32.mrb[0].mxu0
  %3533 = vdwg.mxu0
  %v3534 = vadd.f32 %v3162, %v3280
  %v3535 = vadd.f32 %v3163, %v3283
  %v3536 = vadd.f32 %v3164, %v3288
  %v3537 = vadd.f32 %v3165, %v3291
  %v3538 = vadd.f32 %v3166, %v3296
  %v3539 = vadd.f32 %v3167, %v3299
  %v3540 = vadd.f32 %v3168, %v3304
  %v3541 = vadd.f32 %v3169, %v3307
  %v3542 = vadd.f32 %v3170, %v3312
  %v3543 = vadd.f32 %v3171, %v3315
  %v3544 = vadd.f32 %v3172, %v3320
  %v3545 = vadd.f32 %v3173, %v3323
  %v3546 = vadd.f32 %v3174, %v3328
  %v3547 = vadd.f32 %v3175, %v3331
  %v3548 = vadd.f32 %v3176, %v3336
  %v3549 = vadd.f32 %v3177, %v3339
  %v3550 = vadd.f32 %v3178, %v3344
  %v3551 = vadd.f32 %v3179, %v3347
  %v3552 = vadd.f32 %v3180, %v3352
  %v3553 = vadd.f32 %v3181, %v3355
  %v3554 = vadd.f32 %v3182, %v3360
  %v3555 = vadd.f32 %v3183, %v3363
  %v3556 = vadd.f32 %v3184, %v3368
  %v3557 = vadd.f32 %v3185, %v3371
  %v3558 = vadd.f32 %v3186, %v3376
  %v3559 = vadd.f32 %v3187, %v3379
  %v3560 = vadd.f32 %v3188, %v3384
  %v3561 = vadd.f32 %v3189, %v3387
  %v3562 = vadd.f32 %v3190, %v3392
  %v3563 = vadd.f32 %v3191, %v3395
  %v3564 = vadd.f32 %v3192, %v3400
  %v3565 = vadd.f32 %v3193, %v3403
  %v3566 = vadd.f32 %v3194, %v3408
  %v3567 = vadd.f32 %v3195, %v3411
  %v3568 = vadd.f32 %v3196, %v3416
  %v3569 = vadd.f32 %v3197, %v3419
  %v3570 = vadd.f32 %v3198, %v3424
  %v3571 = vadd.f32 %v3199, %v3427
  %v3572 = vadd.f32 %v3200, %v3432
  %v3573 = vadd.f32 %v3201, %v3435
  %v3574 = vadd.f32 %v3202, %v3440
  %v3575 = vadd.f32 %v3203, %v3443
  %v3576 = vadd.f32 %v3204, %v3448
  %v3577 = vadd.f32 %v3205, %v3451
  %v3578 = vadd.f32 %v3206, %v3456
  %v3579 = vadd.f32 %v3207, %v3459
  %v3580 = vadd.f32 %v3208, %v3464
  %v3581 = vadd.f32 %v3209, %v3467
  %v3582 = vadd.f32 %v3210, %v3472
  %v3583 = vadd.f32 %v3211, %v3475
  %v3584 = vadd.f32 %v3212, %v3480
  %v3585 = vadd.f32 %v3213, %v3483
  %v3586 = vadd.f32 %v3214, %v3488
  %v3587 = vadd.f32 %v3215, %v3491
  %v3588 = vadd.f32 %v3216, %v3496
  %v3589 = vadd.f32 %v3217, %v3499
  %v3590 = vadd.f32 %v3218, %v3504
  %v3591 = vadd.f32 %v3219, %v3507
  %v3592 = vadd.f32 %v3220, %v3512
  %v3593 = vadd.f32 %v3221, %v3515
  %v3594 = vadd.f32 %v3222, %v3520
  %v3595 = vadd.f32 %v3223, %v3523
  %v3596 = vadd.f32 %v3224, %v3528
  %v3597 = vadd.f32 %v3225, %v3531
  %v3599 = vsel %vm1228, %v392, 0
  %3601 = vmatprep.subr.bf16.mxu0 0
  %3602 = vmatpush1.bf16.msra.mxu0 %v3599
  %3603 = vmatprep.subr.bf16.mxu0 0
  %3604 = vmatpush1.bf16.msra.mxu0 0
  %3605 = vmatprep.subr.bf16.mxu0 0
  %3606 = vmatpush1.bf16.msra.mxu0 0
  %3607 = vmatprep.subr.bf16.mxu0 0
  %3608 = vmatpush1.bf16.msra.mxu0 0
  %3609 = vmatprep.subr.bf16.mxu0 0
  %3610 = vmatpush1.bf16.msra.mxu0 0
  %3611 = vmatprep.subr.bf16.mxu0 0
  %3612 = vmatpush1.bf16.msra.mxu0 0
  %3613 = vmatprep.subr.bf16.mxu0 0
  %3614 = vmatpush1.bf16.msra.mxu0 0
  %3615 = vmatprep.subr.bf16.mxu0 0
  %3616 = vmatpush1.bf16.msra.mxu0 0
  %3617 = vmatprep.subr.bf16.mxu0 0
  %3618 = vmatpush1.bf16.msra.mxu0 0
  %3619 = vmatprep.subr.bf16.mxu0 0
  %3620 = vmatpush1.bf16.msra.mxu0 0
  %3621 = vmatprep.subr.bf16.mxu0 0
  %3622 = vmatpush1.bf16.msra.mxu0 0
  %3623 = vmatprep.subr.bf16.mxu0 0
  %3624 = vmatpush1.bf16.msra.mxu0 0
  %3625 = vmatprep.subr.bf16.mxu0 0
  %3626 = vmatpush1.bf16.msra.mxu0 0
  %3627 = vmatprep.subr.bf16.mxu0 0
  %3628 = vmatpush1.bf16.msra.mxu0 0
  %3629 = vmatprep.subr.bf16.mxu0 0
  %3630 = vmatpush1.bf16.msra.mxu0 0
  %3631 = vmatprep.subr.bf16.mxu0 0
  %3632 = vmatpush1.bf16.msra.mxu0 0
  %3633 = vmatprep.mubr.bf16.mxu0 0
  %3634 = vmatmul.mubr.bf16.gmra.mrb[0].mxu0 %v1525
  %v3635 = vpop.f32.mrb[0].mxu0
  %v3636 = vadd.f32 0.0, %v3635
  %v3637 = vpop.f32.mrb[0].mxu0
  %v3638 = vpop.f32.mrb[0].mxu0
  %v3639 = vadd.f32 0.0, %v3638
  %v3640 = vpop.f32.mrb[0].mxu0
  %3641 = vmatprep.mubr.bf16.mxu0 0
  %3642 = vmatmul.mubr.bf16.gmra.mrb[0].mxu0 %v1527
  %v3643 = vpop.f32.mrb[0].mxu0
  %v3644 = vadd.f32 0.0, %v3643
  %v3645 = vpop.f32.mrb[0].mxu0
  %v3646 = vpop.f32.mrb[0].mxu0
  %v3647 = vadd.f32 0.0, %v3646
  %v3648 = vpop.f32.mrb[0].mxu0
  %3649 = vmatprep.mubr.bf16.mxu0 0
  %3650 = vmatmul.mubr.bf16.gmra.mrb[0].mxu0 %v1529
  %v3651 = vpop.f32.mrb[0].mxu0
  %v3652 = vadd.f32 0.0, %v3651
  %v3653 = vpop.f32.mrb[0].mxu0
  %v3654 = vpop.f32.mrb[0].mxu0
  %v3655 = vadd.f32 0.0, %v3654
  %v3656 = vpop.f32.mrb[0].mxu0
  %3657 = vmatprep.mubr.bf16.mxu0 0
  %3658 = vmatmul.mubr.bf16.gmra.mrb[0].mxu0 %v1531
  %v3659 = vpop.f32.mrb[0].mxu0
  %v3660 = vadd.f32 0.0, %v3659
  %v3661 = vpop.f32.mrb[0].mxu0
  %v3662 = vpop.f32.mrb[0].mxu0
  %v3663 = vadd.f32 0.0, %v3662
  %v3664 = vpop.f32.mrb[0].mxu0
  %3665 = vmatprep.mubr.bf16.mxu0 0
  %3666 = vmatmul.mubr.bf16.gmra.mrb[0].mxu0 %v1533
  %v3667 = vpop.f32.mrb[0].mxu0
  %v3668 = vadd.f32 0.0, %v3667
  %v3669 = vpop.f32.mrb[0].mxu0
  %v3670 = vpop.f32.mrb[0].mxu0
  %v3671 = vadd.f32 0.0, %v3670
  %v3672 = vpop.f32.mrb[0].mxu0
  %3673 = vmatprep.mubr.bf16.mxu0 0
  %3674 = vmatmul.mubr.bf16.gmra.mrb[0].mxu0 %v1535
  %v3675 = vpop.f32.mrb[0].mxu0
  %v3676 = vadd.f32 0.0, %v3675
  %v3677 = vpop.f32.mrb[0].mxu0
  %v3678 = vpop.f32.mrb[0].mxu0
  %v3679 = vadd.f32 0.0, %v3678
  %v3680 = vpop.f32.mrb[0].mxu0
  %3681 = vmatprep.mubr.bf16.mxu0 0
  %3682 = vmatmul.mubr.bf16.gmra.mrb[0].mxu0 %v1537
  %v3683 = vpop.f32.mrb[0].mxu0
  %v3684 = vadd.f32 0.0, %v3683
  %v3685 = vpop.f32.mrb[0].mxu0
  %v3686 = vpop.f32.mrb[0].mxu0
  %v3687 = vadd.f32 0.0, %v3686
  %v3688 = vpop.f32.mrb[0].mxu0
  %3689 = vmatprep.mubr.bf16.mxu0 0
  %3690 = vmatmul.mubr.bf16.gmra.mrb[0].mxu0 %v1539
  %v3691 = vpop.f32.mrb[0].mxu0
  %v3692 = vadd.f32 0.0, %v3691
  %v3693 = vpop.f32.mrb[0].mxu0
  %v3694 = vpop.f32.mrb[0].mxu0
  %v3695 = vadd.f32 0.0, %v3694
  %v3696 = vpop.f32.mrb[0].mxu0
  %3697 = vmatprep.mubr.bf16.mxu0 0
  %3698 = vmatmul.mubr.bf16.gmra.mrb[0].mxu0 %v1541
  %v3699 = vpop.f32.mrb[0].mxu0
  %v3700 = vadd.f32 0.0, %v3699
  %v3701 = vpop.f32.mrb[0].mxu0
  %v3702 = vpop.f32.mrb[0].mxu0
  %v3703 = vadd.f32 0.0, %v3702
  %v3704 = vpop.f32.mrb[0].mxu0
  %3705 = vmatprep.mubr.bf16.mxu0 0
  %3706 = vmatmul.mubr.bf16.gmra.mrb[0].mxu0 %v1543
  %v3707 = vpop.f32.mrb[0].mxu0
  %v3708 = vadd.f32 0.0, %v3707
  %v3709 = vpop.f32.mrb[0].mxu0
  %v3710 = vpop.f32.mrb[0].mxu0
  %v3711 = vadd.f32 0.0, %v3710
  %v3712 = vpop.f32.mrb[0].mxu0
  %3713 = vmatprep.mubr.bf16.mxu0 0
  %3714 = vmatmul.mubr.bf16.gmra.mrb[0].mxu0 %v1545
  %v3715 = vpop.f32.mrb[0].mxu0
  %v3716 = vadd.f32 0.0, %v3715
  %v3717 = vpop.f32.mrb[0].mxu0
  %v3718 = vpop.f32.mrb[0].mxu0
  %v3719 = vadd.f32 0.0, %v3718
  %v3720 = vpop.f32.mrb[0].mxu0
  %3721 = vmatprep.mubr.bf16.mxu0 0
  %3722 = vmatmul.mubr.bf16.gmra.mrb[0].mxu0 %v1547
  %v3723 = vpop.f32.mrb[0].mxu0
  %v3724 = vadd.f32 0.0, %v3723
  %v3725 = vpop.f32.mrb[0].mxu0
  %v3726 = vpop.f32.mrb[0].mxu0
  %v3727 = vadd.f32 0.0, %v3726
  %v3728 = vpop.f32.mrb[0].mxu0
  %3729 = vmatprep.mubr.bf16.mxu0 0
  %3730 = vmatmul.mubr.bf16.gmra.mrb[0].mxu0 %v1549
  %v3731 = vpop.f32.mrb[0].mxu0
  %v3732 = vadd.f32 0.0, %v3731
  %v3733 = vpop.f32.mrb[0].mxu0
  %v3734 = vpop.f32.mrb[0].mxu0
  %v3735 = vadd.f32 0.0, %v3734
  %v3736 = vpop.f32.mrb[0].mxu0
  %3737 = vmatprep.mubr.bf16.mxu0 0
  %3738 = vmatmul.mubr.bf16.gmra.mrb[0].mxu0 %v1551
  %v3739 = vpop.f32.mrb[0].mxu0
  %v3740 = vadd.f32 0.0, %v3739
  %v3741 = vpop.f32.mrb[0].mxu0
  %v3742 = vpop.f32.mrb[0].mxu0
  %v3743 = vadd.f32 0.0, %v3742
  %v3744 = vpop.f32.mrb[0].mxu0
  %3745 = vmatprep.mubr.bf16.mxu0 0
  %3746 = vmatmul.mubr.bf16.gmra.mrb[0].mxu0 %v2481
  %v3747 = vpop.f32.mrb[0].mxu0
  %v3748 = vadd.f32 0.0, %v3747
  %v3749 = vpop.f32.mrb[0].mxu0
  %v3750 = vpop.f32.mrb[0].mxu0
  %v3751 = vadd.f32 0.0, %v3750
  %v3752 = vpop.f32.mrb[0].mxu0
  %3753 = vmatprep.mubr.bf16.mxu0 0
  %3754 = vmatmul.mubr.bf16.gmra.mrb[0].mxu0 %v1521
  %v3755 = vpop.f32.mrb[0].mxu0
  %v3756 = vadd.f32 0.0, %v3755
  %v3757 = vpop.f32.mrb[0].mxu0
  %v3758 = vpop.f32.mrb[0].mxu0
  %v3759 = vadd.f32 0.0, %v3758
  %v3760 = vpop.f32.mrb[0].mxu0
  %3761 = vmatprep.mubr.bf16.mxu0 0
  %3762 = vmatmul.mubr.bf16.gmra.mrb[0].mxu0 %v1555
  %v3763 = vpop.f32.mrb[0].mxu0
  %v3764 = vadd.f32 0.0, %v3763
  %v3765 = vpop.f32.mrb[0].mxu0
  %v3766 = vpop.f32.mrb[0].mxu0
  %v3767 = vadd.f32 0.0, %v3766
  %v3768 = vpop.f32.mrb[0].mxu0
  %3769 = vmatprep.mubr.bf16.mxu0 0
  %3770 = vmatmul.mubr.bf16.gmra.mrb[0].mxu0 %v1557
  %v3771 = vpop.f32.mrb[0].mxu0
  %v3772 = vadd.f32 0.0, %v3771
  %v3773 = vpop.f32.mrb[0].mxu0
  %v3774 = vpop.f32.mrb[0].mxu0
  %v3775 = vadd.f32 0.0, %v3774
  %v3776 = vpop.f32.mrb[0].mxu0
  %3777 = vmatprep.mubr.bf16.mxu0 0
  %3778 = vmatmul.mubr.bf16.gmra.mrb[0].mxu0 %v1559
  %v3779 = vpop.f32.mrb[0].mxu0
  %v3780 = vadd.f32 0.0, %v3779
  %v3781 = vpop.f32.mrb[0].mxu0
  %v3782 = vpop.f32.mrb[0].mxu0
  %v3783 = vadd.f32 0.0, %v3782
  %v3784 = vpop.f32.mrb[0].mxu0
  %3785 = vmatprep.mubr.bf16.mxu0 0
  %3786 = vmatmul.mubr.bf16.gmra.mrb[0].mxu0 %v1561
  %v3787 = vpop.f32.mrb[0].mxu0
  %v3788 = vadd.f32 0.0, %v3787
  %v3789 = vpop.f32.mrb[0].mxu0
  %v3790 = vpop.f32.mrb[0].mxu0
  %v3791 = vadd.f32 0.0, %v3790
  %v3792 = vpop.f32.mrb[0].mxu0
  %3793 = vmatprep.mubr.bf16.mxu0 0
  %3794 = vmatmul.mubr.bf16.gmra.mrb[0].mxu0 %v1563
  %v3795 = vpop.f32.mrb[0].mxu0
  %v3796 = vadd.f32 0.0, %v3795
  %v3797 = vpop.f32.mrb[0].mxu0
  %v3798 = vpop.f32.mrb[0].mxu0
  %v3799 = vadd.f32 0.0, %v3798
  %v3800 = vpop.f32.mrb[0].mxu0
  %3801 = vmatprep.mubr.bf16.mxu0 0
  %3802 = vmatmul.mubr.bf16.gmra.mrb[0].mxu0 %v1565
  %v3803 = vpop.f32.mrb[0].mxu0
  %v3804 = vadd.f32 0.0, %v3803
  %v3805 = vpop.f32.mrb[0].mxu0
  %v3806 = vpop.f32.mrb[0].mxu0
  %v3807 = vadd.f32 0.0, %v3806
  %v3808 = vpop.f32.mrb[0].mxu0
  %3809 = vmatprep.mubr.bf16.mxu0 0
  %3810 = vmatmul.mubr.bf16.gmra.mrb[0].mxu0 %v1567
  %v3811 = vpop.f32.mrb[0].mxu0
  %v3812 = vadd.f32 0.0, %v3811
  %v3813 = vpop.f32.mrb[0].mxu0
  %v3814 = vpop.f32.mrb[0].mxu0
  %v3815 = vadd.f32 0.0, %v3814
  %v3816 = vpop.f32.mrb[0].mxu0
  %3817 = vmatprep.mubr.bf16.mxu0 0
  %3818 = vmatmul.mubr.bf16.gmra.mrb[0].mxu0 %v1569
  %v3819 = vpop.f32.mrb[0].mxu0
  %v3820 = vadd.f32 0.0, %v3819
  %v3821 = vpop.f32.mrb[0].mxu0
  %v3822 = vpop.f32.mrb[0].mxu0
  %v3823 = vadd.f32 0.0, %v3822
  %v3824 = vpop.f32.mrb[0].mxu0
  %3825 = vmatprep.mubr.bf16.mxu0 0
  %3826 = vmatmul.mubr.bf16.gmra.mrb[0].mxu0 %v1571
  %v3827 = vpop.f32.mrb[0].mxu0
  %v3828 = vadd.f32 0.0, %v3827
  %v3829 = vpop.f32.mrb[0].mxu0
  %v3830 = vpop.f32.mrb[0].mxu0
  %v3831 = vadd.f32 0.0, %v3830
  %v3832 = vpop.f32.mrb[0].mxu0
  %3833 = vmatprep.mubr.bf16.mxu0 0
  %3834 = vmatmul.mubr.bf16.gmra.mrb[0].mxu0 %v1573
  %v3835 = vpop.f32.mrb[0].mxu0
  %v3836 = vadd.f32 0.0, %v3835
  %v3837 = vpop.f32.mrb[0].mxu0
  %v3838 = vpop.f32.mrb[0].mxu0
  %v3839 = vadd.f32 0.0, %v3838
  %v3840 = vpop.f32.mrb[0].mxu0
  %3841 = vmatprep.mubr.bf16.mxu0 0
  %3842 = vmatmul.mubr.bf16.gmra.mrb[0].mxu0 %v1575
  %v3843 = vpop.f32.mrb[0].mxu0
  %v3844 = vadd.f32 0.0, %v3843
  %v3845 = vpop.f32.mrb[0].mxu0
  %v3846 = vpop.f32.mrb[0].mxu0
  %v3847 = vadd.f32 0.0, %v3846
  %v3848 = vpop.f32.mrb[0].mxu0
  %3849 = vmatprep.mubr.bf16.mxu0 0
  %3850 = vmatmul.mubr.bf16.gmra.mrb[0].mxu0 %v1577
  %v3851 = vpop.f32.mrb[0].mxu0
  %v3852 = vadd.f32 0.0, %v3851
  %v3853 = vpop.f32.mrb[0].mxu0
  %v3854 = vpop.f32.mrb[0].mxu0
  %v3855 = vadd.f32 0.0, %v3854
  %v3856 = vpop.f32.mrb[0].mxu0
  %3857 = vmatprep.mubr.bf16.mxu0 0
  %3858 = vmatmul.mubr.bf16.gmra.mrb[0].mxu0 %v1579
  %v3859 = vpop.f32.mrb[0].mxu0
  %v3860 = vadd.f32 0.0, %v3859
  %v3861 = vpop.f32.mrb[0].mxu0
  %v3862 = vpop.f32.mrb[0].mxu0
  %v3863 = vadd.f32 0.0, %v3862
  %v3864 = vpop.f32.mrb[0].mxu0
  %3865 = vmatprep.mubr.bf16.mxu0 0
  %3866 = vmatmul.mubr.bf16.gmra.mrb[0].mxu0 %v1581
  %v3867 = vpop.f32.mrb[0].mxu0
  %v3868 = vadd.f32 0.0, %v3867
  %v3869 = vpop.f32.mrb[0].mxu0
  %v3870 = vpop.f32.mrb[0].mxu0
  %v3871 = vadd.f32 0.0, %v3870
  %v3872 = vpop.f32.mrb[0].mxu0
  %3873 = vmatprep.mubr.bf16.mxu0 0
  %3874 = vmatmul.mubr.bf16.gmra.mrb[0].mxu0 %v2484
  %v3875 = vpop.f32.mrb[0].mxu0
  %v3876 = vadd.f32 0.0, %v3875
  %v3877 = vpop.f32.mrb[0].mxu0
  %v3878 = vpop.f32.mrb[0].mxu0
  %v3879 = vadd.f32 0.0, %v3878
  %v3880 = vpop.f32.mrb[0].mxu0
  %3881 = vmatprep.mubr.bf16.mxu0 0
  %3882 = vmatmul.mubr.bf16.gmra.mrb[0].mxu0 %v1521
  %v3883 = vpop.f32.mrb[0].mxu0
  %v3884 = vadd.f32 0.0, %v3883
  %v3885 = vpop.f32.mrb[0].mxu0
  %v3886 = vpop.f32.mrb[0].mxu0
  %v3887 = vadd.f32 0.0, %v3886
  %v3888 = vpop.f32.mrb[0].mxu0
  %3889 = vdwg.mxu0
  %v3890 = vadd.f32 %v3534, %v3636
  %v3891 = vadd.f32 %v3535, %v3639
  %v3892 = vadd.f32 %v3536, %v3644
  %v3893 = vadd.f32 %v3537, %v3647
  %v3894 = vadd.f32 %v3538, %v3652
  %v3895 = vadd.f32 %v3539, %v3655
  %v3896 = vadd.f32 %v3540, %v3660
  %v3897 = vadd.f32 %v3541, %v3663
  %v3898 = vadd.f32 %v3542, %v3668
  %v3899 = vadd.f32 %v3543, %v3671
  %v3900 = vadd.f32 %v3544, %v3676
  %v3901 = vadd.f32 %v3545, %v3679
  %v3902 = vadd.f32 %v3546, %v3684
  %v3903 = vadd.f32 %v3547, %v3687
  %v3904 = vadd.f32 %v3548, %v3692
  %v3905 = vadd.f32 %v3549, %v3695
  %v3906 = vadd.f32 %v3550, %v3700
  %v3907 = vadd.f32 %v3551, %v3703
  %v3908 = vadd.f32 %v3552, %v3708
  %v3909 = vadd.f32 %v3553, %v3711
  %v3910 = vadd.f32 %v3554, %v3716
  %v3911 = vadd.f32 %v3555, %v3719
  %v3912 = vadd.f32 %v3556, %v3724
  %v3913 = vadd.f32 %v3557, %v3727
  %v3914 = vadd.f32 %v3558, %v3732
  %v3915 = vadd.f32 %v3559, %v3735
  %v3916 = vadd.f32 %v3560, %v3740
  %v3917 = vadd.f32 %v3561, %v3743
  %v3918 = vadd.f32 %v3562, %v3748
  %v3919 = vadd.f32 %v3563, %v3751
  %v3920 = vadd.f32 %v3564, %v3756
  %v3921 = vadd.f32 %v3565, %v3759
  %v3922 = vadd.f32 %v3566, %v3764
  %v3923 = vadd.f32 %v3567, %v3767
  %v3924 = vadd.f32 %v3568, %v3772
  %v3925 = vadd.f32 %v3569, %v3775
  %v3926 = vadd.f32 %v3570, %v3780
  %v3927 = vadd.f32 %v3571, %v3783
  %v3928 = vadd.f32 %v3572, %v3788
  %v3929 = vadd.f32 %v3573, %v3791
  %v3930 = vadd.f32 %v3574, %v3796
  %v3931 = vadd.f32 %v3575, %v3799
  %v3932 = vadd.f32 %v3576, %v3804
  %v3933 = vadd.f32 %v3577, %v3807
  %v3934 = vadd.f32 %v3578, %v3812
  %v3935 = vadd.f32 %v3579, %v3815
  %v3936 = vadd.f32 %v3580, %v3820
  %v3937 = vadd.f32 %v3581, %v3823
  %v3938 = vadd.f32 %v3582, %v3828
  %v3939 = vadd.f32 %v3583, %v3831
  %v3940 = vadd.f32 %v3584, %v3836
  %v3941 = vadd.f32 %v3585, %v3839
  %v3942 = vadd.f32 %v3586, %v3844
  %v3943 = vadd.f32 %v3587, %v3847
  %v3944 = vadd.f32 %v3588, %v3852
  %v3945 = vadd.f32 %v3589, %v3855
  %v3946 = vadd.f32 %v3590, %v3860
  %v3947 = vadd.f32 %v3591, %v3863
  %v3948 = vadd.f32 %v3592, %v3868
  %v3949 = vadd.f32 %v3593, %v3871
  %v3950 = vadd.f32 %v3594, %v3876
  %v3951 = vadd.f32 %v3595, %v3879
  %v3952 = vadd.f32 %v3596, %v3884
  %v3953 = vadd.f32 %v3597, %v3887
  %v3955 = vsel %vm1228, %v393, 0
  %3957 = vmatprep.subr.bf16.mxu0 0
  %3958 = vmatpush1.bf16.msra.mxu0 %v3955
  %3959 = vmatprep.subr.bf16.mxu0 0
  %3960 = vmatpush1.bf16.msra.mxu0 0
  %3961 = vmatprep.subr.bf16.mxu0 0
  %3962 = vmatpush1.bf16.msra.mxu0 0
  %3963 = vmatprep.subr.bf16.mxu0 0
  %3964 = vmatpush1.bf16.msra.mxu0 0
  %3965 = vmatprep.subr.bf16.mxu0 0
  %3966 = vmatpush1.bf16.msra.mxu0 0
  %3967 = vmatprep.subr.bf16.mxu0 0
  %3968 = vmatpush1.bf16.msra.mxu0 0
  %3969 = vmatprep.subr.bf16.mxu0 0
  %3970 = vmatpush1.bf16.msra.mxu0 0
  %3971 = vmatprep.subr.bf16.mxu0 0
  %3972 = vmatpush1.bf16.msra.mxu0 0
  %3973 = vmatprep.subr.bf16.mxu0 0
  %3974 = vmatpush1.bf16.msra.mxu0 0
  %3975 = vmatprep.subr.bf16.mxu0 0
  %3976 = vmatpush1.bf16.msra.mxu0 0
  %3977 = vmatprep.subr.bf16.mxu0 0
  %3978 = vmatpush1.bf16.msra.mxu0 0
  %3979 = vmatprep.subr.bf16.mxu0 0
  %3980 = vmatpush1.bf16.msra.mxu0 0
  %3981 = vmatprep.subr.bf16.mxu0 0
  %3982 = vmatpush1.bf16.msra.mxu0 0
  %3983 = vmatprep.subr.bf16.mxu0 0
  %3984 = vmatpush1.bf16.msra.mxu0 0
  %3985 = vmatprep.subr.bf16.mxu0 0
  %3986 = vmatpush1.bf16.msra.mxu0 0
  %3987 = vmatprep.subr.bf16.mxu0 0
  %3988 = vmatpush1.bf16.msra.mxu0 0
  %3989 = vmatprep.mubr.bf16.mxu0 0
  %3990 = vmatmul.mubr.bf16.gmra.mrb[0].mxu0 %v1142
  %v3991 = vpop.f32.mrb[0].mxu0
  %v3992 = vadd.f32 0.0, %v3991
  %v3993 = vpop.f32.mrb[0].mxu0
  %v3994 = vpop.f32.mrb[0].mxu0
  %v3995 = vadd.f32 0.0, %v3994
  %v3996 = vpop.f32.mrb[0].mxu0
  %3997 = vmatprep.mubr.bf16.mxu0 0
  %3998 = vmatmul.mubr.bf16.gmra.mrb[0].mxu0 %v1145
  %v3999 = vpop.f32.mrb[0].mxu0
  %v4000 = vadd.f32 0.0, %v3999
  %v4001 = vpop.f32.mrb[0].mxu0
  %v4002 = vpop.f32.mrb[0].mxu0
  %v4003 = vadd.f32 0.0, %v4002
  %v4004 = vpop.f32.mrb[0].mxu0
  %4005 = vmatprep.mubr.bf16.mxu0 0
  %4006 = vmatmul.mubr.bf16.gmra.mrb[0].mxu0 %v1148
  %v4007 = vpop.f32.mrb[0].mxu0
  %v4008 = vadd.f32 0.0, %v4007
  %v4009 = vpop.f32.mrb[0].mxu0
  %v4010 = vpop.f32.mrb[0].mxu0
  %v4011 = vadd.f32 0.0, %v4010
  %v4012 = vpop.f32.mrb[0].mxu0
  %4013 = vmatprep.mubr.bf16.mxu0 0
  %4014 = vmatmul.mubr.bf16.gmra.mrb[0].mxu0 %v1151
  %v4015 = vpop.f32.mrb[0].mxu0
  %v4016 = vadd.f32 0.0, %v4015
  %v4017 = vpop.f32.mrb[0].mxu0
  %v4018 = vpop.f32.mrb[0].mxu0
  %v4019 = vadd.f32 0.0, %v4018
  %v4020 = vpop.f32.mrb[0].mxu0
  %4021 = vmatprep.mubr.bf16.mxu0 0
  %4022 = vmatmul.mubr.bf16.gmra.mrb[0].mxu0 %v1154
  %v4023 = vpop.f32.mrb[0].mxu0
  %v4024 = vadd.f32 0.0, %v4023
  %v4025 = vpop.f32.mrb[0].mxu0
  %v4026 = vpop.f32.mrb[0].mxu0
  %v4027 = vadd.f32 0.0, %v4026
  %v4028 = vpop.f32.mrb[0].mxu0
  %4029 = vmatprep.mubr.bf16.mxu0 0
  %4030 = vmatmul.mubr.bf16.gmra.mrb[0].mxu0 %v1157
  %v4031 = vpop.f32.mrb[0].mxu0
  %v4032 = vadd.f32 0.0, %v4031
  %v4033 = vpop.f32.mrb[0].mxu0
  %v4034 = vpop.f32.mrb[0].mxu0
  %v4035 = vadd.f32 0.0, %v4034
  %v4036 = vpop.f32.mrb[0].mxu0
  %4037 = vmatprep.mubr.bf16.mxu0 0
  %4038 = vmatmul.mubr.bf16.gmra.mrb[0].mxu0 %v1160
  %v4039 = vpop.f32.mrb[0].mxu0
  %v4040 = vadd.f32 0.0, %v4039
  %v4041 = vpop.f32.mrb[0].mxu0
  %v4042 = vpop.f32.mrb[0].mxu0
  %v4043 = vadd.f32 0.0, %v4042
  %v4044 = vpop.f32.mrb[0].mxu0
  %4045 = vmatprep.mubr.bf16.mxu0 0
  %4046 = vmatmul.mubr.bf16.gmra.mrb[0].mxu0 %v1163
  %v4047 = vpop.f32.mrb[0].mxu0
  %v4048 = vadd.f32 0.0, %v4047
  %v4049 = vpop.f32.mrb[0].mxu0
  %v4050 = vpop.f32.mrb[0].mxu0
  %v4051 = vadd.f32 0.0, %v4050
  %v4052 = vpop.f32.mrb[0].mxu0
  %4053 = vmatprep.mubr.bf16.mxu0 0
  %4054 = vmatmul.mubr.bf16.gmra.mrb[0].mxu0 %v1166
  %v4055 = vpop.f32.mrb[0].mxu0
  %v4056 = vadd.f32 0.0, %v4055
  %v4057 = vpop.f32.mrb[0].mxu0
  %v4058 = vpop.f32.mrb[0].mxu0
  %v4059 = vadd.f32 0.0, %v4058
  %v4060 = vpop.f32.mrb[0].mxu0
  %4061 = vmatprep.mubr.bf16.mxu0 0
  %4062 = vmatmul.mubr.bf16.gmra.mrb[0].mxu0 %v1169
  %v4063 = vpop.f32.mrb[0].mxu0
  %v4064 = vadd.f32 0.0, %v4063
  %v4065 = vpop.f32.mrb[0].mxu0
  %v4066 = vpop.f32.mrb[0].mxu0
  %v4067 = vadd.f32 0.0, %v4066
  %v4068 = vpop.f32.mrb[0].mxu0
  %4069 = vmatprep.mubr.bf16.mxu0 0
  %4070 = vmatmul.mubr.bf16.gmra.mrb[0].mxu0 %v1172
  %v4071 = vpop.f32.mrb[0].mxu0
  %v4072 = vadd.f32 0.0, %v4071
  %v4073 = vpop.f32.mrb[0].mxu0
  %v4074 = vpop.f32.mrb[0].mxu0
  %v4075 = vadd.f32 0.0, %v4074
  %v4076 = vpop.f32.mrb[0].mxu0
  %4077 = vmatprep.mubr.bf16.mxu0 0
  %4078 = vmatmul.mubr.bf16.gmra.mrb[0].mxu0 %v1175
  %v4079 = vpop.f32.mrb[0].mxu0
  %v4080 = vadd.f32 0.0, %v4079
  %v4081 = vpop.f32.mrb[0].mxu0
  %v4082 = vpop.f32.mrb[0].mxu0
  %v4083 = vadd.f32 0.0, %v4082
  %v4084 = vpop.f32.mrb[0].mxu0
  %4085 = vmatprep.mubr.bf16.mxu0 0
  %4086 = vmatmul.mubr.bf16.gmra.mrb[0].mxu0 %v1178
  %v4087 = vpop.f32.mrb[0].mxu0
  %v4088 = vadd.f32 0.0, %v4087
  %v4089 = vpop.f32.mrb[0].mxu0
  %v4090 = vpop.f32.mrb[0].mxu0
  %v4091 = vadd.f32 0.0, %v4090
  %v4092 = vpop.f32.mrb[0].mxu0
  %4093 = vmatprep.mubr.bf16.mxu0 0
  %4094 = vmatmul.mubr.bf16.gmra.mrb[0].mxu0 %v1181
  %v4095 = vpop.f32.mrb[0].mxu0
  %v4096 = vadd.f32 0.0, %v4095
  %v4097 = vpop.f32.mrb[0].mxu0
  %v4098 = vpop.f32.mrb[0].mxu0
  %v4099 = vadd.f32 0.0, %v4098
  %v4100 = vpop.f32.mrb[0].mxu0
  %4101 = vmatprep.mubr.bf16.mxu0 0
  %4102 = vmatmul.mubr.bf16.gmra.mrb[0].mxu0 %v2865
  %v4103 = vpop.f32.mrb[0].mxu0
  %v4104 = vadd.f32 0.0, %v4103
  %v4105 = vpop.f32.mrb[0].mxu0
  %v4106 = vpop.f32.mrb[0].mxu0
  %v4107 = vadd.f32 0.0, %v4106
  %v4108 = vpop.f32.mrb[0].mxu0
  %4109 = vmatprep.mubr.bf16.mxu0 0
  %4110 = vmatmul.mubr.bf16.gmra.mrb[0].mxu0 %v1136
  %v4111 = vpop.f32.mrb[0].mxu0
  %v4112 = vadd.f32 0.0, %v4111
  %v4113 = vpop.f32.mrb[0].mxu0
  %v4114 = vpop.f32.mrb[0].mxu0
  %v4115 = vadd.f32 0.0, %v4114
  %v4116 = vpop.f32.mrb[0].mxu0
  %4117 = vmatprep.mubr.bf16.mxu0 0
  %4118 = vmatmul.mubr.bf16.gmra.mrb[0].mxu0 %v1187
  %v4119 = vpop.f32.mrb[0].mxu0
  %v4120 = vadd.f32 0.0, %v4119
  %v4121 = vpop.f32.mrb[0].mxu0
  %v4122 = vpop.f32.mrb[0].mxu0
  %v4123 = vadd.f32 0.0, %v4122
  %v4124 = vpop.f32.mrb[0].mxu0
  %4125 = vmatprep.mubr.bf16.mxu0 0
  %4126 = vmatmul.mubr.bf16.gmra.mrb[0].mxu0 %v1190
  %v4127 = vpop.f32.mrb[0].mxu0
  %v4128 = vadd.f32 0.0, %v4127
  %v4129 = vpop.f32.mrb[0].mxu0
  %v4130 = vpop.f32.mrb[0].mxu0
  %v4131 = vadd.f32 0.0, %v4130
  %v4132 = vpop.f32.mrb[0].mxu0
  %4133 = vmatprep.mubr.bf16.mxu0 0
  %4134 = vmatmul.mubr.bf16.gmra.mrb[0].mxu0 %v1193
  %v4135 = vpop.f32.mrb[0].mxu0
  %v4136 = vadd.f32 0.0, %v4135
  %v4137 = vpop.f32.mrb[0].mxu0
  %v4138 = vpop.f32.mrb[0].mxu0
  %v4139 = vadd.f32 0.0, %v4138
  %v4140 = vpop.f32.mrb[0].mxu0
  %4141 = vmatprep.mubr.bf16.mxu0 0
  %4142 = vmatmul.mubr.bf16.gmra.mrb[0].mxu0 %v1196
  %v4143 = vpop.f32.mrb[0].mxu0
  %v4144 = vadd.f32 0.0, %v4143
  %v4145 = vpop.f32.mrb[0].mxu0
  %v4146 = vpop.f32.mrb[0].mxu0
  %v4147 = vadd.f32 0.0, %v4146
  %v4148 = vpop.f32.mrb[0].mxu0
  %4149 = vmatprep.mubr.bf16.mxu0 0
  %4150 = vmatmul.mubr.bf16.gmra.mrb[0].mxu0 %v1199
  %v4151 = vpop.f32.mrb[0].mxu0
  %v4152 = vadd.f32 0.0, %v4151
  %v4153 = vpop.f32.mrb[0].mxu0
  %v4154 = vpop.f32.mrb[0].mxu0
  %v4155 = vadd.f32 0.0, %v4154
  %v4156 = vpop.f32.mrb[0].mxu0
  %4157 = vmatprep.mubr.bf16.mxu0 0
  %4158 = vmatmul.mubr.bf16.gmra.mrb[0].mxu0 %v1202
  %v4159 = vpop.f32.mrb[0].mxu0
  %v4160 = vadd.f32 0.0, %v4159
  %v4161 = vpop.f32.mrb[0].mxu0
  %v4162 = vpop.f32.mrb[0].mxu0
  %v4163 = vadd.f32 0.0, %v4162
  %v4164 = vpop.f32.mrb[0].mxu0
  %4165 = vmatprep.mubr.bf16.mxu0 0
  %4166 = vmatmul.mubr.bf16.gmra.mrb[0].mxu0 %v1205
  %v4167 = vpop.f32.mrb[0].mxu0
  %v4168 = vadd.f32 0.0, %v4167
  %v4169 = vpop.f32.mrb[0].mxu0
  %v4170 = vpop.f32.mrb[0].mxu0
  %v4171 = vadd.f32 0.0, %v4170
  %v4172 = vpop.f32.mrb[0].mxu0
  %4173 = vmatprep.mubr.bf16.mxu0 0
  %4174 = vmatmul.mubr.bf16.gmra.mrb[0].mxu0 %v1208
  %v4175 = vpop.f32.mrb[0].mxu0
  %v4176 = vadd.f32 0.0, %v4175
  %v4177 = vpop.f32.mrb[0].mxu0
  %v4178 = vpop.f32.mrb[0].mxu0
  %v4179 = vadd.f32 0.0, %v4178
  %v4180 = vpop.f32.mrb[0].mxu0
  %4181 = vmatprep.mubr.bf16.mxu0 0
  %4182 = vmatmul.mubr.bf16.gmra.mrb[0].mxu0 %v1211
  %v4183 = vpop.f32.mrb[0].mxu0
  %v4184 = vadd.f32 0.0, %v4183
  %v4185 = vpop.f32.mrb[0].mxu0
  %v4186 = vpop.f32.mrb[0].mxu0
  %v4187 = vadd.f32 0.0, %v4186
  %v4188 = vpop.f32.mrb[0].mxu0
  %4189 = vmatprep.mubr.bf16.mxu0 0
  %4190 = vmatmul.mubr.bf16.gmra.mrb[0].mxu0 %v1214
  %v4191 = vpop.f32.mrb[0].mxu0
  %v4192 = vadd.f32 0.0, %v4191
  %v4193 = vpop.f32.mrb[0].mxu0
  %v4194 = vpop.f32.mrb[0].mxu0
  %v4195 = vadd.f32 0.0, %v4194
  %v4196 = vpop.f32.mrb[0].mxu0
  %4197 = vmatprep.mubr.bf16.mxu0 0
  %4198 = vmatmul.mubr.bf16.gmra.mrb[0].mxu0 %v1217
  %v4199 = vpop.f32.mrb[0].mxu0
  %v4200 = vadd.f32 0.0, %v4199
  %v4201 = vpop.f32.mrb[0].mxu0
  %v4202 = vpop.f32.mrb[0].mxu0
  %v4203 = vadd.f32 0.0, %v4202
  %v4204 = vpop.f32.mrb[0].mxu0
  %4205 = vmatprep.mubr.bf16.mxu0 0
  %4206 = vmatmul.mubr.bf16.gmra.mrb[0].mxu0 %v1220
  %v4207 = vpop.f32.mrb[0].mxu0
  %v4208 = vadd.f32 0.0, %v4207
  %v4209 = vpop.f32.mrb[0].mxu0
  %v4210 = vpop.f32.mrb[0].mxu0
  %v4211 = vadd.f32 0.0, %v4210
  %v4212 = vpop.f32.mrb[0].mxu0
  %4213 = vmatprep.mubr.bf16.mxu0 0
  %4214 = vmatmul.mubr.bf16.gmra.mrb[0].mxu0 %v1223
  %v4215 = vpop.f32.mrb[0].mxu0
  %v4216 = vadd.f32 0.0, %v4215
  %v4217 = vpop.f32.mrb[0].mxu0
  %v4218 = vpop.f32.mrb[0].mxu0
  %v4219 = vadd.f32 0.0, %v4218
  %v4220 = vpop.f32.mrb[0].mxu0
  %4221 = vmatprep.mubr.bf16.mxu0 0
  %4222 = vmatmul.mubr.bf16.gmra.mrb[0].mxu0 %v1226
  %v4223 = vpop.f32.mrb[0].mxu0
  %v4224 = vadd.f32 0.0, %v4223
  %v4225 = vpop.f32.mrb[0].mxu0
  %v4226 = vpop.f32.mrb[0].mxu0
  %v4227 = vadd.f32 0.0, %v4226
  %v4228 = vpop.f32.mrb[0].mxu0
  %4229 = vmatprep.mubr.bf16.mxu0 0
  %4230 = vmatmul.mubr.bf16.gmra.mrb[0].mxu0 %v2868
  %v4231 = vpop.f32.mrb[0].mxu0
  %v4232 = vadd.f32 0.0, %v4231
  %v4233 = vpop.f32.mrb[0].mxu0
  %v4234 = vpop.f32.mrb[0].mxu0
  %v4235 = vadd.f32 0.0, %v4234
  %v4236 = vpop.f32.mrb[0].mxu0
  %4237 = vmatprep.mubr.bf16.mxu0 0
  %4238 = vmatmul.mubr.bf16.gmra.mrb[0].mxu0 %v1136
  %v4239 = vpop.f32.mrb[0].mxu0
  %v4240 = vadd.f32 0.0, %v4239
  %v4241 = vpop.f32.mrb[0].mxu0
  %v4242 = vpop.f32.mrb[0].mxu0
  %v4243 = vadd.f32 0.0, %v4242
  %v4244 = vpop.f32.mrb[0].mxu0
  %4245 = vdwg.mxu0
  %v4246 = vadd.f32 %v3890, %v3992
  %v4247 = vadd.f32 %v3891, %v3995
  %v4248 = vadd.f32 %v3892, %v4000
  %v4249 = vadd.f32 %v3893, %v4003
  %v4250 = vadd.f32 %v3894, %v4008
  %v4251 = vadd.f32 %v3895, %v4011
  %v4252 = vadd.f32 %v3896, %v4016
  %v4253 = vadd.f32 %v3897, %v4019
  %v4254 = vadd.f32 %v3898, %v4024
  %v4255 = vadd.f32 %v3899, %v4027
  %v4256 = vadd.f32 %v3900, %v4032
  %v4257 = vadd.f32 %v3901, %v4035
  %v4258 = vadd.f32 %v3902, %v4040
  %v4259 = vadd.f32 %v3903, %v4043
  %v4260 = vadd.f32 %v3904, %v4048
  %v4261 = vadd.f32 %v3905, %v4051
  %v4262 = vadd.f32 %v3906, %v4056
  %v4263 = vadd.f32 %v3907, %v4059
  %v4264 = vadd.f32 %v3908, %v4064
  %v4265 = vadd.f32 %v3909, %v4067
  %v4266 = vadd.f32 %v3910, %v4072
  %v4267 = vadd.f32 %v3911, %v4075
  %v4268 = vadd.f32 %v3912, %v4080
  %v4269 = vadd.f32 %v3913, %v4083
  %v4270 = vadd.f32 %v3914, %v4088
  %v4271 = vadd.f32 %v3915, %v4091
  %v4272 = vadd.f32 %v3916, %v4096
  %v4273 = vadd.f32 %v3917, %v4099
  %v4274 = vadd.f32 %v3918, %v4104
  %v4275 = vadd.f32 %v3919, %v4107
  %v4276 = vadd.f32 %v3920, %v4112
  %v4277 = vadd.f32 %v3921, %v4115
  %v4278 = vadd.f32 %v3922, %v4120
  %v4279 = vadd.f32 %v3923, %v4123
  %v4280 = vadd.f32 %v3924, %v4128
  %v4281 = vadd.f32 %v3925, %v4131
  %v4282 = vadd.f32 %v3926, %v4136
  %v4283 = vadd.f32 %v3927, %v4139
  %v4284 = vadd.f32 %v3928, %v4144
  %v4285 = vadd.f32 %v3929, %v4147
  %v4286 = vadd.f32 %v3930, %v4152
  %v4287 = vadd.f32 %v3931, %v4155
  %v4288 = vadd.f32 %v3932, %v4160
  %v4289 = vadd.f32 %v3933, %v4163
  %v4290 = vadd.f32 %v3934, %v4168
  %v4291 = vadd.f32 %v3935, %v4171
  %v4292 = vadd.f32 %v3936, %v4176
  %v4293 = vadd.f32 %v3937, %v4179
  %v4294 = vadd.f32 %v3938, %v4184
  %v4295 = vadd.f32 %v3939, %v4187
  %v4296 = vadd.f32 %v3940, %v4192
  %v4297 = vadd.f32 %v3941, %v4195
  %v4298 = vadd.f32 %v3942, %v4200
  %v4299 = vadd.f32 %v3943, %v4203
  %v4300 = vadd.f32 %v3944, %v4208
  %v4301 = vadd.f32 %v3945, %v4211
  %v4302 = vadd.f32 %v3946, %v4216
  %v4303 = vadd.f32 %v3947, %v4219
  %v4304 = vadd.f32 %v3948, %v4224
  %v4305 = vadd.f32 %v3949, %v4227
  %v4306 = vadd.f32 %v3950, %v4232
  %v4307 = vadd.f32 %v3951, %v4235
  %v4308 = vadd.f32 %v3952, %v4240
  %v4309 = vadd.f32 %v3953, %v4243
  %v4311 = vsel %vm1228, %v394, 0
  %4313 = vmatprep.subr.bf16.mxu0 0
  %4314 = vmatpush1.bf16.msra.mxu0 %v4311
  %4315 = vmatprep.subr.bf16.mxu0 0
  %4316 = vmatpush1.bf16.msra.mxu0 0
  %4317 = vmatprep.subr.bf16.mxu0 0
  %4318 = vmatpush1.bf16.msra.mxu0 0
  %4319 = vmatprep.subr.bf16.mxu0 0
  %4320 = vmatpush1.bf16.msra.mxu0 0
  %4321 = vmatprep.subr.bf16.mxu0 0
  %4322 = vmatpush1.bf16.msra.mxu0 0
  %4323 = vmatprep.subr.bf16.mxu0 0
  %4324 = vmatpush1.bf16.msra.mxu0 0
  %4325 = vmatprep.subr.bf16.mxu0 0
  %4326 = vmatpush1.bf16.msra.mxu0 0
  %4327 = vmatprep.subr.bf16.mxu0 0
  %4328 = vmatpush1.bf16.msra.mxu0 0
  %4329 = vmatprep.subr.bf16.mxu0 0
  %4330 = vmatpush1.bf16.msra.mxu0 0
  %4331 = vmatprep.subr.bf16.mxu0 0
  %4332 = vmatpush1.bf16.msra.mxu0 0
  %4333 = vmatprep.subr.bf16.mxu0 0
  %4334 = vmatpush1.bf16.msra.mxu0 0
  %4335 = vmatprep.subr.bf16.mxu0 0
  %4336 = vmatpush1.bf16.msra.mxu0 0
  %4337 = vmatprep.subr.bf16.mxu0 0
  %4338 = vmatpush1.bf16.msra.mxu0 0
  %4339 = vmatprep.subr.bf16.mxu0 0
  %4340 = vmatpush1.bf16.msra.mxu0 0
  %4341 = vmatprep.subr.bf16.mxu0 0
  %4342 = vmatpush1.bf16.msra.mxu0 0
  %4343 = vmatprep.subr.bf16.mxu0 0
  %4344 = vmatpush1.bf16.msra.mxu0 0
  %4345 = vmatprep.mubr.bf16.mxu0 0
  %4346 = vmatmul.mubr.bf16.gmra.mrb[0].mxu0 %v2038
  %v4347 = vpop.f32.mrb[0].mxu0
  %v4348 = vadd.f32 0.0, %v4347
  %v4349 = vpop.f32.mrb[0].mxu0
  %v4350 = vpop.f32.mrb[0].mxu0
  %v4351 = vadd.f32 0.0, %v4350
  %v4352 = vpop.f32.mrb[0].mxu0
  %4353 = vmatprep.mubr.bf16.mxu0 0
  %4354 = vmatmul.mubr.bf16.gmra.mrb[0].mxu0 %v2041
  %v4355 = vpop.f32.mrb[0].mxu0
  %v4356 = vadd.f32 0.0, %v4355
  %v4357 = vpop.f32.mrb[0].mxu0
  %v4358 = vpop.f32.mrb[0].mxu0
  %v4359 = vadd.f32 0.0, %v4358
  %v4360 = vpop.f32.mrb[0].mxu0
  %4361 = vmatprep.mubr.bf16.mxu0 0
  %4362 = vmatmul.mubr.bf16.gmra.mrb[0].mxu0 %v2044
  %v4363 = vpop.f32.mrb[0].mxu0
  %v4364 = vadd.f32 0.0, %v4363
  %v4365 = vpop.f32.mrb[0].mxu0
  %v4366 = vpop.f32.mrb[0].mxu0
  %v4367 = vadd.f32 0.0, %v4366
  %v4368 = vpop.f32.mrb[0].mxu0
  %4369 = vmatprep.mubr.bf16.mxu0 0
  %4370 = vmatmul.mubr.bf16.gmra.mrb[0].mxu0 %v2047
  %v4371 = vpop.f32.mrb[0].mxu0
  %v4372 = vadd.f32 0.0, %v4371
  %v4373 = vpop.f32.mrb[0].mxu0
  %v4374 = vpop.f32.mrb[0].mxu0
  %v4375 = vadd.f32 0.0, %v4374
  %v4376 = vpop.f32.mrb[0].mxu0
  %4377 = vmatprep.mubr.bf16.mxu0 0
  %4378 = vmatmul.mubr.bf16.gmra.mrb[0].mxu0 %v2050
  %v4379 = vpop.f32.mrb[0].mxu0
  %v4380 = vadd.f32 0.0, %v4379
  %v4381 = vpop.f32.mrb[0].mxu0
  %v4382 = vpop.f32.mrb[0].mxu0
  %v4383 = vadd.f32 0.0, %v4382
  %v4384 = vpop.f32.mrb[0].mxu0
  %4385 = vmatprep.mubr.bf16.mxu0 0
  %4386 = vmatmul.mubr.bf16.gmra.mrb[0].mxu0 %v2053
  %v4387 = vpop.f32.mrb[0].mxu0
  %v4388 = vadd.f32 0.0, %v4387
  %v4389 = vpop.f32.mrb[0].mxu0
  %v4390 = vpop.f32.mrb[0].mxu0
  %v4391 = vadd.f32 0.0, %v4390
  %v4392 = vpop.f32.mrb[0].mxu0
  %4393 = vmatprep.mubr.bf16.mxu0 0
  %4394 = vmatmul.mubr.bf16.gmra.mrb[0].mxu0 %v2056
  %v4395 = vpop.f32.mrb[0].mxu0
  %v4396 = vadd.f32 0.0, %v4395
  %v4397 = vpop.f32.mrb[0].mxu0
  %v4398 = vpop.f32.mrb[0].mxu0
  %v4399 = vadd.f32 0.0, %v4398
  %v4400 = vpop.f32.mrb[0].mxu0
  %4401 = vmatprep.mubr.bf16.mxu0 0
  %4402 = vmatmul.mubr.bf16.gmra.mrb[0].mxu0 %v2059
  %v4403 = vpop.f32.mrb[0].mxu0
  %v4404 = vadd.f32 0.0, %v4403
  %v4405 = vpop.f32.mrb[0].mxu0
  %v4406 = vpop.f32.mrb[0].mxu0
  %v4407 = vadd.f32 0.0, %v4406
  %v4408 = vpop.f32.mrb[0].mxu0
  %4409 = vmatprep.mubr.bf16.mxu0 0
  %4410 = vmatmul.mubr.bf16.gmra.mrb[0].mxu0 %v2062
  %v4411 = vpop.f32.mrb[0].mxu0
  %v4412 = vadd.f32 0.0, %v4411
  %v4413 = vpop.f32.mrb[0].mxu0
  %v4414 = vpop.f32.mrb[0].mxu0
  %v4415 = vadd.f32 0.0, %v4414
  %v4416 = vpop.f32.mrb[0].mxu0
  %4417 = vmatprep.mubr.bf16.mxu0 0
  %4418 = vmatmul.mubr.bf16.gmra.mrb[0].mxu0 %v2065
  %v4419 = vpop.f32.mrb[0].mxu0
  %v4420 = vadd.f32 0.0, %v4419
  %v4421 = vpop.f32.mrb[0].mxu0
  %v4422 = vpop.f32.mrb[0].mxu0
  %v4423 = vadd.f32 0.0, %v4422
  %v4424 = vpop.f32.mrb[0].mxu0
  %4425 = vmatprep.mubr.bf16.mxu0 0
  %4426 = vmatmul.mubr.bf16.gmra.mrb[0].mxu0 %v2068
  %v4427 = vpop.f32.mrb[0].mxu0
  %v4428 = vadd.f32 0.0, %v4427
  %v4429 = vpop.f32.mrb[0].mxu0
  %v4430 = vpop.f32.mrb[0].mxu0
  %v4431 = vadd.f32 0.0, %v4430
  %v4432 = vpop.f32.mrb[0].mxu0
  %4433 = vmatprep.mubr.bf16.mxu0 0
  %4434 = vmatmul.mubr.bf16.gmra.mrb[0].mxu0 %v2071
  %v4435 = vpop.f32.mrb[0].mxu0
  %v4436 = vadd.f32 0.0, %v4435
  %v4437 = vpop.f32.mrb[0].mxu0
  %v4438 = vpop.f32.mrb[0].mxu0
  %v4439 = vadd.f32 0.0, %v4438
  %v4440 = vpop.f32.mrb[0].mxu0
  %4441 = vmatprep.mubr.bf16.mxu0 0
  %4442 = vmatmul.mubr.bf16.gmra.mrb[0].mxu0 %v2074
  %v4443 = vpop.f32.mrb[0].mxu0
  %v4444 = vadd.f32 0.0, %v4443
  %v4445 = vpop.f32.mrb[0].mxu0
  %v4446 = vpop.f32.mrb[0].mxu0
  %v4447 = vadd.f32 0.0, %v4446
  %v4448 = vpop.f32.mrb[0].mxu0
  %4449 = vmatprep.mubr.bf16.mxu0 0
  %4450 = vmatmul.mubr.bf16.gmra.mrb[0].mxu0 %v2077
  %v4451 = vpop.f32.mrb[0].mxu0
  %v4452 = vadd.f32 0.0, %v4451
  %v4453 = vpop.f32.mrb[0].mxu0
  %v4454 = vpop.f32.mrb[0].mxu0
  %v4455 = vadd.f32 0.0, %v4454
  %v4456 = vpop.f32.mrb[0].mxu0
  %4457 = vmatprep.mubr.bf16.mxu0 0
  %4458 = vmatmul.mubr.bf16.gmra.mrb[0].mxu0 %v3237
  %v4459 = vpop.f32.mrb[0].mxu0
  %v4460 = vadd.f32 0.0, %v4459
  %v4461 = vpop.f32.mrb[0].mxu0
  %v4462 = vpop.f32.mrb[0].mxu0
  %v4463 = vadd.f32 0.0, %v4462
  %v4464 = vpop.f32.mrb[0].mxu0
  %4465 = vmatprep.mubr.bf16.mxu0 0
  %4466 = vmatmul.mubr.bf16.gmra.mrb[0].mxu0 %v2032
  %v4467 = vpop.f32.mrb[0].mxu0
  %v4468 = vadd.f32 0.0, %v4467
  %v4469 = vpop.f32.mrb[0].mxu0
  %v4470 = vpop.f32.mrb[0].mxu0
  %v4471 = vadd.f32 0.0, %v4470
  %v4472 = vpop.f32.mrb[0].mxu0
  %4473 = vmatprep.mubr.bf16.mxu0 0
  %4474 = vmatmul.mubr.bf16.gmra.mrb[0].mxu0 %v2083
  %v4475 = vpop.f32.mrb[0].mxu0
  %v4476 = vadd.f32 0.0, %v4475
  %v4477 = vpop.f32.mrb[0].mxu0
  %v4478 = vpop.f32.mrb[0].mxu0
  %v4479 = vadd.f32 0.0, %v4478
  %v4480 = vpop.f32.mrb[0].mxu0
  %4481 = vmatprep.mubr.bf16.mxu0 0
  %4482 = vmatmul.mubr.bf16.gmra.mrb[0].mxu0 %v2086
  %v4483 = vpop.f32.mrb[0].mxu0
  %v4484 = vadd.f32 0.0, %v4483
  %v4485 = vpop.f32.mrb[0].mxu0
  %v4486 = vpop.f32.mrb[0].mxu0
  %v4487 = vadd.f32 0.0, %v4486
  %v4488 = vpop.f32.mrb[0].mxu0
  %4489 = vmatprep.mubr.bf16.mxu0 0
  %4490 = vmatmul.mubr.bf16.gmra.mrb[0].mxu0 %v2089
  %v4491 = vpop.f32.mrb[0].mxu0
  %v4492 = vadd.f32 0.0, %v4491
  %v4493 = vpop.f32.mrb[0].mxu0
  %v4494 = vpop.f32.mrb[0].mxu0
  %v4495 = vadd.f32 0.0, %v4494
  %v4496 = vpop.f32.mrb[0].mxu0
  %4497 = vmatprep.mubr.bf16.mxu0 0
  %4498 = vmatmul.mubr.bf16.gmra.mrb[0].mxu0 %v2092
  %v4499 = vpop.f32.mrb[0].mxu0
  %v4500 = vadd.f32 0.0, %v4499
  %v4501 = vpop.f32.mrb[0].mxu0
  %v4502 = vpop.f32.mrb[0].mxu0
  %v4503 = vadd.f32 0.0, %v4502
  %v4504 = vpop.f32.mrb[0].mxu0
  %4505 = vmatprep.mubr.bf16.mxu0 0
  %4506 = vmatmul.mubr.bf16.gmra.mrb[0].mxu0 %v2095
  %v4507 = vpop.f32.mrb[0].mxu0
  %v4508 = vadd.f32 0.0, %v4507
  %v4509 = vpop.f32.mrb[0].mxu0
  %v4510 = vpop.f32.mrb[0].mxu0
  %v4511 = vadd.f32 0.0, %v4510
  %v4512 = vpop.f32.mrb[0].mxu0
  %4513 = vmatprep.mubr.bf16.mxu0 0
  %4514 = vmatmul.mubr.bf16.gmra.mrb[0].mxu0 %v2098
  %v4515 = vpop.f32.mrb[0].mxu0
  %v4516 = vadd.f32 0.0, %v4515
  %v4517 = vpop.f32.mrb[0].mxu0
  %v4518 = vpop.f32.mrb[0].mxu0
  %v4519 = vadd.f32 0.0, %v4518
  %v4520 = vpop.f32.mrb[0].mxu0
  %4521 = vmatprep.mubr.bf16.mxu0 0
  %4522 = vmatmul.mubr.bf16.gmra.mrb[0].mxu0 %v2101
  %v4523 = vpop.f32.mrb[0].mxu0
  %v4524 = vadd.f32 0.0, %v4523
  %v4525 = vpop.f32.mrb[0].mxu0
  %v4526 = vpop.f32.mrb[0].mxu0
  %v4527 = vadd.f32 0.0, %v4526
  %v4528 = vpop.f32.mrb[0].mxu0
  %4529 = vmatprep.mubr.bf16.mxu0 0
  %4530 = vmatmul.mubr.bf16.gmra.mrb[0].mxu0 %v2104
  %v4531 = vpop.f32.mrb[0].mxu0
  %v4532 = vadd.f32 0.0, %v4531
  %v4533 = vpop.f32.mrb[0].mxu0
  %v4534 = vpop.f32.mrb[0].mxu0
  %v4535 = vadd.f32 0.0, %v4534
  %v4536 = vpop.f32.mrb[0].mxu0
  %4537 = vmatprep.mubr.bf16.mxu0 0
  %4538 = vmatmul.mubr.bf16.gmra.mrb[0].mxu0 %v2107
  %v4539 = vpop.f32.mrb[0].mxu0
  %v4540 = vadd.f32 0.0, %v4539
  %v4541 = vpop.f32.mrb[0].mxu0
  %v4542 = vpop.f32.mrb[0].mxu0
  %v4543 = vadd.f32 0.0, %v4542
  %v4544 = vpop.f32.mrb[0].mxu0
  %4545 = vmatprep.mubr.bf16.mxu0 0
  %4546 = vmatmul.mubr.bf16.gmra.mrb[0].mxu0 %v2110
  %v4547 = vpop.f32.mrb[0].mxu0
  %v4548 = vadd.f32 0.0, %v4547
  %v4549 = vpop.f32.mrb[0].mxu0
  %v4550 = vpop.f32.mrb[0].mxu0
  %v4551 = vadd.f32 0.0, %v4550
  %v4552 = vpop.f32.mrb[0].mxu0
  %4553 = vmatprep.mubr.bf16.mxu0 0
  %4554 = vmatmul.mubr.bf16.gmra.mrb[0].mxu0 %v2113
  %v4555 = vpop.f32.mrb[0].mxu0
  %v4556 = vadd.f32 0.0, %v4555
  %v4557 = vpop.f32.mrb[0].mxu0
  %v4558 = vpop.f32.mrb[0].mxu0
  %v4559 = vadd.f32 0.0, %v4558
  %v4560 = vpop.f32.mrb[0].mxu0
  %4561 = vmatprep.mubr.bf16.mxu0 0
  %4562 = vmatmul.mubr.bf16.gmra.mrb[0].mxu0 %v2116
  %v4563 = vpop.f32.mrb[0].mxu0
  %v4564 = vadd.f32 0.0, %v4563
  %v4565 = vpop.f32.mrb[0].mxu0
  %v4566 = vpop.f32.mrb[0].mxu0
  %v4567 = vadd.f32 0.0, %v4566
  %v4568 = vpop.f32.mrb[0].mxu0
  %4569 = vmatprep.mubr.bf16.mxu0 0
  %4570 = vmatmul.mubr.bf16.gmra.mrb[0].mxu0 %v2119
  %v4571 = vpop.f32.mrb[0].mxu0
  %v4572 = vadd.f32 0.0, %v4571
  %v4573 = vpop.f32.mrb[0].mxu0
  %v4574 = vpop.f32.mrb[0].mxu0
  %v4575 = vadd.f32 0.0, %v4574
  %v4576 = vpop.f32.mrb[0].mxu0
  %4577 = vmatprep.mubr.bf16.mxu0 0
  %4578 = vmatmul.mubr.bf16.gmra.mrb[0].mxu0 %v2122
  %v4579 = vpop.f32.mrb[0].mxu0
  %v4580 = vadd.f32 0.0, %v4579
  %v4581 = vpop.f32.mrb[0].mxu0
  %v4582 = vpop.f32.mrb[0].mxu0
  %v4583 = vadd.f32 0.0, %v4582
  %v4584 = vpop.f32.mrb[0].mxu0
  %4585 = vmatprep.mubr.bf16.mxu0 0
  %4586 = vmatmul.mubr.bf16.gmra.mrb[0].mxu0 %v3240
  %v4587 = vpop.f32.mrb[0].mxu0
  %v4588 = vadd.f32 0.0, %v4587
  %v4589 = vpop.f32.mrb[0].mxu0
  %v4590 = vpop.f32.mrb[0].mxu0
  %v4591 = vadd.f32 0.0, %v4590
  %v4592 = vpop.f32.mrb[0].mxu0
  %4593 = vmatprep.mubr.bf16.mxu0 0
  %4594 = vmatmul.mubr.bf16.gmra.mrb[0].mxu0 %v2032
  %v4595 = vpop.f32.mrb[0].mxu0
  %v4596 = vadd.f32 0.0, %v4595
  %v4597 = vpop.f32.mrb[0].mxu0
  %v4598 = vpop.f32.mrb[0].mxu0
  %v4599 = vadd.f32 0.0, %v4598
  %v4600 = vpop.f32.mrb[0].mxu0
  %4601 = vdwg.mxu0
  %v4602 = vadd.f32 %v4246, %v4348
  %v4603 = vadd.f32 %v4247, %v4351
  %v4604 = vadd.f32 %v4248, %v4356
  %v4605 = vadd.f32 %v4249, %v4359
  %v4606 = vadd.f32 %v4250, %v4364
  %v4607 = vadd.f32 %v4251, %v4367
  %v4608 = vadd.f32 %v4252, %v4372
  %v4609 = vadd.f32 %v4253, %v4375
  %v4610 = vadd.f32 %v4254, %v4380
  %v4611 = vadd.f32 %v4255, %v4383
  %v4612 = vadd.f32 %v4256, %v4388
  %v4613 = vadd.f32 %v4257, %v4391
  %v4614 = vadd.f32 %v4258, %v4396
  %v4615 = vadd.f32 %v4259, %v4399
  %v4616 = vadd.f32 %v4260, %v4404
  %v4617 = vadd.f32 %v4261, %v4407
  %v4618 = vadd.f32 %v4262, %v4412
  %v4619 = vadd.f32 %v4263, %v4415
  %v4620 = vadd.f32 %v4264, %v4420
  %v4621 = vadd.f32 %v4265, %v4423
  %v4622 = vadd.f32 %v4266, %v4428
  %v4623 = vadd.f32 %v4267, %v4431
  %v4624 = vadd.f32 %v4268, %v4436
  %v4625 = vadd.f32 %v4269, %v4439
  %v4626 = vadd.f32 %v4270, %v4444
  %v4627 = vadd.f32 %v4271, %v4447
  %v4628 = vadd.f32 %v4272, %v4452
  %v4629 = vadd.f32 %v4273, %v4455
  %v4630 = vadd.f32 %v4274, %v4460
  %v4631 = vadd.f32 %v4275, %v4463
  %v4632 = vadd.f32 %v4276, %v4468
  %v4633 = vadd.f32 %v4277, %v4471
  %v4634 = vadd.f32 %v4278, %v4476
  %v4635 = vadd.f32 %v4279, %v4479
  %v4636 = vadd.f32 %v4280, %v4484
  %v4637 = vadd.f32 %v4281, %v4487
  %v4638 = vadd.f32 %v4282, %v4492
  %v4639 = vadd.f32 %v4283, %v4495
  %v4640 = vadd.f32 %v4284, %v4500
  %v4641 = vadd.f32 %v4285, %v4503
  %v4642 = vadd.f32 %v4286, %v4508
  %v4643 = vadd.f32 %v4287, %v4511
  %v4644 = vadd.f32 %v4288, %v4516
  %v4645 = vadd.f32 %v4289, %v4519
  %v4646 = vadd.f32 %v4290, %v4524
  %v4647 = vadd.f32 %v4291, %v4527
  %v4648 = vadd.f32 %v4292, %v4532
  %v4649 = vadd.f32 %v4293, %v4535
  %v4650 = vadd.f32 %v4294, %v4540
  %v4651 = vadd.f32 %v4295, %v4543
  %v4652 = vadd.f32 %v4296, %v4548
  %v4653 = vadd.f32 %v4297, %v4551
  %v4654 = vadd.f32 %v4298, %v4556
  %v4655 = vadd.f32 %v4299, %v4559
  %v4656 = vadd.f32 %v4300, %v4564
  %v4657 = vadd.f32 %v4301, %v4567
  %v4658 = vadd.f32 %v4302, %v4572
  %v4659 = vadd.f32 %v4303, %v4575
  %v4660 = vadd.f32 %v4304, %v4580
  %v4661 = vadd.f32 %v4305, %v4583
  %v4662 = vadd.f32 %v4306, %v4588
  %v4663 = vadd.f32 %v4307, %v4591
  %v4664 = vadd.f32 %v4308, %v4596
  %v4665 = vadd.f32 %v4309, %v4599
  %v4666 = vpack.c.bf16 %v4603, %v4602
  %v4667 = vpack.c.bf16 %v4605, %v4604
  %v4668 = vpack.c.bf16 %v4607, %v4606
  %v4669 = vpack.c.bf16 %v4609, %v4608
  %v4670 = vpack.c.bf16 %v4611, %v4610
  %v4671 = vpack.c.bf16 %v4613, %v4612
  %v4672 = vpack.c.bf16 %v4615, %v4614
  %v4673 = vpack.c.bf16 %v4617, %v4616
  %v4674 = vpack.c.bf16 %v4619, %v4618
  %v4675 = vpack.c.bf16 %v4621, %v4620
  %v4676 = vpack.c.bf16 %v4623, %v4622
  %v4677 = vpack.c.bf16 %v4625, %v4624
  %v4678 = vpack.c.bf16 %v4627, %v4626
  %v4679 = vpack.c.bf16 %v4629, %v4628
  %v4680 = vpack.c.bf16 %v4631, %v4630
  %v4681 = vpack.c.bf16 %v4633, %v4632
  %v4682 = vpack.c.bf16 %v4635, %v4634
  %v4683 = vpack.c.bf16 %v4637, %v4636
  %v4684 = vpack.c.bf16 %v4639, %v4638
  %v4685 = vpack.c.bf16 %v4641, %v4640
  %v4686 = vpack.c.bf16 %v4643, %v4642
  %v4687 = vpack.c.bf16 %v4645, %v4644
  %v4688 = vpack.c.bf16 %v4647, %v4646
  %v4689 = vpack.c.bf16 %v4649, %v4648
  %v4690 = vpack.c.bf16 %v4651, %v4650
  %v4691 = vpack.c.bf16 %v4653, %v4652
  %v4692 = vpack.c.bf16 %v4655, %v4654
  %v4693 = vpack.c.bf16 %v4657, %v4656
  %v4694 = vpack.c.bf16 %v4659, %v4658
  %v4695 = vpack.c.bf16 %v4661, %v4660
  %v4696 = vpack.c.bf16 %v4663, %v4662
  %v4697 = vpack.c.bf16 %v4665, %v4664
  %v4730 = vunpack.c.l.b16 %v4666
  %v4731 = vunpack.c.h.b16 %v4666
  %v4732 = vunpack.c.l.b16 %v4667
  %v4733 = vunpack.c.h.b16 %v4667
  %v4734 = vunpack.c.l.b16 %v4668
  %v4735 = vunpack.c.h.b16 %v4668
  %v4736 = vunpack.c.l.b16 %v4669
  %v4737 = vunpack.c.h.b16 %v4669
  %v4738 = vunpack.c.l.b16 %v4670
  %v4739 = vunpack.c.h.b16 %v4670
  %v4740 = vunpack.c.l.b16 %v4671
  %v4741 = vunpack.c.h.b16 %v4671
  %v4742 = vunpack.c.l.b16 %v4672
  %v4743 = vunpack.c.h.b16 %v4672
  %v4744 = vunpack.c.l.b16 %v4673
  %v4745 = vunpack.c.h.b16 %v4673
  %v4746 = vunpack.c.l.b16 %v4674
  %v4747 = vunpack.c.h.b16 %v4674
  %v4748 = vunpack.c.l.b16 %v4675
  %v4749 = vunpack.c.h.b16 %v4675
  %v4750 = vunpack.c.l.b16 %v4676
  %v4751 = vunpack.c.h.b16 %v4676
  %v4752 = vunpack.c.l.b16 %v4677
  %v4753 = vunpack.c.h.b16 %v4677
  %v4754 = vunpack.c.l.b16 %v4678
  %v4755 = vunpack.c.h.b16 %v4678
  %v4756 = vunpack.c.l.b16 %v4679
  %v4757 = vunpack.c.h.b16 %v4679
  %v4758 = vunpack.c.l.b16 %v4680
  %v4759 = vunpack.c.h.b16 %v4680
  %v4760 = vunpack.c.l.b16 %v4681
  %v4761 = vunpack.c.h.b16 %v4681
  %v4762 = vunpack.c.l.b16 %v4682
  %v4763 = vunpack.c.h.b16 %v4682
  %v4764 = vunpack.c.l.b16 %v4683
  %v4765 = vunpack.c.h.b16 %v4683
  %v4766 = vunpack.c.l.b16 %v4684
  %v4767 = vunpack.c.h.b16 %v4684
  %v4768 = vunpack.c.l.b16 %v4685
  %v4769 = vunpack.c.h.b16 %v4685
  %v4770 = vunpack.c.l.b16 %v4686
  %v4771 = vunpack.c.h.b16 %v4686
  %v4772 = vunpack.c.l.b16 %v4687
  %v4773 = vunpack.c.h.b16 %v4687
  %v4774 = vunpack.c.l.b16 %v4688
  %v4775 = vunpack.c.h.b16 %v4688
  %v4776 = vunpack.c.l.b16 %v4689
  %v4777 = vunpack.c.h.b16 %v4689
  %v4778 = vunpack.c.l.b16 %v4690
  %v4779 = vunpack.c.h.b16 %v4690
  %v4780 = vunpack.c.l.b16 %v4691
  %v4781 = vunpack.c.h.b16 %v4691
  %v4782 = vunpack.c.l.b16 %v4692
  %v4783 = vunpack.c.h.b16 %v4692
  %v4784 = vunpack.c.l.b16 %v4693
  %v4785 = vunpack.c.h.b16 %v4693
  %v4786 = vunpack.c.l.b16 %v4694
  %v4787 = vunpack.c.h.b16 %v4694
  %v4788 = vunpack.c.l.b16 %v4695
  %v4789 = vunpack.c.h.b16 %v4695
  %v4790 = vunpack.c.l.b16 %v4696
  %v4791 = vunpack.c.h.b16 %v4696
  %v4792 = vunpack.c.l.b16 %v4697
  %v4793 = vunpack.c.h.b16 %v4697
  %v4794 = vpack.c.b16 %v4730, %v4730
  %v4795 = vpack.c.b16 %v4731, %v4731
  %v4796 = vpack.c.b16 %v4732, %v4732
  %v4797 = vpack.c.b16 %v4733, %v4733
  %v4798 = vpack.c.b16 %v4734, %v4734
  %v4799 = vpack.c.b16 %v4735, %v4735
  %v4800 = vpack.c.b16 %v4736, %v4736
  %v4801 = vpack.c.b16 %v4737, %v4737
  %v4802 = vpack.c.b16 %v4738, %v4738
  %v4803 = vpack.c.b16 %v4739, %v4739
  %v4804 = vpack.c.b16 %v4740, %v4740
  %v4805 = vpack.c.b16 %v4741, %v4741
  %v4806 = vpack.c.b16 %v4742, %v4742
  %v4807 = vpack.c.b16 %v4743, %v4743
  %v4808 = vpack.c.b16 %v4744, %v4744
  %v4809 = vpack.c.b16 %v4745, %v4745
  %v4810 = vpack.c.b16 %v4746, %v4746
  %v4811 = vpack.c.b16 %v4747, %v4747
  %v4812 = vpack.c.b16 %v4748, %v4748
  %v4813 = vpack.c.b16 %v4749, %v4749
  %v4814 = vpack.c.b16 %v4750, %v4750
  %v4815 = vpack.c.b16 %v4751, %v4751
  %v4816 = vpack.c.b16 %v4752, %v4752
  %v4817 = vpack.c.b16 %v4753, %v4753
  %v4818 = vpack.c.b16 %v4754, %v4754
  %v4819 = vpack.c.b16 %v4755, %v4755
  %v4820 = vpack.c.b16 %v4756, %v4756
  %v4821 = vpack.c.b16 %v4757, %v4757
  %v4822 = vpack.c.b16 %v4758, %v4758
  %v4823 = vpack.c.b16 %v4759, %v4759
  %v4824 = vpack.c.b16 %v4760, %v4760
  %v4825 = vpack.c.b16 %v4761, %v4761
  %v4826 = vpack.c.b16 %v4762, %v4762
  %v4827 = vpack.c.b16 %v4763, %v4763
  %v4828 = vpack.c.b16 %v4764, %v4764
  %v4829 = vpack.c.b16 %v4765, %v4765
  %v4830 = vpack.c.b16 %v4766, %v4766
  %v4831 = vpack.c.b16 %v4767, %v4767
  %v4832 = vpack.c.b16 %v4768, %v4768
  %v4833 = vpack.c.b16 %v4769, %v4769
  %v4834 = vpack.c.b16 %v4770, %v4770
  %v4835 = vpack.c.b16 %v4771, %v4771
  %v4836 = vpack.c.b16 %v4772, %v4772
  %v4837 = vpack.c.b16 %v4773, %v4773
  %v4838 = vpack.c.b16 %v4774, %v4774
  %v4839 = vpack.c.b16 %v4775, %v4775
  %v4840 = vpack.c.b16 %v4776, %v4776
  %v4841 = vpack.c.b16 %v4777, %v4777
  %v4842 = vpack.c.b16 %v4778, %v4778
  %v4843 = vpack.c.b16 %v4779, %v4779
  %v4844 = vpack.c.b16 %v4780, %v4780
  %v4845 = vpack.c.b16 %v4781, %v4781
  %v4846 = vpack.c.b16 %v4782, %v4782
  %v4847 = vpack.c.b16 %v4783, %v4783
  %v4848 = vpack.c.b16 %v4784, %v4784
  %v4849 = vpack.c.b16 %v4785, %v4785
  %v4850 = vpack.c.b16 %v4786, %v4786
  %v4851 = vpack.c.b16 %v4787, %v4787
  %v4852 = vpack.c.b16 %v4788, %v4788
  %v4853 = vpack.c.b16 %v4789, %v4789
  %v4854 = vpack.c.b16 %v4790, %v4790
  %v4855 = vpack.c.b16 %v4791, %v4791
  %v4856 = vpack.c.b16 %v4792, %v4792
  %v4857 = vpack.c.b16 %v4793, %v4793
  %vm4922 = vcmask 60416
  %4923 = vst.msk [vmem:[%s4] sm:$0xf] %vm4922, %v4794
  %4924 = vst.msk [vmem:[%s4 + $0x4] sm:$0xf] %vm4922, %v4795
  %4925 = vst.msk [vmem:[%s4 + $0x8] sm:$0xf] %vm4922, %v4796
  %4926 = vst.msk [vmem:[%s4 + $0xc] sm:$0xf] %vm4922, %v4797
  %4927 = vst.msk [vmem:[%s4 + $0x10] sm:$0xf] %vm4922, %v4798
  %4928 = vst.msk [vmem:[%s4 + $0x14] sm:$0xf] %vm4922, %v4799
  %4929 = vst.msk [vmem:[%s4 + $0x18] sm:$0xf] %vm4922, %v4800
  %4930 = vst.msk [vmem:[%s4 + $0x1c] sm:$0xf] %vm4922, %v4801
  %4931 = vst.msk [vmem:[%s4 + $0x20] sm:$0xf] %vm4922, %v4802
  %4932 = vst.msk [vmem:[%s4 + $0x24] sm:$0xf] %vm4922, %v4803
  %4933 = vst.msk [vmem:[%s4 + $0x28] sm:$0xf] %vm4922, %v4804
  %4934 = vst.msk [vmem:[%s4 + $0x2c] sm:$0xf] %vm4922, %v4805
  %4935 = vst.msk [vmem:[%s4 + $0x30] sm:$0xf] %vm4922, %v4806
  %4936 = vst.msk [vmem:[%s4 + $0x34] sm:$0xf] %vm4922, %v4807
  %4937 = vst.msk [vmem:[%s4 + $0x38] sm:$0xf] %vm4922, %v4808
  %4938 = vst.msk [vmem:[%s4 + $0x3c] sm:$0xf] %vm4922, %v4809
  %4939 = vst.msk [vmem:[%s4 + $0x40] sm:$0xf] %vm4922, %v4810
  %4940 = vst.msk [vmem:[%s4 + $0x44] sm:$0xf] %vm4922, %v4811
  %4941 = vst.msk [vmem:[%s4 + $0x48] sm:$0xf] %vm4922, %v4812
  %4942 = vst.msk [vmem:[%s4 + $0x4c] sm:$0xf] %vm4922, %v4813
  %4943 = vst.msk [vmem:[%s4 + $0x50] sm:$0xf] %vm4922, %v4814
  %4944 = vst.msk [vmem:[%s4 + $0x54] sm:$0xf] %vm4922, %v4815
  %4945 = vst.msk [vmem:[%s4 + $0x58] sm:$0xf] %vm4922, %v4816
  %4946 = vst.msk [vmem:[%s4 + $0x5c] sm:$0xf] %vm4922, %v4817
  %4947 = vst.msk [vmem:[%s4 + $0x60] sm:$0xf] %vm4922, %v4818
  %4948 = vst.msk [vmem:[%s4 + $0x64] sm:$0xf] %vm4922, %v4819
  %4949 = vst.msk [vmem:[%s4 + $0x68] sm:$0xf] %vm4922, %v4820
  %4950 = vst.msk [vmem:[%s4 + $0x6c] sm:$0xf] %vm4922, %v4821
  %4951 = vst.msk [vmem:[%s4 + $0x70] sm:$0xf] %vm4922, %v4822
  %4952 = vst.msk [vmem:[%s4 + $0x74] sm:$0xf] %vm4922, %v4823
  %4953 = vst.msk [vmem:[%s4 + $0x78] sm:$0xf] %vm4922, %v4824
  %4954 = vst.msk [vmem:[%s4 + $0x7c] sm:$0xf] %vm4922, %v4825
  %4955 = vst.msk [vmem:[%s4 + $0x80] sm:$0xf] %vm4922, %v4826
  %4956 = vst.msk [vmem:[%s4 + $0x84] sm:$0xf] %vm4922, %v4827
  %4957 = vst.msk [vmem:[%s4 + $0x88] sm:$0xf] %vm4922, %v4828
  %4958 = vst.msk [vmem:[%s4 + $0x8c] sm:$0xf] %vm4922, %v4829
  %4959 = vst.msk [vmem:[%s4 + $0x90] sm:$0xf] %vm4922, %v4830
  %4960 = vst.msk [vmem:[%s4 + $0x94] sm:$0xf] %vm4922, %v4831
  %4961 = vst.msk [vmem:[%s4 + $0x98] sm:$0xf] %vm4922, %v4832
  %4962 = vst.msk [vmem:[%s4 + $0x9c] sm:$0xf] %vm4922, %v4833
  %4963 = vst.msk [vmem:[%s4 + $0xa0] sm:$0xf] %vm4922, %v4834
  %4964 = vst.msk [vmem:[%s4 + $0xa4] sm:$0xf] %vm4922, %v4835
  %4965 = vst.msk [vmem:[%s4 + $0xa8] sm:$0xf] %vm4922, %v4836
  %4966 = vst.msk [vmem:[%s4 + $0xac] sm:$0xf] %vm4922, %v4837
  %4967 = vst.msk [vmem:[%s4 + $0xb0] sm:$0xf] %vm4922, %v4838
  %4968 = vst.msk [vmem:[%s4 + $0xb4] sm:$0xf] %vm4922, %v4839
  %4969 = vst.msk [vmem:[%s4 + $0xb8] sm:$0xf] %vm4922, %v4840
  %4970 = vst.msk [vmem:[%s4 + $0xbc] sm:$0xf] %vm4922, %v4841
  %4971 = vst.msk [vmem:[%s4 + $0xc0] sm:$0xf] %vm4922, %v4842
  %4972 = vst.msk [vmem:[%s4 + $0xc4] sm:$0xf] %vm4922, %v4843
  %4973 = vst.msk [vmem:[%s4 + $0xc8] sm:$0xf] %vm4922, %v4844
  %4974 = vst.msk [vmem:[%s4 + $0xcc] sm:$0xf] %vm4922, %v4845
  %4975 = vst.msk [vmem:[%s4 + $0xd0] sm:$0xf] %vm4922, %v4846
  %4976 = vst.msk [vmem:[%s4 + $0xd4] sm:$0xf] %vm4922, %v4847
  %4977 = vst.msk [vmem:[%s4 + $0xd8] sm:$0xf] %vm4922, %v4848
  %4978 = vst.msk [vmem:[%s4 + $0xdc] sm:$0xf] %vm4922, %v4849
  %4979 = vst.msk [vmem:[%s4 + $0xe0] sm:$0xf] %vm4922, %v4850
  %4980 = vst.msk [vmem:[%s4 + $0xe4] sm:$0xf] %vm4922, %v4851
  %4981 = vst.msk [vmem:[%s4 + $0xe8] sm:$0xf] %vm4922, %v4852
  %4982 = vst.msk [vmem:[%s4 + $0xec] sm:$0xf] %vm4922, %v4853
  %4983 = vst.msk [vmem:[%s4 + $0xf0] sm:$0xf] %vm4922, %v4854
  %4984 = vst.msk [vmem:[%s4 + $0xf4] sm:$0xf] %vm4922, %v4855
  %4985 = vst.msk [vmem:[%s4 + $0xf8] sm:$0xf] %vm4922, %v4856
  %4986 = vst.msk [vmem:[%s4 + $0xfc] sm:$0xf] %vm4922, %v4857
  %v4987 = vsel %vm1134, %v4602, 0.0
  %v4988 = vsel %vm1134, %v4603, 0.0
  %v4989 = vadd.f32 %v4987, %v4988
  %v4990 = vsel %vm1134, %v4604, 0.0
  %v4991 = vadd.f32 %v4989, %v4990
  %v4992 = vsel %vm1134, %v4605, 0.0
  %v4993 = vadd.f32 %v4991, %v4992
  %v4994 = vsel %vm1134, %v4606, 0.0
  %v4995 = vadd.f32 %v4993, %v4994
  %v4996 = vsel %vm1134, %v4607, 0.0
  %v4997 = vadd.f32 %v4995, %v4996
  %v4998 = vsel %vm1134, %v4608, 0.0
  %v4999 = vadd.f32 %v4997, %v4998
  %v5000 = vsel %vm1134, %v4609, 0.0
  %v5001 = vadd.f32 %v4999, %v5000
  %v5002 = vsel %vm1134, %v4610, 0.0
  %v5003 = vadd.f32 %v5001, %v5002
  %v5004 = vsel %vm1134, %v4611, 0.0
  %v5005 = vadd.f32 %v5003, %v5004
  %v5006 = vsel %vm1134, %v4612, 0.0
  %v5007 = vadd.f32 %v5005, %v5006
  %v5008 = vsel %vm1134, %v4613, 0.0
  %v5009 = vadd.f32 %v5007, %v5008
  %v5010 = vsel %vm1134, %v4614, 0.0
  %v5011 = vadd.f32 %v5009, %v5010
  %v5012 = vsel %vm1134, %v4615, 0.0
  %v5013 = vadd.f32 %v5011, %v5012
  %v5014 = vsel %vm1134, %v4616, 0.0
  %v5015 = vadd.f32 %v5013, %v5014
  %v5016 = vsel %vm1134, %v4617, 0.0
  %v5017 = vadd.f32 %v5015, %v5016
  %v5018 = vsel %vm1134, %v4618, 0.0
  %v5019 = vadd.f32 %v5017, %v5018
  %v5020 = vsel %vm1134, %v4619, 0.0
  %v5021 = vadd.f32 %v5019, %v5020
  %v5022 = vsel %vm1134, %v4620, 0.0
  %v5023 = vadd.f32 %v5021, %v5022
  %v5024 = vsel %vm1134, %v4621, 0.0
  %v5025 = vadd.f32 %v5023, %v5024
  %v5026 = vsel %vm1134, %v4622, 0.0
  %v5027 = vadd.f32 %v5025, %v5026
  %v5028 = vsel %vm1134, %v4623, 0.0
  %v5029 = vadd.f32 %v5027, %v5028
  %v5030 = vsel %vm1134, %v4624, 0.0
  %v5031 = vadd.f32 %v5029, %v5030
  %v5032 = vsel %vm1134, %v4625, 0.0
  %v5033 = vadd.f32 %v5031, %v5032
  %v5034 = vsel %vm1134, %v4626, 0.0
  %v5035 = vadd.f32 %v5033, %v5034
  %v5036 = vsel %vm1134, %v4627, 0.0
  %v5037 = vadd.f32 %v5035, %v5036
  %v5038 = vsel %vm1134, %v4628, 0.0
  %v5039 = vadd.f32 %v5037, %v5038
  %v5040 = vsel %vm1134, %v4629, 0.0
  %v5041 = vadd.f32 %v5039, %v5040
  %v5042 = vsel %vm1134, %v4630, 0.0
  %v5043 = vadd.f32 %v5041, %v5042
  %v5044 = vsel %vm1134, %v4631, 0.0
  %v5045 = vadd.f32 %v5043, %v5044
  %v5046 = vsel %vm1134, %v4632, 0.0
  %v5047 = vadd.f32 %v5045, %v5046
  %v5048 = vsel %vm1134, %v4633, 0.0
  %v5049 = vadd.f32 %v5047, %v5048
  %v5050 = vsel %vm1134, %v4634, 0.0
  %v5051 = vadd.f32 %v5049, %v5050
  %v5052 = vsel %vm1134, %v4635, 0.0
  %v5053 = vadd.f32 %v5051, %v5052
  %v5054 = vsel %vm1134, %v4636, 0.0
  %v5055 = vadd.f32 %v5053, %v5054
  %v5056 = vsel %vm1134, %v4637, 0.0
  %v5057 = vadd.f32 %v5055, %v5056
  %v5058 = vsel %vm1134, %v4638, 0.0
  %v5059 = vadd.f32 %v5057, %v5058
  %v5060 = vsel %vm1134, %v4639, 0.0
  %v5061 = vadd.f32 %v5059, %v5060
  %v5062 = vsel %vm1134, %v4640, 0.0
  %v5063 = vadd.f32 %v5061, %v5062
  %v5064 = vsel %vm1134, %v4641, 0.0
  %v5065 = vadd.f32 %v5063, %v5064
  %v5066 = vsel %vm1134, %v4642, 0.0
  %v5067 = vadd.f32 %v5065, %v5066
  %v5068 = vsel %vm1134, %v4643, 0.0
  %v5069 = vadd.f32 %v5067, %v5068
  %v5070 = vsel %vm1134, %v4644, 0.0
  %v5071 = vadd.f32 %v5069, %v5070
  %v5072 = vsel %vm1134, %v4645, 0.0
  %v5073 = vadd.f32 %v5071, %v5072
  %v5074 = vsel %vm1134, %v4646, 0.0
  %v5075 = vadd.f32 %v5073, %v5074
  %v5076 = vsel %vm1134, %v4647, 0.0
  %v5077 = vadd.f32 %v5075, %v5076
  %v5078 = vsel %vm1134, %v4648, 0.0
  %v5079 = vadd.f32 %v5077, %v5078
  %v5080 = vsel %vm1134, %v4649, 0.0
  %v5081 = vadd.f32 %v5079, %v5080
  %v5082 = vsel %vm1134, %v4650, 0.0
  %v5083 = vadd.f32 %v5081, %v5082
  %v5084 = vsel %vm1134, %v4651, 0.0
  %v5085 = vadd.f32 %v5083, %v5084
  %v5086 = vsel %vm1134, %v4652, 0.0
  %v5087 = vadd.f32 %v5085, %v5086
  %v5088 = vsel %vm1134, %v4653, 0.0
  %v5089 = vadd.f32 %v5087, %v5088
  %v5090 = vsel %vm1134, %v4654, 0.0
  %v5091 = vadd.f32 %v5089, %v5090
  %v5092 = vsel %vm1134, %v4655, 0.0
  %v5093 = vadd.f32 %v5091, %v5092
  %v5094 = vsel %vm1134, %v4656, 0.0
  %v5095 = vadd.f32 %v5093, %v5094
  %v5096 = vsel %vm1134, %v4657, 0.0
  %v5097 = vadd.f32 %v5095, %v5096
  %v5098 = vsel %vm1134, %v4658, 0.0
  %v5099 = vadd.f32 %v5097, %v5098
  %v5100 = vsel %vm1134, %v4659, 0.0
  %v5101 = vadd.f32 %v5099, %v5100
  %v5102 = vsel %vm1134, %v4660, 0.0
  %v5103 = vadd.f32 %v5101, %v5102
  %v5104 = vsel %vm1134, %v4661, 0.0
  %v5105 = vadd.f32 %v5103, %v5104
  %v5106 = vsel %vm1134, %v4662, 0.0
  %v5107 = vadd.f32 %v5105, %v5106
  %v5108 = vsel %vm1134, %v4663, 0.0
  %v5109 = vadd.f32 %v5107, %v5108
  %v5110 = vsel %vm1134, %v4664, 0.0
  %v5111 = vadd.f32 %v5109, %v5110
  %v5112 = vsel %vm1134, %v4665, 0.0
  %v5113 = vadd.f32 %v5111, %v5112
  %v5114 = vrot.slane %v5113, 4
  %v5115 = vadd.f32 %v5113, %v5114
  %v5116 = vrot.slane %v5115, 2
  %v5117 = vadd.f32 %v5115, %v5116
  %v5118 = vrot.slane %v5117, 1
  %v5119 = vadd.f32 %v5117, %v5118
  %v5120 = vmul.f32 %v5119, 0.001953125
  %v5121 = vsub.f32 %v4602, %v5120
  %v5122 = vsub.f32 %v4603, %v5120
  %v5123 = vsub.f32 %v4604, %v5120
  %v5124 = vsub.f32 %v4605, %v5120
  %v5125 = vsub.f32 %v4606, %v5120
  %v5126 = vsub.f32 %v4607, %v5120
  %v5127 = vsub.f32 %v4608, %v5120
  %v5128 = vsub.f32 %v4609, %v5120
  %v5129 = vsub.f32 %v4610, %v5120
  %v5130 = vsub.f32 %v4611, %v5120
  %v5131 = vsub.f32 %v4612, %v5120
  %v5132 = vsub.f32 %v4613, %v5120
  %v5133 = vsub.f32 %v4614, %v5120
  %v5134 = vsub.f32 %v4615, %v5120
  %v5135 = vsub.f32 %v4616, %v5120
  %v5136 = vsub.f32 %v4617, %v5120
  %v5137 = vsub.f32 %v4618, %v5120
  %v5138 = vsub.f32 %v4619, %v5120
  %v5139 = vsub.f32 %v4620, %v5120
  %v5140 = vsub.f32 %v4621, %v5120
  %v5141 = vsub.f32 %v4622, %v5120
  %v5142 = vsub.f32 %v4623, %v5120
  %v5143 = vsub.f32 %v4624, %v5120
  %v5144 = vsub.f32 %v4625, %v5120
  %v5145 = vsub.f32 %v4626, %v5120
  %v5146 = vsub.f32 %v4627, %v5120
  %v5147 = vsub.f32 %v4628, %v5120
  %v5148 = vsub.f32 %v4629, %v5120
  %v5149 = vsub.f32 %v4630, %v5120
  %v5150 = vsub.f32 %v4631, %v5120
  %v5151 = vsub.f32 %v4632, %v5120
  %v5152 = vsub.f32 %v4633, %v5120
  %v5153 = vsub.f32 %v4634, %v5120
  %v5154 = vsub.f32 %v4635, %v5120
  %v5155 = vsub.f32 %v4636, %v5120
  %v5156 = vsub.f32 %v4637, %v5120
  %v5157 = vsub.f32 %v4638, %v5120
  %v5158 = vsub.f32 %v4639, %v5120
  %v5159 = vsub.f32 %v4640, %v5120
  %v5160 = vsub.f32 %v4641, %v5120
  %v5161 = vsub.f32 %v4642, %v5120
  %v5162 = vsub.f32 %v4643, %v5120
  %v5163 = vsub.f32 %v4644, %v5120
  %v5164 = vsub.f32 %v4645, %v5120
  %v5165 = vsub.f32 %v4646, %v5120
  %v5166 = vsub.f32 %v4647, %v5120
  %v5167 = vsub.f32 %v4648, %v5120
  %v5168 = vsub.f32 %v4649, %v5120
  %v5169 = vsub.f32 %v4650, %v5120
  %v5170 = vsub.f32 %v4651, %v5120
  %v5171 = vsub.f32 %v4652, %v5120
  %v5172 = vsub.f32 %v4653, %v5120
  %v5173 = vsub.f32 %v4654, %v5120
  %v5174 = vsub.f32 %v4655, %v5120
  %v5175 = vsub.f32 %v4656, %v5120
  %v5176 = vsub.f32 %v4657, %v5120
  %v5177 = vsub.f32 %v4658, %v5120
  %v5178 = vsub.f32 %v4659, %v5120
  %v5179 = vsub.f32 %v4660, %v5120
  %v5180 = vsub.f32 %v4661, %v5120
  %v5181 = vsub.f32 %v4662, %v5120
  %v5182 = vsub.f32 %v4663, %v5120
  %v5183 = vsub.f32 %v4664, %v5120
  %v5184 = vsub.f32 %v4665, %v5120
  %v5185 = vmul.f32 %v5121, %v5121
  %v5186 = vmul.f32 %v5122, %v5122
  %v5187 = vmul.f32 %v5123, %v5123
  %v5188 = vmul.f32 %v5124, %v5124
  %v5189 = vmul.f32 %v5125, %v5125
  %v5190 = vmul.f32 %v5126, %v5126
  %v5191 = vmul.f32 %v5127, %v5127
  %v5192 = vmul.f32 %v5128, %v5128
  %v5193 = vmul.f32 %v5129, %v5129
  %v5194 = vmul.f32 %v5130, %v5130
  %v5195 = vmul.f32 %v5131, %v5131
  %v5196 = vmul.f32 %v5132, %v5132
  %v5197 = vmul.f32 %v5133, %v5133
  %v5198 = vmul.f32 %v5134, %v5134
  %v5199 = vmul.f32 %v5135, %v5135
  %v5200 = vmul.f32 %v5136, %v5136
  %v5201 = vmul.f32 %v5137, %v5137
  %v5202 = vmul.f32 %v5138, %v5138
  %v5203 = vmul.f32 %v5139, %v5139
  %v5204 = vmul.f32 %v5140, %v5140
  %v5205 = vmul.f32 %v5141, %v5141
  %v5206 = vmul.f32 %v5142, %v5142
  %v5207 = vmul.f32 %v5143, %v5143
  %v5208 = vmul.f32 %v5144, %v5144
  %v5209 = vmul.f32 %v5145, %v5145
  %v5210 = vmul.f32 %v5146, %v5146
  %v5211 = vmul.f32 %v5147, %v5147
  %v5212 = vmul.f32 %v5148, %v5148
  %v5213 = vmul.f32 %v5149, %v5149
  %v5214 = vmul.f32 %v5150, %v5150
  %v5215 = vmul.f32 %v5151, %v5151
  %v5216 = vmul.f32 %v5152, %v5152
  %v5217 = vmul.f32 %v5153, %v5153
  %v5218 = vmul.f32 %v5154, %v5154
  %v5219 = vmul.f32 %v5155, %v5155
  %v5220 = vmul.f32 %v5156, %v5156
  %v5221 = vmul.f32 %v5157, %v5157
  %v5222 = vmul.f32 %v5158, %v5158
  %v5223 = vmul.f32 %v5159, %v5159
  %v5224 = vmul.f32 %v5160, %v5160
  %v5225 = vmul.f32 %v5161, %v5161
  %v5226 = vmul.f32 %v5162, %v5162
  %v5227 = vmul.f32 %v5163, %v5163
  %v5228 = vmul.f32 %v5164, %v5164
  %v5229 = vmul.f32 %v5165, %v5165
  %v5230 = vmul.f32 %v5166, %v5166
  %v5231 = vmul.f32 %v5167, %v5167
  %v5232 = vmul.f32 %v5168, %v5168
  %v5233 = vmul.f32 %v5169, %v5169
  %v5234 = vmul.f32 %v5170, %v5170
  %v5235 = vmul.f32 %v5171, %v5171
  %v5236 = vmul.f32 %v5172, %v5172
  %v5237 = vmul.f32 %v5173, %v5173
  %v5238 = vmul.f32 %v5174, %v5174
  %v5239 = vmul.f32 %v5175, %v5175
  %v5240 = vmul.f32 %v5176, %v5176
  %v5241 = vmul.f32 %v5177, %v5177
  %v5242 = vmul.f32 %v5178, %v5178
  %v5243 = vmul.f32 %v5179, %v5179
  %v5244 = vmul.f32 %v5180, %v5180
  %v5245 = vmul.f32 %v5181, %v5181
  %v5246 = vmul.f32 %v5182, %v5182
  %v5247 = vmul.f32 %v5183, %v5183
  %v5248 = vmul.f32 %v5184, %v5184
  %v5249 = vsel %vm1134, %v5185, 0.0
  %v5250 = vsel %vm1134, %v5186, 0.0
  %v5251 = vadd.f32 %v5249, %v5250
  %v5252 = vsel %vm1134, %v5187, 0.0
  %v5253 = vadd.f32 %v5251, %v5252
  %v5254 = vsel %vm1134, %v5188, 0.0
  %v5255 = vadd.f32 %v5253, %v5254
  %v5256 = vsel %vm1134, %v5189, 0.0
  %v5257 = vadd.f32 %v5255, %v5256
  %v5258 = vsel %vm1134, %v5190, 0.0
  %v5259 = vadd.f32 %v5257, %v5258
  %v5260 = vsel %vm1134, %v5191, 0.0
  %v5261 = vadd.f32 %v5259, %v5260
  %v5262 = vsel %vm1134, %v5192, 0.0
  %v5263 = vadd.f32 %v5261, %v5262
  %v5264 = vsel %vm1134, %v5193, 0.0
  %v5265 = vadd.f32 %v5263, %v5264
  %v5266 = vsel %vm1134, %v5194, 0.0
  %v5267 = vadd.f32 %v5265, %v5266
  %v5268 = vsel %vm1134, %v5195, 0.0
  %v5269 = vadd.f32 %v5267, %v5268
  %v5270 = vsel %vm1134, %v5196, 0.0
  %v5271 = vadd.f32 %v5269, %v5270
  %v5272 = vsel %vm1134, %v5197, 0.0
  %v5273 = vadd.f32 %v5271, %v5272
  %v5274 = vsel %vm1134, %v5198, 0.0
  %v5275 = vadd.f32 %v5273, %v5274
  %v5276 = vsel %vm1134, %v5199, 0.0
  %v5277 = vadd.f32 %v5275, %v5276
  %v5278 = vsel %vm1134, %v5200, 0.0
  %v5279 = vadd.f32 %v5277, %v5278
  %v5280 = vsel %vm1134, %v5201, 0.0
  %v5281 = vadd.f32 %v5279, %v5280
  %v5282 = vsel %vm1134, %v5202, 0.0
  %v5283 = vadd.f32 %v5281, %v5282
  %v5284 = vsel %vm1134, %v5203, 0.0
  %v5285 = vadd.f32 %v5283, %v5284
  %v5286 = vsel %vm1134, %v5204, 0.0
  %v5287 = vadd.f32 %v5285, %v5286
  %v5288 = vsel %vm1134, %v5205, 0.0
  %v5289 = vadd.f32 %v5287, %v5288
  %v5290 = vsel %vm1134, %v5206, 0.0
  %v5291 = vadd.f32 %v5289, %v5290
  %v5292 = vsel %vm1134, %v5207, 0.0
  %v5293 = vadd.f32 %v5291, %v5292
  %v5294 = vsel %vm1134, %v5208, 0.0
  %v5295 = vadd.f32 %v5293, %v5294
  %v5296 = vsel %vm1134, %v5209, 0.0
  %v5297 = vadd.f32 %v5295, %v5296
  %v5298 = vsel %vm1134, %v5210, 0.0
  %v5299 = vadd.f32 %v5297, %v5298
  %v5300 = vsel %vm1134, %v5211, 0.0
  %v5301 = vadd.f32 %v5299, %v5300
  %v5302 = vsel %vm1134, %v5212, 0.0
  %v5303 = vadd.f32 %v5301, %v5302
  %v5304 = vsel %vm1134, %v5213, 0.0
  %v5305 = vadd.f32 %v5303, %v5304
  %v5306 = vsel %vm1134, %v5214, 0.0
  %v5307 = vadd.f32 %v5305, %v5306
  %v5308 = vsel %vm1134, %v5215, 0.0
  %v5309 = vadd.f32 %v5307, %v5308
  %v5310 = vsel %vm1134, %v5216, 0.0
  %v5311 = vadd.f32 %v5309, %v5310
  %v5312 = vsel %vm1134, %v5217, 0.0
  %v5313 = vadd.f32 %v5311, %v5312
  %v5314 = vsel %vm1134, %v5218, 0.0
  %v5315 = vadd.f32 %v5313, %v5314
  %v5316 = vsel %vm1134, %v5219, 0.0
  %v5317 = vadd.f32 %v5315, %v5316
  %v5318 = vsel %vm1134, %v5220, 0.0
  %v5319 = vadd.f32 %v5317, %v5318
  %v5320 = vsel %vm1134, %v5221, 0.0
  %v5321 = vadd.f32 %v5319, %v5320
  %v5322 = vsel %vm1134, %v5222, 0.0
  %v5323 = vadd.f32 %v5321, %v5322
  %v5324 = vsel %vm1134, %v5223, 0.0
  %v5325 = vadd.f32 %v5323, %v5324
  %v5326 = vsel %vm1134, %v5224, 0.0
  %v5327 = vadd.f32 %v5325, %v5326
  %v5328 = vsel %vm1134, %v5225, 0.0
  %v5329 = vadd.f32 %v5327, %v5328
  %v5330 = vsel %vm1134, %v5226, 0.0
  %v5331 = vadd.f32 %v5329, %v5330
  %v5332 = vsel %vm1134, %v5227, 0.0
  %v5333 = vadd.f32 %v5331, %v5332
  %v5334 = vsel %vm1134, %v5228, 0.0
  %v5335 = vadd.f32 %v5333, %v5334
  %v5336 = vsel %vm1134, %v5229, 0.0
  %v5337 = vadd.f32 %v5335, %v5336
  %v5338 = vsel %vm1134, %v5230, 0.0
  %v5339 = vadd.f32 %v5337, %v5338
  %v5340 = vsel %vm1134, %v5231, 0.0
  %v5341 = vadd.f32 %v5339, %v5340
  %v5342 = vsel %vm1134, %v5232, 0.0
  %v5343 = vadd.f32 %v5341, %v5342
  %v5344 = vsel %vm1134, %v5233, 0.0
  %v5345 = vadd.f32 %v5343, %v5344
  %v5346 = vsel %vm1134, %v5234, 0.0
  %v5347 = vadd.f32 %v5345, %v5346
  %v5348 = vsel %vm1134, %v5235, 0.0
  %v5349 = vadd.f32 %v5347, %v5348
  %v5350 = vsel %vm1134, %v5236, 0.0
  %v5351 = vadd.f32 %v5349, %v5350
  %v5352 = vsel %vm1134, %v5237, 0.0
  %v5353 = vadd.f32 %v5351, %v5352
  %v5354 = vsel %vm1134, %v5238, 0.0
  %v5355 = vadd.f32 %v5353, %v5354
  %v5356 = vsel %vm1134, %v5239, 0.0
  %v5357 = vadd.f32 %v5355, %v5356
  %v5358 = vsel %vm1134, %v5240, 0.0
  %v5359 = vadd.f32 %v5357, %v5358
  %v5360 = vsel %vm1134, %v5241, 0.0
  %v5361 = vadd.f32 %v5359, %v5360
  %v5362 = vsel %vm1134, %v5242, 0.0
  %v5363 = vadd.f32 %v5361, %v5362
  %v5364 = vsel %vm1134, %v5243, 0.0
  %v5365 = vadd.f32 %v5363, %v5364
  %v5366 = vsel %vm1134, %v5244, 0.0
  %v5367 = vadd.f32 %v5365, %v5366
  %v5368 = vsel %vm1134, %v5245, 0.0
  %v5369 = vadd.f32 %v5367, %v5368
  %v5370 = vsel %vm1134, %v5246, 0.0
  %v5371 = vadd.f32 %v5369, %v5370
  %v5372 = vsel %vm1134, %v5247, 0.0
  %v5373 = vadd.f32 %v5371, %v5372
  %v5374 = vsel %vm1134, %v5248, 0.0
  %v5375 = vadd.f32 %v5373, %v5374
  %v5376 = vrot.slane %v5375, 4
  %v5377 = vadd.f32 %v5375, %v5376
  %v5378 = vrot.slane %v5377, 2
  %v5379 = vadd.f32 %v5377, %v5378
  %v5380 = vrot.slane %v5379, 1
  %v5381 = vadd.f32 %v5379, %v5380
  %vm5382 = vcmask 1040384
  %v5383 = vsel %vm5382, %v5119, %v5381
  %vm5384 = vcmask 58368
  %5385 = vst.msk [vmem:[%s5] sm:$0x3] %vm5384, %v5383
  // Predicated region
  $region18: #{basic_block_forward.4} parent=0 // pred_check
    _
  $region19: #{basic_block_forward.4} parent=0 // pred_check_branch
    %5387 = sbr.rel (0) target = $region21
  $region20: #{basic_block_forward.4} parent=0 // pred_region
    _
  $region21: #{basic_block_forward.4} parent=0 // pred_fallthru
    _
  // Predicated region
  $region22: #{basic_block_forward.4} parent=0 // pred_check
    _
  $region23: #{basic_block_forward.4} parent=0 // pred_check_branch
    %5389 = sbr.rel (0) target = $region25
  $region24: #{basic_block_forward.4} parent=0 // pred_region
    _
  $region25: #{basic_block_forward.4} parent=0 // pred_fallthru
    _
  // Predicated region
  $region26: #{basic_block_forward.4} parent=0 // pred_check
    _
  $region27: #{basic_block_forward.4} parent=0 // pred_check_branch
    %5391 = sbr.rel (0) target = $region29
  $region28: #{basic_block_forward.4} parent=0 // pred_region
    _
  $region29: #{basic_block_forward.4} parent=0 // pred_fallthru
    _
  // Predicated region
  $region30: #{basic_block_forward.4} parent=0 // pred_check
    _
  $region31: #{basic_block_forward.4} parent=0 // pred_check_branch
    %5393 = sbr.rel (0) target = $region33
  $region32: #{basic_block_forward.4} parent=0 // pred_region
    _
  $region33: #{basic_block_forward.4} parent=0 // pred_fallthru
    _

</llo_original>
